<compile_context>
chip_gen: v7x
topology: tpu7x:2x2x1
jax: 0.10.0
libtpu: 0.0.40
codegen_flags: <defaults>
</compile_context>

<pallas_src>
import functools

import jax
import jax.numpy as jnp
from jax.experimental import pallas as pl
from jax.experimental.pallas import tpu as pltpu

# ---------------- scaled-down config ----------------
FEAT = 16        # analog of resnet50's 2048-d pooled feature
EMBED = 32       # embed_size
HIDDEN = 32      # gpt2 hidden_size
N_HEAD = 2
N_LAYER = 2
VOCAB = 64
VOCAB_PAD = 128  # lane-dense LM head (pad 64 -> 128)
N_POS = 16
LN_EPS = 1e-5
_WPAD = 8        # sublane-aligned zero padding used for the 3x3 "same" convs


# ---------------- in-kernel helpers ----------------
def _mxdot(a, b):
    """MXU matmul: bf16 operands, f32 accumulation (v5e/v6e/v7x friendly)."""
    return jnp.dot(a.astype(jnp.bfloat16), b.astype(jnp.bfloat16),
                   preferred_element_type=jnp.float32)


def _ln(x, g, b):
    mu = jnp.mean(x, axis=-1, keepdims=True)
    xc = x - mu
    var = jnp.mean(xc * xc, axis=-1, keepdims=True)
    return xc * jax.lax.rsqrt(var + LN_EPS) * g + b


def _gelu(x):
    # GPT-2 "gelu_new" (tanh approximation); tanh runs on the EUP slot.
    c = 0.7978845608028654  # sqrt(2/pi)
    return 0.5 * x * (1.0 + jnp.tanh(c * (x + 0.044715 * x * x * x)))


# ---------------- fused CNN backbone kernel ----------------
_CNN_PARAM_ORDER = (
    'stem_w', 'stem_s', 'stem_b',
    'c1_w', 'c1_s', 'c1_b',
    'c2_w', 'c2_s', 'c2_b',
    'c3_w', 'c3_s', 'c3_b',
    'ds_w', 'ds_s', 'ds_b',
    'ie_w', 'ie_b', 'ig_w', 'ig_b',
)


def _cnn_kernel(x_ref,
                stem_w_ref, stem_s_ref, stem_b_ref,
                c1_w_ref, c1_s_ref, c1_b_ref,
                c2_w_ref, c2_s_ref, c2_b_ref,
                c3_w_ref, c3_s_ref, c3_b_ref,
                ds_w_ref, ds_s_ref, ds_b_ref,
                ie_w_ref, ie_b_ref, ig_w_ref, ig_b_ref,
                o_ref):
    # One image per grid step; everything below stays in VMEM/vregs.
    x = x_ref[0]                     # (H, W, 3)
    H, W, _ = x.shape

    def conv3x3_same(inp, w, s, b, relu):
        # 3x3 "same" conv with folded (inference) batchnorm.
        Hh, Ww, Cin = inp.shape
        Cout = w.shape[-1]
        # zero-pad: W with 8 (sublane-aligned) zeros each side, H (major dim) with 1.
        zw = jnp.zeros((Hh, _WPAD, Cin), jnp.float32)
        xp = jnp.concatenate([zw, inp, zw], axis=1)            # (H, W+16, Cin)
        zh = jnp.zeros((1, Ww + 2 * _WPAD, Cin), jnp.float32)
        xp = jnp.concatenate([zh, xp, zh], axis=0)             # (H+2, W+16, Cin)
        acc = jnp.zeros((Hh * Ww, Cout), jnp.float32)
        # TODO(synk): at real ResNet sizes replace the 9-tap loop with a single
        # im2col matmul (K = KH*KW*Cin) and tile over H/W; at this toy scale the
        # taps are 9 tiny MXU pushes inside one already-fused kernel.
        for kh in range(3):
            for kw in range(3):
                patch = xp[kh:kh + Hh, (_WPAD - 1) + kw:(_WPAD - 1) + kw + Ww, :]
                acc = acc + _mxdot(patch.reshape(Hh * Ww, Cin), w[kh, kw])
        y = acc * s + b                                        # folded BN
        if relu:
            y = jnp.maximum(y, 0.0)
        return y                                               # (H*W, Cout)

    def lin_bn(inp, w, s, b, relu):
        # 1x1 conv == channel matmul, with folded BN.
        y = _mxdot(inp, w) * s + b
        if relu:
            y = jnp.maximum(y, 0.0)
        return y

    # stem conv-bn-relu
    h0 = conv3x3_same(x, stem_w_ref[...], stem_s_ref[...], stem_b_ref[...], True)   # (H*W, 8)
    # bottleneck (1x1 -> 3x3 -> 1x1) + downsample path
    y = lin_bn(h0, c1_w_ref[...], c1_s_ref[...], c1_b_ref[...], True)               # (H*W, 4)
    y = conv3x3_same(y.reshape(H, W, y.shape[-1]),
                     c2_w_ref[...], c2_s_ref[...], c2_b_ref[...], True)             # (H*W, 4)
    y = lin_bn(y, c3_w_ref[...], c3_s_ref[...], c3_b_ref[...], False)               # (H*W, FEAT)
    d = lin_bn(h0, ds_w_ref[...], ds_s_ref[...], ds_b_ref[...], False)              # (H*W, FEAT)
    f = jnp.maximum(y + d, 0.0)                                                      # residual + relu
    # global average pool -> image_embedding -> image_to_gpt2
    feat = jnp.mean(f, axis=0, keepdims=True)                                        # (1, FEAT)
    emb = _mxdot(feat, ie_w_ref[...]) + ie_b_ref[...]                                # (1, EMBED)
    gemb = _mxdot(emb, ig_w_ref[...]) + ig_b_ref[...]                                # (1, HIDDEN)
    o_ref[0] = gemb.astype(o_ref.dtype)


def _full_spec(a):
    nd = a.ndim
    return pl.BlockSpec(a.shape, lambda b, nd=nd: (0,) * nd)


def cnn_backbone(x_nhwc, cp):
    B, H, W, C = x_nhwc.shape
    pargs = [cp[k] for k in _CNN_PARAM_ORDER]
    return pl.pallas_call(
        _cnn_kernel,
        out_shape=jax.ShapeDtypeStruct((B, 1, HIDDEN), jnp.float32),
        grid=(B,),
        in_specs=[pl.BlockSpec((1, H, W, C), lambda b: (b, 0, 0, 0))]
                 + [_full_spec(a) for a in pargs],
        out_specs=pl.BlockSpec((1, 1, HIDDEN), lambda b: (b, 0, 0)),
        compiler_params=pltpu.CompilerParams(dimension_semantics=("parallel",)),
    )(x_nhwc, *pargs)


# ---------------- fused GPT-2 transformer kernel ----------------
_GPT2_PARAM_ORDER = (
    'qkv_w', 'qkv_b', 'proj_w', 'proj_b',
    'ln1_g', 'ln1_b', 'ln2_g', 'ln2_b',
    'fc_w', 'fc_b', 'out_w', 'out_b',
    'lnf_g', 'lnf_b', 'lm_w',
)


def _gpt2_kernel(gemb_ref, wpe_ref,
                 qkv_w_ref, qkv_b_ref, proj_w_ref, proj_b_ref,
                 ln1_g_ref, ln1_b_ref, ln2_g_ref, ln2_b_ref,
                 fc_w_ref, fc_b_ref, out_w_ref, out_b_ref,
                 lnf_g_ref, lnf_b_ref, lm_w_ref, o_ref, *, n_layer, n_head):
    # One batch element per grid step; h stays resident (no HBM round trips).
    S, H = wpe_ref.shape
    dh = H // n_head
    scale = 1.0 / float(dh) ** 0.5

    # inputs_embeds repeated over seq + position embeddings (broadcast add)
    h = gemb_ref[0] + wpe_ref[...]                                   # (S, H)

    row = jax.lax.broadcasted_iota(jnp.int32, (S, S), 0)
    col = jax.lax.broadcasted_iota(jnp.int32, (S, S), 1)
    causal = col <= row
    # TODO(synk): attention_mask (padding mask) is not supported; causal mask only.

    for l in range(n_layer):
        # ---- attention sub-block ----
        x = _ln(h, ln1_g_ref[l], ln1_b_ref[l])
        qw = qkv_w_ref[l]            # (n_head, 3, H, dh)
        qb = qkv_b_ref[l]            # (n_head, 3, 1, dh)
        pw = proj_w_ref[l]           # (H, H)
        a = jnp.zeros((S, H), jnp.float32)
        for hh in range(n_head):
            q = _mxdot(x, qw[hh, 0]) + qb[hh, 0]                     # (S, dh)
            k = _mxdot(x, qw[hh, 1]) + qb[hh, 1]
            v = _mxdot(x, qw[hh, 2]) + qb[hh, 2]
            s = _mxdot(q, k.T) * scale                               # (S, S)
            s = jnp.where(causal, s, -1e30)
            s = s - jnp.max(s, axis=-1, keepdims=True)
            p_ = jnp.exp(s)
            p_ = p_ / jnp.sum(p_, axis=-1, keepdims=True)
            ho = _mxdot(p_, v)                                       # (S, dh)
            # head-concat fused into the output projection (per-head row slice of W_proj)
            a = a + _mxdot(ho, pw[hh * dh:(hh + 1) * dh, :])
        h = h + a + proj_b_ref[l]
        # ---- MLP sub-block (LN + fc + gelu + proj fused) ----
        x = _ln(h, ln2_g_ref[l], ln2_b_ref[l])
        m = _mxdot(x, fc_w_ref[l]) + fc_b_ref[l]                     # (S, 4H) = 128 lanes
        m = _gelu(m)
        h = h + _mxdot(m, out_w_ref[l]) + out_b_ref[l]

    # final LN + tied LM head (pre-transposed, lane-padded to 128)
    hf = _ln(h, lnf_g_ref[...], lnf_b_ref[...])
    o_ref[0] = _mxdot(hf, lm_w_ref[...]).astype(o_ref.dtype)         # (S, VOCAB_PAD)


def gpt2_transformer(gemb3, tp, S):
    B = gemb3.shape[0]
    wpe_s = tp['wpe'][:S]                                            # (S, HIDDEN)
    pargs = [tp[k] for k in _GPT2_PARAM_ORDER]
    kern = functools.partial(_gpt2_kernel, n_layer=N_LAYER, n_head=N_HEAD)
    out = pl.pallas_call(
        kern,
        out_shape=jax.ShapeDtypeStruct((B, S, VOCAB_PAD), jnp.float32),
        grid=(B,),
        in_specs=[pl.BlockSpec((1, 1, HIDDEN), lambda b: (b, 0, 0)),
                  _full_spec(wpe_s)] + [_full_spec(a) for a in pargs],
        out_specs=pl.BlockSpec((1, S, VOCAB_PAD), lambda b: (b, 0, 0)),
        compiler_params=pltpu.CompilerParams(dimension_semantics=("parallel",)),
    )(gemb3, wpe_s, *pargs)
    return out[:, :, :VOCAB]


# ---------------- parameter init (deterministic, synthetic, pre-folded) ----------------
def init_params(key):
    keys = jax.random.split(key, 10)

    def conv_bn(k, kh, kw, cin, cout):
        k1, k2, k3 = jax.random.split(k, 3)
        w = jax.random.normal(k1, (kh, kw, cin, cout), jnp.float32) * 0.05
        g = 1.0 + 0.1 * jax.random.normal(k2, (cout,), jnp.float32)
        b = 0.1 * jax.random.normal(k3, (cout,), jnp.float32)
        m = jnp.zeros((cout,), jnp.float32)
        v = jnp.ones((cout,), jnp.float32)
        s = g * jax.lax.rsqrt(v + 1e-5)              # fold inference BN once, at init
        return w, s.reshape(1, cout), (b - m * s).reshape(1, cout)

    def dense(k, fi, fo):
        return (jax.random.normal(k, (fi, fo), jnp.float32) * 0.02,
                jnp.zeros((1, fo), jnp.float32))

    stem_w, stem_s, stem_b = conv_bn(keys[0], 3, 3, 3, 8)
    c1_w, c1_s, c1_b = conv_bn(keys[1], 1, 1, 8, 4)
    c2_w, c2_s, c2_b = conv_bn(keys[2], 3, 3, 4, 4)
    c3_w, c3_s, c3_b = conv_bn(keys[3], 1, 1, 4, FEAT)
    ds_w, ds_s, ds_b = conv_bn(keys[4], 1, 1, 8, FEAT)
    ie_w, ie_b = dense(keys[5], FEAT, EMBED)
    ig_w, ig_b = dense(keys[6], EMBED, HIDDEN)
    cnn = dict(stem_w=stem_w, stem_s=stem_s, stem_b=stem_b,
               c1_w=c1_w.reshape(8, 4), c1_s=c1_s, c1_b=c1_b,
               c2_w=c2_w, c2_s=c2_s, c2_b=c2_b,
               c3_w=c3_w.reshape(4, FEAT), c3_s=c3_s, c3_b=c3_b,
               ds_w=ds_w.reshape(8, FEAT), ds_s=ds_s, ds_b=ds_b,
               ie_w=ie_w, ie_b=ie_b, ig_w=ig_w, ig_b=ig_b)

    H = HIDDEN
    dh = H // N_HEAD
    wte = jax.random.normal(keys[7], (VOCAB, H), jnp.float32) * 0.02
    wpe = jax.random.normal(keys[8], (N_POS, H), jnp.float32) * 0.01
    # tied LM head: pre-transposed and lane-padded 64 -> 128 at init (no per-forward glue)
    lm_w = jnp.zeros((H, VOCAB_PAD), jnp.float32).at[:, :VOCAB].set(wte.T)

    def block(k):
        ks = jax.random.split(k, 4)
        attn_w, attn_b = dense(ks[0], H, 3 * H)
        proj_w, proj_b = dense(ks[1], H, H)
        fc_w, fc_b = dense(ks[2], H, 4 * H)
        out_w, out_b = dense(ks[3], 4 * H, H)
        # re-stack c_attn so the kernel reads per-head Q/K/V weights directly
        # (head split done once at init; no unaligned lane slicing in-kernel)
        qkv_w = attn_w.reshape(H, 3, N_HEAD, dh).transpose(2, 1, 0, 3)     # (NH, 3, H, dh)
        qkv_b = attn_b.reshape(3, N_HEAD, dh).transpose(1, 0, 2).reshape(N_HEAD, 3, 1, dh)
        return dict(qkv_w=qkv_w, qkv_b=qkv_b, proj_w=proj_w, proj_b=proj_b,
                    fc_w=fc_w, fc_b=fc_b, out_w=out_w, out_b=out_b,
                    ln1_g=jnp.ones((1, H), jnp.float32), ln1_b=jnp.zeros((1, H), jnp.float32),
                    ln2_g=jnp.ones((1, H), jnp.float32), ln2_b=jnp.zeros((1, H), jnp.float32))

    blocks = [block(k) for k in jax.random.split(keys[9], N_LAYER)]
    stacked = {name: jnp.stack([bl[name] for bl in blocks], axis=0) for name in blocks[0]}
    gpt2 = dict(wpe=wpe, lm_w=lm_w,
                lnf_g=jnp.ones((1, H), jnp.float32), lnf_b=jnp.zeros((1, H), jnp.float32),
                **stacked)
    return dict(cnn=cnn, gpt2=gpt2)


# ---------------- forward pass ----------------
def resnet_gpt2_forward(params, images, input_ids=None, attention_mask=None):
    # TODO(synk): attention_mask (padding mask) is ignored; causal mask only.
    x = jnp.transpose(images, (0, 2, 3, 1)).astype(jnp.float32)      # NCHW -> NHWC
    gemb = cnn_backbone(x, params['cnn'])                            # (B, 1, HIDDEN)
    S = 1 if input_ids is None else input_ids.shape[1]
    return gpt2_transformer(gemb, params['gpt2'], S)                 # (B, S, VOCAB)


if __name__ == "__main__":
    key = jax.random.PRNGKey(0)
    kp, ki, kt = jax.random.split(key, 3)
    params = init_params(kp)
    images = jax.random.normal(ki, (2, 3, 16, 16), jnp.float32)      # NCHW, like PyTorch
    input_ids = jax.random.randint(kt, (2, 8), 0, VOCAB)             # only seq_length is used
    logits = jax.jit(resnet_gpt2_forward)(params, images, input_ids)
    jax.block_until_ready(logits)
    assert logits.shape == (2, 8, VOCAB) and logits.dtype == jnp.float32
    print("KERNEL_OK")
</pallas_src>

<mosaic_0001>
module attributes {stable_mosaic.version = 11 : i64} {
  func.func @_cnn_kernel(%arg0: i32, %arg1: memref<1x16x16x3xf32, #tpu.memory_space<vmem>>, %arg2: memref<3x3x3x8xf32, #tpu.memory_space<vmem>>, %arg3: memref<1x8xf32, #tpu.memory_space<vmem>>, %arg4: memref<1x8xf32, #tpu.memory_space<vmem>>, %arg5: memref<8x4xf32, #tpu.memory_space<vmem>>, %arg6: memref<1x4xf32, #tpu.memory_space<vmem>>, %arg7: memref<1x4xf32, #tpu.memory_space<vmem>>, %arg8: memref<3x3x4x4xf32, #tpu.memory_space<vmem>>, %arg9: memref<1x4xf32, #tpu.memory_space<vmem>>, %arg10: memref<1x4xf32, #tpu.memory_space<vmem>>, %arg11: memref<4x16xf32, #tpu.memory_space<vmem>>, %arg12: memref<1x16xf32, #tpu.memory_space<vmem>>, %arg13: memref<1x16xf32, #tpu.memory_space<vmem>>, %arg14: memref<8x16xf32, #tpu.memory_space<vmem>>, %arg15: memref<1x16xf32, #tpu.memory_space<vmem>>, %arg16: memref<1x16xf32, #tpu.memory_space<vmem>>, %arg17: memref<16x32xf32, #tpu.memory_space<vmem>>, %arg18: memref<1x32xf32, #tpu.memory_space<vmem>>, %arg19: memref<32x32xf32, #tpu.memory_space<vmem>>, %arg20: memref<1x32xf32, #tpu.memory_space<vmem>>, %arg21: memref<1x1x32xf32, #tpu.memory_space<vmem>>) attributes {dimension_semantics = [#tpu.dimension_semantics<parallel>], iteration_bounds = array<i64: 2>, scalar_prefetch = 0 : i64, scratch_operands = 0 : i64, tpu.core_type = #tpu.core_type<tc>, window_params = [{transform_indices = @transform_0, window_bounds = array<i64: 1, 16, 16, 3>}, {pipeline_mode = #tpu.pipeline_mode<synchronous>, transform_indices = @transform_1, window_bounds = array<i64: 3, 3, 3, 8>}, {pipeline_mode = #tpu.pipeline_mode<synchronous>, transform_indices = @transform_2, window_bounds = array<i64: 1, 8>}, {pipeline_mode = #tpu.pipeline_mode<synchronous>, transform_indices = @transform_3, window_bounds = array<i64: 1, 8>}, {pipeline_mode = #tpu.pipeline_mode<synchronous>, transform_indices = @transform_4, window_bounds = array<i64: 8, 4>}, {pipeline_mode = #tpu.pipeline_mode<synchronous>, transform_indices = @transform_5, window_bounds = array<i64: 1, 4>}, {pipeline_mode = #tpu.pipeline_mode<synchronous>, transform_indices = @transform_6, window_bounds = array<i64: 1, 4>}, {pipeline_mode = #tpu.pipeline_mode<synchronous>, transform_indices = @transform_7, window_bounds = array<i64: 3, 3, 4, 4>}, {pipeline_mode = #tpu.pipeline_mode<synchronous>, transform_indices = @transform_8, window_bounds = array<i64: 1, 4>}, {pipeline_mode = #tpu.pipeline_mode<synchronous>, transform_indices = @transform_9, window_bounds = array<i64: 1, 4>}, {pipeline_mode = #tpu.pipeline_mode<synchronous>, transform_indices = @transform_10, window_bounds = array<i64: 4, 16>}, {pipeline_mode = #tpu.pipeline_mode<synchronous>, transform_indices = @transform_11, window_bounds = array<i64: 1, 16>}, {pipeline_mode = #tpu.pipeline_mode<synchronous>, transform_indices = @transform_12, window_bounds = array<i64: 1, 16>}, {pipeline_mode = #tpu.pipeline_mode<synchronous>, transform_indices = @transform_13, window_bounds = array<i64: 8, 16>}, {pipeline_mode = #tpu.pipeline_mode<synchronous>, transform_indices = @transform_14, window_bounds = array<i64: 1, 16>}, {pipeline_mode = #tpu.pipeline_mode<synchronous>, transform_indices = @transform_15, window_bounds = array<i64: 1, 16>}, {pipeline_mode = #tpu.pipeline_mode<synchronous>, transform_indices = @transform_16, window_bounds = array<i64: 16, 32>}, {pipeline_mode = #tpu.pipeline_mode<synchronous>, transform_indices = @transform_17, window_bounds = array<i64: 1, 32>}, {pipeline_mode = #tpu.pipeline_mode<synchronous>, transform_indices = @transform_18, window_bounds = array<i64: 32, 32>}, {pipeline_mode = #tpu.pipeline_mode<synchronous>, transform_indices = @transform_19, window_bounds = array<i64: 1, 32>}, {transform_indices = @transform_20, window_bounds = array<i64: 1, 1, 32>}]} {
    %c0 = arith.constant 0 : index
    %c0_0 = arith.constant 0 : index
    %c0_1 = arith.constant 0 : index
    %c0_2 = arith.constant 0 : index
    %0 = vector.load %arg1[%c0, %c0_0, %c0_1, %c0_2] : memref<1x16x16x3xf32, #tpu.memory_space<vmem>>, vector<1x16x16x3xf32>
    %1 = vector.shape_cast %0 : vector<1x16x16x3xf32> to vector<16x16x3xf32>
    %c0_3 = arith.constant 0 : index
    %c0_4 = arith.constant 0 : index
    %c0_5 = arith.constant 0 : index
    %c0_6 = arith.constant 0 : index
    %2 = vector.load %arg2[%c0_3, %c0_4, %c0_5, %c0_6] : memref<3x3x3x8xf32, #tpu.memory_space<vmem>>, vector<3x3x3x8xf32>
    %c0_7 = arith.constant 0 : index
    %c0_8 = arith.constant 0 : index
    %3 = vector.load %arg3[%c0_7, %c0_8] : memref<1x8xf32, #tpu.memory_space<vmem>>, vector<1x8xf32>
    %c0_9 = arith.constant 0 : index
    %c0_10 = arith.constant 0 : index
    %4 = vector.load %arg4[%c0_9, %c0_10] : memref<1x8xf32, #tpu.memory_space<vmem>>, vector<1x8xf32>
    %cst = arith.constant 0.000000e+00 : f32
    %5 = vector.broadcast %cst : f32 to vector<16x8x3xf32>
    %6 = tpu.concatenate %5, %1, %5 in 1 : vector<16x8x3xf32>, vector<16x16x3xf32>, vector<16x8x3xf32> -> vector<16x32x3xf32>
    %cst_11 = arith.constant 0.000000e+00 : f32
    %7 = vector.broadcast %cst_11 : f32 to vector<1x32x3xf32>
    %8 = tpu.concatenate %7, %6, %7 in 0 : vector<1x32x3xf32>, vector<16x32x3xf32>, vector<1x32x3xf32> -> vector<18x32x3xf32>
    %cst_12 = arith.constant 0.000000e+00 : f32
    %9 = vector.broadcast %cst_12 : f32 to vector<256x8xf32>
    %10 = vector.extract_strided_slice %8 {offsets = [0, 7, 0], sizes = [16, 16, 3], strides = [1, 1, 1]} : vector<18x32x3xf32> to vector<16x16x3xf32>
    %11 = vector.shape_cast %10 : vector<16x16x3xf32> to vector<256x3xf32>
    %12 = vector.extract_strided_slice %2 {offsets = [0, 0, 0, 0], sizes = [1, 1, 3, 8], strides = [1, 1, 1, 1]} : vector<3x3x3x8xf32> to vector<1x1x3x8xf32>
    %13 = vector.shape_cast %12 : vector<1x1x3x8xf32> to vector<3x8xf32>
    %14 = arith.truncf %11 : vector<256x3xf32> to vector<256x3xbf16>
    %15 = arith.truncf %13 : vector<3x8xf32> to vector<3x8xbf16>
    %cst_13 = arith.constant dense<0.000000e+00> : vector<256x8xf32>
    %16 = tpu.matmul %14, %15, %cst_13 {dimension_numbers = #tpu.dot_dimension_numbers<[1], [0], [0], [1], [0, 0, 1, 1], [], []>} : vector<256x3xbf16>, vector<3x8xbf16>, vector<256x8xf32> -> vector<256x8xf32>
    %17 = arith.addf %9, %16 : vector<256x8xf32>
    %18 = vector.extract_strided_slice %8 {offsets = [0, 8, 0], sizes = [16, 16, 3], strides = [1, 1, 1]} : vector<18x32x3xf32> to vector<16x16x3xf32>
    %19 = vector.shape_cast %18 : vector<16x16x3xf32> to vector<256x3xf32>
    %20 = vector.extract_strided_slice %2 {offsets = [0, 1, 0, 0], sizes = [1, 1, 3, 8], strides = [1, 1, 1, 1]} : vector<3x3x3x8xf32> to vector<1x1x3x8xf32>
    %21 = vector.shape_cast %20 : vector<1x1x3x8xf32> to vector<3x8xf32>
    %22 = arith.truncf %19 : vector<256x3xf32> to vector<256x3xbf16>
    %23 = arith.truncf %21 : vector<3x8xf32> to vector<3x8xbf16>
    %cst_14 = arith.constant dense<0.000000e+00> : vector<256x8xf32>
    %24 = tpu.matmul %22, %23, %cst_14 {dimension_numbers = #tpu.dot_dimension_numbers<[1], [0], [0], [1], [0, 0, 1, 1], [], []>} : vector<256x3xbf16>, vector<3x8xbf16>, vector<256x8xf32> -> vector<256x8xf32>
    %25 = arith.addf %17, %24 : vector<256x8xf32>
    %26 = vector.extract_strided_slice %8 {offsets = [0, 9, 0], sizes = [16, 16, 3], strides = [1, 1, 1]} : vector<18x32x3xf32> to vector<16x16x3xf32>
    %27 = vector.shape_cast %26 : vector<16x16x3xf32> to vector<256x3xf32>
    %28 = vector.extract_strided_slice %2 {offsets = [0, 2, 0, 0], sizes = [1, 1, 3, 8], strides = [1, 1, 1, 1]} : vector<3x3x3x8xf32> to vector<1x1x3x8xf32>
    %29 = vector.shape_cast %28 : vector<1x1x3x8xf32> to vector<3x8xf32>
    %30 = arith.truncf %27 : vector<256x3xf32> to vector<256x3xbf16>
    %31 = arith.truncf %29 : vector<3x8xf32> to vector<3x8xbf16>
    %cst_15 = arith.constant dense<0.000000e+00> : vector<256x8xf32>
    %32 = tpu.matmul %30, %31, %cst_15 {dimension_numbers = #tpu.dot_dimension_numbers<[1], [0], [0], [1], [0, 0, 1, 1], [], []>} : vector<256x3xbf16>, vector<3x8xbf16>, vector<256x8xf32> -> vector<256x8xf32>
    %33 = arith.addf %25, %32 : vector<256x8xf32>
    %34 = vector.extract_strided_slice %8 {offsets = [1, 7, 0], sizes = [16, 16, 3], strides = [1, 1, 1]} : vector<18x32x3xf32> to vector<16x16x3xf32>
    %35 = vector.shape_cast %34 : vector<16x16x3xf32> to vector<256x3xf32>
    %36 = vector.extract_strided_slice %2 {offsets = [1, 0, 0, 0], sizes = [1, 1, 3, 8], strides = [1, 1, 1, 1]} : vector<3x3x3x8xf32> to vector<1x1x3x8xf32>
    %37 = vector.shape_cast %36 : vector<1x1x3x8xf32> to vector<3x8xf32>
    %38 = arith.truncf %35 : vector<256x3xf32> to vector<256x3xbf16>
    %39 = arith.truncf %37 : vector<3x8xf32> to vector<3x8xbf16>
    %cst_16 = arith.constant dense<0.000000e+00> : vector<256x8xf32>
    %40 = tpu.matmul %38, %39, %cst_16 {dimension_numbers = #tpu.dot_dimension_numbers<[1], [0], [0], [1], [0, 0, 1, 1], [], []>} : vector<256x3xbf16>, vector<3x8xbf16>, vector<256x8xf32> -> vector<256x8xf32>
    %41 = arith.addf %33, %40 : vector<256x8xf32>
    %42 = vector.extract_strided_slice %8 {offsets = [1, 8, 0], sizes = [16, 16, 3], strides = [1, 1, 1]} : vector<18x32x3xf32> to vector<16x16x3xf32>
    %43 = vector.shape_cast %42 : vector<16x16x3xf32> to vector<256x3xf32>
    %44 = vector.extract_strided_slice %2 {offsets = [1, 1, 0, 0], sizes = [1, 1, 3, 8], strides = [1, 1, 1, 1]} : vector<3x3x3x8xf32> to vector<1x1x3x8xf32>
    %45 = vector.shape_cast %44 : vector<1x1x3x8xf32> to vector<3x8xf32>
    %46 = arith.truncf %43 : vector<256x3xf32> to vector<256x3xbf16>
    %47 = arith.truncf %45 : vector<3x8xf32> to vector<3x8xbf16>
    %cst_17 = arith.constant dense<0.000000e+00> : vector<256x8xf32>
    %48 = tpu.matmul %46, %47, %cst_17 {dimension_numbers = #tpu.dot_dimension_numbers<[1], [0], [0], [1], [0, 0, 1, 1], [], []>} : vector<256x3xbf16>, vector<3x8xbf16>, vector<256x8xf32> -> vector<256x8xf32>
    %49 = arith.addf %41, %48 : vector<256x8xf32>
    %50 = vector.extract_strided_slice %8 {offsets = [1, 9, 0], sizes = [16, 16, 3], strides = [1, 1, 1]} : vector<18x32x3xf32> to vector<16x16x3xf32>
    %51 = vector.shape_cast %50 : vector<16x16x3xf32> to vector<256x3xf32>
    %52 = vector.extract_strided_slice %2 {offsets = [1, 2, 0, 0], sizes = [1, 1, 3, 8], strides = [1, 1, 1, 1]} : vector<3x3x3x8xf32> to vector<1x1x3x8xf32>
    %53 = vector.shape_cast %52 : vector<1x1x3x8xf32> to vector<3x8xf32>
    %54 = arith.truncf %51 : vector<256x3xf32> to vector<256x3xbf16>
    %55 = arith.truncf %53 : vector<3x8xf32> to vector<3x8xbf16>
    %cst_18 = arith.constant dense<0.000000e+00> : vector<256x8xf32>
    %56 = tpu.matmul %54, %55, %cst_18 {dimension_numbers = #tpu.dot_dimension_numbers<[1], [0], [0], [1], [0, 0, 1, 1], [], []>} : vector<256x3xbf16>, vector<3x8xbf16>, vector<256x8xf32> -> vector<256x8xf32>
    %57 = arith.addf %49, %56 : vector<256x8xf32>
    %58 = vector.extract_strided_slice %8 {offsets = [2, 7, 0], sizes = [16, 16, 3], strides = [1, 1, 1]} : vector<18x32x3xf32> to vector<16x16x3xf32>
    %59 = vector.shape_cast %58 : vector<16x16x3xf32> to vector<256x3xf32>
    %60 = vector.extract_strided_slice %2 {offsets = [2, 0, 0, 0], sizes = [1, 1, 3, 8], strides = [1, 1, 1, 1]} : vector<3x3x3x8xf32> to vector<1x1x3x8xf32>
    %61 = vector.shape_cast %60 : vector<1x1x3x8xf32> to vector<3x8xf32>
    %62 = arith.truncf %59 : vector<256x3xf32> to vector<256x3xbf16>
    %63 = arith.truncf %61 : vector<3x8xf32> to vector<3x8xbf16>
    %cst_19 = arith.constant dense<0.000000e+00> : vector<256x8xf32>
    %64 = tpu.matmul %62, %63, %cst_19 {dimension_numbers = #tpu.dot_dimension_numbers<[1], [0], [0], [1], [0, 0, 1, 1], [], []>} : vector<256x3xbf16>, vector<3x8xbf16>, vector<256x8xf32> -> vector<256x8xf32>
    %65 = arith.addf %57, %64 : vector<256x8xf32>
    %66 = vector.extract_strided_slice %8 {offsets = [2, 8, 0], sizes = [16, 16, 3], strides = [1, 1, 1]} : vector<18x32x3xf32> to vector<16x16x3xf32>
    %67 = vector.shape_cast %66 : vector<16x16x3xf32> to vector<256x3xf32>
    %68 = vector.extract_strided_slice %2 {offsets = [2, 1, 0, 0], sizes = [1, 1, 3, 8], strides = [1, 1, 1, 1]} : vector<3x3x3x8xf32> to vector<1x1x3x8xf32>
    %69 = vector.shape_cast %68 : vector<1x1x3x8xf32> to vector<3x8xf32>
    %70 = arith.truncf %67 : vector<256x3xf32> to vector<256x3xbf16>
    %71 = arith.truncf %69 : vector<3x8xf32> to vector<3x8xbf16>
    %cst_20 = arith.constant dense<0.000000e+00> : vector<256x8xf32>
    %72 = tpu.matmul %70, %71, %cst_20 {dimension_numbers = #tpu.dot_dimension_numbers<[1], [0], [0], [1], [0, 0, 1, 1], [], []>} : vector<256x3xbf16>, vector<3x8xbf16>, vector<256x8xf32> -> vector<256x8xf32>
    %73 = arith.addf %65, %72 : vector<256x8xf32>
    %74 = vector.extract_strided_slice %8 {offsets = [2, 9, 0], sizes = [16, 16, 3], strides = [1, 1, 1]} : vector<18x32x3xf32> to vector<16x16x3xf32>
    %75 = vector.shape_cast %74 : vector<16x16x3xf32> to vector<256x3xf32>
    %76 = vector.extract_strided_slice %2 {offsets = [2, 2, 0, 0], sizes = [1, 1, 3, 8], strides = [1, 1, 1, 1]} : vector<3x3x3x8xf32> to vector<1x1x3x8xf32>
    %77 = vector.shape_cast %76 : vector<1x1x3x8xf32> to vector<3x8xf32>
    %78 = arith.truncf %75 : vector<256x3xf32> to vector<256x3xbf16>
    %79 = arith.truncf %77 : vector<3x8xf32> to vector<3x8xbf16>
    %cst_21 = arith.constant dense<0.000000e+00> : vector<256x8xf32>
    %80 = tpu.matmul %78, %79, %cst_21 {dimension_numbers = #tpu.dot_dimension_numbers<[1], [0], [0], [1], [0, 0, 1, 1], [], []>} : vector<256x3xbf16>, vector<3x8xbf16>, vector<256x8xf32> -> vector<256x8xf32>
    %81 = arith.addf %73, %80 : vector<256x8xf32>
    %82 = vector.broadcast %3 : vector<1x8xf32> to vector<256x8xf32>
    %83 = arith.mulf %81, %82 : vector<256x8xf32>
    %84 = vector.broadcast %4 : vector<1x8xf32> to vector<256x8xf32>
    %85 = arith.addf %83, %84 : vector<256x8xf32>
    %cst_22 = arith.constant 0.000000e+00 : f32
    %86 = vector.broadcast %cst_22 : f32 to vector<256x8xf32>
    %87 = arith.maximumf %85, %86 : vector<256x8xf32>
    %c0_23 = arith.constant 0 : index
    %c0_24 = arith.constant 0 : index
    %88 = vector.load %arg5[%c0_23, %c0_24] : memref<8x4xf32, #tpu.memory_space<vmem>>, vector<8x4xf32>
    %c0_25 = arith.constant 0 : index
    %c0_26 = arith.constant 0 : index
    %89 = vector.load %arg6[%c0_25, %c0_26] : memref<1x4xf32, #tpu.memory_space<vmem>>, vector<1x4xf32>
    %c0_27 = arith.constant 0 : index
    %c0_28 = arith.constant 0 : index
    %90 = vector.load %arg7[%c0_27, %c0_28] : memref<1x4xf32, #tpu.memory_space<vmem>>, vector<1x4xf32>
    %91 = arith.truncf %87 : vector<256x8xf32> to vector<256x8xbf16>
    %92 = arith.truncf %88 : vector<8x4xf32> to vector<8x4xbf16>
    %cst_29 = arith.constant dense<0.000000e+00> : vector<256x4xf32>
    %93 = tpu.matmul %91, %92, %cst_29 {dimension_numbers = #tpu.dot_dimension_numbers<[1], [0], [0], [1], [0, 0, 1, 1], [], []>} : vector<256x8xbf16>, vector<8x4xbf16>, vector<256x4xf32> -> vector<256x4xf32>
    %94 = vector.broadcast %89 : vector<1x4xf32> to vector<256x4xf32>
    %95 = arith.mulf %93, %94 : vector<256x4xf32>
    %96 = vector.broadcast %90 : vector<1x4xf32> to vector<256x4xf32>
    %97 = arith.addf %95, %96 : vector<256x4xf32>
    %cst_30 = arith.constant 0.000000e+00 : f32
    %98 = vector.broadcast %cst_30 : f32 to vector<256x4xf32>
    %99 = arith.maximumf %97, %98 : vector<256x4xf32>
    %100 = vector.shape_cast %99 : vector<256x4xf32> to vector<16x16x4xf32>
    %c0_31 = arith.constant 0 : index
    %c0_32 = arith.constant 0 : index
    %c0_33 = arith.constant 0 : index
    %c0_34 = arith.constant 0 : index
    %101 = vector.load %arg8[%c0_31, %c0_32, %c0_33, %c0_34] : memref<3x3x4x4xf32, #tpu.memory_space<vmem>>, vector<3x3x4x4xf32>
    %c0_35 = arith.constant 0 : index
    %c0_36 = arith.constant 0 : index
    %102 = vector.load %arg9[%c0_35, %c0_36] : memref<1x4xf32, #tpu.memory_space<vmem>>, vector<1x4xf32>
    %c0_37 = arith.constant 0 : index
    %c0_38 = arith.constant 0 : index
    %103 = vector.load %arg10[%c0_37, %c0_38] : memref<1x4xf32, #tpu.memory_space<vmem>>, vector<1x4xf32>
    %cst_39 = arith.constant 0.000000e+00 : f32
    %104 = vector.broadcast %cst_39 : f32 to vector<16x8x4xf32>
    %105 = tpu.concatenate %104, %100, %104 in 1 : vector<16x8x4xf32>, vector<16x16x4xf32>, vector<16x8x4xf32> -> vector<16x32x4xf32>
    %cst_40 = arith.constant 0.000000e+00 : f32
    %106 = vector.broadcast %cst_40 : f32 to vector<1x32x4xf32>
    %107 = tpu.concatenate %106, %105, %106 in 0 : vector<1x32x4xf32>, vector<16x32x4xf32>, vector<1x32x4xf32> -> vector<18x32x4xf32>
    %cst_41 = arith.constant 0.000000e+00 : f32
    %108 = vector.broadcast %cst_41 : f32 to vector<256x4xf32>
    %109 = vector.extract_strided_slice %107 {offsets = [0, 7, 0], sizes = [16, 16, 4], strides = [1, 1, 1]} : vector<18x32x4xf32> to vector<16x16x4xf32>
    %110 = vector.shape_cast %109 : vector<16x16x4xf32> to vector<256x4xf32>
    %111 = vector.extract_strided_slice %101 {offsets = [0, 0, 0, 0], sizes = [1, 1, 4, 4], strides = [1, 1, 1, 1]} : vector<3x3x4x4xf32> to vector<1x1x4x4xf32>
    %112 = vector.shape_cast %111 : vector<1x1x4x4xf32> to vector<4x4xf32>
    %113 = arith.truncf %110 : vector<256x4xf32> to vector<256x4xbf16>
    %114 = arith.truncf %112 : vector<4x4xf32> to vector<4x4xbf16>
    %cst_42 = arith.constant dense<0.000000e+00> : vector<256x4xf32>
    %115 = tpu.matmul %113, %114, %cst_42 {dimension_numbers = #tpu.dot_dimension_numbers<[1], [0], [0], [1], [0, 0, 1, 1], [], []>} : vector<256x4xbf16>, vector<4x4xbf16>, vector<256x4xf32> -> vector<256x4xf32>
    %116 = arith.addf %108, %115 : vector<256x4xf32>
    %117 = vector.extract_strided_slice %107 {offsets = [0, 8, 0], sizes = [16, 16, 4], strides = [1, 1, 1]} : vector<18x32x4xf32> to vector<16x16x4xf32>
    %118 = vector.shape_cast %117 : vector<16x16x4xf32> to vector<256x4xf32>
    %119 = vector.extract_strided_slice %101 {offsets = [0, 1, 0, 0], sizes = [1, 1, 4, 4], strides = [1, 1, 1, 1]} : vector<3x3x4x4xf32> to vector<1x1x4x4xf32>
    %120 = vector.shape_cast %119 : vector<1x1x4x4xf32> to vector<4x4xf32>
    %121 = arith.truncf %118 : vector<256x4xf32> to vector<256x4xbf16>
    %122 = arith.truncf %120 : vector<4x4xf32> to vector<4x4xbf16>
    %cst_43 = arith.constant dense<0.000000e+00> : vector<256x4xf32>
    %123 = tpu.matmul %121, %122, %cst_43 {dimension_numbers = #tpu.dot_dimension_numbers<[1], [0], [0], [1], [0, 0, 1, 1], [], []>} : vector<256x4xbf16>, vector<4x4xbf16>, vector<256x4xf32> -> vector<256x4xf32>
    %124 = arith.addf %116, %123 : vector<256x4xf32>
    %125 = vector.extract_strided_slice %107 {offsets = [0, 9, 0], sizes = [16, 16, 4], strides = [1, 1, 1]} : vector<18x32x4xf32> to vector<16x16x4xf32>
    %126 = vector.shape_cast %125 : vector<16x16x4xf32> to vector<256x4xf32>
    %127 = vector.extract_strided_slice %101 {offsets = [0, 2, 0, 0], sizes = [1, 1, 4, 4], strides = [1, 1, 1, 1]} : vector<3x3x4x4xf32> to vector<1x1x4x4xf32>
    %128 = vector.shape_cast %127 : vector<1x1x4x4xf32> to vector<4x4xf32>
    %129 = arith.truncf %126 : vector<256x4xf32> to vector<256x4xbf16>
    %130 = arith.truncf %128 : vector<4x4xf32> to vector<4x4xbf16>
    %cst_44 = arith.constant dense<0.000000e+00> : vector<256x4xf32>
    %131 = tpu.matmul %129, %130, %cst_44 {dimension_numbers = #tpu.dot_dimension_numbers<[1], [0], [0], [1], [0, 0, 1, 1], [], []>} : vector<256x4xbf16>, vector<4x4xbf16>, vector<256x4xf32> -> vector<256x4xf32>
    %132 = arith.addf %124, %131 : vector<256x4xf32>
    %133 = vector.extract_strided_slice %107 {offsets = [1, 7, 0], sizes = [16, 16, 4], strides = [1, 1, 1]} : vector<18x32x4xf32> to vector<16x16x4xf32>
    %134 = vector.shape_cast %133 : vector<16x16x4xf32> to vector<256x4xf32>
    %135 = vector.extract_strided_slice %101 {offsets = [1, 0, 0, 0], sizes = [1, 1, 4, 4], strides = [1, 1, 1, 1]} : vector<3x3x4x4xf32> to vector<1x1x4x4xf32>
    %136 = vector.shape_cast %135 : vector<1x1x4x4xf32> to vector<4x4xf32>
    %137 = arith.truncf %134 : vector<256x4xf32> to vector<256x4xbf16>
    %138 = arith.truncf %136 : vector<4x4xf32> to vector<4x4xbf16>
    %cst_45 = arith.constant dense<0.000000e+00> : vector<256x4xf32>
    %139 = tpu.matmul %137, %138, %cst_45 {dimension_numbers = #tpu.dot_dimension_numbers<[1], [0], [0], [1], [0, 0, 1, 1], [], []>} : vector<256x4xbf16>, vector<4x4xbf16>, vector<256x4xf32> -> vector<256x4xf32>
    %140 = arith.addf %132, %139 : vector<256x4xf32>
    %141 = vector.extract_strided_slice %107 {offsets = [1, 8, 0], sizes = [16, 16, 4], strides = [1, 1, 1]} : vector<18x32x4xf32> to vector<16x16x4xf32>
    %142 = vector.shape_cast %141 : vector<16x16x4xf32> to vector<256x4xf32>
    %143 = vector.extract_strided_slice %101 {offsets = [1, 1, 0, 0], sizes = [1, 1, 4, 4], strides = [1, 1, 1, 1]} : vector<3x3x4x4xf32> to vector<1x1x4x4xf32>
    %144 = vector.shape_cast %143 : vector<1x1x4x4xf32> to vector<4x4xf32>
    %145 = arith.truncf %142 : vector<256x4xf32> to vector<256x4xbf16>
    %146 = arith.truncf %144 : vector<4x4xf32> to vector<4x4xbf16>
    %cst_46 = arith.constant dense<0.000000e+00> : vector<256x4xf32>
    %147 = tpu.matmul %145, %146, %cst_46 {dimension_numbers = #tpu.dot_dimension_numbers<[1], [0], [0], [1], [0, 0, 1, 1], [], []>} : vector<256x4xbf16>, vector<4x4xbf16>, vector<256x4xf32> -> vector<256x4xf32>
    %148 = arith.addf %140, %147 : vector<256x4xf32>
    %149 = vector.extract_strided_slice %107 {offsets = [1, 9, 0], sizes = [16, 16, 4], strides = [1, 1, 1]} : vector<18x32x4xf32> to vector<16x16x4xf32>
    %150 = vector.shape_cast %149 : vector<16x16x4xf32> to vector<256x4xf32>
    %151 = vector.extract_strided_slice %101 {offsets = [1, 2, 0, 0], sizes = [1, 1, 4, 4], strides = [1, 1, 1, 1]} : vector<3x3x4x4xf32> to vector<1x1x4x4xf32>
    %152 = vector.shape_cast %151 : vector<1x1x4x4xf32> to vector<4x4xf32>
    %153 = arith.truncf %150 : vector<256x4xf32> to vector<256x4xbf16>
    %154 = arith.truncf %152 : vector<4x4xf32> to vector<4x4xbf16>
    %cst_47 = arith.constant dense<0.000000e+00> : vector<256x4xf32>
    %155 = tpu.matmul %153, %154, %cst_47 {dimension_numbers = #tpu.dot_dimension_numbers<[1], [0], [0], [1], [0, 0, 1, 1], [], []>} : vector<256x4xbf16>, vector<4x4xbf16>, vector<256x4xf32> -> vector<256x4xf32>
    %156 = arith.addf %148, %155 : vector<256x4xf32>
    %157 = vector.extract_strided_slice %107 {offsets = [2, 7, 0], sizes = [16, 16, 4], strides = [1, 1, 1]} : vector<18x32x4xf32> to vector<16x16x4xf32>
    %158 = vector.shape_cast %157 : vector<16x16x4xf32> to vector<256x4xf32>
    %159 = vector.extract_strided_slice %101 {offsets = [2, 0, 0, 0], sizes = [1, 1, 4, 4], strides = [1, 1, 1, 1]} : vector<3x3x4x4xf32> to vector<1x1x4x4xf32>
    %160 = vector.shape_cast %159 : vector<1x1x4x4xf32> to vector<4x4xf32>
    %161 = arith.truncf %158 : vector<256x4xf32> to vector<256x4xbf16>
    %162 = arith.truncf %160 : vector<4x4xf32> to vector<4x4xbf16>
    %cst_48 = arith.constant dense<0.000000e+00> : vector<256x4xf32>
    %163 = tpu.matmul %161, %162, %cst_48 {dimension_numbers = #tpu.dot_dimension_numbers<[1], [0], [0], [1], [0, 0, 1, 1], [], []>} : vector<256x4xbf16>, vector<4x4xbf16>, vector<256x4xf32> -> vector<256x4xf32>
    %164 = arith.addf %156, %163 : vector<256x4xf32>
    %165 = vector.extract_strided_slice %107 {offsets = [2, 8, 0], sizes = [16, 16, 4], strides = [1, 1, 1]} : vector<18x32x4xf32> to vector<16x16x4xf32>
    %166 = vector.shape_cast %165 : vector<16x16x4xf32> to vector<256x4xf32>
    %167 = vector.extract_strided_slice %101 {offsets = [2, 1, 0, 0], sizes = [1, 1, 4, 4], strides = [1, 1, 1, 1]} : vector<3x3x4x4xf32> to vector<1x1x4x4xf32>
    %168 = vector.shape_cast %167 : vector<1x1x4x4xf32> to vector<4x4xf32>
    %169 = arith.truncf %166 : vector<256x4xf32> to vector<256x4xbf16>
    %170 = arith.truncf %168 : vector<4x4xf32> to vector<4x4xbf16>
    %cst_49 = arith.constant dense<0.000000e+00> : vector<256x4xf32>
    %171 = tpu.matmul %169, %170, %cst_49 {dimension_numbers = #tpu.dot_dimension_numbers<[1], [0], [0], [1], [0, 0, 1, 1], [], []>} : vector<256x4xbf16>, vector<4x4xbf16>, vector<256x4xf32> -> vector<256x4xf32>
    %172 = arith.addf %164, %171 : vector<256x4xf32>
    %173 = vector.extract_strided_slice %107 {offsets = [2, 9, 0], sizes = [16, 16, 4], strides = [1, 1, 1]} : vector<18x32x4xf32> to vector<16x16x4xf32>
    %174 = vector.shape_cast %173 : vector<16x16x4xf32> to vector<256x4xf32>
    %175 = vector.extract_strided_slice %101 {offsets = [2, 2, 0, 0], sizes = [1, 1, 4, 4], strides = [1, 1, 1, 1]} : vector<3x3x4x4xf32> to vector<1x1x4x4xf32>
    %176 = vector.shape_cast %175 : vector<1x1x4x4xf32> to vector<4x4xf32>
    %177 = arith.truncf %174 : vector<256x4xf32> to vector<256x4xbf16>
    %178 = arith.truncf %176 : vector<4x4xf32> to vector<4x4xbf16>
    %cst_50 = arith.constant dense<0.000000e+00> : vector<256x4xf32>
    %179 = tpu.matmul %177, %178, %cst_50 {dimension_numbers = #tpu.dot_dimension_numbers<[1], [0], [0], [1], [0, 0, 1, 1], [], []>} : vector<256x4xbf16>, vector<4x4xbf16>, vector<256x4xf32> -> vector<256x4xf32>
    %180 = arith.addf %172, %179 : vector<256x4xf32>
    %181 = vector.broadcast %102 : vector<1x4xf32> to vector<256x4xf32>
    %182 = arith.mulf %180, %181 : vector<256x4xf32>
    %183 = vector.broadcast %103 : vector<1x4xf32> to vector<256x4xf32>
    %184 = arith.addf %182, %183 : vector<256x4xf32>
    %cst_51 = arith.constant 0.000000e+00 : f32
    %185 = vector.broadcast %cst_51 : f32 to vector<256x4xf32>
    %186 = arith.maximumf %184, %185 : vector<256x4xf32>
    %c0_52 = arith.constant 0 : index
    %c0_53 = arith.constant 0 : index
    %187 = vector.load %arg11[%c0_52, %c0_53] : memref<4x16xf32, #tpu.memory_space<vmem>>, vector<4x16xf32>
    %c0_54 = arith.constant 0 : index
    %c0_55 = arith.constant 0 : index
    %188 = vector.load %arg12[%c0_54, %c0_55] : memref<1x16xf32, #tpu.memory_space<vmem>>, vector<1x16xf32>
    %c0_56 = arith.constant 0 : index
    %c0_57 = arith.constant 0 : index
    %189 = vector.load %arg13[%c0_56, %c0_57] : memref<1x16xf32, #tpu.memory_space<vmem>>, vector<1x16xf32>
    %190 = arith.truncf %186 : vector<256x4xf32> to vector<256x4xbf16>
    %191 = arith.truncf %187 : vector<4x16xf32> to vector<4x16xbf16>
    %cst_58 = arith.constant dense<0.000000e+00> : vector<256x16xf32>
    %192 = tpu.matmul %190, %191, %cst_58 {dimension_numbers = #tpu.dot_dimension_numbers<[1], [0], [0], [1], [0, 0, 1, 1], [], []>} : vector<256x4xbf16>, vector<4x16xbf16>, vector<256x16xf32> -> vector<256x16xf32>
    %193 = vector.broadcast %188 : vector<1x16xf32> to vector<256x16xf32>
    %194 = arith.mulf %192, %193 : vector<256x16xf32>
    %195 = vector.broadcast %189 : vector<1x16xf32> to vector<256x16xf32>
    %196 = arith.addf %194, %195 : vector<256x16xf32>
    %c0_59 = arith.constant 0 : index
    %c0_60 = arith.constant 0 : index
    %197 = vector.load %arg14[%c0_59, %c0_60] : memref<8x16xf32, #tpu.memory_space<vmem>>, vector<8x16xf32>
    %c0_61 = arith.constant 0 : index
    %c0_62 = arith.constant 0 : index
    %198 = vector.load %arg15[%c0_61, %c0_62] : memref<1x16xf32, #tpu.memory_space<vmem>>, vector<1x16xf32>
    %c0_63 = arith.constant 0 : index
    %c0_64 = arith.constant 0 : index
    %199 = vector.load %arg16[%c0_63, %c0_64] : memref<1x16xf32, #tpu.memory_space<vmem>>, vector<1x16xf32>
    %200 = arith.truncf %87 : vector<256x8xf32> to vector<256x8xbf16>
    %201 = arith.truncf %197 : vector<8x16xf32> to vector<8x16xbf16>
    %cst_65 = arith.constant dense<0.000000e+00> : vector<256x16xf32>
    %202 = tpu.matmul %200, %201, %cst_65 {dimension_numbers = #tpu.dot_dimension_numbers<[1], [0], [0], [1], [0, 0, 1, 1], [], []>} : vector<256x8xbf16>, vector<8x16xbf16>, vector<256x16xf32> -> vector<256x16xf32>
    %203 = vector.broadcast %198 : vector<1x16xf32> to vector<256x16xf32>
    %204 = arith.mulf %202, %203 : vector<256x16xf32>
    %205 = vector.broadcast %199 : vector<1x16xf32> to vector<256x16xf32>
    %206 = arith.addf %204, %205 : vector<256x16xf32>
    %207 = arith.addf %196, %206 : vector<256x16xf32>
    %cst_66 = arith.constant 0.000000e+00 : f32
    %208 = vector.broadcast %cst_66 : f32 to vector<256x16xf32>
    %209 = arith.maximumf %207, %208 : vector<256x16xf32>
    %cst_67 = arith.constant dense<0.000000e+00> : vector<16xf32>
    %210 = vector.multi_reduction <add>, %209, %cst_67 [0] : vector<256x16xf32> to vector<16xf32>
    %211 = vector.shape_cast %210 : vector<16xf32> to vector<1x16xf32>
    %cst_68 = arith.constant 2.560000e+02 : f32
    %212 = vector.broadcast %cst_68 : f32 to vector<1x16xf32>
    %213 = arith.divf %211, %212 : vector<1x16xf32>
    %c0_69 = arith.constant 0 : index
    %c0_70 = arith.constant 0 : index
    %214 = vector.load %arg17[%c0_69, %c0_70] : memref<16x32xf32, #tpu.memory_space<vmem>>, vector<16x32xf32>
    %215 = arith.truncf %213 : vector<1x16xf32> to vector<1x16xbf16>
    %216 = arith.truncf %214 : vector<16x32xf32> to vector<16x32xbf16>
    %cst_71 = arith.constant dense<0.000000e+00> : vector<1x32xf32>
    %217 = tpu.matmul %215, %216, %cst_71 {dimension_numbers = #tpu.dot_dimension_numbers<[1], [0], [0], [1], [0, 0, 1, 1], [], []>} : vector<1x16xbf16>, vector<16x32xbf16>, vector<1x32xf32> -> vector<1x32xf32>
    %c0_72 = arith.constant 0 : index
    %c0_73 = arith.constant 0 : index
    %218 = vector.load %arg18[%c0_72, %c0_73] : memref<1x32xf32, #tpu.memory_space<vmem>>, vector<1x32xf32>
    %219 = arith.addf %217, %218 : vector<1x32xf32>
    %c0_74 = arith.constant 0 : index
    %c0_75 = arith.constant 0 : index
    %220 = vector.load %arg19[%c0_74, %c0_75] : memref<32x32xf32, #tpu.memory_space<vmem>>, vector<32x32xf32>
    %221 = arith.truncf %219 : vector<1x32xf32> to vector<1x32xbf16>
    %222 = arith.truncf %220 : vector<32x32xf32> to vector<32x32xbf16>
    %cst_76 = arith.constant dense<0.000000e+00> : vector<1x32xf32>
    %223 = tpu.matmul %221, %222, %cst_76 {dimension_numbers = #tpu.dot_dimension_numbers<[1], [0], [0], [1], [0, 0, 1, 1], [], []>} : vector<1x32xbf16>, vector<32x32xbf16>, vector<1x32xf32> -> vector<1x32xf32>
    %c0_77 = arith.constant 0 : index
    %c0_78 = arith.constant 0 : index
    %224 = vector.load %arg20[%c0_77, %c0_78] : memref<1x32xf32, #tpu.memory_space<vmem>>, vector<1x32xf32>
    %225 = arith.addf %223, %224 : vector<1x32xf32>
    %c0_79 = arith.constant 0 : index
    %c0_80 = arith.constant 0 : index
    %c0_81 = arith.constant 0 : index
    %226 = vector.load %arg21[%c0_79, %c0_80, %c0_81] : memref<1x1x32xf32, #tpu.memory_space<vmem>>, vector<1x1x32xf32>
    %227 = vector.shape_cast %226 : vector<1x1x32xf32> to vector<1x32xf32>
    %228 = vector.shape_cast %225 : vector<1x32xf32> to vector<1x1x32xf32>
    tpu.vector_store %arg21[%c0_79, %c0_80, %c0_81], %228 {strides = array<i32>} : memref<1x1x32xf32, #tpu.memory_space<vmem>>, vector<1x1x32xf32>,
    return
  }
  func.func @transform_0(%arg0: i32) -> (i32, i32, i32, i32) {
    %c0_i32 = arith.constant 0 : i32
    %c0_i32_0 = arith.constant 0 : i32
    %c0_i32_1 = arith.constant 0 : i32
    %c0_i32_2 = arith.constant 0 : i32
    return %arg0, %c0_i32, %c0_i32_0, %c0_i32_1 : i32, i32, i32, i32
  }
  func.func @transform_1(%arg0: i32) -> (i32, i32, i32, i32) {
    %c0_i32 = arith.constant 0 : i32
    %c0_i32_0 = arith.constant 0 : i32
    %c0_i32_1 = arith.constant 0 : i32
    %c0_i32_2 = arith.constant 0 : i32
    %c0_i32_3 = arith.constant 0 : i32
    return %c0_i32, %c0_i32_0, %c0_i32_1, %c0_i32_2 : i32, i32, i32, i32
  }
  func.func @transform_2(%arg0: i32) -> (i32, i32) {
    %c0_i32 = arith.constant 0 : i32
    %c0_i32_0 = arith.constant 0 : i32
    %c0_i32_1 = arith.constant 0 : i32
    return %c0_i32, %c0_i32_0 : i32, i32
  }
  func.func @transform_3(%arg0: i32) -> (i32, i32) {
    %c0_i32 = arith.constant 0 : i32
    %c0_i32_0 = arith.constant 0 : i32
    %c0_i32_1 = arith.constant 0 : i32
    return %c0_i32, %c0_i32_0 : i32, i32
  }
  func.func @transform_4(%arg0: i32) -> (i32, i32) {
    %c0_i32 = arith.constant 0 : i32
    %c0_i32_0 = arith.constant 0 : i32
    %c0_i32_1 = arith.constant 0 : i32
    return %c0_i32, %c0_i32_0 : i32, i32
  }
  func.func @transform_5(%arg0: i32) -> (i32, i32) {
    %c0_i32 = arith.constant 0 : i32
    %c0_i32_0 = arith.constant 0 : i32
    %c0_i32_1 = arith.constant 0 : i32
    return %c0_i32, %c0_i32_0 : i32, i32
  }
  func.func @transform_6(%arg0: i32) -> (i32, i32) {
    %c0_i32 = arith.constant 0 : i32
    %c0_i32_0 = arith.constant 0 : i32
    %c0_i32_1 = arith.constant 0 : i32
    return %c0_i32, %c0_i32_0 : i32, i32
  }
  func.func @transform_7(%arg0: i32) -> (i32, i32, i32, i32) {
    %c0_i32 = arith.constant 0 : i32
    %c0_i32_0 = arith.constant 0 : i32
    %c0_i32_1 = arith.constant 0 : i32
    %c0_i32_2 = arith.constant 0 : i32
    %c0_i32_3 = arith.constant 0 : i32
    return %c0_i32, %c0_i32_0, %c0_i32_1, %c0_i32_2 : i32, i32, i32, i32
  }
  func.func @transform_8(%arg0: i32) -> (i32, i32) {
    %c0_i32 = arith.constant 0 : i32
    %c0_i32_0 = arith.constant 0 : i32
    %c0_i32_1 = arith.constant 0 : i32
    return %c0_i32, %c0_i32_0 : i32, i32
  }
  func.func @transform_9(%arg0: i32) -> (i32, i32) {
    %c0_i32 = arith.constant 0 : i32
    %c0_i32_0 = arith.constant 0 : i32
    %c0_i32_1 = arith.constant 0 : i32
    return %c0_i32, %c0_i32_0 : i32, i32
  }
  func.func @transform_10(%arg0: i32) -> (i32, i32) {
    %c0_i32 = arith.constant 0 : i32
    %c0_i32_0 = arith.constant 0 : i32
    %c0_i32_1 = arith.constant 0 : i32
    return %c0_i32, %c0_i32_0 : i32, i32
  }
  func.func @transform_11(%arg0: i32) -> (i32, i32) {
    %c0_i32 = arith.constant 0 : i32
    %c0_i32_0 = arith.constant 0 : i32
    %c0_i32_1 = arith.constant 0 : i32
    return %c0_i32, %c0_i32_0 : i32, i32
  }
  func.func @transform_12(%arg0: i32) -> (i32, i32) {
    %c0_i32 = arith.constant 0 : i32
    %c0_i32_0 = arith.constant 0 : i32
    %c0_i32_1 = arith.constant 0 : i32
    return %c0_i32, %c0_i32_0 : i32, i32
  }
  func.func @transform_13(%arg0: i32) -> (i32, i32) {
    %c0_i32 = arith.constant 0 : i32
    %c0_i32_0 = arith.constant 0 : i32
    %c0_i32_1 = arith.constant 0 : i32
    return %c0_i32, %c0_i32_0 : i32, i32
  }
  func.func @transform_14(%arg0: i32) -> (i32, i32) {
    %c0_i32 = arith.constant 0 : i32
    %c0_i32_0 = arith.constant 0 : i32
    %c0_i32_1 = arith.constant 0 : i32
    return %c0_i32, %c0_i32_0 : i32, i32
  }
  func.func @transform_15(%arg0: i32) -> (i32, i32) {
    %c0_i32 = arith.constant 0 : i32
    %c0_i32_0 = arith.constant 0 : i32
    %c0_i32_1 = arith.constant 0 : i32
    return %c0_i32, %c0_i32_0 : i32, i32
  }
  func.func @transform_16(%arg0: i32) -> (i32, i32) {
    %c0_i32 = arith.constant 0 : i32
    %c0_i32_0 = arith.constant 0 : i32
    %c0_i32_1 = arith.constant 0 : i32
    return %c0_i32, %c0_i32_0 : i32, i32
  }
  func.func @transform_17(%arg0: i32) -> (i32, i32) {
    %c0_i32 = arith.constant 0 : i32
    %c0_i32_0 = arith.constant 0 : i32
    %c0_i32_1 = arith.constant 0 : i32
    return %c0_i32, %c0_i32_0 : i32, i32
  }
  func.func @transform_18(%arg0: i32) -> (i32, i32) {
    %c0_i32 = arith.constant 0 : i32
    %c0_i32_0 = arith.constant 0 : i32
    %c0_i32_1 = arith.constant 0 : i32
    return %c0_i32, %c0_i32_0 : i32, i32
  }
  func.func @transform_19(%arg0: i32) -> (i32, i32) {
    %c0_i32 = arith.constant 0 : i32
    %c0_i32_0 = arith.constant 0 : i32
    %c0_i32_1 = arith.constant 0 : i32
    return %c0_i32, %c0_i32_0 : i32, i32
  }
  func.func @transform_20(%arg0: i32) -> (i32, i32, i32) {
    %c0_i32 = arith.constant 0 : i32
    %c0_i32_0 = arith.constant 0 : i32
    %c0_i32_1 = arith.constant 0 : i32
    return %arg0, %c0_i32, %c0_i32_0 : i32, i32, i32
  }
}

module attributes {stable_mosaic.version = 11 : i64} {
  func.func @_gpt2_kernel(%arg0: i32, %arg1: memref<1x1x32xf32, #tpu.memory_space<vmem>>, %arg2: memref<8x32xf32, #tpu.memory_space<vmem>>, %arg3: memref<2x2x3x32x16xf32, #tpu.memory_space<vmem>>, %arg4: memref<2x2x3x1x16xf32, #tpu.memory_space<vmem>>, %arg5: memref<2x32x32xf32, #tpu.memory_space<vmem>>, %arg6: memref<2x1x32xf32, #tpu.memory_space<vmem>>, %arg7: memref<2x1x32xf32, #tpu.memory_space<vmem>>, %arg8: memref<2x1x32xf32, #tpu.memory_space<vmem>>, %arg9: memref<2x1x32xf32, #tpu.memory_space<vmem>>, %arg10: memref<2x1x32xf32, #tpu.memory_space<vmem>>, %arg11: memref<2x32x128xf32, #tpu.memory_space<vmem>>, %arg12: memref<2x1x128xf32, #tpu.memory_space<vmem>>, %arg13: memref<2x128x32xf32, #tpu.memory_space<vmem>>, %arg14: memref<2x1x32xf32, #tpu.memory_space<vmem>>, %arg15: memref<1x32xf32, #tpu.memory_space<vmem>>, %arg16: memref<1x32xf32, #tpu.memory_space<vmem>>, %arg17: memref<32x128xf32, #tpu.memory_space<vmem>>, %arg18: memref<1x8x128xf32, #tpu.memory_space<vmem>>) attributes {dimension_semantics = [#tpu.dimension_semantics<parallel>], iteration_bounds = array<i64: 2>, scalar_prefetch = 0 : i64, scratch_operands = 0 : i64, tpu.core_type = #tpu.core_type<tc>, window_params = [{transform_indices = @transform_0, window_bounds = array<i64: 1, 1, 32>}, {pipeline_mode = #tpu.pipeline_mode<synchronous>, transform_indices = @transform_1, window_bounds = array<i64: 8, 32>}, {pipeline_mode = #tpu.pipeline_mode<synchronous>, transform_indices = @transform_2, window_bounds = array<i64: 2, 2, 3, 32, 16>}, {pipeline_mode = #tpu.pipeline_mode<synchronous>, transform_indices = @transform_3, window_bounds = array<i64: 2, 2, 3, 1, 16>}, {pipeline_mode = #tpu.pipeline_mode<synchronous>, transform_indices = @transform_4, window_bounds = array<i64: 2, 32, 32>}, {pipeline_mode = #tpu.pipeline_mode<synchronous>, transform_indices = @transform_5, window_bounds = array<i64: 2, 1, 32>}, {pipeline_mode = #tpu.pipeline_mode<synchronous>, transform_indices = @transform_6, window_bounds = array<i64: 2, 1, 32>}, {pipeline_mode = #tpu.pipeline_mode<synchronous>, transform_indices = @transform_7, window_bounds = array<i64: 2, 1, 32>}, {pipeline_mode = #tpu.pipeline_mode<synchronous>, transform_indices = @transform_8, window_bounds = array<i64: 2, 1, 32>}, {pipeline_mode = #tpu.pipeline_mode<synchronous>, transform_indices = @transform_9, window_bounds = array<i64: 2, 1, 32>}, {pipeline_mode = #tpu.pipeline_mode<synchronous>, transform_indices = @transform_10, window_bounds = array<i64: 2, 32, 128>}, {pipeline_mode = #tpu.pipeline_mode<synchronous>, transform_indices = @transform_11, window_bounds = array<i64: 2, 1, 128>}, {pipeline_mode = #tpu.pipeline_mode<synchronous>, transform_indices = @transform_12, window_bounds = array<i64: 2, 128, 32>}, {pipeline_mode = #tpu.pipeline_mode<synchronous>, transform_indices = @transform_13, window_bounds = array<i64: 2, 1, 32>}, {pipeline_mode = #tpu.pipeline_mode<synchronous>, transform_indices = @transform_14, window_bounds = array<i64: 1, 32>}, {pipeline_mode = #tpu.pipeline_mode<synchronous>, transform_indices = @transform_15, window_bounds = array<i64: 1, 32>}, {pipeline_mode = #tpu.pipeline_mode<synchronous>, transform_indices = @transform_16, window_bounds = array<i64: 32, 128>}, {transform_indices = @transform_17, window_bounds = array<i64: 1, 8, 128>}]} {
    %c0 = arith.constant 0 : index
    %c0_0 = arith.constant 0 : index
    %c0_1 = arith.constant 0 : index
    %0 = vector.load %arg1[%c0, %c0_0, %c0_1] : memref<1x1x32xf32, #tpu.memory_space<vmem>>, vector<1x1x32xf32>
    %1 = vector.shape_cast %0 : vector<1x1x32xf32> to vector<1x32xf32>
    %c0_2 = arith.constant 0 : index
    %c0_3 = arith.constant 0 : index
    %2 = vector.load %arg2[%c0_2, %c0_3] : memref<8x32xf32, #tpu.memory_space<vmem>>, vector<8x32xf32>
    %3 = vector.broadcast %1 : vector<1x32xf32> to vector<8x32xf32>
    %4 = arith.addf %3, %2 : vector<8x32xf32>
    %5 = tpu.iota {dimensions = array<i32: 0>} : vector<8x8xi32>
    %6 = tpu.iota {dimensions = array<i32: 1>} : vector<8x8xi32>
    %7 = arith.cmpi sle, %6, %5 : vector<8x8xi32>
    %c0_4 = arith.constant 0 : index
    %c0_5 = arith.constant 0 : index
    %c0_6 = arith.constant 0 : index
    %8 = vector.load %arg7[%c0_4, %c0_5, %c0_6] : memref<2x1x32xf32, #tpu.memory_space<vmem>>, vector<1x1x32xf32>
    %9 = vector.shape_cast %8 : vector<1x1x32xf32> to vector<1x32xf32>
    %c0_7 = arith.constant 0 : index
    %c0_8 = arith.constant 0 : index
    %c0_9 = arith.constant 0 : index
    %10 = vector.load %arg8[%c0_7, %c0_8, %c0_9] : memref<2x1x32xf32, #tpu.memory_space<vmem>>, vector<1x1x32xf32>
    %11 = vector.shape_cast %10 : vector<1x1x32xf32> to vector<1x32xf32>
    %cst = arith.constant dense<0.000000e+00> : vector<8xf32>
    %12 = vector.multi_reduction <add>, %4, %cst [1] : vector<8x32xf32> to vector<8xf32>
    %13 = vector.shape_cast %12 : vector<8xf32> to vector<8x1xf32>
    %cst_10 = arith.constant 3.200000e+01 : f32
    %14 = vector.broadcast %cst_10 : f32 to vector<8x1xf32>
    %15 = arith.divf %13, %14 : vector<8x1xf32>
    %16 = vector.broadcast %15 : vector<8x1xf32> to vector<8x32xf32>
    %17 = arith.subf %4, %16 : vector<8x32xf32>
    %18 = arith.mulf %17, %17 : vector<8x32xf32>
    %cst_11 = arith.constant dense<0.000000e+00> : vector<8xf32>
    %19 = vector.multi_reduction <add>, %18, %cst_11 [1] : vector<8x32xf32> to vector<8xf32>
    %20 = vector.shape_cast %19 : vector<8xf32> to vector<8x1xf32>
    %cst_12 = arith.constant 3.200000e+01 : f32
    %21 = vector.broadcast %cst_12 : f32 to vector<8x1xf32>
    %22 = arith.divf %20, %21 : vector<8x1xf32>
    %cst_13 = arith.constant 9.99999974E-6 : f32
    %23 = vector.broadcast %cst_13 : f32 to vector<8x1xf32>
    %24 = arith.addf %22, %23 : vector<8x1xf32>
    %25 = math.rsqrt %24 : vector<8x1xf32>
    %26 = vector.broadcast %25 : vector<8x1xf32> to vector<8x32xf32>
    %27 = arith.mulf %17, %26 : vector<8x32xf32>
    %28 = vector.broadcast %9 : vector<1x32xf32> to vector<8x32xf32>
    %29 = arith.mulf %27, %28 : vector<8x32xf32>
    %30 = vector.broadcast %11 : vector<1x32xf32> to vector<8x32xf32>
    %31 = arith.addf %29, %30 : vector<8x32xf32>
    %c0_14 = arith.constant 0 : index
    %c0_15 = arith.constant 0 : index
    %c0_16 = arith.constant 0 : index
    %c0_17 = arith.constant 0 : index
    %c0_18 = arith.constant 0 : index
    %32 = vector.load %arg3[%c0_14, %c0_15, %c0_16, %c0_17, %c0_18] : memref<2x2x3x32x16xf32, #tpu.memory_space<vmem>>, vector<1x2x3x32x16xf32>
    %33 = vector.shape_cast %32 : vector<1x2x3x32x16xf32> to vector<2x3x32x16xf32>
    %c0_19 = arith.constant 0 : index
    %c0_20 = arith.constant 0 : index
    %c0_21 = arith.constant 0 : index
    %c0_22 = arith.constant 0 : index
    %c0_23 = arith.constant 0 : index
    %34 = vector.load %arg4[%c0_19, %c0_20, %c0_21, %c0_22, %c0_23] : memref<2x2x3x1x16xf32, #tpu.memory_space<vmem>>, vector<1x2x3x1x16xf32>
    %35 = vector.shape_cast %34 : vector<1x2x3x1x16xf32> to vector<2x3x1x16xf32>
    %c0_24 = arith.constant 0 : index
    %c0_25 = arith.constant 0 : index
    %c0_26 = arith.constant 0 : index
    %36 = vector.load %arg5[%c0_24, %c0_25, %c0_26] : memref<2x32x32xf32, #tpu.memory_space<vmem>>, vector<1x32x32xf32>
    %37 = vector.shape_cast %36 : vector<1x32x32xf32> to vector<32x32xf32>
    %cst_27 = arith.constant 0.000000e+00 : f32
    %38 = vector.broadcast %cst_27 : f32 to vector<8x32xf32>
    %39 = vector.extract_strided_slice %33 {offsets = [0, 0, 0, 0], sizes = [1, 1, 32, 16], strides = [1, 1, 1, 1]} : vector<2x3x32x16xf32> to vector<1x1x32x16xf32>
    %40 = vector.shape_cast %39 : vector<1x1x32x16xf32> to vector<32x16xf32>
    %41 = arith.truncf %31 : vector<8x32xf32> to vector<8x32xbf16>
    %42 = arith.truncf %40 : vector<32x16xf32> to vector<32x16xbf16>
    %cst_28 = arith.constant dense<0.000000e+00> : vector<8x16xf32>
    %43 = tpu.matmul %41, %42, %cst_28 {dimension_numbers = #tpu.dot_dimension_numbers<[1], [0], [0], [1], [0, 0, 1, 1], [], []>} : vector<8x32xbf16>, vector<32x16xbf16>, vector<8x16xf32> -> vector<8x16xf32>
    %44 = vector.extract_strided_slice %35 {offsets = [0, 0, 0, 0], sizes = [1, 1, 1, 16], strides = [1, 1, 1, 1]} : vector<2x3x1x16xf32> to vector<1x1x1x16xf32>
    %45 = vector.shape_cast %44 : vector<1x1x1x16xf32> to vector<1x16xf32>
    %46 = vector.broadcast %45 : vector<1x16xf32> to vector<8x16xf32>
    %47 = arith.addf %43, %46 : vector<8x16xf32>
    %48 = vector.extract_strided_slice %33 {offsets = [0, 1, 0, 0], sizes = [1, 1, 32, 16], strides = [1, 1, 1, 1]} : vector<2x3x32x16xf32> to vector<1x1x32x16xf32>
    %49 = vector.shape_cast %48 : vector<1x1x32x16xf32> to vector<32x16xf32>
    %50 = arith.truncf %31 : vector<8x32xf32> to vector<8x32xbf16>
    %51 = arith.truncf %49 : vector<32x16xf32> to vector<32x16xbf16>
    %cst_29 = arith.constant dense<0.000000e+00> : vector<8x16xf32>
    %52 = tpu.matmul %50, %51, %cst_29 {dimension_numbers = #tpu.dot_dimension_numbers<[1], [0], [0], [1], [0, 0, 1, 1], [], []>} : vector<8x32xbf16>, vector<32x16xbf16>, vector<8x16xf32> -> vector<8x16xf32>
    %53 = vector.extract_strided_slice %35 {offsets = [0, 1, 0, 0], sizes = [1, 1, 1, 16], strides = [1, 1, 1, 1]} : vector<2x3x1x16xf32> to vector<1x1x1x16xf32>
    %54 = vector.shape_cast %53 : vector<1x1x1x16xf32> to vector<1x16xf32>
    %55 = vector.broadcast %54 : vector<1x16xf32> to vector<8x16xf32>
    %56 = arith.addf %52, %55 : vector<8x16xf32>
    %57 = vector.extract_strided_slice %33 {offsets = [0, 2, 0, 0], sizes = [1, 1, 32, 16], strides = [1, 1, 1, 1]} : vector<2x3x32x16xf32> to vector<1x1x32x16xf32>
    %58 = vector.shape_cast %57 : vector<1x1x32x16xf32> to vector<32x16xf32>
    %59 = arith.truncf %31 : vector<8x32xf32> to vector<8x32xbf16>
    %60 = arith.truncf %58 : vector<32x16xf32> to vector<32x16xbf16>
    %cst_30 = arith.constant dense<0.000000e+00> : vector<8x16xf32>
    %61 = tpu.matmul %59, %60, %cst_30 {dimension_numbers = #tpu.dot_dimension_numbers<[1], [0], [0], [1], [0, 0, 1, 1], [], []>} : vector<8x32xbf16>, vector<32x16xbf16>, vector<8x16xf32> -> vector<8x16xf32>
    %62 = vector.extract_strided_slice %35 {offsets = [0, 2, 0, 0], sizes = [1, 1, 1, 16], strides = [1, 1, 1, 1]} : vector<2x3x1x16xf32> to vector<1x1x1x16xf32>
    %63 = vector.shape_cast %62 : vector<1x1x1x16xf32> to vector<1x16xf32>
    %64 = vector.broadcast %63 : vector<1x16xf32> to vector<8x16xf32>
    %65 = arith.addf %61, %64 : vector<8x16xf32>
    %66 = tpu.transpose %56, [1, 0] : vector<8x16xf32> -> vector<16x8xf32>
    %67 = arith.truncf %47 : vector<8x16xf32> to vector<8x16xbf16>
    %68 = arith.truncf %66 : vector<16x8xf32> to vector<16x8xbf16>
    %cst_31 = arith.constant dense<0.000000e+00> : vector<8x8xf32>
    %69 = tpu.matmul %67, %68, %cst_31 {dimension_numbers = #tpu.dot_dimension_numbers<[1], [0], [0], [1], [0, 0, 1, 1], [], []>} : vector<8x16xbf16>, vector<16x8xbf16>, vector<8x8xf32> -> vector<8x8xf32>
    %cst_32 = arith.constant 2.500000e-01 : f32
    %70 = vector.broadcast %cst_32 : f32 to vector<8x8xf32>
    %71 = arith.mulf %69, %70 : vector<8x8xf32>
    %cst_33 = arith.constant -1.000000e+30 : f32
    %72 = vector.broadcast %cst_33 : f32 to vector<8x8xf32>
    %73 = arith.select %7, %71, %72 : vector<8x8xi1>, vector<8x8xf32>
    %cst_34 = arith.constant dense<0xFF800000> : vector<8xf32>
    %74 = vector.multi_reduction <maximumf>, %73, %cst_34 [1] : vector<8x8xf32> to vector<8xf32>
    %75 = vector.shape_cast %74 : vector<8xf32> to vector<8x1xf32>
    %76 = vector.broadcast %75 : vector<8x1xf32> to vector<8x8xf32>
    %77 = arith.subf %73, %76 : vector<8x8xf32>
    %78 = math.exp %77 : vector<8x8xf32>
    %cst_35 = arith.constant dense<0.000000e+00> : vector<8xf32>
    %79 = vector.multi_reduction <add>, %78, %cst_35 [1] : vector<8x8xf32> to vector<8xf32>
    %80 = vector.shape_cast %79 : vector<8xf32> to vector<8x1xf32>
    %81 = vector.broadcast %80 : vector<8x1xf32> to vector<8x8xf32>
    %82 = arith.divf %78, %81 : vector<8x8xf32>
    %83 = arith.truncf %82 : vector<8x8xf32> to vector<8x8xbf16>
    %84 = arith.truncf %65 : vector<8x16xf32> to vector<8x16xbf16>
    %cst_36 = arith.constant dense<0.000000e+00> : vector<8x16xf32>
    %85 = tpu.matmul %83, %84, %cst_36 {dimension_numbers = #tpu.dot_dimension_numbers<[1], [0], [0], [1], [0, 0, 1, 1], [], []>} : vector<8x8xbf16>, vector<8x16xbf16>, vector<8x16xf32> -> vector<8x16xf32>
    %86 = vector.extract_strided_slice %37 {offsets = [0, 0], sizes = [16, 32], strides = [1, 1]} : vector<32x32xf32> to vector<16x32xf32>
    %87 = arith.truncf %85 : vector<8x16xf32> to vector<8x16xbf16>
    %88 = arith.truncf %86 : vector<16x32xf32> to vector<16x32xbf16>
    %cst_37 = arith.constant dense<0.000000e+00> : vector<8x32xf32>
    %89 = tpu.matmul %87, %88, %cst_37 {dimension_numbers = #tpu.dot_dimension_numbers<[1], [0], [0], [1], [0, 0, 1, 1], [], []>} : vector<8x16xbf16>, vector<16x32xbf16>, vector<8x32xf32> -> vector<8x32xf32>
    %90 = arith.addf %38, %89 : vector<8x32xf32>
    %91 = vector.extract_strided_slice %33 {offsets = [1, 0, 0, 0], sizes = [1, 1, 32, 16], strides = [1, 1, 1, 1]} : vector<2x3x32x16xf32> to vector<1x1x32x16xf32>
    %92 = vector.shape_cast %91 : vector<1x1x32x16xf32> to vector<32x16xf32>
    %93 = arith.truncf %31 : vector<8x32xf32> to vector<8x32xbf16>
    %94 = arith.truncf %92 : vector<32x16xf32> to vector<32x16xbf16>
    %cst_38 = arith.constant dense<0.000000e+00> : vector<8x16xf32>
    %95 = tpu.matmul %93, %94, %cst_38 {dimension_numbers = #tpu.dot_dimension_numbers<[1], [0], [0], [1], [0, 0, 1, 1], [], []>} : vector<8x32xbf16>, vector<32x16xbf16>, vector<8x16xf32> -> vector<8x16xf32>
    %96 = vector.extract_strided_slice %35 {offsets = [1, 0, 0, 0], sizes = [1, 1, 1, 16], strides = [1, 1, 1, 1]} : vector<2x3x1x16xf32> to vector<1x1x1x16xf32>
    %97 = vector.shape_cast %96 : vector<1x1x1x16xf32> to vector<1x16xf32>
    %98 = vector.broadcast %97 : vector<1x16xf32> to vector<8x16xf32>
    %99 = arith.addf %95, %98 : vector<8x16xf32>
    %100 = vector.extract_strided_slice %33 {offsets = [1, 1, 0, 0], sizes = [1, 1, 32, 16], strides = [1, 1, 1, 1]} : vector<2x3x32x16xf32> to vector<1x1x32x16xf32>
    %101 = vector.shape_cast %100 : vector<1x1x32x16xf32> to vector<32x16xf32>
    %102 = arith.truncf %31 : vector<8x32xf32> to vector<8x32xbf16>
    %103 = arith.truncf %101 : vector<32x16xf32> to vector<32x16xbf16>
    %cst_39 = arith.constant dense<0.000000e+00> : vector<8x16xf32>
    %104 = tpu.matmul %102, %103, %cst_39 {dimension_numbers = #tpu.dot_dimension_numbers<[1], [0], [0], [1], [0, 0, 1, 1], [], []>} : vector<8x32xbf16>, vector<32x16xbf16>, vector<8x16xf32> -> vector<8x16xf32>
    %105 = vector.extract_strided_slice %35 {offsets = [1, 1, 0, 0], sizes = [1, 1, 1, 16], strides = [1, 1, 1, 1]} : vector<2x3x1x16xf32> to vector<1x1x1x16xf32>
    %106 = vector.shape_cast %105 : vector<1x1x1x16xf32> to vector<1x16xf32>
    %107 = vector.broadcast %106 : vector<1x16xf32> to vector<8x16xf32>
    %108 = arith.addf %104, %107 : vector<8x16xf32>
    %109 = vector.extract_strided_slice %33 {offsets = [1, 2, 0, 0], sizes = [1, 1, 32, 16], strides = [1, 1, 1, 1]} : vector<2x3x32x16xf32> to vector<1x1x32x16xf32>
    %110 = vector.shape_cast %109 : vector<1x1x32x16xf32> to vector<32x16xf32>
    %111 = arith.truncf %31 : vector<8x32xf32> to vector<8x32xbf16>
    %112 = arith.truncf %110 : vector<32x16xf32> to vector<32x16xbf16>
    %cst_40 = arith.constant dense<0.000000e+00> : vector<8x16xf32>
    %113 = tpu.matmul %111, %112, %cst_40 {dimension_numbers = #tpu.dot_dimension_numbers<[1], [0], [0], [1], [0, 0, 1, 1], [], []>} : vector<8x32xbf16>, vector<32x16xbf16>, vector<8x16xf32> -> vector<8x16xf32>
    %114 = vector.extract_strided_slice %35 {offsets = [1, 2, 0, 0], sizes = [1, 1, 1, 16], strides = [1, 1, 1, 1]} : vector<2x3x1x16xf32> to vector<1x1x1x16xf32>
    %115 = vector.shape_cast %114 : vector<1x1x1x16xf32> to vector<1x16xf32>
    %116 = vector.broadcast %115 : vector<1x16xf32> to vector<8x16xf32>
    %117 = arith.addf %113, %116 : vector<8x16xf32>
    %118 = tpu.transpose %108, [1, 0] : vector<8x16xf32> -> vector<16x8xf32>
    %119 = arith.truncf %99 : vector<8x16xf32> to vector<8x16xbf16>
    %120 = arith.truncf %118 : vector<16x8xf32> to vector<16x8xbf16>
    %cst_41 = arith.constant dense<0.000000e+00> : vector<8x8xf32>
    %121 = tpu.matmul %119, %120, %cst_41 {dimension_numbers = #tpu.dot_dimension_numbers<[1], [0], [0], [1], [0, 0, 1, 1], [], []>} : vector<8x16xbf16>, vector<16x8xbf16>, vector<8x8xf32> -> vector<8x8xf32>
    %cst_42 = arith.constant 2.500000e-01 : f32
    %122 = vector.broadcast %cst_42 : f32 to vector<8x8xf32>
    %123 = arith.mulf %121, %122 : vector<8x8xf32>
    %cst_43 = arith.constant -1.000000e+30 : f32
    %124 = vector.broadcast %cst_43 : f32 to vector<8x8xf32>
    %125 = arith.select %7, %123, %124 : vector<8x8xi1>, vector<8x8xf32>
    %cst_44 = arith.constant dense<0xFF800000> : vector<8xf32>
    %126 = vector.multi_reduction <maximumf>, %125, %cst_44 [1] : vector<8x8xf32> to vector<8xf32>
    %127 = vector.shape_cast %126 : vector<8xf32> to vector<8x1xf32>
    %128 = vector.broadcast %127 : vector<8x1xf32> to vector<8x8xf32>
    %129 = arith.subf %125, %128 : vector<8x8xf32>
    %130 = math.exp %129 : vector<8x8xf32>
    %cst_45 = arith.constant dense<0.000000e+00> : vector<8xf32>
    %131 = vector.multi_reduction <add>, %130, %cst_45 [1] : vector<8x8xf32> to vector<8xf32>
    %132 = vector.shape_cast %131 : vector<8xf32> to vector<8x1xf32>
    %133 = vector.broadcast %132 : vector<8x1xf32> to vector<8x8xf32>
    %134 = arith.divf %130, %133 : vector<8x8xf32>
    %135 = arith.truncf %134 : vector<8x8xf32> to vector<8x8xbf16>
    %136 = arith.truncf %117 : vector<8x16xf32> to vector<8x16xbf16>
    %cst_46 = arith.constant dense<0.000000e+00> : vector<8x16xf32>
    %137 = tpu.matmul %135, %136, %cst_46 {dimension_numbers = #tpu.dot_dimension_numbers<[1], [0], [0], [1], [0, 0, 1, 1], [], []>} : vector<8x8xbf16>, vector<8x16xbf16>, vector<8x16xf32> -> vector<8x16xf32>
    %138 = vector.extract_strided_slice %37 {offsets = [16, 0], sizes = [16, 32], strides = [1, 1]} : vector<32x32xf32> to vector<16x32xf32>
    %139 = arith.truncf %137 : vector<8x16xf32> to vector<8x16xbf16>
    %140 = arith.truncf %138 : vector<16x32xf32> to vector<16x32xbf16>
    %cst_47 = arith.constant dense<0.000000e+00> : vector<8x32xf32>
    %141 = tpu.matmul %139, %140, %cst_47 {dimension_numbers = #tpu.dot_dimension_numbers<[1], [0], [0], [1], [0, 0, 1, 1], [], []>} : vector<8x16xbf16>, vector<16x32xbf16>, vector<8x32xf32> -> vector<8x32xf32>
    %142 = arith.addf %90, %141 : vector<8x32xf32>
    %143 = arith.addf %4, %142 : vector<8x32xf32>
    %c0_48 = arith.constant 0 : index
    %c0_49 = arith.constant 0 : index
    %c0_50 = arith.constant 0 : index
    %144 = vector.load %arg6[%c0_48, %c0_49, %c0_50] : memref<2x1x32xf32, #tpu.memory_space<vmem>>, vector<1x1x32xf32>
    %145 = vector.shape_cast %144 : vector<1x1x32xf32> to vector<1x32xf32>
    %146 = vector.broadcast %145 : vector<1x32xf32> to vector<8x32xf32>
    %147 = arith.addf %143, %146 : vector<8x32xf32>
    %c0_51 = arith.constant 0 : index
    %c0_52 = arith.constant 0 : index
    %c0_53 = arith.constant 0 : index
    %148 = vector.load %arg9[%c0_51, %c0_52, %c0_53] : memref<2x1x32xf32, #tpu.memory_space<vmem>>, vector<1x1x32xf32>
    %149 = vector.shape_cast %148 : vector<1x1x32xf32> to vector<1x32xf32>
    %c0_54 = arith.constant 0 : index
    %c0_55 = arith.constant 0 : index
    %c0_56 = arith.constant 0 : index
    %150 = vector.load %arg10[%c0_54, %c0_55, %c0_56] : memref<2x1x32xf32, #tpu.memory_space<vmem>>, vector<1x1x32xf32>
    %151 = vector.shape_cast %150 : vector<1x1x32xf32> to vector<1x32xf32>
    %cst_57 = arith.constant dense<0.000000e+00> : vector<8xf32>
    %152 = vector.multi_reduction <add>, %147, %cst_57 [1] : vector<8x32xf32> to vector<8xf32>
    %153 = vector.shape_cast %152 : vector<8xf32> to vector<8x1xf32>
    %cst_58 = arith.constant 3.200000e+01 : f32
    %154 = vector.broadcast %cst_58 : f32 to vector<8x1xf32>
    %155 = arith.divf %153, %154 : vector<8x1xf32>
    %156 = vector.broadcast %155 : vector<8x1xf32> to vector<8x32xf32>
    %157 = arith.subf %147, %156 : vector<8x32xf32>
    %158 = arith.mulf %157, %157 : vector<8x32xf32>
    %cst_59 = arith.constant dense<0.000000e+00> : vector<8xf32>
    %159 = vector.multi_reduction <add>, %158, %cst_59 [1] : vector<8x32xf32> to vector<8xf32>
    %160 = vector.shape_cast %159 : vector<8xf32> to vector<8x1xf32>
    %cst_60 = arith.constant 3.200000e+01 : f32
    %161 = vector.broadcast %cst_60 : f32 to vector<8x1xf32>
    %162 = arith.divf %160, %161 : vector<8x1xf32>
    %cst_61 = arith.constant 9.99999974E-6 : f32
    %163 = vector.broadcast %cst_61 : f32 to vector<8x1xf32>
    %164 = arith.addf %162, %163 : vector<8x1xf32>
    %165 = math.rsqrt %164 : vector<8x1xf32>
    %166 = vector.broadcast %165 : vector<8x1xf32> to vector<8x32xf32>
    %167 = arith.mulf %157, %166 : vector<8x32xf32>
    %168 = vector.broadcast %149 : vector<1x32xf32> to vector<8x32xf32>
    %169 = arith.mulf %167, %168 : vector<8x32xf32>
    %170 = vector.broadcast %151 : vector<1x32xf32> to vector<8x32xf32>
    %171 = arith.addf %169, %170 : vector<8x32xf32>
    %c0_62 = arith.constant 0 : index
    %c0_63 = arith.constant 0 : index
    %c0_64 = arith.constant 0 : index
    %172 = vector.load %arg11[%c0_62, %c0_63, %c0_64] : memref<2x32x128xf32, #tpu.memory_space<vmem>>, vector<1x32x128xf32>
    %173 = vector.shape_cast %172 : vector<1x32x128xf32> to vector<32x128xf32>
    %174 = arith.truncf %171 : vector<8x32xf32> to vector<8x32xbf16>
    %175 = arith.truncf %173 : vector<32x128xf32> to vector<32x128xbf16>
    %cst_65 = arith.constant dense<0.000000e+00> : vector<8x128xf32>
    %176 = tpu.matmul %174, %175, %cst_65 {dimension_numbers = #tpu.dot_dimension_numbers<[1], [0], [0], [1], [0, 0, 1, 1], [], []>} : vector<8x32xbf16>, vector<32x128xbf16>, vector<8x128xf32> -> vector<8x128xf32>
    %c0_66 = arith.constant 0 : index
    %c0_67 = arith.constant 0 : index
    %c0_68 = arith.constant 0 : index
    %177 = vector.load %arg12[%c0_66, %c0_67, %c0_68] : memref<2x1x128xf32, #tpu.memory_space<vmem>>, vector<1x1x128xf32>
    %178 = vector.shape_cast %177 : vector<1x1x128xf32> to vector<1x128xf32>
    %179 = vector.broadcast %178 : vector<1x128xf32> to vector<8x128xf32>
    %180 = arith.addf %176, %179 : vector<8x128xf32>
    %cst_69 = arith.constant 5.000000e-01 : f32
    %181 = vector.broadcast %cst_69 : f32 to vector<8x128xf32>
    %182 = arith.mulf %181, %180 : vector<8x128xf32>
    %cst_70 = arith.constant 4.471500e-02 : f32
    %183 = vector.broadcast %cst_70 : f32 to vector<8x128xf32>
    %184 = arith.mulf %183, %180 : vector<8x128xf32>
    %185 = arith.mulf %184, %180 : vector<8x128xf32>
    %186 = arith.mulf %185, %180 : vector<8x128xf32>
    %187 = arith.addf %180, %186 : vector<8x128xf32>
    %cst_71 = arith.constant 0.797884583 : f32
    %188 = vector.broadcast %cst_71 : f32 to vector<8x128xf32>
    %189 = arith.mulf %188, %187 : vector<8x128xf32>
    %190 = math.tanh %189 : vector<8x128xf32>
    %cst_72 = arith.constant 1.000000e+00 : f32
    %191 = vector.broadcast %cst_72 : f32 to vector<8x128xf32>
    %192 = arith.addf %191, %190 : vector<8x128xf32>
    %193 = arith.mulf %182, %192 : vector<8x128xf32>
    %c0_73 = arith.constant 0 : index
    %c0_74 = arith.constant 0 : index
    %c0_75 = arith.constant 0 : index
    %194 = vector.load %arg13[%c0_73, %c0_74, %c0_75] : memref<2x128x32xf32, #tpu.memory_space<vmem>>, vector<1x128x32xf32>
    %195 = vector.shape_cast %194 : vector<1x128x32xf32> to vector<128x32xf32>
    %196 = arith.truncf %193 : vector<8x128xf32> to vector<8x128xbf16>
    %197 = arith.truncf %195 : vector<128x32xf32> to vector<128x32xbf16>
    %cst_76 = arith.constant dense<0.000000e+00> : vector<8x32xf32>
    %198 = tpu.matmul %196, %197, %cst_76 {dimension_numbers = #tpu.dot_dimension_numbers<[1], [0], [0], [1], [0, 0, 1, 1], [], []>} : vector<8x128xbf16>, vector<128x32xbf16>, vector<8x32xf32> -> vector<8x32xf32>
    %199 = arith.addf %147, %198 : vector<8x32xf32>
    %c0_77 = arith.constant 0 : index
    %c0_78 = arith.constant 0 : index
    %c0_79 = arith.constant 0 : index
    %200 = vector.load %arg14[%c0_77, %c0_78, %c0_79] : memref<2x1x32xf32, #tpu.memory_space<vmem>>, vector<1x1x32xf32>
    %201 = vector.shape_cast %200 : vector<1x1x32xf32> to vector<1x32xf32>
    %202 = vector.broadcast %201 : vector<1x32xf32> to vector<8x32xf32>
    %203 = arith.addf %199, %202 : vector<8x32xf32>
    %c1 = arith.constant 1 : index
    %c0_80 = arith.constant 0 : index
    %c0_81 = arith.constant 0 : index
    %204 = vector.load %arg7[%c1, %c0_80, %c0_81] : memref<2x1x32xf32, #tpu.memory_space<vmem>>, vector<1x1x32xf32>
    %205 = vector.shape_cast %204 : vector<1x1x32xf32> to vector<1x32xf32>
    %c1_82 = arith.constant 1 : index
    %c0_83 = arith.constant 0 : index
    %c0_84 = arith.constant 0 : index
    %206 = vector.load %arg8[%c1_82, %c0_83, %c0_84] : memref<2x1x32xf32, #tpu.memory_space<vmem>>, vector<1x1x32xf32>
    %207 = vector.shape_cast %206 : vector<1x1x32xf32> to vector<1x32xf32>
    %cst_85 = arith.constant dense<0.000000e+00> : vector<8xf32>
    %208 = vector.multi_reduction <add>, %203, %cst_85 [1] : vector<8x32xf32> to vector<8xf32>
    %209 = vector.shape_cast %208 : vector<8xf32> to vector<8x1xf32>
    %cst_86 = arith.constant 3.200000e+01 : f32
    %210 = vector.broadcast %cst_86 : f32 to vector<8x1xf32>
    %211 = arith.divf %209, %210 : vector<8x1xf32>
    %212 = vector.broadcast %211 : vector<8x1xf32> to vector<8x32xf32>
    %213 = arith.subf %203, %212 : vector<8x32xf32>
    %214 = arith.mulf %213, %213 : vector<8x32xf32>
    %cst_87 = arith.constant dense<0.000000e+00> : vector<8xf32>
    %215 = vector.multi_reduction <add>, %214, %cst_87 [1] : vector<8x32xf32> to vector<8xf32>
    %216 = vector.shape_cast %215 : vector<8xf32> to vector<8x1xf32>
    %cst_88 = arith.constant 3.200000e+01 : f32
    %217 = vector.broadcast %cst_88 : f32 to vector<8x1xf32>
    %218 = arith.divf %216, %217 : vector<8x1xf32>
    %cst_89 = arith.constant 9.99999974E-6 : f32
    %219 = vector.broadcast %cst_89 : f32 to vector<8x1xf32>
    %220 = arith.addf %218, %219 : vector<8x1xf32>
    %221 = math.rsqrt %220 : vector<8x1xf32>
    %222 = vector.broadcast %221 : vector<8x1xf32> to vector<8x32xf32>
    %223 = arith.mulf %213, %222 : vector<8x32xf32>
    %224 = vector.broadcast %205 : vector<1x32xf32> to vector<8x32xf32>
    %225 = arith.mulf %223, %224 : vector<8x32xf32>
    %226 = vector.broadcast %207 : vector<1x32xf32> to vector<8x32xf32>
    %227 = arith.addf %225, %226 : vector<8x32xf32>
    %c1_90 = arith.constant 1 : index
    %c0_91 = arith.constant 0 : index
    %c0_92 = arith.constant 0 : index
    %c0_93 = arith.constant 0 : index
    %c0_94 = arith.constant 0 : index
    %228 = vector.load %arg3[%c1_90, %c0_91, %c0_92, %c0_93, %c0_94] : memref<2x2x3x32x16xf32, #tpu.memory_space<vmem>>, vector<1x2x3x32x16xf32>
    %229 = vector.shape_cast %228 : vector<1x2x3x32x16xf32> to vector<2x3x32x16xf32>
    %c1_95 = arith.constant 1 : index
    %c0_96 = arith.constant 0 : index
    %c0_97 = arith.constant 0 : index
    %c0_98 = arith.constant 0 : index
    %c0_99 = arith.constant 0 : index
    %230 = vector.load %arg4[%c1_95, %c0_96, %c0_97, %c0_98, %c0_99] : memref<2x2x3x1x16xf32, #tpu.memory_space<vmem>>, vector<1x2x3x1x16xf32>
    %231 = vector.shape_cast %230 : vector<1x2x3x1x16xf32> to vector<2x3x1x16xf32>
    %c1_100 = arith.constant 1 : index
    %c0_101 = arith.constant 0 : index
    %c0_102 = arith.constant 0 : index
    %232 = vector.load %arg5[%c1_100, %c0_101, %c0_102] : memref<2x32x32xf32, #tpu.memory_space<vmem>>, vector<1x32x32xf32>
    %233 = vector.shape_cast %232 : vector<1x32x32xf32> to vector<32x32xf32>
    %cst_103 = arith.constant 0.000000e+00 : f32
    %234 = vector.broadcast %cst_103 : f32 to vector<8x32xf32>
    %235 = vector.extract_strided_slice %229 {offsets = [0, 0, 0, 0], sizes = [1, 1, 32, 16], strides = [1, 1, 1, 1]} : vector<2x3x32x16xf32> to vector<1x1x32x16xf32>
    %236 = vector.shape_cast %235 : vector<1x1x32x16xf32> to vector<32x16xf32>
    %237 = arith.truncf %227 : vector<8x32xf32> to vector<8x32xbf16>
    %238 = arith.truncf %236 : vector<32x16xf32> to vector<32x16xbf16>
    %cst_104 = arith.constant dense<0.000000e+00> : vector<8x16xf32>
    %239 = tpu.matmul %237, %238, %cst_104 {dimension_numbers = #tpu.dot_dimension_numbers<[1], [0], [0], [1], [0, 0, 1, 1], [], []>} : vector<8x32xbf16>, vector<32x16xbf16>, vector<8x16xf32> -> vector<8x16xf32>
    %240 = vector.extract_strided_slice %231 {offsets = [0, 0, 0, 0], sizes = [1, 1, 1, 16], strides = [1, 1, 1, 1]} : vector<2x3x1x16xf32> to vector<1x1x1x16xf32>
    %241 = vector.shape_cast %240 : vector<1x1x1x16xf32> to vector<1x16xf32>
    %242 = vector.broadcast %241 : vector<1x16xf32> to vector<8x16xf32>
    %243 = arith.addf %239, %242 : vector<8x16xf32>
    %244 = vector.extract_strided_slice %229 {offsets = [0, 1, 0, 0], sizes = [1, 1, 32, 16], strides = [1, 1, 1, 1]} : vector<2x3x32x16xf32> to vector<1x1x32x16xf32>
    %245 = vector.shape_cast %244 : vector<1x1x32x16xf32> to vector<32x16xf32>
    %246 = arith.truncf %227 : vector<8x32xf32> to vector<8x32xbf16>
    %247 = arith.truncf %245 : vector<32x16xf32> to vector<32x16xbf16>
    %cst_105 = arith.constant dense<0.000000e+00> : vector<8x16xf32>
    %248 = tpu.matmul %246, %247, %cst_105 {dimension_numbers = #tpu.dot_dimension_numbers<[1], [0], [0], [1], [0, 0, 1, 1], [], []>} : vector<8x32xbf16>, vector<32x16xbf16>, vector<8x16xf32> -> vector<8x16xf32>
    %249 = vector.extract_strided_slice %231 {offsets = [0, 1, 0, 0], sizes = [1, 1, 1, 16], strides = [1, 1, 1, 1]} : vector<2x3x1x16xf32> to vector<1x1x1x16xf32>
    %250 = vector.shape_cast %249 : vector<1x1x1x16xf32> to vector<1x16xf32>
    %251 = vector.broadcast %250 : vector<1x16xf32> to vector<8x16xf32>
    %252 = arith.addf %248, %251 : vector<8x16xf32>
    %253 = vector.extract_strided_slice %229 {offsets = [0, 2, 0, 0], sizes = [1, 1, 32, 16], strides = [1, 1, 1, 1]} : vector<2x3x32x16xf32> to vector<1x1x32x16xf32>
    %254 = vector.shape_cast %253 : vector<1x1x32x16xf32> to vector<32x16xf32>
    %255 = arith.truncf %227 : vector<8x32xf32> to vector<8x32xbf16>
    %256 = arith.truncf %254 : vector<32x16xf32> to vector<32x16xbf16>
    %cst_106 = arith.constant dense<0.000000e+00> : vector<8x16xf32>
    %257 = tpu.matmul %255, %256, %cst_106 {dimension_numbers = #tpu.dot_dimension_numbers<[1], [0], [0], [1], [0, 0, 1, 1], [], []>} : vector<8x32xbf16>, vector<32x16xbf16>, vector<8x16xf32> -> vector<8x16xf32>
    %258 = vector.extract_strided_slice %231 {offsets = [0, 2, 0, 0], sizes = [1, 1, 1, 16], strides = [1, 1, 1, 1]} : vector<2x3x1x16xf32> to vector<1x1x1x16xf32>
    %259 = vector.shape_cast %258 : vector<1x1x1x16xf32> to vector<1x16xf32>
    %260 = vector.broadcast %259 : vector<1x16xf32> to vector<8x16xf32>
    %261 = arith.addf %257, %260 : vector<8x16xf32>
    %262 = tpu.transpose %252, [1, 0] : vector<8x16xf32> -> vector<16x8xf32>
    %263 = arith.truncf %243 : vector<8x16xf32> to vector<8x16xbf16>
    %264 = arith.truncf %262 : vector<16x8xf32> to vector<16x8xbf16>
    %cst_107 = arith.constant dense<0.000000e+00> : vector<8x8xf32>
    %265 = tpu.matmul %263, %264, %cst_107 {dimension_numbers = #tpu.dot_dimension_numbers<[1], [0], [0], [1], [0, 0, 1, 1], [], []>} : vector<8x16xbf16>, vector<16x8xbf16>, vector<8x8xf32> -> vector<8x8xf32>
    %cst_108 = arith.constant 2.500000e-01 : f32
    %266 = vector.broadcast %cst_108 : f32 to vector<8x8xf32>
    %267 = arith.mulf %265, %266 : vector<8x8xf32>
    %cst_109 = arith.constant -1.000000e+30 : f32
    %268 = vector.broadcast %cst_109 : f32 to vector<8x8xf32>
    %269 = arith.select %7, %267, %268 : vector<8x8xi1>, vector<8x8xf32>
    %cst_110 = arith.constant dense<0xFF800000> : vector<8xf32>
    %270 = vector.multi_reduction <maximumf>, %269, %cst_110 [1] : vector<8x8xf32> to vector<8xf32>
    %271 = vector.shape_cast %270 : vector<8xf32> to vector<8x1xf32>
    %272 = vector.broadcast %271 : vector<8x1xf32> to vector<8x8xf32>
    %273 = arith.subf %269, %272 : vector<8x8xf32>
    %274 = math.exp %273 : vector<8x8xf32>
    %cst_111 = arith.constant dense<0.000000e+00> : vector<8xf32>
    %275 = vector.multi_reduction <add>, %274, %cst_111 [1] : vector<8x8xf32> to vector<8xf32>
    %276 = vector.shape_cast %275 : vector<8xf32> to vector<8x1xf32>
    %277 = vector.broadcast %276 : vector<8x1xf32> to vector<8x8xf32>
    %278 = arith.divf %274, %277 : vector<8x8xf32>
    %279 = arith.truncf %278 : vector<8x8xf32> to vector<8x8xbf16>
    %280 = arith.truncf %261 : vector<8x16xf32> to vector<8x16xbf16>
    %cst_112 = arith.constant dense<0.000000e+00> : vector<8x16xf32>
    %281 = tpu.matmul %279, %280, %cst_112 {dimension_numbers = #tpu.dot_dimension_numbers<[1], [0], [0], [1], [0, 0, 1, 1], [], []>} : vector<8x8xbf16>, vector<8x16xbf16>, vector<8x16xf32> -> vector<8x16xf32>
    %282 = vector.extract_strided_slice %233 {offsets = [0, 0], sizes = [16, 32], strides = [1, 1]} : vector<32x32xf32> to vector<16x32xf32>
    %283 = arith.truncf %281 : vector<8x16xf32> to vector<8x16xbf16>
    %284 = arith.truncf %282 : vector<16x32xf32> to vector<16x32xbf16>
    %cst_113 = arith.constant dense<0.000000e+00> : vector<8x32xf32>
    %285 = tpu.matmul %283, %284, %cst_113 {dimension_numbers = #tpu.dot_dimension_numbers<[1], [0], [0], [1], [0, 0, 1, 1], [], []>} : vector<8x16xbf16>, vector<16x32xbf16>, vector<8x32xf32> -> vector<8x32xf32>
    %286 = arith.addf %234, %285 : vector<8x32xf32>
    %287 = vector.extract_strided_slice %229 {offsets = [1, 0, 0, 0], sizes = [1, 1, 32, 16], strides = [1, 1, 1, 1]} : vector<2x3x32x16xf32> to vector<1x1x32x16xf32>
    %288 = vector.shape_cast %287 : vector<1x1x32x16xf32> to vector<32x16xf32>
    %289 = arith.truncf %227 : vector<8x32xf32> to vector<8x32xbf16>
    %290 = arith.truncf %288 : vector<32x16xf32> to vector<32x16xbf16>
    %cst_114 = arith.constant dense<0.000000e+00> : vector<8x16xf32>
    %291 = tpu.matmul %289, %290, %cst_114 {dimension_numbers = #tpu.dot_dimension_numbers<[1], [0], [0], [1], [0, 0, 1, 1], [], []>} : vector<8x32xbf16>, vector<32x16xbf16>, vector<8x16xf32> -> vector<8x16xf32>
    %292 = vector.extract_strided_slice %231 {offsets = [1, 0, 0, 0], sizes = [1, 1, 1, 16], strides = [1, 1, 1, 1]} : vector<2x3x1x16xf32> to vector<1x1x1x16xf32>
    %293 = vector.shape_cast %292 : vector<1x1x1x16xf32> to vector<1x16xf32>
    %294 = vector.broadcast %293 : vector<1x16xf32> to vector<8x16xf32>
    %295 = arith.addf %291, %294 : vector<8x16xf32>
    %296 = vector.extract_strided_slice %229 {offsets = [1, 1, 0, 0], sizes = [1, 1, 32, 16], strides = [1, 1, 1, 1]} : vector<2x3x32x16xf32> to vector<1x1x32x16xf32>
    %297 = vector.shape_cast %296 : vector<1x1x32x16xf32> to vector<32x16xf32>
    %298 = arith.truncf %227 : vector<8x32xf32> to vector<8x32xbf16>
    %299 = arith.truncf %297 : vector<32x16xf32> to vector<32x16xbf16>
    %cst_115 = arith.constant dense<0.000000e+00> : vector<8x16xf32>
    %300 = tpu.matmul %298, %299, %cst_115 {dimension_numbers = #tpu.dot_dimension_numbers<[1], [0], [0], [1], [0, 0, 1, 1], [], []>} : vector<8x32xbf16>, vector<32x16xbf16>, vector<8x16xf32> -> vector<8x16xf32>
    %301 = vector.extract_strided_slice %231 {offsets = [1, 1, 0, 0], sizes = [1, 1, 1, 16], strides = [1, 1, 1, 1]} : vector<2x3x1x16xf32> to vector<1x1x1x16xf32>
    %302 = vector.shape_cast %301 : vector<1x1x1x16xf32> to vector<1x16xf32>
    %303 = vector.broadcast %302 : vector<1x16xf32> to vector<8x16xf32>
    %304 = arith.addf %300, %303 : vector<8x16xf32>
    %305 = vector.extract_strided_slice %229 {offsets = [1, 2, 0, 0], sizes = [1, 1, 32, 16], strides = [1, 1, 1, 1]} : vector<2x3x32x16xf32> to vector<1x1x32x16xf32>
    %306 = vector.shape_cast %305 : vector<1x1x32x16xf32> to vector<32x16xf32>
    %307 = arith.truncf %227 : vector<8x32xf32> to vector<8x32xbf16>
    %308 = arith.truncf %306 : vector<32x16xf32> to vector<32x16xbf16>
    %cst_116 = arith.constant dense<0.000000e+00> : vector<8x16xf32>
    %309 = tpu.matmul %307, %308, %cst_116 {dimension_numbers = #tpu.dot_dimension_numbers<[1], [0], [0], [1], [0, 0, 1, 1], [], []>} : vector<8x32xbf16>, vector<32x16xbf16>, vector<8x16xf32> -> vector<8x16xf32>
    %310 = vector.extract_strided_slice %231 {offsets = [1, 2, 0, 0], sizes = [1, 1, 1, 16], strides = [1, 1, 1, 1]} : vector<2x3x1x16xf32> to vector<1x1x1x16xf32>
    %311 = vector.shape_cast %310 : vector<1x1x1x16xf32> to vector<1x16xf32>
    %312 = vector.broadcast %311 : vector<1x16xf32> to vector<8x16xf32>
    %313 = arith.addf %309, %312 : vector<8x16xf32>
    %314 = tpu.transpose %304, [1, 0] : vector<8x16xf32> -> vector<16x8xf32>
    %315 = arith.truncf %295 : vector<8x16xf32> to vector<8x16xbf16>
    %316 = arith.truncf %314 : vector<16x8xf32> to vector<16x8xbf16>
    %cst_117 = arith.constant dense<0.000000e+00> : vector<8x8xf32>
    %317 = tpu.matmul %315, %316, %cst_117 {dimension_numbers = #tpu.dot_dimension_numbers<[1], [0], [0], [1], [0, 0, 1, 1], [], []>} : vector<8x16xbf16>, vector<16x8xbf16>, vector<8x8xf32> -> vector<8x8xf32>
    %cst_118 = arith.constant 2.500000e-01 : f32
    %318 = vector.broadcast %cst_118 : f32 to vector<8x8xf32>
    %319 = arith.mulf %317, %318 : vector<8x8xf32>
    %cst_119 = arith.constant -1.000000e+30 : f32
    %320 = vector.broadcast %cst_119 : f32 to vector<8x8xf32>
    %321 = arith.select %7, %319, %320 : vector<8x8xi1>, vector<8x8xf32>
    %cst_120 = arith.constant dense<0xFF800000> : vector<8xf32>
    %322 = vector.multi_reduction <maximumf>, %321, %cst_120 [1] : vector<8x8xf32> to vector<8xf32>
    %323 = vector.shape_cast %322 : vector<8xf32> to vector<8x1xf32>
    %324 = vector.broadcast %323 : vector<8x1xf32> to vector<8x8xf32>
    %325 = arith.subf %321, %324 : vector<8x8xf32>
    %326 = math.exp %325 : vector<8x8xf32>
    %cst_121 = arith.constant dense<0.000000e+00> : vector<8xf32>
    %327 = vector.multi_reduction <add>, %326, %cst_121 [1] : vector<8x8xf32> to vector<8xf32>
    %328 = vector.shape_cast %327 : vector<8xf32> to vector<8x1xf32>
    %329 = vector.broadcast %328 : vector<8x1xf32> to vector<8x8xf32>
    %330 = arith.divf %326, %329 : vector<8x8xf32>
    %331 = arith.truncf %330 : vector<8x8xf32> to vector<8x8xbf16>
    %332 = arith.truncf %313 : vector<8x16xf32> to vector<8x16xbf16>
    %cst_122 = arith.constant dense<0.000000e+00> : vector<8x16xf32>
    %333 = tpu.matmul %331, %332, %cst_122 {dimension_numbers = #tpu.dot_dimension_numbers<[1], [0], [0], [1], [0, 0, 1, 1], [], []>} : vector<8x8xbf16>, vector<8x16xbf16>, vector<8x16xf32> -> vector<8x16xf32>
    %334 = vector.extract_strided_slice %233 {offsets = [16, 0], sizes = [16, 32], strides = [1, 1]} : vector<32x32xf32> to vector<16x32xf32>
    %335 = arith.truncf %333 : vector<8x16xf32> to vector<8x16xbf16>
    %336 = arith.truncf %334 : vector<16x32xf32> to vector<16x32xbf16>
    %cst_123 = arith.constant dense<0.000000e+00> : vector<8x32xf32>
    %337 = tpu.matmul %335, %336, %cst_123 {dimension_numbers = #tpu.dot_dimension_numbers<[1], [0], [0], [1], [0, 0, 1, 1], [], []>} : vector<8x16xbf16>, vector<16x32xbf16>, vector<8x32xf32> -> vector<8x32xf32>
    %338 = arith.addf %286, %337 : vector<8x32xf32>
    %339 = arith.addf %203, %338 : vector<8x32xf32>
    %c1_124 = arith.constant 1 : index
    %c0_125 = arith.constant 0 : index
    %c0_126 = arith.constant 0 : index
    %340 = vector.load %arg6[%c1_124, %c0_125, %c0_126] : memref<2x1x32xf32, #tpu.memory_space<vmem>>, vector<1x1x32xf32>
    %341 = vector.shape_cast %340 : vector<1x1x32xf32> to vector<1x32xf32>
    %342 = vector.broadcast %341 : vector<1x32xf32> to vector<8x32xf32>
    %343 = arith.addf %339, %342 : vector<8x32xf32>
    %c1_127 = arith.constant 1 : index
    %c0_128 = arith.constant 0 : index
    %c0_129 = arith.constant 0 : index
    %344 = vector.load %arg9[%c1_127, %c0_128, %c0_129] : memref<2x1x32xf32, #tpu.memory_space<vmem>>, vector<1x1x32xf32>
    %345 = vector.shape_cast %344 : vector<1x1x32xf32> to vector<1x32xf32>
    %c1_130 = arith.constant 1 : index
    %c0_131 = arith.constant 0 : index
    %c0_132 = arith.constant 0 : index
    %346 = vector.load %arg10[%c1_130, %c0_131, %c0_132] : memref<2x1x32xf32, #tpu.memory_space<vmem>>, vector<1x1x32xf32>
    %347 = vector.shape_cast %346 : vector<1x1x32xf32> to vector<1x32xf32>
    %cst_133 = arith.constant dense<0.000000e+00> : vector<8xf32>
    %348 = vector.multi_reduction <add>, %343, %cst_133 [1] : vector<8x32xf32> to vector<8xf32>
    %349 = vector.shape_cast %348 : vector<8xf32> to vector<8x1xf32>
    %cst_134 = arith.constant 3.200000e+01 : f32
    %350 = vector.broadcast %cst_134 : f32 to vector<8x1xf32>
    %351 = arith.divf %349, %350 : vector<8x1xf32>
    %352 = vector.broadcast %351 : vector<8x1xf32> to vector<8x32xf32>
    %353 = arith.subf %343, %352 : vector<8x32xf32>
    %354 = arith.mulf %353, %353 : vector<8x32xf32>
    %cst_135 = arith.constant dense<0.000000e+00> : vector<8xf32>
    %355 = vector.multi_reduction <add>, %354, %cst_135 [1] : vector<8x32xf32> to vector<8xf32>
    %356 = vector.shape_cast %355 : vector<8xf32> to vector<8x1xf32>
    %cst_136 = arith.constant 3.200000e+01 : f32
    %357 = vector.broadcast %cst_136 : f32 to vector<8x1xf32>
    %358 = arith.divf %356, %357 : vector<8x1xf32>
    %cst_137 = arith.constant 9.99999974E-6 : f32
    %359 = vector.broadcast %cst_137 : f32 to vector<8x1xf32>
    %360 = arith.addf %358, %359 : vector<8x1xf32>
    %361 = math.rsqrt %360 : vector<8x1xf32>
    %362 = vector.broadcast %361 : vector<8x1xf32> to vector<8x32xf32>
    %363 = arith.mulf %353, %362 : vector<8x32xf32>
    %364 = vector.broadcast %345 : vector<1x32xf32> to vector<8x32xf32>
    %365 = arith.mulf %363, %364 : vector<8x32xf32>
    %366 = vector.broadcast %347 : vector<1x32xf32> to vector<8x32xf32>
    %367 = arith.addf %365, %366 : vector<8x32xf32>
    %c1_138 = arith.constant 1 : index
    %c0_139 = arith.constant 0 : index
    %c0_140 = arith.constant 0 : index
    %368 = vector.load %arg11[%c1_138, %c0_139, %c0_140] : memref<2x32x128xf32, #tpu.memory_space<vmem>>, vector<1x32x128xf32>
    %369 = vector.shape_cast %368 : vector<1x32x128xf32> to vector<32x128xf32>
    %370 = arith.truncf %367 : vector<8x32xf32> to vector<8x32xbf16>
    %371 = arith.truncf %369 : vector<32x128xf32> to vector<32x128xbf16>
    %cst_141 = arith.constant dense<0.000000e+00> : vector<8x128xf32>
    %372 = tpu.matmul %370, %371, %cst_141 {dimension_numbers = #tpu.dot_dimension_numbers<[1], [0], [0], [1], [0, 0, 1, 1], [], []>} : vector<8x32xbf16>, vector<32x128xbf16>, vector<8x128xf32> -> vector<8x128xf32>
    %c1_142 = arith.constant 1 : index
    %c0_143 = arith.constant 0 : index
    %c0_144 = arith.constant 0 : index
    %373 = vector.load %arg12[%c1_142, %c0_143, %c0_144] : memref<2x1x128xf32, #tpu.memory_space<vmem>>, vector<1x1x128xf32>
    %374 = vector.shape_cast %373 : vector<1x1x128xf32> to vector<1x128xf32>
    %375 = vector.broadcast %374 : vector<1x128xf32> to vector<8x128xf32>
    %376 = arith.addf %372, %375 : vector<8x128xf32>
    %cst_145 = arith.constant 5.000000e-01 : f32
    %377 = vector.broadcast %cst_145 : f32 to vector<8x128xf32>
    %378 = arith.mulf %377, %376 : vector<8x128xf32>
    %cst_146 = arith.constant 4.471500e-02 : f32
    %379 = vector.broadcast %cst_146 : f32 to vector<8x128xf32>
    %380 = arith.mulf %379, %376 : vector<8x128xf32>
    %381 = arith.mulf %380, %376 : vector<8x128xf32>
    %382 = arith.mulf %381, %376 : vector<8x128xf32>
    %383 = arith.addf %376, %382 : vector<8x128xf32>
    %cst_147 = arith.constant 0.797884583 : f32
    %384 = vector.broadcast %cst_147 : f32 to vector<8x128xf32>
    %385 = arith.mulf %384, %383 : vector<8x128xf32>
    %386 = math.tanh %385 : vector<8x128xf32>
    %cst_148 = arith.constant 1.000000e+00 : f32
    %387 = vector.broadcast %cst_148 : f32 to vector<8x128xf32>
    %388 = arith.addf %387, %386 : vector<8x128xf32>
    %389 = arith.mulf %378, %388 : vector<8x128xf32>
    %c1_149 = arith.constant 1 : index
    %c0_150 = arith.constant 0 : index
    %c0_151 = arith.constant 0 : index
    %390 = vector.load %arg13[%c1_149, %c0_150, %c0_151] : memref<2x128x32xf32, #tpu.memory_space<vmem>>, vector<1x128x32xf32>
    %391 = vector.shape_cast %390 : vector<1x128x32xf32> to vector<128x32xf32>
    %392 = arith.truncf %389 : vector<8x128xf32> to vector<8x128xbf16>
    %393 = arith.truncf %391 : vector<128x32xf32> to vector<128x32xbf16>
    %cst_152 = arith.constant dense<0.000000e+00> : vector<8x32xf32>
    %394 = tpu.matmul %392, %393, %cst_152 {dimension_numbers = #tpu.dot_dimension_numbers<[1], [0], [0], [1], [0, 0, 1, 1], [], []>} : vector<8x128xbf16>, vector<128x32xbf16>, vector<8x32xf32> -> vector<8x32xf32>
    %395 = arith.addf %343, %394 : vector<8x32xf32>
    %c1_153 = arith.constant 1 : index
    %c0_154 = arith.constant 0 : index
    %c0_155 = arith.constant 0 : index
    %396 = vector.load %arg14[%c1_153, %c0_154, %c0_155] : memref<2x1x32xf32, #tpu.memory_space<vmem>>, vector<1x1x32xf32>
    %397 = vector.shape_cast %396 : vector<1x1x32xf32> to vector<1x32xf32>
    %398 = vector.broadcast %397 : vector<1x32xf32> to vector<8x32xf32>
    %399 = arith.addf %395, %398 : vector<8x32xf32>
    %c0_156 = arith.constant 0 : index
    %c0_157 = arith.constant 0 : index
    %400 = vector.load %arg15[%c0_156, %c0_157] : memref<1x32xf32, #tpu.memory_space<vmem>>, vector<1x32xf32>
    %c0_158 = arith.constant 0 : index
    %c0_159 = arith.constant 0 : index
    %401 = vector.load %arg16[%c0_158, %c0_159] : memref<1x32xf32, #tpu.memory_space<vmem>>, vector<1x32xf32>
    %cst_160 = arith.constant dense<0.000000e+00> : vector<8xf32>
    %402 = vector.multi_reduction <add>, %399, %cst_160 [1] : vector<8x32xf32> to vector<8xf32>
    %403 = vector.shape_cast %402 : vector<8xf32> to vector<8x1xf32>
    %cst_161 = arith.constant 3.200000e+01 : f32
    %404 = vector.broadcast %cst_161 : f32 to vector<8x1xf32>
    %405 = arith.divf %403, %404 : vector<8x1xf32>
    %406 = vector.broadcast %405 : vector<8x1xf32> to vector<8x32xf32>
    %407 = arith.subf %399, %406 : vector<8x32xf32>
    %408 = arith.mulf %407, %407 : vector<8x32xf32>
    %cst_162 = arith.constant dense<0.000000e+00> : vector<8xf32>
    %409 = vector.multi_reduction <add>, %408, %cst_162 [1] : vector<8x32xf32> to vector<8xf32>
    %410 = vector.shape_cast %409 : vector<8xf32> to vector<8x1xf32>
    %cst_163 = arith.constant 3.200000e+01 : f32
    %411 = vector.broadcast %cst_163 : f32 to vector<8x1xf32>
    %412 = arith.divf %410, %411 : vector<8x1xf32>
    %cst_164 = arith.constant 9.99999974E-6 : f32
    %413 = vector.broadcast %cst_164 : f32 to vector<8x1xf32>
    %414 = arith.addf %412, %413 : vector<8x1xf32>
    %415 = math.rsqrt %414 : vector<8x1xf32>
    %416 = vector.broadcast %415 : vector<8x1xf32> to vector<8x32xf32>
    %417 = arith.mulf %407, %416 : vector<8x32xf32>
    %418 = vector.broadcast %400 : vector<1x32xf32> to vector<8x32xf32>
    %419 = arith.mulf %417, %418 : vector<8x32xf32>
    %420 = vector.broadcast %401 : vector<1x32xf32> to vector<8x32xf32>
    %421 = arith.addf %419, %420 : vector<8x32xf32>
    %c0_165 = arith.constant 0 : index
    %c0_166 = arith.constant 0 : index
    %422 = vector.load %arg17[%c0_165, %c0_166] : memref<32x128xf32, #tpu.memory_space<vmem>>, vector<32x128xf32>
    %423 = arith.truncf %421 : vector<8x32xf32> to vector<8x32xbf16>
    %424 = arith.truncf %422 : vector<32x128xf32> to vector<32x128xbf16>
    %cst_167 = arith.constant dense<0.000000e+00> : vector<8x128xf32>
    %425 = tpu.matmul %423, %424, %cst_167 {dimension_numbers = #tpu.dot_dimension_numbers<[1], [0], [0], [1], [0, 0, 1, 1], [], []>} : vector<8x32xbf16>, vector<32x128xbf16>, vector<8x128xf32> -> vector<8x128xf32>
    %c0_168 = arith.constant 0 : index
    %c0_169 = arith.constant 0 : index
    %c0_170 = arith.constant 0 : index
    %426 = vector.load %arg18[%c0_168, %c0_169, %c0_170] : memref<1x8x128xf32, #tpu.memory_space<vmem>>, vector<1x8x128xf32>
    %427 = vector.shape_cast %426 : vector<1x8x128xf32> to vector<8x128xf32>
    %428 = vector.shape_cast %425 : vector<8x128xf32> to vector<1x8x128xf32>
    tpu.vector_store %arg18[%c0_168, %c0_169, %c0_170], %428 {strides = array<i32>} : memref<1x8x128xf32, #tpu.memory_space<vmem>>, vector<1x8x128xf32>,
    return
  }
  func.func @transform_0(%arg0: i32) -> (i32, i32, i32) {
    %c0_i32 = arith.constant 0 : i32
    %c0_i32_0 = arith.constant 0 : i32
    %c0_i32_1 = arith.constant 0 : i32
    return %arg0, %c0_i32, %c0_i32_0 : i32, i32, i32
  }
  func.func @transform_1(%arg0: i32) -> (i32, i32) {
    %c0_i32 = arith.constant 0 : i32
    %c0_i32_0 = arith.constant 0 : i32
    %c0_i32_1 = arith.constant 0 : i32
    return %c0_i32, %c0_i32_0 : i32, i32
  }
  func.func @transform_2(%arg0: i32) -> (i32, i32, i32, i32, i32) {
    %c0_i32 = arith.constant 0 : i32
    %c0_i32_0 = arith.constant 0 : i32
    %c0_i32_1 = arith.constant 0 : i32
    %c0_i32_2 = arith.constant 0 : i32
    %c0_i32_3 = arith.constant 0 : i32
    %c0_i32_4 = arith.constant 0 : i32
    return %c0_i32, %c0_i32_0, %c0_i32_1, %c0_i32_2, %c0_i32_3 : i32, i32, i32, i32, i32
  }
  func.func @transform_3(%arg0: i32) -> (i32, i32, i32, i32, i32) {
    %c0_i32 = arith.constant 0 : i32
    %c0_i32_0 = arith.constant 0 : i32
    %c0_i32_1 = arith.constant 0 : i32
    %c0_i32_2 = arith.constant 0 : i32
    %c0_i32_3 = arith.constant 0 : i32
    %c0_i32_4 = arith.constant 0 : i32
    return %c0_i32, %c0_i32_0, %c0_i32_1, %c0_i32_2, %c0_i32_3 : i32, i32, i32, i32, i32
  }
  func.func @transform_4(%arg0: i32) -> (i32, i32, i32) {
    %c0_i32 = arith.constant 0 : i32
    %c0_i32_0 = arith.constant 0 : i32
    %c0_i32_1 = arith.constant 0 : i32
    %c0_i32_2 = arith.constant 0 : i32
    return %c0_i32, %c0_i32_0, %c0_i32_1 : i32, i32, i32
  }
  func.func @transform_5(%arg0: i32) -> (i32, i32, i32) {
    %c0_i32 = arith.constant 0 : i32
    %c0_i32_0 = arith.constant 0 : i32
    %c0_i32_1 = arith.constant 0 : i32
    %c0_i32_2 = arith.constant 0 : i32
    return %c0_i32, %c0_i32_0, %c0_i32_1 : i32, i32, i32
  }
  func.func @transform_6(%arg0: i32) -> (i32, i32, i32) {
    %c0_i32 = arith.constant 0 : i32
    %c0_i32_0 = arith.constant 0 : i32
    %c0_i32_1 = arith.constant 0 : i32
    %c0_i32_2 = arith.constant 0 : i32
    return %c0_i32, %c0_i32_0, %c0_i32_1 : i32, i32, i32
  }
  func.func @transform_7(%arg0: i32) -> (i32, i32, i32) {
    %c0_i32 = arith.constant 0 : i32
    %c0_i32_0 = arith.constant 0 : i32
    %c0_i32_1 = arith.constant 0 : i32
    %c0_i32_2 = arith.constant 0 : i32
    return %c0_i32, %c0_i32_0, %c0_i32_1 : i32, i32, i32
  }
  func.func @transform_8(%arg0: i32) -> (i32, i32, i32) {
    %c0_i32 = arith.constant 0 : i32
    %c0_i32_0 = arith.constant 0 : i32
    %c0_i32_1 = arith.constant 0 : i32
    %c0_i32_2 = arith.constant 0 : i32
    return %c0_i32, %c0_i32_0, %c0_i32_1 : i32, i32, i32
  }
  func.func @transform_9(%arg0: i32) -> (i32, i32, i32) {
    %c0_i32 = arith.constant 0 : i32
    %c0_i32_0 = arith.constant 0 : i32
    %c0_i32_1 = arith.constant 0 : i32
    %c0_i32_2 = arith.constant 0 : i32
    return %c0_i32, %c0_i32_0, %c0_i32_1 : i32, i32, i32
  }
  func.func @transform_10(%arg0: i32) -> (i32, i32, i32) {
    %c0_i32 = arith.constant 0 : i32
    %c0_i32_0 = arith.constant 0 : i32
    %c0_i32_1 = arith.constant 0 : i32
    %c0_i32_2 = arith.constant 0 : i32
    return %c0_i32, %c0_i32_0, %c0_i32_1 : i32, i32, i32
  }
  func.func @transform_11(%arg0: i32) -> (i32, i32, i32) {
    %c0_i32 = arith.constant 0 : i32
    %c0_i32_0 = arith.constant 0 : i32
    %c0_i32_1 = arith.constant 0 : i32
    %c0_i32_2 = arith.constant 0 : i32
    return %c0_i32, %c0_i32_0, %c0_i32_1 : i32, i32, i32
  }
  func.func @transform_12(%arg0: i32) -> (i32, i32, i32) {
    %c0_i32 = arith.constant 0 : i32
    %c0_i32_0 = arith.constant 0 : i32
    %c0_i32_1 = arith.constant 0 : i32
    %c0_i32_2 = arith.constant 0 : i32
    return %c0_i32, %c0_i32_0, %c0_i32_1 : i32, i32, i32
  }
  func.func @transform_13(%arg0: i32) -> (i32, i32, i32) {
    %c0_i32 = arith.constant 0 : i32
    %c0_i32_0 = arith.constant 0 : i32
    %c0_i32_1 = arith.constant 0 : i32
    %c0_i32_2 = arith.constant 0 : i32
    return %c0_i32, %c0_i32_0, %c0_i32_1 : i32, i32, i32
  }
  func.func @transform_14(%arg0: i32) -> (i32, i32) {
    %c0_i32 = arith.constant 0 : i32
    %c0_i32_0 = arith.constant 0 : i32
    %c0_i32_1 = arith.constant 0 : i32
    return %c0_i32, %c0_i32_0 : i32, i32
  }
  func.func @transform_15(%arg0: i32) -> (i32, i32) {
    %c0_i32 = arith.constant 0 : i32
    %c0_i32_0 = arith.constant 0 : i32
    %c0_i32_1 = arith.constant 0 : i32
    return %c0_i32, %c0_i32_0 : i32, i32
  }
  func.func @transform_16(%arg0: i32) -> (i32, i32) {
    %c0_i32 = arith.constant 0 : i32
    %c0_i32_0 = arith.constant 0 : i32
    %c0_i32_1 = arith.constant 0 : i32
    return %c0_i32, %c0_i32_0 : i32, i32
  }
  func.func @transform_17(%arg0: i32) -> (i32, i32, i32) {
    %c0_i32 = arith.constant 0 : i32
    %c0_i32_0 = arith.constant 0 : i32
    %c0_i32_1 = arith.constant 0 : i32
    return %arg0, %c0_i32, %c0_i32_0 : i32, i32, i32
  }
}

</mosaic_0001>

<llo_original>
// kernel: resnet_gpt2_forward.3
$region0: #{resnet_gpt2_forward.3}
  #allocation0 [shape = 'u32[]', space=smem, size = 0x4, offset = 0x4, fixed_abs, tag = 'smem constant byte address 0x4 - core index']
  #allocation1 [shape = 'u32[144,128]{1,0:T(1,128)}', space=vmem, size = 0x12000, scoped, tag = 'internal scratch']
  %s0 = inlined_call_operand.vmem [shape: f32[2,1,32], index: 0, kind: input, shape index: {}]
  %s1 = inlined_call_operand.vmem [shape: f32[8,32], index: 1, kind: input, shape index: {}]
  %s2 = inlined_call_operand.vmem [shape: f32[2,2,3,32,16], index: 2, kind: input, shape index: {}]
  %s3 = inlined_call_operand.vmem [shape: f32[2,2,3,1,16], index: 3, kind: input, shape index: {}]
  %s4 = inlined_call_operand.vmem [shape: f32[2,32,32], index: 4, kind: input, shape index: {}]
  %s5 = inlined_call_operand.vmem [shape: f32[2,1,32], index: 5, kind: input, shape index: {}]
  %s6 = inlined_call_operand.vmem [shape: f32[2,1,32], index: 6, kind: input, shape index: {}]
  %s7 = inlined_call_operand.vmem [shape: f32[2,1,32], index: 7, kind: input, shape index: {}]
  %s8 = inlined_call_operand.vmem [shape: f32[2,1,32], index: 8, kind: input, shape index: {}]
  %s9 = inlined_call_operand.vmem [shape: f32[2,1,32], index: 9, kind: input, shape index: {}]
  %s10 = inlined_call_operand.vmem [shape: f32[2,32,128], index: 10, kind: input, shape index: {}]
  %s11 = inlined_call_operand.vmem [shape: f32[2,1,128], index: 11, kind: input, shape index: {}]
  %s12 = inlined_call_operand.vmem [shape: f32[2,128,32], index: 12, kind: input, shape index: {}]
  %s13 = inlined_call_operand.vmem [shape: f32[2,1,32], index: 13, kind: input, shape index: {}]
  %s14 = inlined_call_operand.vmem [shape: f32[1,32], index: 14, kind: input, shape index: {}]
  %s15 = inlined_call_operand.vmem [shape: f32[1,32], index: 15, kind: input, shape index: {}]
  %s16 = inlined_call_operand.vmem [shape: f32[32,128], index: 16, kind: input, shape index: {}]
  %s17 = inlined_call_operand.hbm [shape: f32[2,8,128], index: 17, kind: output, shape index: {}]
  %s18 = sld [smem:[#allocation0]]
  $region101: #{resnet_gpt2_forward.3} parent=0
    _
  %s20 = ssub.s32 1, %s18
  %s21 = scalar_select 0, %s20, %s18
  $region1: #{resnet_gpt2_forward.3} parent=0
    #allocation2 [shape = 'u8[8192]{0}', space=vmem, size = 0x2000, scoped, tag = 'output window, operand 0']
    #allocation3 [shape = 's32[2]{0}', space=sflag, size = 0x8, scoped, tag = 'scoped memory for resnet_gpt2_forward.3']
    %22 = vsyncpa [#allocation3], 0
    %s23 = scalar_lea.sflag [#allocation3], 1
    %24 = vsyncpa %s23, 0
    loop: start=0, step=1, limit=4
    $region2: #{resnet_gpt2_forward.3} parent=1 // loop_pre_header
      _
    $region3: #{resnet_gpt2_forward.3} parent=1 // loop_header
      %s26 = sphi 0, %s30
      %p27 = scmp.ge.s32.totalorder %s26, 4
      %s36 = sphi 0, %s38
      %s39 = sphi 0, %s36
      %s40 = sphi 0, %s39
      %s56 = sphi 0, %s40
      %s60 = sphi 0, %s60
      %s62 = sphi 0, %s60
      %s63 = sphi 0, %s62
      %s77 = sphi 0, %s63
      %s81 = sphi 0, %s81
      %s83 = sphi 0, %s81
      %s84 = sphi 0, %s83
      %s98 = sphi 0, %s84
      %s102 = sphi 0, %s102
      %s104 = sphi 0, %s102
      %s105 = sphi 0, %s104
      %s119 = sphi 0, %s105
      %s123 = sphi 0, %s123
      %s125 = sphi 0, %s123
      %s126 = sphi 0, %s125
      %s140 = sphi 0, %s126
      %s144 = sphi 0, %s144
      %s146 = sphi 0, %s144
      %s147 = sphi 0, %s146
      %s161 = sphi 0, %s147
      %s165 = sphi 0, %s165
      %s167 = sphi 0, %s165
      %s168 = sphi 0, %s167
      %s182 = sphi 0, %s168
      %s186 = sphi 0, %s186
      %s188 = sphi 0, %s186
      %s189 = sphi 0, %s188
      %s203 = sphi 0, %s189
      %s207 = sphi 0, %s207
      %s209 = sphi 0, %s207
      %s210 = sphi 0, %s209
      %s224 = sphi 0, %s210
      %s228 = sphi 0, %s228
      %s230 = sphi 0, %s228
      %s231 = sphi 0, %s230
      %s245 = sphi 0, %s231
      %s249 = sphi 0, %s249
      %s251 = sphi 0, %s249
      %s252 = sphi 0, %s251
      %s266 = sphi 0, %s252
      %s270 = sphi 0, %s270
      %s272 = sphi 0, %s270
      %s273 = sphi 0, %s272
      %s287 = sphi 0, %s273
      %s291 = sphi 0, %s291
      %s293 = sphi 0, %s291
      %s294 = sphi 0, %s293
      %s308 = sphi 0, %s294
      %s312 = sphi 0, %s312
      %s314 = sphi 0, %s312
      %s315 = sphi 0, %s314
      %s329 = sphi 0, %s315
      %s333 = sphi 0, %s333
      %s335 = sphi 0, %s333
      %s336 = sphi 0, %s335
      %s350 = sphi 0, %s336
      %s354 = sphi 0, %s354
      %s356 = sphi 0, %s354
      %s357 = sphi 0, %s356
      %s371 = sphi 0, %s357
      %s375 = sphi 0, %s375
      %s377 = sphi 0, %s375
      %s378 = sphi 0, %s377
      %s392 = sphi 0, %s378
      %s398 = sphi 0, %s400
      %s401 = sphi 0, %s398
      %s402 = sphi 0, %s401
      %s418 = sphi 0, %s402
    $region4: #{resnet_gpt2_forward.3} parent=1 // loop_header_branch
      %29 = sbr.rel (%p27) target = $region8
    $region5: #{resnet_gpt2_forward.3} parent=1 // loop_body
      %s31 = ssub.s32 %s26, 1
      %s32 = ssub.s32 %s26, 2
      %s33 = sadd.s32 %s26, 1
      %s34 = ssub.s32 %s26, %s33
      %p35 = scmp.eq.s32.totalorder %s34, 0
      %s37 = sadd.s32 %s36, 1
      %s38 = scalar_select %p35, %s36, %s37
      %p41 = pneg %p35
      %p42 = scmp.eq.s32.totalorder %s26, 1
      %p43 = por %p41, %p42
      %p44 = scmp.ne.s32.totalorder %s36, %s39
      %p45 = scmp.eq.s32.totalorder %s26, 0
      %p46 = por %p44, %p45
      %p47 = scmp.ne.s32.totalorder %s36, %s39
      %p48 = scmp.eq.s32.totalorder %s31, 1
      %p49 = por %p47, %p48
      %p50 = scmp.ne.s32.totalorder %s39, %s40
      %p51 = scmp.eq.s32.totalorder %s31, 0
      %p52 = por %p50, %p51
      %p53 = scmp.ne.s32.totalorder %s39, %s40
      %p54 = scmp.eq.s32.totalorder %s32, 1
      %p55 = por %p53, %p54
      %p57 = scmp.ne.s32.totalorder %s40, %s56
      %p58 = scmp.eq.s32.totalorder %s32, 0
      %p59 = por %p57, %p58
      %s61 = sadd.s32 %s60, 1
      %p64 = scmp.eq.s32.totalorder %s26, 1
      %p65 = scmp.ne.s32.totalorder %s60, %s62
      %p66 = scmp.eq.s32.totalorder %s26, 0
      %p67 = por %p65, %p66
      %p68 = scmp.ne.s32.totalorder %s60, %s62
      %p69 = scmp.eq.s32.totalorder %s31, 1
      %p70 = por %p68, %p69
      %p71 = scmp.ne.s32.totalorder %s62, %s63
      %p72 = scmp.eq.s32.totalorder %s31, 0
      %p73 = por %p71, %p72
      %p74 = scmp.ne.s32.totalorder %s62, %s63
      %p75 = scmp.eq.s32.totalorder %s32, 1
      %p76 = por %p74, %p75
      %p78 = scmp.ne.s32.totalorder %s63, %s77
      %p79 = scmp.eq.s32.totalorder %s32, 0
      %p80 = por %p78, %p79
      %s82 = sadd.s32 %s81, 1
      %p85 = scmp.eq.s32.totalorder %s26, 1
      %p86 = scmp.ne.s32.totalorder %s81, %s83
      %p87 = scmp.eq.s32.totalorder %s26, 0
      %p88 = por %p86, %p87
      %p89 = scmp.ne.s32.totalorder %s81, %s83
      %p90 = scmp.eq.s32.totalorder %s31, 1
      %p91 = por %p89, %p90
      %p92 = scmp.ne.s32.totalorder %s83, %s84
      %p93 = scmp.eq.s32.totalorder %s31, 0
      %p94 = por %p92, %p93
      %p95 = scmp.ne.s32.totalorder %s83, %s84
      %p96 = scmp.eq.s32.totalorder %s32, 1
      %p97 = por %p95, %p96
      %p99 = scmp.ne.s32.totalorder %s84, %s98
      %p100 = scmp.eq.s32.totalorder %s32, 0
      %p101 = por %p99, %p100
      %s103 = sadd.s32 %s102, 1
      %p106 = scmp.eq.s32.totalorder %s26, 1
      %p107 = scmp.ne.s32.totalorder %s102, %s104
      %p108 = scmp.eq.s32.totalorder %s26, 0
      %p109 = por %p107, %p108
      %p110 = scmp.ne.s32.totalorder %s102, %s104
      %p111 = scmp.eq.s32.totalorder %s31, 1
      %p112 = por %p110, %p111
      %p113 = scmp.ne.s32.totalorder %s104, %s105
      %p114 = scmp.eq.s32.totalorder %s31, 0
      %p115 = por %p113, %p114
      %p116 = scmp.ne.s32.totalorder %s104, %s105
      %p117 = scmp.eq.s32.totalorder %s32, 1
      %p118 = por %p116, %p117
      %p120 = scmp.ne.s32.totalorder %s105, %s119
      %p121 = scmp.eq.s32.totalorder %s32, 0
      %p122 = por %p120, %p121
      %s124 = sadd.s32 %s123, 1
      %p127 = scmp.eq.s32.totalorder %s26, 1
      %p128 = scmp.ne.s32.totalorder %s123, %s125
      %p129 = scmp.eq.s32.totalorder %s26, 0
      %p130 = por %p128, %p129
      %p131 = scmp.ne.s32.totalorder %s123, %s125
      %p132 = scmp.eq.s32.totalorder %s31, 1
      %p133 = por %p131, %p132
      %p134 = scmp.ne.s32.totalorder %s125, %s126
      %p135 = scmp.eq.s32.totalorder %s31, 0
      %p136 = por %p134, %p135
      %p137 = scmp.ne.s32.totalorder %s125, %s126
      %p138 = scmp.eq.s32.totalorder %s32, 1
      %p139 = por %p137, %p138
      %p141 = scmp.ne.s32.totalorder %s126, %s140
      %p142 = scmp.eq.s32.totalorder %s32, 0
      %p143 = por %p141, %p142
      %s145 = sadd.s32 %s144, 1
      %p148 = scmp.eq.s32.totalorder %s26, 1
      %p149 = scmp.ne.s32.totalorder %s144, %s146
      %p150 = scmp.eq.s32.totalorder %s26, 0
      %p151 = por %p149, %p150
      %p152 = scmp.ne.s32.totalorder %s144, %s146
      %p153 = scmp.eq.s32.totalorder %s31, 1
      %p154 = por %p152, %p153
      %p155 = scmp.ne.s32.totalorder %s146, %s147
      %p156 = scmp.eq.s32.totalorder %s31, 0
      %p157 = por %p155, %p156
      %p158 = scmp.ne.s32.totalorder %s146, %s147
      %p159 = scmp.eq.s32.totalorder %s32, 1
      %p160 = por %p158, %p159
      %p162 = scmp.ne.s32.totalorder %s147, %s161
      %p163 = scmp.eq.s32.totalorder %s32, 0
      %p164 = por %p162, %p163
      %s166 = sadd.s32 %s165, 1
      %p169 = scmp.eq.s32.totalorder %s26, 1
      %p170 = scmp.ne.s32.totalorder %s165, %s167
      %p171 = scmp.eq.s32.totalorder %s26, 0
      %p172 = por %p170, %p171
      %p173 = scmp.ne.s32.totalorder %s165, %s167
      %p174 = scmp.eq.s32.totalorder %s31, 1
      %p175 = por %p173, %p174
      %p176 = scmp.ne.s32.totalorder %s167, %s168
      %p177 = scmp.eq.s32.totalorder %s31, 0
      %p178 = por %p176, %p177
      %p179 = scmp.ne.s32.totalorder %s167, %s168
      %p180 = scmp.eq.s32.totalorder %s32, 1
      %p181 = por %p179, %p180
      %p183 = scmp.ne.s32.totalorder %s168, %s182
      %p184 = scmp.eq.s32.totalorder %s32, 0
      %p185 = por %p183, %p184
      %s187 = sadd.s32 %s186, 1
      %p190 = scmp.eq.s32.totalorder %s26, 1
      %p191 = scmp.ne.s32.totalorder %s186, %s188
      %p192 = scmp.eq.s32.totalorder %s26, 0
      %p193 = por %p191, %p192
      %p194 = scmp.ne.s32.totalorder %s186, %s188
      %p195 = scmp.eq.s32.totalorder %s31, 1
      %p196 = por %p194, %p195
      %p197 = scmp.ne.s32.totalorder %s188, %s189
      %p198 = scmp.eq.s32.totalorder %s31, 0
      %p199 = por %p197, %p198
      %p200 = scmp.ne.s32.totalorder %s188, %s189
      %p201 = scmp.eq.s32.totalorder %s32, 1
      %p202 = por %p200, %p201
      %p204 = scmp.ne.s32.totalorder %s189, %s203
      %p205 = scmp.eq.s32.totalorder %s32, 0
      %p206 = por %p204, %p205
      %s208 = sadd.s32 %s207, 1
      %p211 = scmp.eq.s32.totalorder %s26, 1
      %p212 = scmp.ne.s32.totalorder %s207, %s209
      %p213 = scmp.eq.s32.totalorder %s26, 0
      %p214 = por %p212, %p213
      %p215 = scmp.ne.s32.totalorder %s207, %s209
      %p216 = scmp.eq.s32.totalorder %s31, 1
      %p217 = por %p215, %p216
      %p218 = scmp.ne.s32.totalorder %s209, %s210
      %p219 = scmp.eq.s32.totalorder %s31, 0
      %p220 = por %p218, %p219
      %p221 = scmp.ne.s32.totalorder %s209, %s210
      %p222 = scmp.eq.s32.totalorder %s32, 1
      %p223 = por %p221, %p222
      %p225 = scmp.ne.s32.totalorder %s210, %s224
      %p226 = scmp.eq.s32.totalorder %s32, 0
      %p227 = por %p225, %p226
      %s229 = sadd.s32 %s228, 1
      %p232 = scmp.eq.s32.totalorder %s26, 1
      %p233 = scmp.ne.s32.totalorder %s228, %s230
      %p234 = scmp.eq.s32.totalorder %s26, 0
      %p235 = por %p233, %p234
      %p236 = scmp.ne.s32.totalorder %s228, %s230
      %p237 = scmp.eq.s32.totalorder %s31, 1
      %p238 = por %p236, %p237
      %p239 = scmp.ne.s32.totalorder %s230, %s231
      %p240 = scmp.eq.s32.totalorder %s31, 0
      %p241 = por %p239, %p240
      %p242 = scmp.ne.s32.totalorder %s230, %s231
      %p243 = scmp.eq.s32.totalorder %s32, 1
      %p244 = por %p242, %p243
      %p246 = scmp.ne.s32.totalorder %s231, %s245
      %p247 = scmp.eq.s32.totalorder %s32, 0
      %p248 = por %p246, %p247
      %s250 = sadd.s32 %s249, 1
      %p253 = scmp.eq.s32.totalorder %s26, 1
      %p254 = scmp.ne.s32.totalorder %s249, %s251
      %p255 = scmp.eq.s32.totalorder %s26, 0
      %p256 = por %p254, %p255
      %p257 = scmp.ne.s32.totalorder %s249, %s251
      %p258 = scmp.eq.s32.totalorder %s31, 1
      %p259 = por %p257, %p258
      %p260 = scmp.ne.s32.totalorder %s251, %s252
      %p261 = scmp.eq.s32.totalorder %s31, 0
      %p262 = por %p260, %p261
      %p263 = scmp.ne.s32.totalorder %s251, %s252
      %p264 = scmp.eq.s32.totalorder %s32, 1
      %p265 = por %p263, %p264
      %p267 = scmp.ne.s32.totalorder %s252, %s266
      %p268 = scmp.eq.s32.totalorder %s32, 0
      %p269 = por %p267, %p268
      %s271 = sadd.s32 %s270, 1
      %p274 = scmp.eq.s32.totalorder %s26, 1
      %p275 = scmp.ne.s32.totalorder %s270, %s272
      %p276 = scmp.eq.s32.totalorder %s26, 0
      %p277 = por %p275, %p276
      %p278 = scmp.ne.s32.totalorder %s270, %s272
      %p279 = scmp.eq.s32.totalorder %s31, 1
      %p280 = por %p278, %p279
      %p281 = scmp.ne.s32.totalorder %s272, %s273
      %p282 = scmp.eq.s32.totalorder %s31, 0
      %p283 = por %p281, %p282
      %p284 = scmp.ne.s32.totalorder %s272, %s273
      %p285 = scmp.eq.s32.totalorder %s32, 1
      %p286 = por %p284, %p285
      %p288 = scmp.ne.s32.totalorder %s273, %s287
      %p289 = scmp.eq.s32.totalorder %s32, 0
      %p290 = por %p288, %p289
      %s292 = sadd.s32 %s291, 1
      %p295 = scmp.eq.s32.totalorder %s26, 1
      %p296 = scmp.ne.s32.totalorder %s291, %s293
      %p297 = scmp.eq.s32.totalorder %s26, 0
      %p298 = por %p296, %p297
      %p299 = scmp.ne.s32.totalorder %s291, %s293
      %p300 = scmp.eq.s32.totalorder %s31, 1
      %p301 = por %p299, %p300
      %p302 = scmp.ne.s32.totalorder %s293, %s294
      %p303 = scmp.eq.s32.totalorder %s31, 0
      %p304 = por %p302, %p303
      %p305 = scmp.ne.s32.totalorder %s293, %s294
      %p306 = scmp.eq.s32.totalorder %s32, 1
      %p307 = por %p305, %p306
      %p309 = scmp.ne.s32.totalorder %s294, %s308
      %p310 = scmp.eq.s32.totalorder %s32, 0
      %p311 = por %p309, %p310
      %s313 = sadd.s32 %s312, 1
      %p316 = scmp.eq.s32.totalorder %s26, 1
      %p317 = scmp.ne.s32.totalorder %s312, %s314
      %p318 = scmp.eq.s32.totalorder %s26, 0
      %p319 = por %p317, %p318
      %p320 = scmp.ne.s32.totalorder %s312, %s314
      %p321 = scmp.eq.s32.totalorder %s31, 1
      %p322 = por %p320, %p321
      %p323 = scmp.ne.s32.totalorder %s314, %s315
      %p324 = scmp.eq.s32.totalorder %s31, 0
      %p325 = por %p323, %p324
      %p326 = scmp.ne.s32.totalorder %s314, %s315
      %p327 = scmp.eq.s32.totalorder %s32, 1
      %p328 = por %p326, %p327
      %p330 = scmp.ne.s32.totalorder %s315, %s329
      %p331 = scmp.eq.s32.totalorder %s32, 0
      %p332 = por %p330, %p331
      %s334 = sadd.s32 %s333, 1
      %p337 = scmp.eq.s32.totalorder %s26, 1
      %p338 = scmp.ne.s32.totalorder %s333, %s335
      %p339 = scmp.eq.s32.totalorder %s26, 0
      %p340 = por %p338, %p339
      %p341 = scmp.ne.s32.totalorder %s333, %s335
      %p342 = scmp.eq.s32.totalorder %s31, 1
      %p343 = por %p341, %p342
      %p344 = scmp.ne.s32.totalorder %s335, %s336
      %p345 = scmp.eq.s32.totalorder %s31, 0
      %p346 = por %p344, %p345
      %p347 = scmp.ne.s32.totalorder %s335, %s336
      %p348 = scmp.eq.s32.totalorder %s32, 1
      %p349 = por %p347, %p348
      %p351 = scmp.ne.s32.totalorder %s336, %s350
      %p352 = scmp.eq.s32.totalorder %s32, 0
      %p353 = por %p351, %p352
      %s355 = sadd.s32 %s354, 1
      %p358 = scmp.eq.s32.totalorder %s26, 1
      %p359 = scmp.ne.s32.totalorder %s354, %s356
      %p360 = scmp.eq.s32.totalorder %s26, 0
      %p361 = por %p359, %p360
      %p362 = scmp.ne.s32.totalorder %s354, %s356
      %p363 = scmp.eq.s32.totalorder %s31, 1
      %p364 = por %p362, %p363
      %p365 = scmp.ne.s32.totalorder %s356, %s357
      %p366 = scmp.eq.s32.totalorder %s31, 0
      %p367 = por %p365, %p366
      %p368 = scmp.ne.s32.totalorder %s356, %s357
      %p369 = scmp.eq.s32.totalorder %s32, 1
      %p370 = por %p368, %p369
      %p372 = scmp.ne.s32.totalorder %s357, %s371
      %p373 = scmp.eq.s32.totalorder %s32, 0
      %p374 = por %p372, %p373
      %s376 = sadd.s32 %s375, 1
      %p379 = scmp.eq.s32.totalorder %s26, 1
      %p380 = scmp.ne.s32.totalorder %s375, %s377
      %p381 = scmp.eq.s32.totalorder %s26, 0
      %p382 = por %p380, %p381
      %p383 = scmp.ne.s32.totalorder %s375, %s377
      %p384 = scmp.eq.s32.totalorder %s31, 1
      %p385 = por %p383, %p384
      %p386 = scmp.ne.s32.totalorder %s377, %s378
      %p387 = scmp.eq.s32.totalorder %s31, 0
      %p388 = por %p386, %p387
      %p389 = scmp.ne.s32.totalorder %s377, %s378
      %p390 = scmp.eq.s32.totalorder %s32, 1
      %p391 = por %p389, %p390
      %p393 = scmp.ne.s32.totalorder %s378, %s392
      %p394 = scmp.eq.s32.totalorder %s32, 0
      %p395 = por %p393, %p394
      %s396 = ssub.s32 %s26, %s33
      %p397 = scmp.eq.s32.totalorder %s396, 0
      %s399 = sadd.s32 %s398, 1
      %s400 = scalar_select %p397, %s398, %s399
      %p403 = pneg %p397
      %p404 = scmp.eq.s32.totalorder %s26, 1
      %p405 = por %p403, %p404
      %p406 = scmp.ne.s32.totalorder %s398, %s401
      %p407 = scmp.eq.s32.totalorder %s26, 0
      %p408 = por %p406, %p407
      %p409 = scmp.ne.s32.totalorder %s398, %s401
      %p410 = scmp.eq.s32.totalorder %s31, 1
      %p411 = por %p409, %p410
      %p412 = scmp.ne.s32.totalorder %s401, %s402
      %p413 = scmp.eq.s32.totalorder %s31, 0
      %p414 = por %p412, %p413
      %p415 = scmp.ne.s32.totalorder %s401, %s402
      %p416 = scmp.eq.s32.totalorder %s32, 1
      %p417 = por %p415, %p416
      %p419 = scmp.ne.s32.totalorder %s402, %s418
      %p420 = scmp.eq.s32.totalorder %s32, 0
      %p421 = por %p419, %p420
      %p422 = scmp.le.s32.totalorder 1, %s26
      %p423 = scmp.lt.s32.totalorder %s26, 3
      %p424 = pnand %p422, %p423
      %p425 = pneg %p424
      // Predicated region
      $region9: #{resnet_gpt2_forward.3} parent=5 // pred_check
        _
      $region10: #{resnet_gpt2_forward.3} parent=5 // pred_check_branch
        %427 = sbr.rel (%p424) target = $region12
      $region11: #{resnet_gpt2_forward.3} parent=5 // pred_region
        %s428 = ssub.s32 %s26, 1
        // Predicated region
        $region13: #{resnet_gpt2_forward.3} parent=11 // pred_check
          %p429 = pneg %p73
        $region14: #{resnet_gpt2_forward.3} parent=11 // pred_check_branch
          %431 = sbr.rel (%p429) target = $region16
        $region15: #{resnet_gpt2_forward.3} parent=11 // pred_region
          _
        $region16: #{resnet_gpt2_forward.3} parent=11 // pred_fallthru
          _
        // Predicated region
        $region17: #{resnet_gpt2_forward.3} parent=11 // pred_check
          %p432 = pneg %p94
        $region18: #{resnet_gpt2_forward.3} parent=11 // pred_check_branch
          %434 = sbr.rel (%p432) target = $region20
        $region19: #{resnet_gpt2_forward.3} parent=11 // pred_region
          _
        $region20: #{resnet_gpt2_forward.3} parent=11 // pred_fallthru
          _
        // Predicated region
        $region21: #{resnet_gpt2_forward.3} parent=11 // pred_check
          %p435 = pneg %p115
        $region22: #{resnet_gpt2_forward.3} parent=11 // pred_check_branch
          %437 = sbr.rel (%p435) target = $region24
        $region23: #{resnet_gpt2_forward.3} parent=11 // pred_region
          _
        $region24: #{resnet_gpt2_forward.3} parent=11 // pred_fallthru
          _
        // Predicated region
        $region25: #{resnet_gpt2_forward.3} parent=11 // pred_check
          %p438 = pneg %p136
        $region26: #{resnet_gpt2_forward.3} parent=11 // pred_check_branch
          %440 = sbr.rel (%p438) target = $region28
        $region27: #{resnet_gpt2_forward.3} parent=11 // pred_region
          _
        $region28: #{resnet_gpt2_forward.3} parent=11 // pred_fallthru
          _
        // Predicated region
        $region29: #{resnet_gpt2_forward.3} parent=11 // pred_check
          %p441 = pneg %p157
        $region30: #{resnet_gpt2_forward.3} parent=11 // pred_check_branch
          %443 = sbr.rel (%p441) target = $region32
        $region31: #{resnet_gpt2_forward.3} parent=11 // pred_region
          _
        $region32: #{resnet_gpt2_forward.3} parent=11 // pred_fallthru
          _
        // Predicated region
        $region33: #{resnet_gpt2_forward.3} parent=11 // pred_check
          %p444 = pneg %p178
        $region34: #{resnet_gpt2_forward.3} parent=11 // pred_check_branch
          %446 = sbr.rel (%p444) target = $region36
        $region35: #{resnet_gpt2_forward.3} parent=11 // pred_region
          _
        $region36: #{resnet_gpt2_forward.3} parent=11 // pred_fallthru
          _
        // Predicated region
        $region37: #{resnet_gpt2_forward.3} parent=11 // pred_check
          %p447 = pneg %p199
        $region38: #{resnet_gpt2_forward.3} parent=11 // pred_check_branch
          %449 = sbr.rel (%p447) target = $region40
        $region39: #{resnet_gpt2_forward.3} parent=11 // pred_region
          _
        $region40: #{resnet_gpt2_forward.3} parent=11 // pred_fallthru
          _
        // Predicated region
        $region41: #{resnet_gpt2_forward.3} parent=11 // pred_check
          %p450 = pneg %p220
        $region42: #{resnet_gpt2_forward.3} parent=11 // pred_check_branch
          %452 = sbr.rel (%p450) target = $region44
        $region43: #{resnet_gpt2_forward.3} parent=11 // pred_region
          _
        $region44: #{resnet_gpt2_forward.3} parent=11 // pred_fallthru
          _
        // Predicated region
        $region45: #{resnet_gpt2_forward.3} parent=11 // pred_check
          %p453 = pneg %p241
        $region46: #{resnet_gpt2_forward.3} parent=11 // pred_check_branch
          %455 = sbr.rel (%p453) target = $region48
        $region47: #{resnet_gpt2_forward.3} parent=11 // pred_region
          _
        $region48: #{resnet_gpt2_forward.3} parent=11 // pred_fallthru
          _
        // Predicated region
        $region49: #{resnet_gpt2_forward.3} parent=11 // pred_check
          %p456 = pneg %p262
        $region50: #{resnet_gpt2_forward.3} parent=11 // pred_check_branch
          %458 = sbr.rel (%p456) target = $region52
        $region51: #{resnet_gpt2_forward.3} parent=11 // pred_region
          _
        $region52: #{resnet_gpt2_forward.3} parent=11 // pred_fallthru
          _
        // Predicated region
        $region53: #{resnet_gpt2_forward.3} parent=11 // pred_check
          %p459 = pneg %p283
        $region54: #{resnet_gpt2_forward.3} parent=11 // pred_check_branch
          %461 = sbr.rel (%p459) target = $region56
        $region55: #{resnet_gpt2_forward.3} parent=11 // pred_region
          _
        $region56: #{resnet_gpt2_forward.3} parent=11 // pred_fallthru
          _
        // Predicated region
        $region57: #{resnet_gpt2_forward.3} parent=11 // pred_check
          %p462 = pneg %p304
        $region58: #{resnet_gpt2_forward.3} parent=11 // pred_check_branch
          %464 = sbr.rel (%p462) target = $region60
        $region59: #{resnet_gpt2_forward.3} parent=11 // pred_region
          _
        $region60: #{resnet_gpt2_forward.3} parent=11 // pred_fallthru
          _
        // Predicated region
        $region61: #{resnet_gpt2_forward.3} parent=11 // pred_check
          %p465 = pneg %p325
        $region62: #{resnet_gpt2_forward.3} parent=11 // pred_check_branch
          %467 = sbr.rel (%p465) target = $region64
        $region63: #{resnet_gpt2_forward.3} parent=11 // pred_region
          _
        $region64: #{resnet_gpt2_forward.3} parent=11 // pred_fallthru
          _
        // Predicated region
        $region65: #{resnet_gpt2_forward.3} parent=11 // pred_check
          %p468 = pneg %p346
        $region66: #{resnet_gpt2_forward.3} parent=11 // pred_check_branch
          %470 = sbr.rel (%p468) target = $region68
        $region67: #{resnet_gpt2_forward.3} parent=11 // pred_region
          _
        $region68: #{resnet_gpt2_forward.3} parent=11 // pred_fallthru
          _
        // Predicated region
        $region69: #{resnet_gpt2_forward.3} parent=11 // pred_check
          %p471 = pneg %p367
        $region70: #{resnet_gpt2_forward.3} parent=11 // pred_check_branch
          %473 = sbr.rel (%p471) target = $region72
        $region71: #{resnet_gpt2_forward.3} parent=11 // pred_region
          _
        $region72: #{resnet_gpt2_forward.3} parent=11 // pred_fallthru
          _
        // Predicated region
        $region73: #{resnet_gpt2_forward.3} parent=11 // pred_check
          %p474 = pneg %p388
        $region74: #{resnet_gpt2_forward.3} parent=11 // pred_check_branch
          %476 = sbr.rel (%p474) target = $region76
        $region75: #{resnet_gpt2_forward.3} parent=11 // pred_region
          _
        $region76: #{resnet_gpt2_forward.3} parent=11 // pred_fallthru
          _
      $region12: #{resnet_gpt2_forward.3} parent=5 // pred_fallthru
        _
      %p477 = scmp.lt.s32.totalorder %s26, 2
      // Predicated region
      $region77: #{resnet_gpt2_forward.3} parent=5 // pred_check
        %p478 = pneg %p477
      $region78: #{resnet_gpt2_forward.3} parent=5 // pred_check_branch
        %480 = sbr.rel (%p478) target = $region80
      $region79: #{resnet_gpt2_forward.3} parent=5 // pred_region
        // Predicated region
        $region81: #{resnet_gpt2_forward.3} parent=79 // pred_check
          %p481 = pneg %p46
        $region82: #{resnet_gpt2_forward.3} parent=79 // pred_check_branch
          %483 = sbr.rel (%p481) target = $region84
        $region83: #{resnet_gpt2_forward.3} parent=79 // pred_region
          %p484 = scmp.lt.s32.totalorder %s26, 1
          %s485 = scalar_select %p484, %s26, 1
          %s486 = scalar_lea.vmem %s0, %s485
        $region84: #{resnet_gpt2_forward.3} parent=79 // pred_fallthru
          _
      $region80: #{resnet_gpt2_forward.3} parent=5 // pred_fallthru
        _
      %p487 = scmp.le.s32.totalorder 1, %s26
      %p488 = scmp.lt.s32.totalorder %s26, 3
      %p489 = pnand %p487, %p488
      %p490 = pneg %p489
      // Predicated region
      $region85: #{resnet_gpt2_forward.3} parent=5 // pred_check
        _
      $region86: #{resnet_gpt2_forward.3} parent=5 // pred_check_branch
        %492 = sbr.rel (%p489) target = $region88
      $region87: #{resnet_gpt2_forward.3} parent=5 // pred_region
        %s493 = ssub.s32 %s26, 1
        %p494 = scmp.lt.s32.totalorder %s31, 1
        %s495 = scalar_select %p494, %s31, 1
        %s496 = scalar_lea.vmem %s0, %s495
        %p497 = pneg %p52
        %p498 = pneg %p49
        %p499 = pneg %p73
        %p500 = pneg %p70
        %p501 = pneg %p94
        %p502 = pneg %p91
        %p503 = pneg %p115
        %p504 = pneg %p112
        %p505 = pneg %p136
        %p506 = pneg %p133
        %p507 = pneg %p157
        %p508 = pneg %p154
        %p509 = pneg %p178
        %p510 = pneg %p175
        %p511 = pneg %p199
        %p512 = pneg %p196
        %p513 = pneg %p220
        %p514 = pneg %p217
        %p515 = pneg %p241
        %p516 = pneg %p238
        %p517 = pneg %p262
        %p518 = pneg %p259
        %p519 = pneg %p283
        %p520 = pneg %p280
        %p521 = pneg %p304
        %p522 = pneg %p301
        %p523 = pneg %p325
        %p524 = pneg %p322
        %p525 = pneg %p346
        %p526 = pneg %p343
        %p527 = pneg %p367
        %p528 = pneg %p364
        %p529 = pneg %p388
        %p530 = pneg %p385
        %p531 = pneg %p414
        %p532 = pneg %p411
        %s533 = sand.u32 %s401, 1
        %s534 = scalar_lea.sflag [#allocation3], %s533
        %s535 = sand.u32 %s401, 1
        %s536 = smul.addr %s535, 8
        %s537 = scalar_lea.vmem [#allocation2], %s536
        %p538 = scmp.lt.s32.totalorder %s31, 1
        %s539 = scalar_select %p538, %s31, 1
        %s540 = scalar_lea.vmem %s0, %s539
        %v542 = vld [vmem:[%s540] sm:$0x1]
        %v543 = vld [vmem:[%s1] sm:$0xff]
        %v545 = vlaneseq
        %v546 = vshrl.u32 %v545, 7
        %v547 = vsub.s32 0, %v546
        %v548 = vrot.slane %v542, %v547
        %v550 = vadd.f32 %v548, %v543
        %v551 = vlaneseq
        %v552 = vshrl.u32 %v551, 7
        %v553 = vlaneseq
        %v554 = vand.u32 %v553, 127
        %vm555 = vcmp.le.s32.totalorder %v554, %v552
        %v556 = vld [vmem:[%s6] sm:$0x1]
        %v557 = vld [vmem:[%s7] sm:$0x1]
        %vm558 = vcmask 261120
        %v559 = vsel %vm558, %v550, 0.0
        %560 = vadd.xlane.f32.xlu0 %v559
        %v561 = vpop.xlane.xlu0 %560
        %v562 = vrcp.pop 32.0
        %v563 = vmul.f32 %v561, %v562
        %v564 = vsub.f32 %v550, %v563
        %v565 = vmul.f32 %v564, %v564
        %v566 = vsel %vm558, %v565, 0.0
        %567 = vadd.xlane.f32.xlu0 %v566
        %v568 = vpop.xlane.xlu0 %567
        %v569 = vmul.f32 %v568, %v562
        %v570 = vadd.f32 %v569, 1e-05
        %v571 = vrsqrt.pop %v570
        %v572 = vmul.f32 %v564, %v571
        %v574 = vlaneseq
        %v575 = vshrl.u32 %v574, 7
        %v576 = vsub.s32 0, %v575
        %v577 = vrot.slane %v556, %v576
        %v579 = vmul.f32 %v572, %v577
        %v581 = vlaneseq
        %v582 = vshrl.u32 %v581, 7
        %v583 = vsub.s32 0, %v582
        %v584 = vrot.slane %v557, %v583
        %v586 = vadd.f32 %v579, %v584
        %v587 = vld [vmem:[%s2] sm:$0xff]
        %v588 = vld [vmem:[%s2 + $0x8] sm:$0xff]
        %v589 = vld [vmem:[%s2 + $0x10] sm:$0xff]
        %v590 = vld [vmem:[%s2 + $0x18] sm:$0xff]
        %v591 = vld [vmem:[%s2 + $0x20] sm:$0xff]
        %v592 = vld [vmem:[%s2 + $0x28] sm:$0xff]
        %v593 = vld [vmem:[%s2 + $0x30] sm:$0xff]
        %v594 = vld [vmem:[%s2 + $0x38] sm:$0xff]
        %v595 = vld [vmem:[%s2 + $0x40] sm:$0xff]
        %v596 = vld [vmem:[%s2 + $0x48] sm:$0xff]
        %v597 = vld [vmem:[%s2 + $0x50] sm:$0xff]
        %v598 = vld [vmem:[%s2 + $0x58] sm:$0xff]
        %v599 = vld [vmem:[%s2 + $0x60] sm:$0xff]
        %v600 = vld [vmem:[%s2 + $0x68] sm:$0xff]
        %v601 = vld [vmem:[%s2 + $0x70] sm:$0xff]
        %v602 = vld [vmem:[%s2 + $0x78] sm:$0xff]
        %v603 = vld [vmem:[%s2 + $0x80] sm:$0xff]
        %v604 = vld [vmem:[%s2 + $0x88] sm:$0xff]
        %v605 = vld [vmem:[%s2 + $0x90] sm:$0xff]
        %v606 = vld [vmem:[%s2 + $0x98] sm:$0xff]
        %v607 = vld [vmem:[%s2 + $0xa0] sm:$0xff]
        %v608 = vld [vmem:[%s2 + $0xa8] sm:$0xff]
        %v609 = vld [vmem:[%s2 + $0xb0] sm:$0xff]
        %v610 = vld [vmem:[%s2 + $0xb8] sm:$0xff]
        %v611 = vld [vmem:[%s3] sm:$0x1]
        %v612 = vld [vmem:[%s3 + $0x1] sm:$0x1]
        %v613 = vld [vmem:[%s3 + $0x2] sm:$0x1]
        %v614 = vld [vmem:[%s3 + $0x3] sm:$0x1]
        %v615 = vld [vmem:[%s3 + $0x4] sm:$0x1]
        %v616 = vld [vmem:[%s3 + $0x5] sm:$0x1]
        %v617 = vld [vmem:[%s4] sm:$0xff]
        %v618 = vld [vmem:[%s4 + $0x8] sm:$0xff]
        %v619 = vld [vmem:[%s4 + $0x10] sm:$0xff]
        %v620 = vld [vmem:[%s4 + $0x18] sm:$0xff]
        %v621 = vpack.c.bf16 %v586, %v586
        %v622 = vpack.c.bf16 %v588, %v587
        %v623 = vpack.c.bf16 %v590, %v589
        %v625 = vlaneseq
        %v626 = vshrl.u32 %v625, 7
        %v627 = vsub.s32 0, %v626
        %v628 = vrot.slane %v611, %v627
        %v631 = vsel %vm558, %v621, 0
        %633 = vmatprep.subr.bf16.mxu0 0
        %634 = vmatpush1.bf16.msra.mxu0 %v622
        %635 = vmatprep.subr.bf16.mxu0 0
        %636 = vmatpush1.bf16.msra.mxu0 %v623
        %637 = vmatprep.subr.bf16.mxu0 0
        %638 = vmatpush1.bf16.msra.mxu0 0
        %639 = vmatprep.subr.bf16.mxu0 0
        %640 = vmatpush1.bf16.msra.mxu0 0
        %641 = vmatprep.subr.bf16.mxu0 0
        %642 = vmatpush1.bf16.msra.mxu0 0
        %643 = vmatprep.subr.bf16.mxu0 0
        %644 = vmatpush1.bf16.msra.mxu0 0
        %645 = vmatprep.subr.bf16.mxu0 0
        %646 = vmatpush1.bf16.msra.mxu0 0
        %647 = vmatprep.subr.bf16.mxu0 0
        %648 = vmatpush1.bf16.msra.mxu0 0
        %649 = vmatprep.subr.bf16.mxu0 0
        %650 = vmatpush1.bf16.msra.mxu0 0
        %651 = vmatprep.subr.bf16.mxu0 0
        %652 = vmatpush1.bf16.msra.mxu0 0
        %653 = vmatprep.subr.bf16.mxu0 0
        %654 = vmatpush1.bf16.msra.mxu0 0
        %655 = vmatprep.subr.bf16.mxu0 0
        %656 = vmatpush1.bf16.msra.mxu0 0
        %657 = vmatprep.subr.bf16.mxu0 0
        %658 = vmatpush1.bf16.msra.mxu0 0
        %659 = vmatprep.subr.bf16.mxu0 0
        %660 = vmatpush1.bf16.msra.mxu0 0
        %661 = vmatprep.subr.bf16.mxu0 0
        %662 = vmatpush1.bf16.msra.mxu0 0
        %663 = vmatprep.subr.bf16.mxu0 0
        %664 = vmatpush1.bf16.msra.mxu0 0
        %665 = vmatprep.mubr.bf16.mxu0 0
        %666 = vmatmul.mubr.bf16.gmra.mrb[0].mxu0 %v631
        %v667 = vpop.f32.mrb[0].mxu0
        %v668 = vadd.f32 %v628, %v667
        %v669 = vpop.f32.mrb[0].mxu0
        %v670 = vpop.f32.mrb[0].mxu0
        %v671 = vpop.f32.mrb[0].mxu0
        %672 = vdwg.mxu0
        %v673 = vpack.c.bf16 %v592, %v591
        %v674 = vpack.c.bf16 %v594, %v593
        %v676 = vlaneseq
        %v677 = vshrl.u32 %v676, 7
        %v678 = vsub.s32 0, %v677
        %v679 = vrot.slane %v612, %v678
        %681 = vmatprep.subr.bf16.mxu0 0
        %682 = vmatpush1.bf16.msra.mxu0 %v673
        %683 = vmatprep.subr.bf16.mxu0 0
        %684 = vmatpush1.bf16.msra.mxu0 %v674
        %685 = vmatprep.subr.bf16.mxu0 0
        %686 = vmatpush1.bf16.msra.mxu0 0
        %687 = vmatprep.subr.bf16.mxu0 0
        %688 = vmatpush1.bf16.msra.mxu0 0
        %689 = vmatprep.subr.bf16.mxu0 0
        %690 = vmatpush1.bf16.msra.mxu0 0
        %691 = vmatprep.subr.bf16.mxu0 0
        %692 = vmatpush1.bf16.msra.mxu0 0
        %693 = vmatprep.subr.bf16.mxu0 0
        %694 = vmatpush1.bf16.msra.mxu0 0
        %695 = vmatprep.subr.bf16.mxu0 0
        %696 = vmatpush1.bf16.msra.mxu0 0
        %697 = vmatprep.subr.bf16.mxu0 0
        %698 = vmatpush1.bf16.msra.mxu0 0
        %699 = vmatprep.subr.bf16.mxu0 0
        %700 = vmatpush1.bf16.msra.mxu0 0
        %701 = vmatprep.subr.bf16.mxu0 0
        %702 = vmatpush1.bf16.msra.mxu0 0
        %703 = vmatprep.subr.bf16.mxu0 0
        %704 = vmatpush1.bf16.msra.mxu0 0
        %705 = vmatprep.subr.bf16.mxu0 0
        %706 = vmatpush1.bf16.msra.mxu0 0
        %707 = vmatprep.subr.bf16.mxu0 0
        %708 = vmatpush1.bf16.msra.mxu0 0
        %709 = vmatprep.subr.bf16.mxu0 0
        %710 = vmatpush1.bf16.msra.mxu0 0
        %711 = vmatprep.subr.bf16.mxu0 0
        %712 = vmatpush1.bf16.msra.mxu0 0
        %713 = vmatprep.mubr.bf16.mxu0 0
        %714 = vmatmul.mubr.bf16.gmra.mrb[0].mxu0 %v631
        %v715 = vpop.f32.mrb[0].mxu0
        %v716 = vadd.f32 %v679, %v715
        %v717 = vpop.f32.mrb[0].mxu0
        %v718 = vpop.f32.mrb[0].mxu0
        %v719 = vpop.f32.mrb[0].mxu0
        %720 = vdwg.mxu0
        %v721 = vpack.c.bf16 %v596, %v595
        %v722 = vpack.c.bf16 %v598, %v597
        %v724 = vlaneseq
        %v725 = vshrl.u32 %v724, 7
        %v726 = vsub.s32 0, %v725
        %v727 = vrot.slane %v613, %v726
        %729 = vmatprep.subr.bf16.mxu0 0
        %730 = vmatpush1.bf16.msra.mxu0 %v721
        %731 = vmatprep.subr.bf16.mxu0 0
        %732 = vmatpush1.bf16.msra.mxu0 %v722
        %733 = vmatprep.subr.bf16.mxu0 0
        %734 = vmatpush1.bf16.msra.mxu0 0
        %735 = vmatprep.subr.bf16.mxu0 0
        %736 = vmatpush1.bf16.msra.mxu0 0
        %737 = vmatprep.subr.bf16.mxu0 0
        %738 = vmatpush1.bf16.msra.mxu0 0
        %739 = vmatprep.subr.bf16.mxu0 0
        %740 = vmatpush1.bf16.msra.mxu0 0
        %741 = vmatprep.subr.bf16.mxu0 0
        %742 = vmatpush1.bf16.msra.mxu0 0
        %743 = vmatprep.subr.bf16.mxu0 0
        %744 = vmatpush1.bf16.msra.mxu0 0
        %745 = vmatprep.subr.bf16.mxu0 0
        %746 = vmatpush1.bf16.msra.mxu0 0
        %747 = vmatprep.subr.bf16.mxu0 0
        %748 = vmatpush1.bf16.msra.mxu0 0
        %749 = vmatprep.subr.bf16.mxu0 0
        %750 = vmatpush1.bf16.msra.mxu0 0
        %751 = vmatprep.subr.bf16.mxu0 0
        %752 = vmatpush1.bf16.msra.mxu0 0
        %753 = vmatprep.subr.bf16.mxu0 0
        %754 = vmatpush1.bf16.msra.mxu0 0
        %755 = vmatprep.subr.bf16.mxu0 0
        %756 = vmatpush1.bf16.msra.mxu0 0
        %757 = vmatprep.subr.bf16.mxu0 0
        %758 = vmatpush1.bf16.msra.mxu0 0
        %759 = vmatprep.subr.bf16.mxu0 0
        %760 = vmatpush1.bf16.msra.mxu0 0
        %761 = vmatprep.mubr.bf16.mxu0 0
        %762 = vmatmul.mubr.bf16.gmra.mrb[0].mxu0 %v631
        %v763 = vpop.f32.mrb[0].mxu0
        %v764 = vadd.f32 %v727, %v763
        %v765 = vpop.f32.mrb[0].mxu0
        %v766 = vpop.f32.mrb[0].mxu0
        %v767 = vpop.f32.mrb[0].mxu0
        %768 = vdwg.mxu0
        %769 = vxpose.xlu0.b32.start [1/16] %v716, 128
        %770 = vxpose.xlu0.b32.cont [2/16] 0.0, 128
        %771 = vxpose.xlu0.b32.cont [3/16] 0.0, 128
        %772 = vxpose.xlu0.b32.cont [4/16] 0.0, 128
        %773 = vxpose.xlu0.b32.cont [5/16] 0.0, 128
        %774 = vxpose.xlu0.b32.cont [6/16] 0.0, 128
        %775 = vxpose.xlu0.b32.cont [7/16] 0.0, 128
        %776 = vxpose.xlu0.b32.cont [8/16] 0.0, 128
        %777 = vxpose.xlu0.b32.cont [9/16] 0.0, 128
        %778 = vxpose.xlu0.b32.cont [10/16] 0.0, 128
        %779 = vxpose.xlu0.b32.cont [11/16] 0.0, 128
        %780 = vxpose.xlu0.b32.cont [12/16] 0.0, 128
        %781 = vxpose.xlu0.b32.cont [13/16] 0.0, 128
        %782 = vxpose.xlu0.b32.cont [14/16] 0.0, 128
        %783 = vxpose.xlu0.b32.cont [15/16] 0.0, 128
        %784 = vxpose.xlu0.b32.end [16/16] 0.0, 128
        %v785 = vpop.trf.xlu0
        %v786 = vpop.trf.xlu0
        %v787 = vpop.trf.xlu0
        %v788 = vpop.trf.xlu0
        %v789 = vpop.trf.xlu0
        %v790 = vpop.trf.xlu0
        %v791 = vpop.trf.xlu0
        %v792 = vpop.trf.xlu0
        %v793 = vpop.trf.xlu0
        %v794 = vpop.trf.xlu0
        %v795 = vpop.trf.xlu0
        %v796 = vpop.trf.xlu0
        %v797 = vpop.trf.xlu0
        %v798 = vpop.trf.xlu0
        %v799 = vpop.trf.xlu0
        %v800 = vpop.trf.xlu0
        %v801 = vpack.c.bf16 %v668, %v668
        %v802 = vpack.c.bf16 %v786, %v785
        %vm803 = vcmask 130048
        %v805 = vsel %vm803, %v801, 0
        %807 = vmatprep.subr.bf16.mxu0 0
        %808 = vmatpush1.bf16.msra.mxu0 %v802
        %809 = vmatprep.subr.bf16.mxu0 0
        %810 = vmatpush1.bf16.msra.mxu0 0
        %811 = vmatprep.subr.bf16.mxu0 0
        %812 = vmatpush1.bf16.msra.mxu0 0
        %813 = vmatprep.subr.bf16.mxu0 0
        %814 = vmatpush1.bf16.msra.mxu0 0
        %815 = vmatprep.subr.bf16.mxu0 0
        %816 = vmatpush1.bf16.msra.mxu0 0
        %817 = vmatprep.subr.bf16.mxu0 0
        %818 = vmatpush1.bf16.msra.mxu0 0
        %819 = vmatprep.subr.bf16.mxu0 0
        %820 = vmatpush1.bf16.msra.mxu0 0
        %821 = vmatprep.subr.bf16.mxu0 0
        %822 = vmatpush1.bf16.msra.mxu0 0
        %823 = vmatprep.subr.bf16.mxu0 0
        %824 = vmatpush1.bf16.msra.mxu0 0
        %825 = vmatprep.subr.bf16.mxu0 0
        %826 = vmatpush1.bf16.msra.mxu0 0
        %827 = vmatprep.subr.bf16.mxu0 0
        %828 = vmatpush1.bf16.msra.mxu0 0
        %829 = vmatprep.subr.bf16.mxu0 0
        %830 = vmatpush1.bf16.msra.mxu0 0
        %831 = vmatprep.subr.bf16.mxu0 0
        %832 = vmatpush1.bf16.msra.mxu0 0
        %833 = vmatprep.subr.bf16.mxu0 0
        %834 = vmatpush1.bf16.msra.mxu0 0
        %835 = vmatprep.subr.bf16.mxu0 0
        %836 = vmatpush1.bf16.msra.mxu0 0
        %837 = vmatprep.subr.bf16.mxu0 0
        %838 = vmatpush1.bf16.msra.mxu0 0
        %839 = vmatprep.mubr.bf16.mxu0 0
        %840 = vmatmul.mubr.bf16.gmra.mrb[0].mxu0 %v805
        %v841 = vpop.f32.mrb[0].mxu0
        %v842 = vadd.f32 0.0, %v841
        %v843 = vpop.f32.mrb[0].mxu0
        %v844 = vpop.f32.mrb[0].mxu0
        %v845 = vpop.f32.mrb[0].mxu0
        %846 = vdwg.mxu0
        %v847 = vmul.f32 %v842, 0.25
        %v848 = vsel %vm555, %v847, -1e+30
        %vm849 = vcmask 64512
        %v850 = vsel %vm849, %v848, -inf
        %851 = vmax.xlane.f32.xlu0 %v850
        %v852 = vpop.xlane.xlu0 %851
        %v853 = vsub.f32 %v848, %v852
        %v854 = vmul.f32 %v853, 1.442695
        %v855 = vpow.pop %v854
        %v856 = vsel %vm849, %v855, 0.0
        %857 = vadd.xlane.f32.xlu0 %v856
        %v858 = vpop.xlane.xlu0 %857
        %v859 = vrcp.pop %v858
        %v860 = vmul.f32 %v855, %v859
        %v861 = vpack.c.bf16 %v860, %v860
        %v862 = vpack.c.bf16 %v764, %v764
        %v864 = vsel %vm849, %v861, 0
        %vm866 = vcmask 1043456
        %v868 = vsel %vm866, %v862, 0
        %870 = vmatprep.subr.bf16.mxu0 0
        %871 = vmatpush1.bf16.msra.mxu0 %v868
        %872 = vmatprep.subr.bf16.mxu0 0
        %873 = vmatpush1.bf16.msra.mxu0 0
        %874 = vmatprep.subr.bf16.mxu0 0
        %875 = vmatpush1.bf16.msra.mxu0 0
        %876 = vmatprep.subr.bf16.mxu0 0
        %877 = vmatpush1.bf16.msra.mxu0 0
        %878 = vmatprep.subr.bf16.mxu0 0
        %879 = vmatpush1.bf16.msra.mxu0 0
        %880 = vmatprep.subr.bf16.mxu0 0
        %881 = vmatpush1.bf16.msra.mxu0 0
        %882 = vmatprep.subr.bf16.mxu0 0
        %883 = vmatpush1.bf16.msra.mxu0 0
        %884 = vmatprep.subr.bf16.mxu0 0
        %885 = vmatpush1.bf16.msra.mxu0 0
        %886 = vmatprep.subr.bf16.mxu0 0
        %887 = vmatpush1.bf16.msra.mxu0 0
        %888 = vmatprep.subr.bf16.mxu0 0
        %889 = vmatpush1.bf16.msra.mxu0 0
        %890 = vmatprep.subr.bf16.mxu0 0
        %891 = vmatpush1.bf16.msra.mxu0 0
        %892 = vmatprep.subr.bf16.mxu0 0
        %893 = vmatpush1.bf16.msra.mxu0 0
        %894 = vmatprep.subr.bf16.mxu0 0
        %895 = vmatpush1.bf16.msra.mxu0 0
        %896 = vmatprep.subr.bf16.mxu0 0
        %897 = vmatpush1.bf16.msra.mxu0 0
        %898 = vmatprep.subr.bf16.mxu0 0
        %899 = vmatpush1.bf16.msra.mxu0 0
        %900 = vmatprep.subr.bf16.mxu0 0
        %901 = vmatpush1.bf16.msra.mxu0 0
        %902 = vmatprep.mubr.bf16.mxu0 0
        %903 = vmatmul.mubr.bf16.gmra.mrb[0].mxu0 %v864
        %v904 = vpop.f32.mrb[0].mxu0
        %v905 = vadd.f32 0.0, %v904
        %v906 = vpop.f32.mrb[0].mxu0
        %v907 = vpop.f32.mrb[0].mxu0
        %v908 = vpop.f32.mrb[0].mxu0
        %909 = vdwg.mxu0
        %v910 = vpack.c.bf16 %v905, %v905
        %v911 = vpack.c.bf16 %v618, %v617
        %v912 = vpack.c.bf16 %v600, %v599
        %v913 = vpack.c.bf16 %v602, %v601
        %v915 = vlaneseq
        %v916 = vshrl.u32 %v915, 7
        %v917 = vsub.s32 0, %v916
        %v918 = vrot.slane %v614, %v917
        %920 = vmatprep.subr.bf16.mxu0 0
        %921 = vmatpush1.bf16.msra.mxu0 %v912
        %922 = vmatprep.subr.bf16.mxu0 0
        %923 = vmatpush1.bf16.msra.mxu0 %v913
        %924 = vmatprep.subr.bf16.mxu0 0
        %925 = vmatpush1.bf16.msra.mxu0 0
        %926 = vmatprep.subr.bf16.mxu0 0
        %927 = vmatpush1.bf16.msra.mxu0 0
        %928 = vmatprep.subr.bf16.mxu0 0
        %929 = vmatpush1.bf16.msra.mxu0 0
        %930 = vmatprep.subr.bf16.mxu0 0
        %931 = vmatpush1.bf16.msra.mxu0 0
        %932 = vmatprep.subr.bf16.mxu0 0
        %933 = vmatpush1.bf16.msra.mxu0 0
        %934 = vmatprep.subr.bf16.mxu0 0
        %935 = vmatpush1.bf16.msra.mxu0 0
        %936 = vmatprep.subr.bf16.mxu0 0
        %937 = vmatpush1.bf16.msra.mxu0 0
        %938 = vmatprep.subr.bf16.mxu0 0
        %939 = vmatpush1.bf16.msra.mxu0 0
        %940 = vmatprep.subr.bf16.mxu0 0
        %941 = vmatpush1.bf16.msra.mxu0 0
        %942 = vmatprep.subr.bf16.mxu0 0
        %943 = vmatpush1.bf16.msra.mxu0 0
        %944 = vmatprep.subr.bf16.mxu0 0
        %945 = vmatpush1.bf16.msra.mxu0 0
        %946 = vmatprep.subr.bf16.mxu0 0
        %947 = vmatpush1.bf16.msra.mxu0 0
        %948 = vmatprep.subr.bf16.mxu0 0
        %949 = vmatpush1.bf16.msra.mxu0 0
        %950 = vmatprep.subr.bf16.mxu0 0
        %951 = vmatpush1.bf16.msra.mxu0 0
        %952 = vmatprep.mubr.bf16.mxu0 0
        %953 = vmatmul.mubr.bf16.gmra.mrb[0].mxu0 %v631
        %v954 = vpop.f32.mrb[0].mxu0
        %v955 = vadd.f32 %v918, %v954
        %v956 = vpop.f32.mrb[0].mxu0
        %v957 = vpop.f32.mrb[0].mxu0
        %v958 = vpop.f32.mrb[0].mxu0
        %959 = vdwg.mxu0
        %v960 = vpack.c.bf16 %v604, %v603
        %v961 = vpack.c.bf16 %v606, %v605
        %v963 = vlaneseq
        %v964 = vshrl.u32 %v963, 7
        %v965 = vsub.s32 0, %v964
        %v966 = vrot.slane %v615, %v965
        %968 = vmatprep.subr.bf16.mxu0 0
        %969 = vmatpush1.bf16.msra.mxu0 %v960
        %970 = vmatprep.subr.bf16.mxu0 0
        %971 = vmatpush1.bf16.msra.mxu0 %v961
        %972 = vmatprep.subr.bf16.mxu0 0
        %973 = vmatpush1.bf16.msra.mxu0 0
        %974 = vmatprep.subr.bf16.mxu0 0
        %975 = vmatpush1.bf16.msra.mxu0 0
        %976 = vmatprep.subr.bf16.mxu0 0
        %977 = vmatpush1.bf16.msra.mxu0 0
        %978 = vmatprep.subr.bf16.mxu0 0
        %979 = vmatpush1.bf16.msra.mxu0 0
        %980 = vmatprep.subr.bf16.mxu0 0
        %981 = vmatpush1.bf16.msra.mxu0 0
        %982 = vmatprep.subr.bf16.mxu0 0
        %983 = vmatpush1.bf16.msra.mxu0 0
        %984 = vmatprep.subr.bf16.mxu0 0
        %985 = vmatpush1.bf16.msra.mxu0 0
        %986 = vmatprep.subr.bf16.mxu0 0
        %987 = vmatpush1.bf16.msra.mxu0 0
        %988 = vmatprep.subr.bf16.mxu0 0
        %989 = vmatpush1.bf16.msra.mxu0 0
        %990 = vmatprep.subr.bf16.mxu0 0
        %991 = vmatpush1.bf16.msra.mxu0 0
        %992 = vmatprep.subr.bf16.mxu0 0
        %993 = vmatpush1.bf16.msra.mxu0 0
        %994 = vmatprep.subr.bf16.mxu0 0
        %995 = vmatpush1.bf16.msra.mxu0 0
        %996 = vmatprep.subr.bf16.mxu0 0
        %997 = vmatpush1.bf16.msra.mxu0 0
        %998 = vmatprep.subr.bf16.mxu0 0
        %999 = vmatpush1.bf16.msra.mxu0 0
        %1000 = vmatprep.mubr.bf16.mxu0 0
        %1001 = vmatmul.mubr.bf16.gmra.mrb[0].mxu0 %v631
        %v1002 = vpop.f32.mrb[0].mxu0
        %v1003 = vadd.f32 %v966, %v1002
        %v1004 = vpop.f32.mrb[0].mxu0
        %v1005 = vpop.f32.mrb[0].mxu0
        %v1006 = vpop.f32.mrb[0].mxu0
        %1007 = vdwg.mxu0
        %v1008 = vpack.c.bf16 %v608, %v607
        %v1009 = vpack.c.bf16 %v610, %v609
        %v1011 = vlaneseq
        %v1012 = vshrl.u32 %v1011, 7
        %v1013 = vsub.s32 0, %v1012
        %v1014 = vrot.slane %v616, %v1013
        %1016 = vmatprep.subr.bf16.mxu0 0
        %1017 = vmatpush1.bf16.msra.mxu0 %v1008
        %1018 = vmatprep.subr.bf16.mxu0 0
        %1019 = vmatpush1.bf16.msra.mxu0 %v1009
        %1020 = vmatprep.subr.bf16.mxu0 0
        %1021 = vmatpush1.bf16.msra.mxu0 0
        %1022 = vmatprep.subr.bf16.mxu0 0
        %1023 = vmatpush1.bf16.msra.mxu0 0
        %1024 = vmatprep.subr.bf16.mxu0 0
        %1025 = vmatpush1.bf16.msra.mxu0 0
        %1026 = vmatprep.subr.bf16.mxu0 0
        %1027 = vmatpush1.bf16.msra.mxu0 0
        %1028 = vmatprep.subr.bf16.mxu0 0
        %1029 = vmatpush1.bf16.msra.mxu0 0
        %1030 = vmatprep.subr.bf16.mxu0 0
        %1031 = vmatpush1.bf16.msra.mxu0 0
        %1032 = vmatprep.subr.bf16.mxu0 0
        %1033 = vmatpush1.bf16.msra.mxu0 0
        %1034 = vmatprep.subr.bf16.mxu0 0
        %1035 = vmatpush1.bf16.msra.mxu0 0
        %1036 = vmatprep.subr.bf16.mxu0 0
        %1037 = vmatpush1.bf16.msra.mxu0 0
        %1038 = vmatprep.subr.bf16.mxu0 0
        %1039 = vmatpush1.bf16.msra.mxu0 0
        %1040 = vmatprep.subr.bf16.mxu0 0
        %1041 = vmatpush1.bf16.msra.mxu0 0
        %1042 = vmatprep.subr.bf16.mxu0 0
        %1043 = vmatpush1.bf16.msra.mxu0 0
        %1044 = vmatprep.subr.bf16.mxu0 0
        %1045 = vmatpush1.bf16.msra.mxu0 0
        %1046 = vmatprep.subr.bf16.mxu0 0
        %1047 = vmatpush1.bf16.msra.mxu0 0
        %1048 = vmatprep.mubr.bf16.mxu0 0
        %1049 = vmatmul.mubr.bf16.gmra.mrb[0].mxu0 %v631
        %v1050 = vpop.f32.mrb[0].mxu0
        %v1051 = vadd.f32 %v1014, %v1050
        %v1052 = vpop.f32.mrb[0].mxu0
        %v1053 = vpop.f32.mrb[0].mxu0
        %v1054 = vpop.f32.mrb[0].mxu0
        %1055 = vdwg.mxu0
        %1056 = vxpose.xlu0.b32.start [1/16] %v1003, 128
        %1057 = vxpose.xlu0.b32.cont [2/16] 0.0, 128
        %1058 = vxpose.xlu0.b32.cont [3/16] 0.0, 128
        %1059 = vxpose.xlu0.b32.cont [4/16] 0.0, 128
        %1060 = vxpose.xlu0.b32.cont [5/16] 0.0, 128
        %1061 = vxpose.xlu0.b32.cont [6/16] 0.0, 128
        %1062 = vxpose.xlu0.b32.cont [7/16] 0.0, 128
        %1063 = vxpose.xlu0.b32.cont [8/16] 0.0, 128
        %1064 = vxpose.xlu0.b32.cont [9/16] 0.0, 128
        %1065 = vxpose.xlu0.b32.cont [10/16] 0.0, 128
        %1066 = vxpose.xlu0.b32.cont [11/16] 0.0, 128
        %1067 = vxpose.xlu0.b32.cont [12/16] 0.0, 128
        %1068 = vxpose.xlu0.b32.cont [13/16] 0.0, 128
        %1069 = vxpose.xlu0.b32.cont [14/16] 0.0, 128
        %1070 = vxpose.xlu0.b32.cont [15/16] 0.0, 128
        %1071 = vxpose.xlu0.b32.end [16/16] 0.0, 128
        %v1072 = vpop.trf.xlu0
        %v1073 = vpop.trf.xlu0
        %v1074 = vpop.trf.xlu0
        %v1075 = vpop.trf.xlu0
        %v1076 = vpop.trf.xlu0
        %v1077 = vpop.trf.xlu0
        %v1078 = vpop.trf.xlu0
        %v1079 = vpop.trf.xlu0
        %v1080 = vpop.trf.xlu0
        %v1081 = vpop.trf.xlu0
        %v1082 = vpop.trf.xlu0
        %v1083 = vpop.trf.xlu0
        %v1084 = vpop.trf.xlu0
        %v1085 = vpop.trf.xlu0
        %v1086 = vpop.trf.xlu0
        %v1087 = vpop.trf.xlu0
        %v1088 = vpack.c.bf16 %v955, %v955
        %v1089 = vpack.c.bf16 %v1073, %v1072
        %v1091 = vsel %vm803, %v1088, 0
        %1093 = vmatprep.subr.bf16.mxu0 0
        %1094 = vmatpush1.bf16.msra.mxu0 %v1089
        %1095 = vmatprep.subr.bf16.mxu0 0
        %1096 = vmatpush1.bf16.msra.mxu0 0
        %1097 = vmatprep.subr.bf16.mxu0 0
        %1098 = vmatpush1.bf16.msra.mxu0 0
        %1099 = vmatprep.subr.bf16.mxu0 0
        %1100 = vmatpush1.bf16.msra.mxu0 0
        %1101 = vmatprep.subr.bf16.mxu0 0
        %1102 = vmatpush1.bf16.msra.mxu0 0
        %1103 = vmatprep.subr.bf16.mxu0 0
        %1104 = vmatpush1.bf16.msra.mxu0 0
        %1105 = vmatprep.subr.bf16.mxu0 0
        %1106 = vmatpush1.bf16.msra.mxu0 0
        %1107 = vmatprep.subr.bf16.mxu0 0
        %1108 = vmatpush1.bf16.msra.mxu0 0
        %1109 = vmatprep.subr.bf16.mxu0 0
        %1110 = vmatpush1.bf16.msra.mxu0 0
        %1111 = vmatprep.subr.bf16.mxu0 0
        %1112 = vmatpush1.bf16.msra.mxu0 0
        %1113 = vmatprep.subr.bf16.mxu0 0
        %1114 = vmatpush1.bf16.msra.mxu0 0
        %1115 = vmatprep.subr.bf16.mxu0 0
        %1116 = vmatpush1.bf16.msra.mxu0 0
        %1117 = vmatprep.subr.bf16.mxu0 0
        %1118 = vmatpush1.bf16.msra.mxu0 0
        %1119 = vmatprep.subr.bf16.mxu0 0
        %1120 = vmatpush1.bf16.msra.mxu0 0
        %1121 = vmatprep.subr.bf16.mxu0 0
        %1122 = vmatpush1.bf16.msra.mxu0 0
        %1123 = vmatprep.subr.bf16.mxu0 0
        %1124 = vmatpush1.bf16.msra.mxu0 0
        %1125 = vmatprep.mubr.bf16.mxu0 0
        %1126 = vmatmul.mubr.bf16.gmra.mrb[0].mxu0 %v1091
        %v1127 = vpop.f32.mrb[0].mxu0
        %v1128 = vadd.f32 0.0, %v1127
        %v1129 = vpop.f32.mrb[0].mxu0
        %v1130 = vpop.f32.mrb[0].mxu0
        %v1131 = vpop.f32.mrb[0].mxu0
        %1132 = vdwg.mxu0
        %v1133 = vmul.f32 %v1128, 0.25
        %v1134 = vsel %vm555, %v1133, -1e+30
        %v1135 = vsel %vm849, %v1134, -inf
        %1136 = vmax.xlane.f32.xlu0 %v1135
        %v1137 = vpop.xlane.xlu0 %1136
        %v1138 = vsub.f32 %v1134, %v1137
        %v1139 = vmul.f32 %v1138, 1.442695
        %v1140 = vpow.pop %v1139
        %v1141 = vsel %vm849, %v1140, 0.0
        %1142 = vadd.xlane.f32.xlu0 %v1141
        %v1143 = vpop.xlane.xlu0 %1142
        %v1144 = vrcp.pop %v1143
        %v1145 = vmul.f32 %v1140, %v1144
        %v1146 = vpack.c.bf16 %v1145, %v1145
        %v1147 = vpack.c.bf16 %v1051, %v1051
        %v1149 = vsel %vm849, %v1146, 0
        %v1152 = vsel %vm866, %v1147, 0
        %1154 = vmatprep.subr.bf16.mxu0 0
        %1155 = vmatpush1.bf16.msra.mxu0 %v1152
        %1156 = vmatprep.subr.bf16.mxu0 0
        %1157 = vmatpush1.bf16.msra.mxu0 0
        %1158 = vmatprep.subr.bf16.mxu0 0
        %1159 = vmatpush1.bf16.msra.mxu0 0
        %1160 = vmatprep.subr.bf16.mxu0 0
        %1161 = vmatpush1.bf16.msra.mxu0 0
        %1162 = vmatprep.subr.bf16.mxu0 0
        %1163 = vmatpush1.bf16.msra.mxu0 0
        %1164 = vmatprep.subr.bf16.mxu0 0
        %1165 = vmatpush1.bf16.msra.mxu0 0
        %1166 = vmatprep.subr.bf16.mxu0 0
        %1167 = vmatpush1.bf16.msra.mxu0 0
        %1168 = vmatprep.subr.bf16.mxu0 0
        %1169 = vmatpush1.bf16.msra.mxu0 0
        %1170 = vmatprep.subr.bf16.mxu0 0
        %1171 = vmatpush1.bf16.msra.mxu0 0
        %1172 = vmatprep.subr.bf16.mxu0 0
        %1173 = vmatpush1.bf16.msra.mxu0 0
        %1174 = vmatprep.subr.bf16.mxu0 0
        %1175 = vmatpush1.bf16.msra.mxu0 0
        %1176 = vmatprep.subr.bf16.mxu0 0
        %1177 = vmatpush1.bf16.msra.mxu0 0
        %1178 = vmatprep.subr.bf16.mxu0 0
        %1179 = vmatpush1.bf16.msra.mxu0 0
        %1180 = vmatprep.subr.bf16.mxu0 0
        %1181 = vmatpush1.bf16.msra.mxu0 0
        %1182 = vmatprep.subr.bf16.mxu0 0
        %1183 = vmatpush1.bf16.msra.mxu0 0
        %1184 = vmatprep.subr.bf16.mxu0 0
        %1185 = vmatpush1.bf16.msra.mxu0 0
        %1186 = vmatprep.mubr.bf16.mxu0 0
        %1187 = vmatmul.mubr.bf16.gmra.mrb[0].mxu0 %v1149
        %v1188 = vpop.f32.mrb[0].mxu0
        %v1189 = vadd.f32 0.0, %v1188
        %v1190 = vpop.f32.mrb[0].mxu0
        %v1191 = vpop.f32.mrb[0].mxu0
        %v1192 = vpop.f32.mrb[0].mxu0
        %1193 = vdwg.mxu0
        %v1194 = vpack.c.bf16 %v1189, %v1189
        %v1195 = vpack.c.bf16 %v620, %v619
        %v1197 = vsel %vm803, %v1194, 0
        %1199 = vmatprep.subr.bf16.mxu0 0
        %1200 = vmatpush1.bf16.msra.mxu0 %v1195
        %1201 = vmatprep.subr.bf16.mxu0 0
        %1202 = vmatpush1.bf16.msra.mxu0 0
        %1203 = vmatprep.subr.bf16.mxu0 0
        %1204 = vmatpush1.bf16.msra.mxu0 0
        %1205 = vmatprep.subr.bf16.mxu0 0
        %1206 = vmatpush1.bf16.msra.mxu0 0
        %1207 = vmatprep.subr.bf16.mxu0 0
        %1208 = vmatpush1.bf16.msra.mxu0 0
        %1209 = vmatprep.subr.bf16.mxu0 0
        %1210 = vmatpush1.bf16.msra.mxu0 0
        %1211 = vmatprep.subr.bf16.mxu0 0
        %1212 = vmatpush1.bf16.msra.mxu0 0
        %1213 = vmatprep.subr.bf16.mxu0 0
        %1214 = vmatpush1.bf16.msra.mxu0 0
        %1215 = vmatprep.subr.bf16.mxu0 0
        %1216 = vmatpush1.bf16.msra.mxu0 0
        %1217 = vmatprep.subr.bf16.mxu0 0
        %1218 = vmatpush1.bf16.msra.mxu0 0
        %1219 = vmatprep.subr.bf16.mxu0 0
        %1220 = vmatpush1.bf16.msra.mxu0 0
        %1221 = vmatprep.subr.bf16.mxu0 0
        %1222 = vmatpush1.bf16.msra.mxu0 0
        %1223 = vmatprep.subr.bf16.mxu0 0
        %1224 = vmatpush1.bf16.msra.mxu0 0
        %1225 = vmatprep.subr.bf16.mxu0 0
        %1226 = vmatpush1.bf16.msra.mxu0 0
        %1227 = vmatprep.subr.bf16.mxu0 0
        %1228 = vmatpush1.bf16.msra.mxu0 0
        %1229 = vmatprep.subr.bf16.mxu0 0
        %1230 = vmatpush1.bf16.msra.mxu0 0
        %1231 = vmatprep.mubr.bf16.mxu0 0
        %1232 = vmatmul.mubr.bf16.gmra.mrb[0].mxu0 %v1197
        %v1233 = vpop.f32.mrb[0].mxu0
        %v1234 = vadd.f32 0.0, %v1233
        %v1235 = vpop.f32.mrb[0].mxu0
        %v1236 = vpop.f32.mrb[0].mxu0
        %v1237 = vpop.f32.mrb[0].mxu0
        %1238 = vdwg.mxu0
        %v1240 = vsel %vm803, %v910, 0
        %1242 = vmatprep.subr.bf16.mxu0 0
        %1243 = vmatpush1.bf16.msra.mxu0 %v911
        %1244 = vmatprep.subr.bf16.mxu0 0
        %1245 = vmatpush1.bf16.msra.mxu0 0
        %1246 = vmatprep.subr.bf16.mxu0 0
        %1247 = vmatpush1.bf16.msra.mxu0 0
        %1248 = vmatprep.subr.bf16.mxu0 0
        %1249 = vmatpush1.bf16.msra.mxu0 0
        %1250 = vmatprep.subr.bf16.mxu0 0
        %1251 = vmatpush1.bf16.msra.mxu0 0
        %1252 = vmatprep.subr.bf16.mxu0 0
        %1253 = vmatpush1.bf16.msra.mxu0 0
        %1254 = vmatprep.subr.bf16.mxu0 0
        %1255 = vmatpush1.bf16.msra.mxu0 0
        %1256 = vmatprep.subr.bf16.mxu0 0
        %1257 = vmatpush1.bf16.msra.mxu0 0
        %1258 = vmatprep.subr.bf16.mxu0 0
        %1259 = vmatpush1.bf16.msra.mxu0 0
        %1260 = vmatprep.subr.bf16.mxu0 0
        %1261 = vmatpush1.bf16.msra.mxu0 0
        %1262 = vmatprep.subr.bf16.mxu0 0
        %1263 = vmatpush1.bf16.msra.mxu0 0
        %1264 = vmatprep.subr.bf16.mxu0 0
        %1265 = vmatpush1.bf16.msra.mxu0 0
        %1266 = vmatprep.subr.bf16.mxu0 0
        %1267 = vmatpush1.bf16.msra.mxu0 0
        %1268 = vmatprep.subr.bf16.mxu0 0
        %1269 = vmatpush1.bf16.msra.mxu0 0
        %1270 = vmatprep.subr.bf16.mxu0 0
        %1271 = vmatpush1.bf16.msra.mxu0 0
        %1272 = vmatprep.subr.bf16.mxu0 0
        %1273 = vmatpush1.bf16.msra.mxu0 0
        %1274 = vmatprep.mubr.bf16.mxu0 0
        %1275 = vmatmul.mubr.bf16.gmra.mrb[0].mxu0 %v1240
        %v1276 = vpop.f32.mrb[0].mxu0
        %v1277 = vadd.f32 %v1234, %v1276
        %v1278 = vpop.f32.mrb[0].mxu0
        %v1279 = vpop.f32.mrb[0].mxu0
        %v1280 = vpop.f32.mrb[0].mxu0
        %1281 = vdwg.mxu0
        %v1282 = vadd.f32 %v550, %v1277
        %v1283 = vld [vmem:[%s5] sm:$0x1]
        %v1285 = vlaneseq
        %v1286 = vshrl.u32 %v1285, 7
        %v1287 = vsub.s32 0, %v1286
        %v1288 = vrot.slane %v1283, %v1287
        %v1290 = vadd.f32 %v1282, %v1288
        %v1291 = vld [vmem:[%s8] sm:$0x1]
        %v1292 = vld [vmem:[%s9] sm:$0x1]
        %v1293 = vsel %vm558, %v1290, 0.0
        %1294 = vadd.xlane.f32.xlu0 %v1293
        %v1295 = vpop.xlane.xlu0 %1294
        %v1296 = vmul.f32 %v1295, %v562
        %v1297 = vsub.f32 %v1290, %v1296
        %v1298 = vmul.f32 %v1297, %v1297
        %v1299 = vsel %vm558, %v1298, 0.0
        %1300 = vadd.xlane.f32.xlu0 %v1299
        %v1301 = vpop.xlane.xlu0 %1300
        %v1302 = vmul.f32 %v1301, %v562
        %v1303 = vadd.f32 %v1302, 1e-05
        %v1304 = vrsqrt.pop %v1303
        %v1305 = vmul.f32 %v1297, %v1304
        %v1307 = vlaneseq
        %v1308 = vshrl.u32 %v1307, 7
        %v1309 = vsub.s32 0, %v1308
        %v1310 = vrot.slane %v1291, %v1309
        %v1312 = vmul.f32 %v1305, %v1310
        %v1314 = vlaneseq
        %v1315 = vshrl.u32 %v1314, 7
        %v1316 = vsub.s32 0, %v1315
        %v1317 = vrot.slane %v1292, %v1316
        %v1319 = vadd.f32 %v1312, %v1317
        %v1320 = vld [vmem:[%s10] sm:$0xff]
        %v1321 = vld [vmem:[%s10 + $0x8] sm:$0xff]
        %v1322 = vld [vmem:[%s10 + $0x10] sm:$0xff]
        %v1323 = vld [vmem:[%s10 + $0x18] sm:$0xff]
        %v1324 = vpack.c.bf16 %v1319, %v1319
        %v1325 = vpack.c.bf16 %v1321, %v1320
        %v1326 = vpack.c.bf16 %v1323, %v1322
        %v1327 = vld [vmem:[%s11] sm:$0x1]
        %v1329 = vlaneseq
        %v1330 = vshrl.u32 %v1329, 7
        %v1331 = vsub.s32 0, %v1330
        %v1332 = vrot.slane %v1327, %v1331
        %v1335 = vsel %vm558, %v1324, 0
        %1337 = vmatprep.subr.bf16.mxu0 0
        %1338 = vmatpush1.bf16.msra.mxu0 %v1325
        %1339 = vmatprep.subr.bf16.mxu0 0
        %1340 = vmatpush1.bf16.msra.mxu0 %v1326
        %1341 = vmatprep.subr.bf16.mxu0 0
        %1342 = vmatpush1.bf16.msra.mxu0 0
        %1343 = vmatprep.subr.bf16.mxu0 0
        %1344 = vmatpush1.bf16.msra.mxu0 0
        %1345 = vmatprep.subr.bf16.mxu0 0
        %1346 = vmatpush1.bf16.msra.mxu0 0
        %1347 = vmatprep.subr.bf16.mxu0 0
        %1348 = vmatpush1.bf16.msra.mxu0 0
        %1349 = vmatprep.subr.bf16.mxu0 0
        %1350 = vmatpush1.bf16.msra.mxu0 0
        %1351 = vmatprep.subr.bf16.mxu0 0
        %1352 = vmatpush1.bf16.msra.mxu0 0
        %1353 = vmatprep.subr.bf16.mxu0 0
        %1354 = vmatpush1.bf16.msra.mxu0 0
        %1355 = vmatprep.subr.bf16.mxu0 0
        %1356 = vmatpush1.bf16.msra.mxu0 0
        %1357 = vmatprep.subr.bf16.mxu0 0
        %1358 = vmatpush1.bf16.msra.mxu0 0
        %1359 = vmatprep.subr.bf16.mxu0 0
        %1360 = vmatpush1.bf16.msra.mxu0 0
        %1361 = vmatprep.subr.bf16.mxu0 0
        %1362 = vmatpush1.bf16.msra.mxu0 0
        %1363 = vmatprep.subr.bf16.mxu0 0
        %1364 = vmatpush1.bf16.msra.mxu0 0
        %1365 = vmatprep.subr.bf16.mxu0 0
        %1366 = vmatpush1.bf16.msra.mxu0 0
        %1367 = vmatprep.subr.bf16.mxu0 0
        %1368 = vmatpush1.bf16.msra.mxu0 0
        %1369 = vmatprep.mubr.bf16.mxu0 0
        %1370 = vmatmul.mubr.bf16.gmra.mrb[0].mxu0 %v1335
        %v1371 = vpop.f32.mrb[0].mxu0
        %v1372 = vadd.f32 %v1332, %v1371
        %v1373 = vpop.f32.mrb[0].mxu0
        %v1374 = vpop.f32.mrb[0].mxu0
        %v1375 = vpop.f32.mrb[0].mxu0
        %1376 = vdwg.mxu0
        %v1377 = vmul.f32 %v1372, 0.5
        %v1378 = vmul.f32 %v1372, 0.044715
        %v1379 = vmul.f32 %v1378, %v1372
        %v1380 = vmul.f32 %v1379, %v1372
        %v1381 = vadd.f32 %v1372, %v1380
        %v1382 = vmul.f32 %v1381, 0.7978846
        %v1383 = vtanh.pop %v1382
        %v1384 = vadd.f32 %v1383, 1.0
        %v1385 = vmul.f32 %v1377, %v1384
        %v1386 = vld [vmem:[%s12] sm:$0xff]
        %v1387 = vld [vmem:[%s12 + $0x8] sm:$0xff]
        %v1388 = vld [vmem:[%s12 + $0x10] sm:$0xff]
        %v1389 = vld [vmem:[%s12 + $0x18] sm:$0xff]
        %v1390 = vld [vmem:[%s12 + $0x20] sm:$0xff]
        %v1391 = vld [vmem:[%s12 + $0x28] sm:$0xff]
        %v1392 = vld [vmem:[%s12 + $0x30] sm:$0xff]
        %v1393 = vld [vmem:[%s12 + $0x38] sm:$0xff]
        %v1394 = vld [vmem:[%s12 + $0x40] sm:$0xff]
        %v1395 = vld [vmem:[%s12 + $0x48] sm:$0xff]
        %v1396 = vld [vmem:[%s12 + $0x50] sm:$0xff]
        %v1397 = vld [vmem:[%s12 + $0x58] sm:$0xff]
        %v1398 = vld [vmem:[%s12 + $0x60] sm:$0xff]
        %v1399 = vld [vmem:[%s12 + $0x68] sm:$0xff]
        %v1400 = vld [vmem:[%s12 + $0x70] sm:$0xff]
        %v1401 = vld [vmem:[%s12 + $0x78] sm:$0xff]
        %v1402 = vpack.c.bf16 %v1385, %v1385
        %v1403 = vpack.c.bf16 %v1387, %v1386
        %v1404 = vpack.c.bf16 %v1389, %v1388
        %v1405 = vpack.c.bf16 %v1391, %v1390
        %v1406 = vpack.c.bf16 %v1393, %v1392
        %v1407 = vpack.c.bf16 %v1395, %v1394
        %v1408 = vpack.c.bf16 %v1397, %v1396
        %v1409 = vpack.c.bf16 %v1399, %v1398
        %v1410 = vpack.c.bf16 %v1401, %v1400
        %1411 = vmatprep.subr.bf16.mxu0 0
        %1412 = vmatpush1.bf16.msra.mxu0 %v1403
        %1413 = vmatprep.subr.bf16.mxu0 0
        %1414 = vmatpush1.bf16.msra.mxu0 %v1404
        %1415 = vmatprep.subr.bf16.mxu0 0
        %1416 = vmatpush1.bf16.msra.mxu0 %v1405
        %1417 = vmatprep.subr.bf16.mxu0 0
        %1418 = vmatpush1.bf16.msra.mxu0 %v1406
        %1419 = vmatprep.subr.bf16.mxu0 0
        %1420 = vmatpush1.bf16.msra.mxu0 %v1407
        %1421 = vmatprep.subr.bf16.mxu0 0
        %1422 = vmatpush1.bf16.msra.mxu0 %v1408
        %1423 = vmatprep.subr.bf16.mxu0 0
        %1424 = vmatpush1.bf16.msra.mxu0 %v1409
        %1425 = vmatprep.subr.bf16.mxu0 0
        %1426 = vmatpush1.bf16.msra.mxu0 %v1410
        %1427 = vmatprep.subr.bf16.mxu0 0
        %1428 = vmatpush1.bf16.msra.mxu0 0
        %1429 = vmatprep.subr.bf16.mxu0 0
        %1430 = vmatpush1.bf16.msra.mxu0 0
        %1431 = vmatprep.subr.bf16.mxu0 0
        %1432 = vmatpush1.bf16.msra.mxu0 0
        %1433 = vmatprep.subr.bf16.mxu0 0
        %1434 = vmatpush1.bf16.msra.mxu0 0
        %1435 = vmatprep.subr.bf16.mxu0 0
        %1436 = vmatpush1.bf16.msra.mxu0 0
        %1437 = vmatprep.subr.bf16.mxu0 0
        %1438 = vmatpush1.bf16.msra.mxu0 0
        %1439 = vmatprep.subr.bf16.mxu0 0
        %1440 = vmatpush1.bf16.msra.mxu0 0
        %1441 = vmatprep.subr.bf16.mxu0 0
        %1442 = vmatpush1.bf16.msra.mxu0 0
        %1443 = vmatprep.mubr.bf16.mxu0 0
        %1444 = vmatmul.mubr.bf16.gmra.mrb[0].mxu0 %v1402
        %v1445 = vpop.f32.mrb[0].mxu0
        %v1446 = vadd.f32 0.0, %v1445
        %v1447 = vpop.f32.mrb[0].mxu0
        %v1448 = vpop.f32.mrb[0].mxu0
        %v1449 = vpop.f32.mrb[0].mxu0
        %1450 = vdwg.mxu0
        %v1451 = vadd.f32 %v1290, %v1446
        %v1452 = vld [vmem:[%s13] sm:$0x1]
        %v1454 = vlaneseq
        %v1455 = vshrl.u32 %v1454, 7
        %v1456 = vsub.s32 0, %v1455
        %v1457 = vrot.slane %v1452, %v1456
        %v1459 = vadd.f32 %v1451, %v1457
        %s1460 = scalar_lea.vmem %s6, 1
        %v1461 = vld [vmem:[%s1460] sm:$0x1]
        %s1462 = scalar_lea.vmem %s7, 1
        %v1463 = vld [vmem:[%s1462] sm:$0x1]
        %v1464 = vsel %vm558, %v1459, 0.0
        %1465 = vadd.xlane.f32.xlu0 %v1464
        %v1466 = vpop.xlane.xlu0 %1465
        %v1467 = vmul.f32 %v1466, %v562
        %v1468 = vsub.f32 %v1459, %v1467
        %v1469 = vmul.f32 %v1468, %v1468
        %v1470 = vsel %vm558, %v1469, 0.0
        %1471 = vadd.xlane.f32.xlu0 %v1470
        %v1472 = vpop.xlane.xlu0 %1471
        %v1473 = vmul.f32 %v1472, %v562
        %v1474 = vadd.f32 %v1473, 1e-05
        %v1475 = vrsqrt.pop %v1474
        %v1476 = vmul.f32 %v1468, %v1475
        %v1478 = vlaneseq
        %v1479 = vshrl.u32 %v1478, 7
        %v1480 = vsub.s32 0, %v1479
        %v1481 = vrot.slane %v1461, %v1480
        %v1483 = vmul.f32 %v1476, %v1481
        %v1485 = vlaneseq
        %v1486 = vshrl.u32 %v1485, 7
        %v1487 = vsub.s32 0, %v1486
        %v1488 = vrot.slane %v1463, %v1487
        %v1490 = vadd.f32 %v1483, %v1488
        %s1491 = scalar_lea.vmem %s2, 192
        %v1492 = vld [vmem:[%s1491] sm:$0xff]
        %v1493 = vld [vmem:[%s1491 + $0x8] sm:$0xff]
        %v1494 = vld [vmem:[%s1491 + $0x10] sm:$0xff]
        %v1495 = vld [vmem:[%s1491 + $0x18] sm:$0xff]
        %v1496 = vld [vmem:[%s1491 + $0x20] sm:$0xff]
        %v1497 = vld [vmem:[%s1491 + $0x28] sm:$0xff]
        %v1498 = vld [vmem:[%s1491 + $0x30] sm:$0xff]
        %v1499 = vld [vmem:[%s1491 + $0x38] sm:$0xff]
        %v1500 = vld [vmem:[%s1491 + $0x40] sm:$0xff]
        %v1501 = vld [vmem:[%s1491 + $0x48] sm:$0xff]
        %v1502 = vld [vmem:[%s1491 + $0x50] sm:$0xff]
        %v1503 = vld [vmem:[%s1491 + $0x58] sm:$0xff]
        %v1504 = vld [vmem:[%s1491 + $0x60] sm:$0xff]
        %v1505 = vld [vmem:[%s1491 + $0x68] sm:$0xff]
        %v1506 = vld [vmem:[%s1491 + $0x70] sm:$0xff]
        %v1507 = vld [vmem:[%s1491 + $0x78] sm:$0xff]
        %v1508 = vld [vmem:[%s1491 + $0x80] sm:$0xff]
        %v1509 = vld [vmem:[%s1491 + $0x88] sm:$0xff]
        %v1510 = vld [vmem:[%s1491 + $0x90] sm:$0xff]
        %v1511 = vld [vmem:[%s1491 + $0x98] sm:$0xff]
        %v1512 = vld [vmem:[%s1491 + $0xa0] sm:$0xff]
        %v1513 = vld [vmem:[%s1491 + $0xa8] sm:$0xff]
        %v1514 = vld [vmem:[%s1491 + $0xb0] sm:$0xff]
        %v1515 = vld [vmem:[%s1491 + $0xb8] sm:$0xff]
        %s1516 = scalar_lea.vmem %s3, 6
        %v1517 = vld [vmem:[%s1516] sm:$0x1]
        %v1518 = vld [vmem:[%s1516 + $0x1] sm:$0x1]
        %v1519 = vld [vmem:[%s1516 + $0x2] sm:$0x1]
        %v1520 = vld [vmem:[%s1516 + $0x3] sm:$0x1]
        %v1521 = vld [vmem:[%s1516 + $0x4] sm:$0x1]
        %v1522 = vld [vmem:[%s1516 + $0x5] sm:$0x1]
        %s1523 = scalar_lea.vmem %s4, 32
        %v1524 = vld [vmem:[%s1523] sm:$0xff]
        %v1525 = vld [vmem:[%s1523 + $0x8] sm:$0xff]
        %v1526 = vld [vmem:[%s1523 + $0x10] sm:$0xff]
        %v1527 = vld [vmem:[%s1523 + $0x18] sm:$0xff]
        %v1528 = vpack.c.bf16 %v1490, %v1490
        %v1529 = vpack.c.bf16 %v1493, %v1492
        %v1530 = vpack.c.bf16 %v1495, %v1494
        %v1532 = vlaneseq
        %v1533 = vshrl.u32 %v1532, 7
        %v1534 = vsub.s32 0, %v1533
        %v1535 = vrot.slane %v1517, %v1534
        %v1538 = vsel %vm558, %v1528, 0
        %1540 = vmatprep.subr.bf16.mxu0 0
        %1541 = vmatpush1.bf16.msra.mxu0 %v1529
        %1542 = vmatprep.subr.bf16.mxu0 0
        %1543 = vmatpush1.bf16.msra.mxu0 %v1530
        %1544 = vmatprep.subr.bf16.mxu0 0
        %1545 = vmatpush1.bf16.msra.mxu0 0
        %1546 = vmatprep.subr.bf16.mxu0 0
        %1547 = vmatpush1.bf16.msra.mxu0 0
        %1548 = vmatprep.subr.bf16.mxu0 0
        %1549 = vmatpush1.bf16.msra.mxu0 0
        %1550 = vmatprep.subr.bf16.mxu0 0
        %1551 = vmatpush1.bf16.msra.mxu0 0
        %1552 = vmatprep.subr.bf16.mxu0 0
        %1553 = vmatpush1.bf16.msra.mxu0 0
        %1554 = vmatprep.subr.bf16.mxu0 0
        %1555 = vmatpush1.bf16.msra.mxu0 0
        %1556 = vmatprep.subr.bf16.mxu0 0
        %1557 = vmatpush1.bf16.msra.mxu0 0
        %1558 = vmatprep.subr.bf16.mxu0 0
        %1559 = vmatpush1.bf16.msra.mxu0 0
        %1560 = vmatprep.subr.bf16.mxu0 0
        %1561 = vmatpush1.bf16.msra.mxu0 0
        %1562 = vmatprep.subr.bf16.mxu0 0
        %1563 = vmatpush1.bf16.msra.mxu0 0
        %1564 = vmatprep.subr.bf16.mxu0 0
        %1565 = vmatpush1.bf16.msra.mxu0 0
        %1566 = vmatprep.subr.bf16.mxu0 0
        %1567 = vmatpush1.bf16.msra.mxu0 0
        %1568 = vmatprep.subr.bf16.mxu0 0
        %1569 = vmatpush1.bf16.msra.mxu0 0
        %1570 = vmatprep.subr.bf16.mxu0 0
        %1571 = vmatpush1.bf16.msra.mxu0 0
        %1572 = vmatprep.mubr.bf16.mxu0 0
        %1573 = vmatmul.mubr.bf16.gmra.mrb[0].mxu0 %v1538
        %v1574 = vpop.f32.mrb[0].mxu0
        %v1575 = vadd.f32 %v1535, %v1574
        %v1576 = vpop.f32.mrb[0].mxu0
        %v1577 = vpop.f32.mrb[0].mxu0
        %v1578 = vpop.f32.mrb[0].mxu0
        %1579 = vdwg.mxu0
        %v1580 = vpack.c.bf16 %v1497, %v1496
        %v1581 = vpack.c.bf16 %v1499, %v1498
        %v1583 = vlaneseq
        %v1584 = vshrl.u32 %v1583, 7
        %v1585 = vsub.s32 0, %v1584
        %v1586 = vrot.slane %v1518, %v1585
        %1588 = vmatprep.subr.bf16.mxu0 0
        %1589 = vmatpush1.bf16.msra.mxu0 %v1580
        %1590 = vmatprep.subr.bf16.mxu0 0
        %1591 = vmatpush1.bf16.msra.mxu0 %v1581
        %1592 = vmatprep.subr.bf16.mxu0 0
        %1593 = vmatpush1.bf16.msra.mxu0 0
        %1594 = vmatprep.subr.bf16.mxu0 0
        %1595 = vmatpush1.bf16.msra.mxu0 0
        %1596 = vmatprep.subr.bf16.mxu0 0
        %1597 = vmatpush1.bf16.msra.mxu0 0
        %1598 = vmatprep.subr.bf16.mxu0 0
        %1599 = vmatpush1.bf16.msra.mxu0 0
        %1600 = vmatprep.subr.bf16.mxu0 0
        %1601 = vmatpush1.bf16.msra.mxu0 0
        %1602 = vmatprep.subr.bf16.mxu0 0
        %1603 = vmatpush1.bf16.msra.mxu0 0
        %1604 = vmatprep.subr.bf16.mxu0 0
        %1605 = vmatpush1.bf16.msra.mxu0 0
        %1606 = vmatprep.subr.bf16.mxu0 0
        %1607 = vmatpush1.bf16.msra.mxu0 0
        %1608 = vmatprep.subr.bf16.mxu0 0
        %1609 = vmatpush1.bf16.msra.mxu0 0
        %1610 = vmatprep.subr.bf16.mxu0 0
        %1611 = vmatpush1.bf16.msra.mxu0 0
        %1612 = vmatprep.subr.bf16.mxu0 0
        %1613 = vmatpush1.bf16.msra.mxu0 0
        %1614 = vmatprep.subr.bf16.mxu0 0
        %1615 = vmatpush1.bf16.msra.mxu0 0
        %1616 = vmatprep.subr.bf16.mxu0 0
        %1617 = vmatpush1.bf16.msra.mxu0 0
        %1618 = vmatprep.subr.bf16.mxu0 0
        %1619 = vmatpush1.bf16.msra.mxu0 0
        %1620 = vmatprep.mubr.bf16.mxu0 0
        %1621 = vmatmul.mubr.bf16.gmra.mrb[0].mxu0 %v1538
        %v1622 = vpop.f32.mrb[0].mxu0
        %v1623 = vadd.f32 %v1586, %v1622
        %v1624 = vpop.f32.mrb[0].mxu0
        %v1625 = vpop.f32.mrb[0].mxu0
        %v1626 = vpop.f32.mrb[0].mxu0
        %1627 = vdwg.mxu0
        %v1628 = vpack.c.bf16 %v1501, %v1500
        %v1629 = vpack.c.bf16 %v1503, %v1502
        %v1631 = vlaneseq
        %v1632 = vshrl.u32 %v1631, 7
        %v1633 = vsub.s32 0, %v1632
        %v1634 = vrot.slane %v1519, %v1633
        %1636 = vmatprep.subr.bf16.mxu0 0
        %1637 = vmatpush1.bf16.msra.mxu0 %v1628
        %1638 = vmatprep.subr.bf16.mxu0 0
        %1639 = vmatpush1.bf16.msra.mxu0 %v1629
        %1640 = vmatprep.subr.bf16.mxu0 0
        %1641 = vmatpush1.bf16.msra.mxu0 0
        %1642 = vmatprep.subr.bf16.mxu0 0
        %1643 = vmatpush1.bf16.msra.mxu0 0
        %1644 = vmatprep.subr.bf16.mxu0 0
        %1645 = vmatpush1.bf16.msra.mxu0 0
        %1646 = vmatprep.subr.bf16.mxu0 0
        %1647 = vmatpush1.bf16.msra.mxu0 0
        %1648 = vmatprep.subr.bf16.mxu0 0
        %1649 = vmatpush1.bf16.msra.mxu0 0
        %1650 = vmatprep.subr.bf16.mxu0 0
        %1651 = vmatpush1.bf16.msra.mxu0 0
        %1652 = vmatprep.subr.bf16.mxu0 0
        %1653 = vmatpush1.bf16.msra.mxu0 0
        %1654 = vmatprep.subr.bf16.mxu0 0
        %1655 = vmatpush1.bf16.msra.mxu0 0
        %1656 = vmatprep.subr.bf16.mxu0 0
        %1657 = vmatpush1.bf16.msra.mxu0 0
        %1658 = vmatprep.subr.bf16.mxu0 0
        %1659 = vmatpush1.bf16.msra.mxu0 0
        %1660 = vmatprep.subr.bf16.mxu0 0
        %1661 = vmatpush1.bf16.msra.mxu0 0
        %1662 = vmatprep.subr.bf16.mxu0 0
        %1663 = vmatpush1.bf16.msra.mxu0 0
        %1664 = vmatprep.subr.bf16.mxu0 0
        %1665 = vmatpush1.bf16.msra.mxu0 0
        %1666 = vmatprep.subr.bf16.mxu0 0
        %1667 = vmatpush1.bf16.msra.mxu0 0
        %1668 = vmatprep.mubr.bf16.mxu0 0
        %1669 = vmatmul.mubr.bf16.gmra.mrb[0].mxu0 %v1538
        %v1670 = vpop.f32.mrb[0].mxu0
        %v1671 = vadd.f32 %v1634, %v1670
        %v1672 = vpop.f32.mrb[0].mxu0
        %v1673 = vpop.f32.mrb[0].mxu0
        %v1674 = vpop.f32.mrb[0].mxu0
        %1675 = vdwg.mxu0
        %1676 = vxpose.xlu0.b32.start [1/16] %v1623, 128
        %1677 = vxpose.xlu0.b32.cont [2/16] 0.0, 128
        %1678 = vxpose.xlu0.b32.cont [3/16] 0.0, 128
        %1679 = vxpose.xlu0.b32.cont [4/16] 0.0, 128
        %1680 = vxpose.xlu0.b32.cont [5/16] 0.0, 128
        %1681 = vxpose.xlu0.b32.cont [6/16] 0.0, 128
        %1682 = vxpose.xlu0.b32.cont [7/16] 0.0, 128
        %1683 = vxpose.xlu0.b32.cont [8/16] 0.0, 128
        %1684 = vxpose.xlu0.b32.cont [9/16] 0.0, 128
        %1685 = vxpose.xlu0.b32.cont [10/16] 0.0, 128
        %1686 = vxpose.xlu0.b32.cont [11/16] 0.0, 128
        %1687 = vxpose.xlu0.b32.cont [12/16] 0.0, 128
        %1688 = vxpose.xlu0.b32.cont [13/16] 0.0, 128
        %1689 = vxpose.xlu0.b32.cont [14/16] 0.0, 128
        %1690 = vxpose.xlu0.b32.cont [15/16] 0.0, 128
        %1691 = vxpose.xlu0.b32.end [16/16] 0.0, 128
        %v1692 = vpop.trf.xlu0
        %v1693 = vpop.trf.xlu0
        %v1694 = vpop.trf.xlu0
        %v1695 = vpop.trf.xlu0
        %v1696 = vpop.trf.xlu0
        %v1697 = vpop.trf.xlu0
        %v1698 = vpop.trf.xlu0
        %v1699 = vpop.trf.xlu0
        %v1700 = vpop.trf.xlu0
        %v1701 = vpop.trf.xlu0
        %v1702 = vpop.trf.xlu0
        %v1703 = vpop.trf.xlu0
        %v1704 = vpop.trf.xlu0
        %v1705 = vpop.trf.xlu0
        %v1706 = vpop.trf.xlu0
        %v1707 = vpop.trf.xlu0
        %v1708 = vpack.c.bf16 %v1575, %v1575
        %v1709 = vpack.c.bf16 %v1693, %v1692
        %v1711 = vsel %vm803, %v1708, 0
        %1713 = vmatprep.subr.bf16.mxu0 0
        %1714 = vmatpush1.bf16.msra.mxu0 %v1709
        %1715 = vmatprep.subr.bf16.mxu0 0
        %1716 = vmatpush1.bf16.msra.mxu0 0
        %1717 = vmatprep.subr.bf16.mxu0 0
        %1718 = vmatpush1.bf16.msra.mxu0 0
        %1719 = vmatprep.subr.bf16.mxu0 0
        %1720 = vmatpush1.bf16.msra.mxu0 0
        %1721 = vmatprep.subr.bf16.mxu0 0
        %1722 = vmatpush1.bf16.msra.mxu0 0
        %1723 = vmatprep.subr.bf16.mxu0 0
        %1724 = vmatpush1.bf16.msra.mxu0 0
        %1725 = vmatprep.subr.bf16.mxu0 0
        %1726 = vmatpush1.bf16.msra.mxu0 0
        %1727 = vmatprep.subr.bf16.mxu0 0
        %1728 = vmatpush1.bf16.msra.mxu0 0
        %1729 = vmatprep.subr.bf16.mxu0 0
        %1730 = vmatpush1.bf16.msra.mxu0 0
        %1731 = vmatprep.subr.bf16.mxu0 0
        %1732 = vmatpush1.bf16.msra.mxu0 0
        %1733 = vmatprep.subr.bf16.mxu0 0
        %1734 = vmatpush1.bf16.msra.mxu0 0
        %1735 = vmatprep.subr.bf16.mxu0 0
        %1736 = vmatpush1.bf16.msra.mxu0 0
        %1737 = vmatprep.subr.bf16.mxu0 0
        %1738 = vmatpush1.bf16.msra.mxu0 0
        %1739 = vmatprep.subr.bf16.mxu0 0
        %1740 = vmatpush1.bf16.msra.mxu0 0
        %1741 = vmatprep.subr.bf16.mxu0 0
        %1742 = vmatpush1.bf16.msra.mxu0 0
        %1743 = vmatprep.subr.bf16.mxu0 0
        %1744 = vmatpush1.bf16.msra.mxu0 0
        %1745 = vmatprep.mubr.bf16.mxu0 0
        %1746 = vmatmul.mubr.bf16.gmra.mrb[0].mxu0 %v1711
        %v1747 = vpop.f32.mrb[0].mxu0
        %v1748 = vadd.f32 0.0, %v1747
        %v1749 = vpop.f32.mrb[0].mxu0
        %v1750 = vpop.f32.mrb[0].mxu0
        %v1751 = vpop.f32.mrb[0].mxu0
        %1752 = vdwg.mxu0
        %v1753 = vmul.f32 %v1748, 0.25
        %v1754 = vsel %vm555, %v1753, -1e+30
        %v1755 = vsel %vm849, %v1754, -inf
        %1756 = vmax.xlane.f32.xlu0 %v1755
        %v1757 = vpop.xlane.xlu0 %1756
        %v1758 = vsub.f32 %v1754, %v1757
        %v1759 = vmul.f32 %v1758, 1.442695
        %v1760 = vpow.pop %v1759
        %v1761 = vsel %vm849, %v1760, 0.0
        %1762 = vadd.xlane.f32.xlu0 %v1761
        %v1763 = vpop.xlane.xlu0 %1762
        %v1764 = vrcp.pop %v1763
        %v1765 = vmul.f32 %v1760, %v1764
        %v1766 = vpack.c.bf16 %v1765, %v1765
        %v1767 = vpack.c.bf16 %v1671, %v1671
        %v1769 = vsel %vm849, %v1766, 0
        %v1772 = vsel %vm866, %v1767, 0
        %1774 = vmatprep.subr.bf16.mxu0 0
        %1775 = vmatpush1.bf16.msra.mxu0 %v1772
        %1776 = vmatprep.subr.bf16.mxu0 0
        %1777 = vmatpush1.bf16.msra.mxu0 0
        %1778 = vmatprep.subr.bf16.mxu0 0
        %1779 = vmatpush1.bf16.msra.mxu0 0
        %1780 = vmatprep.subr.bf16.mxu0 0
        %1781 = vmatpush1.bf16.msra.mxu0 0
        %1782 = vmatprep.subr.bf16.mxu0 0
        %1783 = vmatpush1.bf16.msra.mxu0 0
        %1784 = vmatprep.subr.bf16.mxu0 0
        %1785 = vmatpush1.bf16.msra.mxu0 0
        %1786 = vmatprep.subr.bf16.mxu0 0
        %1787 = vmatpush1.bf16.msra.mxu0 0
        %1788 = vmatprep.subr.bf16.mxu0 0
        %1789 = vmatpush1.bf16.msra.mxu0 0
        %1790 = vmatprep.subr.bf16.mxu0 0
        %1791 = vmatpush1.bf16.msra.mxu0 0
        %1792 = vmatprep.subr.bf16.mxu0 0
        %1793 = vmatpush1.bf16.msra.mxu0 0
        %1794 = vmatprep.subr.bf16.mxu0 0
        %1795 = vmatpush1.bf16.msra.mxu0 0
        %1796 = vmatprep.subr.bf16.mxu0 0
        %1797 = vmatpush1.bf16.msra.mxu0 0
        %1798 = vmatprep.subr.bf16.mxu0 0
        %1799 = vmatpush1.bf16.msra.mxu0 0
        %1800 = vmatprep.subr.bf16.mxu0 0
        %1801 = vmatpush1.bf16.msra.mxu0 0
        %1802 = vmatprep.subr.bf16.mxu0 0
        %1803 = vmatpush1.bf16.msra.mxu0 0
        %1804 = vmatprep.subr.bf16.mxu0 0
        %1805 = vmatpush1.bf16.msra.mxu0 0
        %1806 = vmatprep.mubr.bf16.mxu0 0
        %1807 = vmatmul.mubr.bf16.gmra.mrb[0].mxu0 %v1769
        %v1808 = vpop.f32.mrb[0].mxu0
        %v1809 = vadd.f32 0.0, %v1808
        %v1810 = vpop.f32.mrb[0].mxu0
        %v1811 = vpop.f32.mrb[0].mxu0
        %v1812 = vpop.f32.mrb[0].mxu0
        %1813 = vdwg.mxu0
        %v1814 = vpack.c.bf16 %v1809, %v1809
        %v1815 = vpack.c.bf16 %v1525, %v1524
        %v1816 = vpack.c.bf16 %v1505, %v1504
        %v1817 = vpack.c.bf16 %v1507, %v1506
        %v1819 = vlaneseq
        %v1820 = vshrl.u32 %v1819, 7
        %v1821 = vsub.s32 0, %v1820
        %v1822 = vrot.slane %v1520, %v1821
        %1824 = vmatprep.subr.bf16.mxu0 0
        %1825 = vmatpush1.bf16.msra.mxu0 %v1816
        %1826 = vmatprep.subr.bf16.mxu0 0
        %1827 = vmatpush1.bf16.msra.mxu0 %v1817
        %1828 = vmatprep.subr.bf16.mxu0 0
        %1829 = vmatpush1.bf16.msra.mxu0 0
        %1830 = vmatprep.subr.bf16.mxu0 0
        %1831 = vmatpush1.bf16.msra.mxu0 0
        %1832 = vmatprep.subr.bf16.mxu0 0
        %1833 = vmatpush1.bf16.msra.mxu0 0
        %1834 = vmatprep.subr.bf16.mxu0 0
        %1835 = vmatpush1.bf16.msra.mxu0 0
        %1836 = vmatprep.subr.bf16.mxu0 0
        %1837 = vmatpush1.bf16.msra.mxu0 0
        %1838 = vmatprep.subr.bf16.mxu0 0
        %1839 = vmatpush1.bf16.msra.mxu0 0
        %1840 = vmatprep.subr.bf16.mxu0 0
        %1841 = vmatpush1.bf16.msra.mxu0 0
        %1842 = vmatprep.subr.bf16.mxu0 0
        %1843 = vmatpush1.bf16.msra.mxu0 0
        %1844 = vmatprep.subr.bf16.mxu0 0
        %1845 = vmatpush1.bf16.msra.mxu0 0
        %1846 = vmatprep.subr.bf16.mxu0 0
        %1847 = vmatpush1.bf16.msra.mxu0 0
        %1848 = vmatprep.subr.bf16.mxu0 0
        %1849 = vmatpush1.bf16.msra.mxu0 0
        %1850 = vmatprep.subr.bf16.mxu0 0
        %1851 = vmatpush1.bf16.msra.mxu0 0
        %1852 = vmatprep.subr.bf16.mxu0 0
        %1853 = vmatpush1.bf16.msra.mxu0 0
        %1854 = vmatprep.subr.bf16.mxu0 0
        %1855 = vmatpush1.bf16.msra.mxu0 0
        %1856 = vmatprep.mubr.bf16.mxu0 0
        %1857 = vmatmul.mubr.bf16.gmra.mrb[0].mxu0 %v1538
        %v1858 = vpop.f32.mrb[0].mxu0
        %v1859 = vadd.f32 %v1822, %v1858
        %v1860 = vpop.f32.mrb[0].mxu0
        %v1861 = vpop.f32.mrb[0].mxu0
        %v1862 = vpop.f32.mrb[0].mxu0
        %1863 = vdwg.mxu0
        %v1864 = vpack.c.bf16 %v1509, %v1508
        %v1865 = vpack.c.bf16 %v1511, %v1510
        %v1867 = vlaneseq
        %v1868 = vshrl.u32 %v1867, 7
        %v1869 = vsub.s32 0, %v1868
        %v1870 = vrot.slane %v1521, %v1869
        %1872 = vmatprep.subr.bf16.mxu0 0
        %1873 = vmatpush1.bf16.msra.mxu0 %v1864
        %1874 = vmatprep.subr.bf16.mxu0 0
        %1875 = vmatpush1.bf16.msra.mxu0 %v1865
        %1876 = vmatprep.subr.bf16.mxu0 0
        %1877 = vmatpush1.bf16.msra.mxu0 0
        %1878 = vmatprep.subr.bf16.mxu0 0
        %1879 = vmatpush1.bf16.msra.mxu0 0
        %1880 = vmatprep.subr.bf16.mxu0 0
        %1881 = vmatpush1.bf16.msra.mxu0 0
        %1882 = vmatprep.subr.bf16.mxu0 0
        %1883 = vmatpush1.bf16.msra.mxu0 0
        %1884 = vmatprep.subr.bf16.mxu0 0
        %1885 = vmatpush1.bf16.msra.mxu0 0
        %1886 = vmatprep.subr.bf16.mxu0 0
        %1887 = vmatpush1.bf16.msra.mxu0 0
        %1888 = vmatprep.subr.bf16.mxu0 0
        %1889 = vmatpush1.bf16.msra.mxu0 0
        %1890 = vmatprep.subr.bf16.mxu0 0
        %1891 = vmatpush1.bf16.msra.mxu0 0
        %1892 = vmatprep.subr.bf16.mxu0 0
        %1893 = vmatpush1.bf16.msra.mxu0 0
        %1894 = vmatprep.subr.bf16.mxu0 0
        %1895 = vmatpush1.bf16.msra.mxu0 0
        %1896 = vmatprep.subr.bf16.mxu0 0
        %1897 = vmatpush1.bf16.msra.mxu0 0
        %1898 = vmatprep.subr.bf16.mxu0 0
        %1899 = vmatpush1.bf16.msra.mxu0 0
        %1900 = vmatprep.subr.bf16.mxu0 0
        %1901 = vmatpush1.bf16.msra.mxu0 0
        %1902 = vmatprep.subr.bf16.mxu0 0
        %1903 = vmatpush1.bf16.msra.mxu0 0
        %1904 = vmatprep.mubr.bf16.mxu0 0
        %1905 = vmatmul.mubr.bf16.gmra.mrb[0].mxu0 %v1538
        %v1906 = vpop.f32.mrb[0].mxu0
        %v1907 = vadd.f32 %v1870, %v1906
        %v1908 = vpop.f32.mrb[0].mxu0
        %v1909 = vpop.f32.mrb[0].mxu0
        %v1910 = vpop.f32.mrb[0].mxu0
        %1911 = vdwg.mxu0
        %v1912 = vpack.c.bf16 %v1513, %v1512
        %v1913 = vpack.c.bf16 %v1515, %v1514
        %v1915 = vlaneseq
        %v1916 = vshrl.u32 %v1915, 7
        %v1917 = vsub.s32 0, %v1916
        %v1918 = vrot.slane %v1522, %v1917
        %1920 = vmatprep.subr.bf16.mxu0 0
        %1921 = vmatpush1.bf16.msra.mxu0 %v1912
        %1922 = vmatprep.subr.bf16.mxu0 0
        %1923 = vmatpush1.bf16.msra.mxu0 %v1913
        %1924 = vmatprep.subr.bf16.mxu0 0
        %1925 = vmatpush1.bf16.msra.mxu0 0
        %1926 = vmatprep.subr.bf16.mxu0 0
        %1927 = vmatpush1.bf16.msra.mxu0 0
        %1928 = vmatprep.subr.bf16.mxu0 0
        %1929 = vmatpush1.bf16.msra.mxu0 0
        %1930 = vmatprep.subr.bf16.mxu0 0
        %1931 = vmatpush1.bf16.msra.mxu0 0
        %1932 = vmatprep.subr.bf16.mxu0 0
        %1933 = vmatpush1.bf16.msra.mxu0 0
        %1934 = vmatprep.subr.bf16.mxu0 0
        %1935 = vmatpush1.bf16.msra.mxu0 0
        %1936 = vmatprep.subr.bf16.mxu0 0
        %1937 = vmatpush1.bf16.msra.mxu0 0
        %1938 = vmatprep.subr.bf16.mxu0 0
        %1939 = vmatpush1.bf16.msra.mxu0 0
        %1940 = vmatprep.subr.bf16.mxu0 0
        %1941 = vmatpush1.bf16.msra.mxu0 0
        %1942 = vmatprep.subr.bf16.mxu0 0
        %1943 = vmatpush1.bf16.msra.mxu0 0
        %1944 = vmatprep.subr.bf16.mxu0 0
        %1945 = vmatpush1.bf16.msra.mxu0 0
        %1946 = vmatprep.subr.bf16.mxu0 0
        %1947 = vmatpush1.bf16.msra.mxu0 0
        %1948 = vmatprep.subr.bf16.mxu0 0
        %1949 = vmatpush1.bf16.msra.mxu0 0
        %1950 = vmatprep.subr.bf16.mxu0 0
        %1951 = vmatpush1.bf16.msra.mxu0 0
        %1952 = vmatprep.mubr.bf16.mxu0 0
        %1953 = vmatmul.mubr.bf16.gmra.mrb[0].mxu0 %v1538
        %v1954 = vpop.f32.mrb[0].mxu0
        %v1955 = vadd.f32 %v1918, %v1954
        %v1956 = vpop.f32.mrb[0].mxu0
        %v1957 = vpop.f32.mrb[0].mxu0
        %v1958 = vpop.f32.mrb[0].mxu0
        %1959 = vdwg.mxu0
        %1960 = vxpose.xlu0.b32.start [1/16] %v1907, 128
        %1961 = vxpose.xlu0.b32.cont [2/16] 0.0, 128
        %1962 = vxpose.xlu0.b32.cont [3/16] 0.0, 128
        %1963 = vxpose.xlu0.b32.cont [4/16] 0.0, 128
        %1964 = vxpose.xlu0.b32.cont [5/16] 0.0, 128
        %1965 = vxpose.xlu0.b32.cont [6/16] 0.0, 128
        %1966 = vxpose.xlu0.b32.cont [7/16] 0.0, 128
        %1967 = vxpose.xlu0.b32.cont [8/16] 0.0, 128
        %1968 = vxpose.xlu0.b32.cont [9/16] 0.0, 128
        %1969 = vxpose.xlu0.b32.cont [10/16] 0.0, 128
        %1970 = vxpose.xlu0.b32.cont [11/16] 0.0, 128
        %1971 = vxpose.xlu0.b32.cont [12/16] 0.0, 128
        %1972 = vxpose.xlu0.b32.cont [13/16] 0.0, 128
        %1973 = vxpose.xlu0.b32.cont [14/16] 0.0, 128
        %1974 = vxpose.xlu0.b32.cont [15/16] 0.0, 128
        %1975 = vxpose.xlu0.b32.end [16/16] 0.0, 128
        %v1976 = vpop.trf.xlu0
        %v1977 = vpop.trf.xlu0
        %v1978 = vpop.trf.xlu0
        %v1979 = vpop.trf.xlu0
        %v1980 = vpop.trf.xlu0
        %v1981 = vpop.trf.xlu0
        %v1982 = vpop.trf.xlu0
        %v1983 = vpop.trf.xlu0
        %v1984 = vpop.trf.xlu0
        %v1985 = vpop.trf.xlu0
        %v1986 = vpop.trf.xlu0
        %v1987 = vpop.trf.xlu0
        %v1988 = vpop.trf.xlu0
        %v1989 = vpop.trf.xlu0
        %v1990 = vpop.trf.xlu0
        %v1991 = vpop.trf.xlu0
        %v1992 = vpack.c.bf16 %v1859, %v1859
        %v1993 = vpack.c.bf16 %v1977, %v1976
        %v1995 = vsel %vm803, %v1992, 0
        %1997 = vmatprep.subr.bf16.mxu0 0
        %1998 = vmatpush1.bf16.msra.mxu0 %v1993
        %1999 = vmatprep.subr.bf16.mxu0 0
        %2000 = vmatpush1.bf16.msra.mxu0 0
        %2001 = vmatprep.subr.bf16.mxu0 0
        %2002 = vmatpush1.bf16.msra.mxu0 0
        %2003 = vmatprep.subr.bf16.mxu0 0
        %2004 = vmatpush1.bf16.msra.mxu0 0
        %2005 = vmatprep.subr.bf16.mxu0 0
        %2006 = vmatpush1.bf16.msra.mxu0 0
        %2007 = vmatprep.subr.bf16.mxu0 0
        %2008 = vmatpush1.bf16.msra.mxu0 0
        %2009 = vmatprep.subr.bf16.mxu0 0
        %2010 = vmatpush1.bf16.msra.mxu0 0
        %2011 = vmatprep.subr.bf16.mxu0 0
        %2012 = vmatpush1.bf16.msra.mxu0 0
        %2013 = vmatprep.subr.bf16.mxu0 0
        %2014 = vmatpush1.bf16.msra.mxu0 0
        %2015 = vmatprep.subr.bf16.mxu0 0
        %2016 = vmatpush1.bf16.msra.mxu0 0
        %2017 = vmatprep.subr.bf16.mxu0 0
        %2018 = vmatpush1.bf16.msra.mxu0 0
        %2019 = vmatprep.subr.bf16.mxu0 0
        %2020 = vmatpush1.bf16.msra.mxu0 0
        %2021 = vmatprep.subr.bf16.mxu0 0
        %2022 = vmatpush1.bf16.msra.mxu0 0
        %2023 = vmatprep.subr.bf16.mxu0 0
        %2024 = vmatpush1.bf16.msra.mxu0 0
        %2025 = vmatprep.subr.bf16.mxu0 0
        %2026 = vmatpush1.bf16.msra.mxu0 0
        %2027 = vmatprep.subr.bf16.mxu0 0
        %2028 = vmatpush1.bf16.msra.mxu0 0
        %2029 = vmatprep.mubr.bf16.mxu0 0
        %2030 = vmatmul.mubr.bf16.gmra.mrb[0].mxu0 %v1995
        %v2031 = vpop.f32.mrb[0].mxu0
        %v2032 = vadd.f32 0.0, %v2031
        %v2033 = vpop.f32.mrb[0].mxu0
        %v2034 = vpop.f32.mrb[0].mxu0
        %v2035 = vpop.f32.mrb[0].mxu0
        %2036 = vdwg.mxu0
        %v2037 = vmul.f32 %v2032, 0.25
        %v2038 = vsel %vm555, %v2037, -1e+30
        %v2039 = vsel %vm849, %v2038, -inf
        %2040 = vmax.xlane.f32.xlu0 %v2039
        %v2041 = vpop.xlane.xlu0 %2040
        %v2042 = vsub.f32 %v2038, %v2041
        %v2043 = vmul.f32 %v2042, 1.442695
        %v2044 = vpow.pop %v2043
        %v2045 = vsel %vm849, %v2044, 0.0
        %2046 = vadd.xlane.f32.xlu0 %v2045
        %v2047 = vpop.xlane.xlu0 %2046
        %v2048 = vrcp.pop %v2047
        %v2049 = vmul.f32 %v2044, %v2048
        %v2050 = vpack.c.bf16 %v2049, %v2049
        %v2051 = vpack.c.bf16 %v1955, %v1955
        %v2053 = vsel %vm849, %v2050, 0
        %v2056 = vsel %vm866, %v2051, 0
        %2058 = vmatprep.subr.bf16.mxu0 0
        %2059 = vmatpush1.bf16.msra.mxu0 %v2056
        %2060 = vmatprep.subr.bf16.mxu0 0
        %2061 = vmatpush1.bf16.msra.mxu0 0
        %2062 = vmatprep.subr.bf16.mxu0 0
        %2063 = vmatpush1.bf16.msra.mxu0 0
        %2064 = vmatprep.subr.bf16.mxu0 0
        %2065 = vmatpush1.bf16.msra.mxu0 0
        %2066 = vmatprep.subr.bf16.mxu0 0
        %2067 = vmatpush1.bf16.msra.mxu0 0
        %2068 = vmatprep.subr.bf16.mxu0 0
        %2069 = vmatpush1.bf16.msra.mxu0 0
        %2070 = vmatprep.subr.bf16.mxu0 0
        %2071 = vmatpush1.bf16.msra.mxu0 0
        %2072 = vmatprep.subr.bf16.mxu0 0
        %2073 = vmatpush1.bf16.msra.mxu0 0
        %2074 = vmatprep.subr.bf16.mxu0 0
        %2075 = vmatpush1.bf16.msra.mxu0 0
        %2076 = vmatprep.subr.bf16.mxu0 0
        %2077 = vmatpush1.bf16.msra.mxu0 0
        %2078 = vmatprep.subr.bf16.mxu0 0
        %2079 = vmatpush1.bf16.msra.mxu0 0
        %2080 = vmatprep.subr.bf16.mxu0 0
        %2081 = vmatpush1.bf16.msra.mxu0 0
        %2082 = vmatprep.subr.bf16.mxu0 0
        %2083 = vmatpush1.bf16.msra.mxu0 0
        %2084 = vmatprep.subr.bf16.mxu0 0
        %2085 = vmatpush1.bf16.msra.mxu0 0
        %2086 = vmatprep.subr.bf16.mxu0 0
        %2087 = vmatpush1.bf16.msra.mxu0 0
        %2088 = vmatprep.subr.bf16.mxu0 0
        %2089 = vmatpush1.bf16.msra.mxu0 0
        %2090 = vmatprep.mubr.bf16.mxu0 0
        %2091 = vmatmul.mubr.bf16.gmra.mrb[0].mxu0 %v2053
        %v2092 = vpop.f32.mrb[0].mxu0
        %v2093 = vadd.f32 0.0, %v2092
        %v2094 = vpop.f32.mrb[0].mxu0
        %v2095 = vpop.f32.mrb[0].mxu0
        %v2096 = vpop.f32.mrb[0].mxu0
        %2097 = vdwg.mxu0
        %v2098 = vpack.c.bf16 %v2093, %v2093
        %v2099 = vpack.c.bf16 %v1527, %v1526
        %v2101 = vsel %vm803, %v2098, 0
        %2103 = vmatprep.subr.bf16.mxu0 0
        %2104 = vmatpush1.bf16.msra.mxu0 %v2099
        %2105 = vmatprep.subr.bf16.mxu0 0
        %2106 = vmatpush1.bf16.msra.mxu0 0
        %2107 = vmatprep.subr.bf16.mxu0 0
        %2108 = vmatpush1.bf16.msra.mxu0 0
        %2109 = vmatprep.subr.bf16.mxu0 0
        %2110 = vmatpush1.bf16.msra.mxu0 0
        %2111 = vmatprep.subr.bf16.mxu0 0
        %2112 = vmatpush1.bf16.msra.mxu0 0
        %2113 = vmatprep.subr.bf16.mxu0 0
        %2114 = vmatpush1.bf16.msra.mxu0 0
        %2115 = vmatprep.subr.bf16.mxu0 0
        %2116 = vmatpush1.bf16.msra.mxu0 0
        %2117 = vmatprep.subr.bf16.mxu0 0
        %2118 = vmatpush1.bf16.msra.mxu0 0
        %2119 = vmatprep.subr.bf16.mxu0 0
        %2120 = vmatpush1.bf16.msra.mxu0 0
        %2121 = vmatprep.subr.bf16.mxu0 0
        %2122 = vmatpush1.bf16.msra.mxu0 0
        %2123 = vmatprep.subr.bf16.mxu0 0
        %2124 = vmatpush1.bf16.msra.mxu0 0
        %2125 = vmatprep.subr.bf16.mxu0 0
        %2126 = vmatpush1.bf16.msra.mxu0 0
        %2127 = vmatprep.subr.bf16.mxu0 0
        %2128 = vmatpush1.bf16.msra.mxu0 0
        %2129 = vmatprep.subr.bf16.mxu0 0
        %2130 = vmatpush1.bf16.msra.mxu0 0
        %2131 = vmatprep.subr.bf16.mxu0 0
        %2132 = vmatpush1.bf16.msra.mxu0 0
        %2133 = vmatprep.subr.bf16.mxu0 0
        %2134 = vmatpush1.bf16.msra.mxu0 0
        %2135 = vmatprep.mubr.bf16.mxu0 0
        %2136 = vmatmul.mubr.bf16.gmra.mrb[0].mxu0 %v2101
        %v2137 = vpop.f32.mrb[0].mxu0
        %v2138 = vadd.f32 0.0, %v2137
        %v2139 = vpop.f32.mrb[0].mxu0
        %v2140 = vpop.f32.mrb[0].mxu0
        %v2141 = vpop.f32.mrb[0].mxu0
        %2142 = vdwg.mxu0
        %v2144 = vsel %vm803, %v1814, 0
        %2146 = vmatprep.subr.bf16.mxu0 0
        %2147 = vmatpush1.bf16.msra.mxu0 %v1815
        %2148 = vmatprep.subr.bf16.mxu0 0
        %2149 = vmatpush1.bf16.msra.mxu0 0
        %2150 = vmatprep.subr.bf16.mxu0 0
        %2151 = vmatpush1.bf16.msra.mxu0 0
        %2152 = vmatprep.subr.bf16.mxu0 0
        %2153 = vmatpush1.bf16.msra.mxu0 0
        %2154 = vmatprep.subr.bf16.mxu0 0
        %2155 = vmatpush1.bf16.msra.mxu0 0
        %2156 = vmatprep.subr.bf16.mxu0 0
        %2157 = vmatpush1.bf16.msra.mxu0 0
        %2158 = vmatprep.subr.bf16.mxu0 0
        %2159 = vmatpush1.bf16.msra.mxu0 0
        %2160 = vmatprep.subr.bf16.mxu0 0
        %2161 = vmatpush1.bf16.msra.mxu0 0
        %2162 = vmatprep.subr.bf16.mxu0 0
        %2163 = vmatpush1.bf16.msra.mxu0 0
        %2164 = vmatprep.subr.bf16.mxu0 0
        %2165 = vmatpush1.bf16.msra.mxu0 0
        %2166 = vmatprep.subr.bf16.mxu0 0
        %2167 = vmatpush1.bf16.msra.mxu0 0
        %2168 = vmatprep.subr.bf16.mxu0 0
        %2169 = vmatpush1.bf16.msra.mxu0 0
        %2170 = vmatprep.subr.bf16.mxu0 0
        %2171 = vmatpush1.bf16.msra.mxu0 0
        %2172 = vmatprep.subr.bf16.mxu0 0
        %2173 = vmatpush1.bf16.msra.mxu0 0
        %2174 = vmatprep.subr.bf16.mxu0 0
        %2175 = vmatpush1.bf16.msra.mxu0 0
        %2176 = vmatprep.subr.bf16.mxu0 0
        %2177 = vmatpush1.bf16.msra.mxu0 0
        %2178 = vmatprep.mubr.bf16.mxu0 0
        %2179 = vmatmul.mubr.bf16.gmra.mrb[0].mxu0 %v2144
        %v2180 = vpop.f32.mrb[0].mxu0
        %v2181 = vadd.f32 %v2138, %v2180
        %v2182 = vpop.f32.mrb[0].mxu0
        %v2183 = vpop.f32.mrb[0].mxu0
        %v2184 = vpop.f32.mrb[0].mxu0
        %2185 = vdwg.mxu0
        %v2186 = vadd.f32 %v1459, %v2181
        %s2187 = scalar_lea.vmem %s5, 1
        %v2188 = vld [vmem:[%s2187] sm:$0x1]
        %v2190 = vlaneseq
        %v2191 = vshrl.u32 %v2190, 7
        %v2192 = vsub.s32 0, %v2191
        %v2193 = vrot.slane %v2188, %v2192
        %v2195 = vadd.f32 %v2186, %v2193
        %s2196 = scalar_lea.vmem %s8, 1
        %v2197 = vld [vmem:[%s2196] sm:$0x1]
        %s2198 = scalar_lea.vmem %s9, 1
        %v2199 = vld [vmem:[%s2198] sm:$0x1]
        %v2200 = vsel %vm558, %v2195, 0.0
        %2201 = vadd.xlane.f32.xlu0 %v2200
        %v2202 = vpop.xlane.xlu0 %2201
        %v2203 = vmul.f32 %v2202, %v562
        %v2204 = vsub.f32 %v2195, %v2203
        %v2205 = vmul.f32 %v2204, %v2204
        %v2206 = vsel %vm558, %v2205, 0.0
        %2207 = vadd.xlane.f32.xlu0 %v2206
        %v2208 = vpop.xlane.xlu0 %2207
        %v2209 = vmul.f32 %v2208, %v562
        %v2210 = vadd.f32 %v2209, 1e-05
        %v2211 = vrsqrt.pop %v2210
        %v2212 = vmul.f32 %v2204, %v2211
        %v2214 = vlaneseq
        %v2215 = vshrl.u32 %v2214, 7
        %v2216 = vsub.s32 0, %v2215
        %v2217 = vrot.slane %v2197, %v2216
        %v2219 = vmul.f32 %v2212, %v2217
        %v2221 = vlaneseq
        %v2222 = vshrl.u32 %v2221, 7
        %v2223 = vsub.s32 0, %v2222
        %v2224 = vrot.slane %v2199, %v2223
        %v2226 = vadd.f32 %v2219, %v2224
        %s2227 = scalar_lea.vmem %s10, 32
        %v2228 = vld [vmem:[%s2227] sm:$0xff]
        %v2229 = vld [vmem:[%s2227 + $0x8] sm:$0xff]
        %v2230 = vld [vmem:[%s2227 + $0x10] sm:$0xff]
        %v2231 = vld [vmem:[%s2227 + $0x18] sm:$0xff]
        %v2232 = vpack.c.bf16 %v2226, %v2226
        %v2233 = vpack.c.bf16 %v2229, %v2228
        %v2234 = vpack.c.bf16 %v2231, %v2230
        %s2235 = scalar_lea.vmem %s11, 1
        %v2236 = vld [vmem:[%s2235] sm:$0x1]
        %v2238 = vlaneseq
        %v2239 = vshrl.u32 %v2238, 7
        %v2240 = vsub.s32 0, %v2239
        %v2241 = vrot.slane %v2236, %v2240
        %v2244 = vsel %vm558, %v2232, 0
        %2246 = vmatprep.subr.bf16.mxu0 0
        %2247 = vmatpush1.bf16.msra.mxu0 %v2233
        %2248 = vmatprep.subr.bf16.mxu0 0
        %2249 = vmatpush1.bf16.msra.mxu0 %v2234
        %2250 = vmatprep.subr.bf16.mxu0 0
        %2251 = vmatpush1.bf16.msra.mxu0 0
        %2252 = vmatprep.subr.bf16.mxu0 0
        %2253 = vmatpush1.bf16.msra.mxu0 0
        %2254 = vmatprep.subr.bf16.mxu0 0
        %2255 = vmatpush1.bf16.msra.mxu0 0
        %2256 = vmatprep.subr.bf16.mxu0 0
        %2257 = vmatpush1.bf16.msra.mxu0 0
        %2258 = vmatprep.subr.bf16.mxu0 0
        %2259 = vmatpush1.bf16.msra.mxu0 0
        %2260 = vmatprep.subr.bf16.mxu0 0
        %2261 = vmatpush1.bf16.msra.mxu0 0
        %2262 = vmatprep.subr.bf16.mxu0 0
        %2263 = vmatpush1.bf16.msra.mxu0 0
        %2264 = vmatprep.subr.bf16.mxu0 0
        %2265 = vmatpush1.bf16.msra.mxu0 0
        %2266 = vmatprep.subr.bf16.mxu0 0
        %2267 = vmatpush1.bf16.msra.mxu0 0
        %2268 = vmatprep.subr.bf16.mxu0 0
        %2269 = vmatpush1.bf16.msra.mxu0 0
        %2270 = vmatprep.subr.bf16.mxu0 0
        %2271 = vmatpush1.bf16.msra.mxu0 0
        %2272 = vmatprep.subr.bf16.mxu0 0
        %2273 = vmatpush1.bf16.msra.mxu0 0
        %2274 = vmatprep.subr.bf16.mxu0 0
        %2275 = vmatpush1.bf16.msra.mxu0 0
        %2276 = vmatprep.subr.bf16.mxu0 0
        %2277 = vmatpush1.bf16.msra.mxu0 0
        %2278 = vmatprep.mubr.bf16.mxu0 0
        %2279 = vmatmul.mubr.bf16.gmra.mrb[0].mxu0 %v2244
        %v2280 = vpop.f32.mrb[0].mxu0
        %v2281 = vadd.f32 %v2241, %v2280
        %v2282 = vpop.f32.mrb[0].mxu0
        %v2283 = vpop.f32.mrb[0].mxu0
        %v2284 = vpop.f32.mrb[0].mxu0
        %2285 = vdwg.mxu0
        %v2286 = vmul.f32 %v2281, 0.5
        %v2287 = vmul.f32 %v2281, 0.044715
        %v2288 = vmul.f32 %v2287, %v2281
        %v2289 = vmul.f32 %v2288, %v2281
        %v2290 = vadd.f32 %v2281, %v2289
        %v2291 = vmul.f32 %v2290, 0.7978846
        %v2292 = vtanh.pop %v2291
        %v2293 = vadd.f32 %v2292, 1.0
        %v2294 = vmul.f32 %v2286, %v2293
        %s2295 = scalar_lea.vmem %s12, 128
        %v2296 = vld [vmem:[%s2295] sm:$0xff]
        %v2297 = vld [vmem:[%s2295 + $0x8] sm:$0xff]
        %v2298 = vld [vmem:[%s2295 + $0x10] sm:$0xff]
        %v2299 = vld [vmem:[%s2295 + $0x18] sm:$0xff]
        %v2300 = vld [vmem:[%s2295 + $0x20] sm:$0xff]
        %v2301 = vld [vmem:[%s2295 + $0x28] sm:$0xff]
        %v2302 = vld [vmem:[%s2295 + $0x30] sm:$0xff]
        %v2303 = vld [vmem:[%s2295 + $0x38] sm:$0xff]
        %v2304 = vld [vmem:[%s2295 + $0x40] sm:$0xff]
        %v2305 = vld [vmem:[%s2295 + $0x48] sm:$0xff]
        %v2306 = vld [vmem:[%s2295 + $0x50] sm:$0xff]
        %v2307 = vld [vmem:[%s2295 + $0x58] sm:$0xff]
        %v2308 = vld [vmem:[%s2295 + $0x60] sm:$0xff]
        %v2309 = vld [vmem:[%s2295 + $0x68] sm:$0xff]
        %v2310 = vld [vmem:[%s2295 + $0x70] sm:$0xff]
        %v2311 = vld [vmem:[%s2295 + $0x78] sm:$0xff]
        %v2312 = vpack.c.bf16 %v2294, %v2294
        %v2313 = vpack.c.bf16 %v2297, %v2296
        %v2314 = vpack.c.bf16 %v2299, %v2298
        %v2315 = vpack.c.bf16 %v2301, %v2300
        %v2316 = vpack.c.bf16 %v2303, %v2302
        %v2317 = vpack.c.bf16 %v2305, %v2304
        %v2318 = vpack.c.bf16 %v2307, %v2306
        %v2319 = vpack.c.bf16 %v2309, %v2308
        %v2320 = vpack.c.bf16 %v2311, %v2310
        %2321 = vmatprep.subr.bf16.mxu0 0
        %2322 = vmatpush1.bf16.msra.mxu0 %v2313
        %2323 = vmatprep.subr.bf16.mxu0 0
        %2324 = vmatpush1.bf16.msra.mxu0 %v2314
        %2325 = vmatprep.subr.bf16.mxu0 0
        %2326 = vmatpush1.bf16.msra.mxu0 %v2315
        %2327 = vmatprep.subr.bf16.mxu0 0
        %2328 = vmatpush1.bf16.msra.mxu0 %v2316
        %2329 = vmatprep.subr.bf16.mxu0 0
        %2330 = vmatpush1.bf16.msra.mxu0 %v2317
        %2331 = vmatprep.subr.bf16.mxu0 0
        %2332 = vmatpush1.bf16.msra.mxu0 %v2318
        %2333 = vmatprep.subr.bf16.mxu0 0
        %2334 = vmatpush1.bf16.msra.mxu0 %v2319
        %2335 = vmatprep.subr.bf16.mxu0 0
        %2336 = vmatpush1.bf16.msra.mxu0 %v2320
        %2337 = vmatprep.subr.bf16.mxu0 0
        %2338 = vmatpush1.bf16.msra.mxu0 0
        %2339 = vmatprep.subr.bf16.mxu0 0
        %2340 = vmatpush1.bf16.msra.mxu0 0
        %2341 = vmatprep.subr.bf16.mxu0 0
        %2342 = vmatpush1.bf16.msra.mxu0 0
        %2343 = vmatprep.subr.bf16.mxu0 0
        %2344 = vmatpush1.bf16.msra.mxu0 0
        %2345 = vmatprep.subr.bf16.mxu0 0
        %2346 = vmatpush1.bf16.msra.mxu0 0
        %2347 = vmatprep.subr.bf16.mxu0 0
        %2348 = vmatpush1.bf16.msra.mxu0 0
        %2349 = vmatprep.subr.bf16.mxu0 0
        %2350 = vmatpush1.bf16.msra.mxu0 0
        %2351 = vmatprep.subr.bf16.mxu0 0
        %2352 = vmatpush1.bf16.msra.mxu0 0
        %2353 = vmatprep.mubr.bf16.mxu0 0
        %2354 = vmatmul.mubr.bf16.gmra.mrb[0].mxu0 %v2312
        %v2355 = vpop.f32.mrb[0].mxu0
        %v2356 = vadd.f32 0.0, %v2355
        %v2357 = vpop.f32.mrb[0].mxu0
        %v2358 = vpop.f32.mrb[0].mxu0
        %v2359 = vpop.f32.mrb[0].mxu0
        %2360 = vdwg.mxu0
        %v2361 = vadd.f32 %v2195, %v2356
        %s2362 = scalar_lea.vmem %s13, 1
        %v2363 = vld [vmem:[%s2362] sm:$0x1]
        %v2365 = vlaneseq
        %v2366 = vshrl.u32 %v2365, 7
        %v2367 = vsub.s32 0, %v2366
        %v2368 = vrot.slane %v2363, %v2367
        %v2370 = vadd.f32 %v2361, %v2368
        %v2371 = vld [vmem:[%s14] sm:$0x1]
        %v2372 = vld [vmem:[%s15] sm:$0x1]
        %v2373 = vsel %vm558, %v2370, 0.0
        %2374 = vadd.xlane.f32.xlu0 %v2373
        %v2375 = vpop.xlane.xlu0 %2374
        %v2376 = vmul.f32 %v2375, %v562
        %v2377 = vsub.f32 %v2370, %v2376
        %v2378 = vmul.f32 %v2377, %v2377
        %v2379 = vsel %vm558, %v2378, 0.0
        %2380 = vadd.xlane.f32.xlu0 %v2379
        %v2381 = vpop.xlane.xlu0 %2380
        %v2382 = vmul.f32 %v2381, %v562
        %v2383 = vadd.f32 %v2382, 1e-05
        %v2384 = vrsqrt.pop %v2383
        %v2385 = vmul.f32 %v2377, %v2384
        %v2387 = vlaneseq
        %v2388 = vshrl.u32 %v2387, 7
        %v2389 = vsub.s32 0, %v2388
        %v2390 = vrot.slane %v2371, %v2389
        %v2392 = vmul.f32 %v2385, %v2390
        %v2394 = vlaneseq
        %v2395 = vshrl.u32 %v2394, 7
        %v2396 = vsub.s32 0, %v2395
        %v2397 = vrot.slane %v2372, %v2396
        %v2399 = vadd.f32 %v2392, %v2397
        %v2400 = vld [vmem:[%s16] sm:$0xff]
        %v2401 = vld [vmem:[%s16 + $0x8] sm:$0xff]
        %v2402 = vld [vmem:[%s16 + $0x10] sm:$0xff]
        %v2403 = vld [vmem:[%s16 + $0x18] sm:$0xff]
        %v2404 = vpack.c.bf16 %v2399, %v2399
        %v2405 = vpack.c.bf16 %v2401, %v2400
        %v2406 = vpack.c.bf16 %v2403, %v2402
        %v2408 = vsel %vm558, %v2404, 0
        %2410 = vmatprep.subr.bf16.mxu0 0
        %2411 = vmatpush1.bf16.msra.mxu0 %v2405
        %2412 = vmatprep.subr.bf16.mxu0 0
        %2413 = vmatpush1.bf16.msra.mxu0 %v2406
        %2414 = vmatprep.subr.bf16.mxu0 0
        %2415 = vmatpush1.bf16.msra.mxu0 0
        %2416 = vmatprep.subr.bf16.mxu0 0
        %2417 = vmatpush1.bf16.msra.mxu0 0
        %2418 = vmatprep.subr.bf16.mxu0 0
        %2419 = vmatpush1.bf16.msra.mxu0 0
        %2420 = vmatprep.subr.bf16.mxu0 0
        %2421 = vmatpush1.bf16.msra.mxu0 0
        %2422 = vmatprep.subr.bf16.mxu0 0
        %2423 = vmatpush1.bf16.msra.mxu0 0
        %2424 = vmatprep.subr.bf16.mxu0 0
        %2425 = vmatpush1.bf16.msra.mxu0 0
        %2426 = vmatprep.subr.bf16.mxu0 0
        %2427 = vmatpush1.bf16.msra.mxu0 0
        %2428 = vmatprep.subr.bf16.mxu0 0
        %2429 = vmatpush1.bf16.msra.mxu0 0
        %2430 = vmatprep.subr.bf16.mxu0 0
        %2431 = vmatpush1.bf16.msra.mxu0 0
        %2432 = vmatprep.subr.bf16.mxu0 0
        %2433 = vmatpush1.bf16.msra.mxu0 0
        %2434 = vmatprep.subr.bf16.mxu0 0
        %2435 = vmatpush1.bf16.msra.mxu0 0
        %2436 = vmatprep.subr.bf16.mxu0 0
        %2437 = vmatpush1.bf16.msra.mxu0 0
        %2438 = vmatprep.subr.bf16.mxu0 0
        %2439 = vmatpush1.bf16.msra.mxu0 0
        %2440 = vmatprep.subr.bf16.mxu0 0
        %2441 = vmatpush1.bf16.msra.mxu0 0
        %2442 = vmatprep.mubr.bf16.mxu0 0
        %2443 = vmatmul.mubr.bf16.gmra.mrb[0].mxu0 %v2408
        %v2444 = vpop.f32.mrb[0].mxu0
        %v2445 = vadd.f32 0.0, %v2444
        %v2446 = vpop.f32.mrb[0].mxu0
        %v2447 = vpop.f32.mrb[0].mxu0
        %v2448 = vpop.f32.mrb[0].mxu0
        %2449 = vdwg.mxu0
        %2450 = vst [vmem:[%s537] sm:$0xff] %v2445
        %s2451 = sand.u32 %s401, 1
        %s2452 = scalar_lea.sflag [#allocation3], %s2451
        %s2453 = sand.u32 %s401, 1
        %s2454 = smul.addr %s2453, 8
        %s2455 = scalar_lea.vmem [#allocation2], %s2454
        // Predicated region
        $region89: #{resnet_gpt2_forward.3} parent=87 // pred_check
          %p2456 = pneg %p411
        $region90: #{resnet_gpt2_forward.3} parent=87 // pred_check_branch
          %2458 = sbr.rel (%p2456) target = $region92
        $region91: #{resnet_gpt2_forward.3} parent=87 // pred_region
          %s2460 = ssub.s32 128, 128
          %2461 = vsyncadd %s2452, %s2460
          %s2462 = smul.addr %s31, 128
          %s2463 = scalar_lea.hbm %s17, %s2462
          %s2465 = sshll.u32 %s2455, 4
          %s2466 = int_to_ptr.vmem [resolvable:$true] %s2465
          %2468 = dma.vmem_to_hbm [thread:$0]  %s2466, 128, %s2463, %s2452
        $region92: #{resnet_gpt2_forward.3} parent=87 // pred_fallthru
          _
      $region88: #{resnet_gpt2_forward.3} parent=5 // pred_fallthru
        _
      %p2469 = scmp.le.s32.totalorder 2, %s26
      // Predicated region
      $region93: #{resnet_gpt2_forward.3} parent=5 // pred_check
        %p2470 = pneg %p2469
      $region94: #{resnet_gpt2_forward.3} parent=5 // pred_check_branch
        %2472 = sbr.rel (%p2470) target = $region96
      $region95: #{resnet_gpt2_forward.3} parent=5 // pred_region
        %s2473 = ssub.s32 %s26, 2
        // Predicated region
        $region97: #{resnet_gpt2_forward.3} parent=95 // pred_check
          %p2474 = pneg %p417
        $region98: #{resnet_gpt2_forward.3} parent=95 // pred_check_branch
          %2476 = sbr.rel (%p2474) target = $region100
        $region99: #{resnet_gpt2_forward.3} parent=95 // pred_region
          %s2477 = sand.u32 %s402, 1
          %s2478 = scalar_lea.sflag [#allocation3], %s2477
          %s2479 = sand.u32 %s402, 1
          %s2480 = smul.addr %s2479, 8
          %s2481 = scalar_lea.vmem [#allocation2], %s2480
          %2482 = dma.done %s2478, 128
        $region100: #{resnet_gpt2_forward.3} parent=95 // pred_fallthru
          _
      $region96: #{resnet_gpt2_forward.3} parent=5 // pred_fallthru
        _
    $region6: #{resnet_gpt2_forward.3} parent=1 // loop_footer
      %s30 = sadd.s32 1, %s26
    $region7: #{resnet_gpt2_forward.3} parent=1 // loop_footer_branch
      %25 = sbr.rel target = $region3
    $region8: #{resnet_gpt2_forward.3} parent=1 // loop_exit
      _
    %2483 = vsyncpa [#allocation3], 1
    %s2484 = scalar_lea.sflag [#allocation3], 1
    %2485 = vsyncpa %s2484, 1

// kernel: resnet_gpt2_forward.2
$region0: #{resnet_gpt2_forward.2}
  #allocation0 [shape = 'u32[]', space=smem, size = 0x4, offset = 0x4, fixed_abs, tag = 'smem constant byte address 0x4 - core index']
  #allocation1 [shape = 'u32[144,128]{1,0:T(1,128)}', space=vmem, size = 0x12000, scoped, tag = 'internal scratch']
  %s0 = inlined_call_operand.vmem [shape: f32[2,16,16,3], index: 0, kind: input, shape index: {}]
  %s1 = inlined_call_operand.vmem [shape: f32[3,3,3,8], index: 1, kind: input, shape index: {}]
  %s2 = inlined_call_operand.vmem [shape: f32[1,8], index: 2, kind: input, shape index: {}]
  %s3 = inlined_call_operand.vmem [shape: f32[1,8], index: 3, kind: input, shape index: {}]
  %s4 = inlined_call_operand.vmem [shape: f32[8,4], index: 4, kind: input, shape index: {}]
  %s5 = inlined_call_operand.vmem [shape: f32[1,4], index: 5, kind: input, shape index: {}]
  %s6 = inlined_call_operand.vmem [shape: f32[1,4], index: 6, kind: input, shape index: {}]
  %s7 = inlined_call_operand.vmem [shape: f32[3,3,4,4], index: 7, kind: input, shape index: {}]
  %s8 = inlined_call_operand.vmem [shape: f32[1,4], index: 8, kind: input, shape index: {}]
  %s9 = inlined_call_operand.vmem [shape: f32[1,4], index: 9, kind: input, shape index: {}]
  %s10 = inlined_call_operand.vmem [shape: f32[4,16], index: 10, kind: input, shape index: {}]
  %s11 = inlined_call_operand.vmem [shape: f32[1,16], index: 11, kind: input, shape index: {}]
  %s12 = inlined_call_operand.vmem [shape: f32[1,16], index: 12, kind: input, shape index: {}]
  %s13 = inlined_call_operand.vmem [shape: f32[8,16], index: 13, kind: input, shape index: {}]
  %s14 = inlined_call_operand.vmem [shape: f32[1,16], index: 14, kind: input, shape index: {}]
  %s15 = inlined_call_operand.vmem [shape: f32[1,16], index: 15, kind: input, shape index: {}]
  %s16 = inlined_call_operand.vmem [shape: f32[16,32], index: 16, kind: input, shape index: {}]
  %s17 = inlined_call_operand.vmem [shape: f32[1,32], index: 17, kind: input, shape index: {}]
  %s18 = inlined_call_operand.vmem [shape: f32[32,32], index: 18, kind: input, shape index: {}]
  %s19 = inlined_call_operand.vmem [shape: f32[1,32], index: 19, kind: input, shape index: {}]
  %s20 = inlined_call_operand.vmem [shape: f32[2,1,32], index: 20, kind: output, shape index: {}]
  %s21 = sld [smem:[#allocation0]]
  $region113: #{resnet_gpt2_forward.2} parent=0
    _
  %s23 = ssub.s32 1, %s21
  %s24 = scalar_select 0, %s23, %s21
  loop: start=0, step=1, limit=4
  $region2: #{resnet_gpt2_forward.2} parent=0 // loop_pre_header
    _
  $region3: #{resnet_gpt2_forward.2} parent=0 // loop_header
    %s26 = sphi 0, %s30
    %p27 = scmp.ge.s32.totalorder %s26, 4
    %s36 = sphi 0, %s38
    %s39 = sphi 0, %s36
    %s40 = sphi 0, %s39
    %s56 = sphi 0, %s40
    %s60 = sphi 0, %s60
    %s62 = sphi 0, %s60
    %s63 = sphi 0, %s62
    %s77 = sphi 0, %s63
    %s81 = sphi 0, %s81
    %s83 = sphi 0, %s81
    %s84 = sphi 0, %s83
    %s98 = sphi 0, %s84
    %s102 = sphi 0, %s102
    %s104 = sphi 0, %s102
    %s105 = sphi 0, %s104
    %s119 = sphi 0, %s105
    %s123 = sphi 0, %s123
    %s125 = sphi 0, %s123
    %s126 = sphi 0, %s125
    %s140 = sphi 0, %s126
    %s144 = sphi 0, %s144
    %s146 = sphi 0, %s144
    %s147 = sphi 0, %s146
    %s161 = sphi 0, %s147
    %s165 = sphi 0, %s165
    %s167 = sphi 0, %s165
    %s168 = sphi 0, %s167
    %s182 = sphi 0, %s168
    %s186 = sphi 0, %s186
    %s188 = sphi 0, %s186
    %s189 = sphi 0, %s188
    %s203 = sphi 0, %s189
    %s207 = sphi 0, %s207
    %s209 = sphi 0, %s207
    %s210 = sphi 0, %s209
    %s224 = sphi 0, %s210
    %s228 = sphi 0, %s228
    %s230 = sphi 0, %s228
    %s231 = sphi 0, %s230
    %s245 = sphi 0, %s231
    %s249 = sphi 0, %s249
    %s251 = sphi 0, %s249
    %s252 = sphi 0, %s251
    %s266 = sphi 0, %s252
    %s270 = sphi 0, %s270
    %s272 = sphi 0, %s270
    %s273 = sphi 0, %s272
    %s287 = sphi 0, %s273
    %s291 = sphi 0, %s291
    %s293 = sphi 0, %s291
    %s294 = sphi 0, %s293
    %s308 = sphi 0, %s294
    %s312 = sphi 0, %s312
    %s314 = sphi 0, %s312
    %s315 = sphi 0, %s314
    %s329 = sphi 0, %s315
    %s333 = sphi 0, %s333
    %s335 = sphi 0, %s333
    %s336 = sphi 0, %s335
    %s350 = sphi 0, %s336
    %s354 = sphi 0, %s354
    %s356 = sphi 0, %s354
    %s357 = sphi 0, %s356
    %s371 = sphi 0, %s357
    %s375 = sphi 0, %s375
    %s377 = sphi 0, %s375
    %s378 = sphi 0, %s377
    %s392 = sphi 0, %s378
    %s396 = sphi 0, %s396
    %s398 = sphi 0, %s396
    %s399 = sphi 0, %s398
    %s413 = sphi 0, %s399
    %s417 = sphi 0, %s417
    %s419 = sphi 0, %s417
    %s420 = sphi 0, %s419
    %s434 = sphi 0, %s420
    %s438 = sphi 0, %s438
    %s440 = sphi 0, %s438
    %s441 = sphi 0, %s440
    %s455 = sphi 0, %s441
    %s461 = sphi 0, %s463
    %s464 = sphi 0, %s461
    %s465 = sphi 0, %s464
    %s481 = sphi 0, %s465
  $region4: #{resnet_gpt2_forward.2} parent=0 // loop_header_branch
    %29 = sbr.rel (%p27) target = $region8
  $region5: #{resnet_gpt2_forward.2} parent=0 // loop_body
    %s31 = ssub.s32 %s26, 1
    %s32 = ssub.s32 %s26, 2
    %s33 = sadd.s32 %s26, 1
    %s34 = ssub.s32 %s26, %s33
    %p35 = scmp.eq.s32.totalorder %s34, 0
    %s37 = sadd.s32 %s36, 1
    %s38 = scalar_select %p35, %s36, %s37
    %p41 = pneg %p35
    %p42 = scmp.eq.s32.totalorder %s26, 1
    %p43 = por %p41, %p42
    %p44 = scmp.ne.s32.totalorder %s36, %s39
    %p45 = scmp.eq.s32.totalorder %s26, 0
    %p46 = por %p44, %p45
    %p47 = scmp.ne.s32.totalorder %s36, %s39
    %p48 = scmp.eq.s32.totalorder %s31, 1
    %p49 = por %p47, %p48
    %p50 = scmp.ne.s32.totalorder %s39, %s40
    %p51 = scmp.eq.s32.totalorder %s31, 0
    %p52 = por %p50, %p51
    %p53 = scmp.ne.s32.totalorder %s39, %s40
    %p54 = scmp.eq.s32.totalorder %s32, 1
    %p55 = por %p53, %p54
    %p57 = scmp.ne.s32.totalorder %s40, %s56
    %p58 = scmp.eq.s32.totalorder %s32, 0
    %p59 = por %p57, %p58
    %s61 = sadd.s32 %s60, 1
    %p64 = scmp.eq.s32.totalorder %s26, 1
    %p65 = scmp.ne.s32.totalorder %s60, %s62
    %p66 = scmp.eq.s32.totalorder %s26, 0
    %p67 = por %p65, %p66
    %p68 = scmp.ne.s32.totalorder %s60, %s62
    %p69 = scmp.eq.s32.totalorder %s31, 1
    %p70 = por %p68, %p69
    %p71 = scmp.ne.s32.totalorder %s62, %s63
    %p72 = scmp.eq.s32.totalorder %s31, 0
    %p73 = por %p71, %p72
    %p74 = scmp.ne.s32.totalorder %s62, %s63
    %p75 = scmp.eq.s32.totalorder %s32, 1
    %p76 = por %p74, %p75
    %p78 = scmp.ne.s32.totalorder %s63, %s77
    %p79 = scmp.eq.s32.totalorder %s32, 0
    %p80 = por %p78, %p79
    %s82 = sadd.s32 %s81, 1
    %p85 = scmp.eq.s32.totalorder %s26, 1
    %p86 = scmp.ne.s32.totalorder %s81, %s83
    %p87 = scmp.eq.s32.totalorder %s26, 0
    %p88 = por %p86, %p87
    %p89 = scmp.ne.s32.totalorder %s81, %s83
    %p90 = scmp.eq.s32.totalorder %s31, 1
    %p91 = por %p89, %p90
    %p92 = scmp.ne.s32.totalorder %s83, %s84
    %p93 = scmp.eq.s32.totalorder %s31, 0
    %p94 = por %p92, %p93
    %p95 = scmp.ne.s32.totalorder %s83, %s84
    %p96 = scmp.eq.s32.totalorder %s32, 1
    %p97 = por %p95, %p96
    %p99 = scmp.ne.s32.totalorder %s84, %s98
    %p100 = scmp.eq.s32.totalorder %s32, 0
    %p101 = por %p99, %p100
    %s103 = sadd.s32 %s102, 1
    %p106 = scmp.eq.s32.totalorder %s26, 1
    %p107 = scmp.ne.s32.totalorder %s102, %s104
    %p108 = scmp.eq.s32.totalorder %s26, 0
    %p109 = por %p107, %p108
    %p110 = scmp.ne.s32.totalorder %s102, %s104
    %p111 = scmp.eq.s32.totalorder %s31, 1
    %p112 = por %p110, %p111
    %p113 = scmp.ne.s32.totalorder %s104, %s105
    %p114 = scmp.eq.s32.totalorder %s31, 0
    %p115 = por %p113, %p114
    %p116 = scmp.ne.s32.totalorder %s104, %s105
    %p117 = scmp.eq.s32.totalorder %s32, 1
    %p118 = por %p116, %p117
    %p120 = scmp.ne.s32.totalorder %s105, %s119
    %p121 = scmp.eq.s32.totalorder %s32, 0
    %p122 = por %p120, %p121
    %s124 = sadd.s32 %s123, 1
    %p127 = scmp.eq.s32.totalorder %s26, 1
    %p128 = scmp.ne.s32.totalorder %s123, %s125
    %p129 = scmp.eq.s32.totalorder %s26, 0
    %p130 = por %p128, %p129
    %p131 = scmp.ne.s32.totalorder %s123, %s125
    %p132 = scmp.eq.s32.totalorder %s31, 1
    %p133 = por %p131, %p132
    %p134 = scmp.ne.s32.totalorder %s125, %s126
    %p135 = scmp.eq.s32.totalorder %s31, 0
    %p136 = por %p134, %p135
    %p137 = scmp.ne.s32.totalorder %s125, %s126
    %p138 = scmp.eq.s32.totalorder %s32, 1
    %p139 = por %p137, %p138
    %p141 = scmp.ne.s32.totalorder %s126, %s140
    %p142 = scmp.eq.s32.totalorder %s32, 0
    %p143 = por %p141, %p142
    %s145 = sadd.s32 %s144, 1
    %p148 = scmp.eq.s32.totalorder %s26, 1
    %p149 = scmp.ne.s32.totalorder %s144, %s146
    %p150 = scmp.eq.s32.totalorder %s26, 0
    %p151 = por %p149, %p150
    %p152 = scmp.ne.s32.totalorder %s144, %s146
    %p153 = scmp.eq.s32.totalorder %s31, 1
    %p154 = por %p152, %p153
    %p155 = scmp.ne.s32.totalorder %s146, %s147
    %p156 = scmp.eq.s32.totalorder %s31, 0
    %p157 = por %p155, %p156
    %p158 = scmp.ne.s32.totalorder %s146, %s147
    %p159 = scmp.eq.s32.totalorder %s32, 1
    %p160 = por %p158, %p159
    %p162 = scmp.ne.s32.totalorder %s147, %s161
    %p163 = scmp.eq.s32.totalorder %s32, 0
    %p164 = por %p162, %p163
    %s166 = sadd.s32 %s165, 1
    %p169 = scmp.eq.s32.totalorder %s26, 1
    %p170 = scmp.ne.s32.totalorder %s165, %s167
    %p171 = scmp.eq.s32.totalorder %s26, 0
    %p172 = por %p170, %p171
    %p173 = scmp.ne.s32.totalorder %s165, %s167
    %p174 = scmp.eq.s32.totalorder %s31, 1
    %p175 = por %p173, %p174
    %p176 = scmp.ne.s32.totalorder %s167, %s168
    %p177 = scmp.eq.s32.totalorder %s31, 0
    %p178 = por %p176, %p177
    %p179 = scmp.ne.s32.totalorder %s167, %s168
    %p180 = scmp.eq.s32.totalorder %s32, 1
    %p181 = por %p179, %p180
    %p183 = scmp.ne.s32.totalorder %s168, %s182
    %p184 = scmp.eq.s32.totalorder %s32, 0
    %p185 = por %p183, %p184
    %s187 = sadd.s32 %s186, 1
    %p190 = scmp.eq.s32.totalorder %s26, 1
    %p191 = scmp.ne.s32.totalorder %s186, %s188
    %p192 = scmp.eq.s32.totalorder %s26, 0
    %p193 = por %p191, %p192
    %p194 = scmp.ne.s32.totalorder %s186, %s188
    %p195 = scmp.eq.s32.totalorder %s31, 1
    %p196 = por %p194, %p195
    %p197 = scmp.ne.s32.totalorder %s188, %s189
    %p198 = scmp.eq.s32.totalorder %s31, 0
    %p199 = por %p197, %p198
    %p200 = scmp.ne.s32.totalorder %s188, %s189
    %p201 = scmp.eq.s32.totalorder %s32, 1
    %p202 = por %p200, %p201
    %p204 = scmp.ne.s32.totalorder %s189, %s203
    %p205 = scmp.eq.s32.totalorder %s32, 0
    %p206 = por %p204, %p205
    %s208 = sadd.s32 %s207, 1
    %p211 = scmp.eq.s32.totalorder %s26, 1
    %p212 = scmp.ne.s32.totalorder %s207, %s209
    %p213 = scmp.eq.s32.totalorder %s26, 0
    %p214 = por %p212, %p213
    %p215 = scmp.ne.s32.totalorder %s207, %s209
    %p216 = scmp.eq.s32.totalorder %s31, 1
    %p217 = por %p215, %p216
    %p218 = scmp.ne.s32.totalorder %s209, %s210
    %p219 = scmp.eq.s32.totalorder %s31, 0
    %p220 = por %p218, %p219
    %p221 = scmp.ne.s32.totalorder %s209, %s210
    %p222 = scmp.eq.s32.totalorder %s32, 1
    %p223 = por %p221, %p222
    %p225 = scmp.ne.s32.totalorder %s210, %s224
    %p226 = scmp.eq.s32.totalorder %s32, 0
    %p227 = por %p225, %p226
    %s229 = sadd.s32 %s228, 1
    %p232 = scmp.eq.s32.totalorder %s26, 1
    %p233 = scmp.ne.s32.totalorder %s228, %s230
    %p234 = scmp.eq.s32.totalorder %s26, 0
    %p235 = por %p233, %p234
    %p236 = scmp.ne.s32.totalorder %s228, %s230
    %p237 = scmp.eq.s32.totalorder %s31, 1
    %p238 = por %p236, %p237
    %p239 = scmp.ne.s32.totalorder %s230, %s231
    %p240 = scmp.eq.s32.totalorder %s31, 0
    %p241 = por %p239, %p240
    %p242 = scmp.ne.s32.totalorder %s230, %s231
    %p243 = scmp.eq.s32.totalorder %s32, 1
    %p244 = por %p242, %p243
    %p246 = scmp.ne.s32.totalorder %s231, %s245
    %p247 = scmp.eq.s32.totalorder %s32, 0
    %p248 = por %p246, %p247
    %s250 = sadd.s32 %s249, 1
    %p253 = scmp.eq.s32.totalorder %s26, 1
    %p254 = scmp.ne.s32.totalorder %s249, %s251
    %p255 = scmp.eq.s32.totalorder %s26, 0
    %p256 = por %p254, %p255
    %p257 = scmp.ne.s32.totalorder %s249, %s251
    %p258 = scmp.eq.s32.totalorder %s31, 1
    %p259 = por %p257, %p258
    %p260 = scmp.ne.s32.totalorder %s251, %s252
    %p261 = scmp.eq.s32.totalorder %s31, 0
    %p262 = por %p260, %p261
    %p263 = scmp.ne.s32.totalorder %s251, %s252
    %p264 = scmp.eq.s32.totalorder %s32, 1
    %p265 = por %p263, %p264
    %p267 = scmp.ne.s32.totalorder %s252, %s266
    %p268 = scmp.eq.s32.totalorder %s32, 0
    %p269 = por %p267, %p268
    %s271 = sadd.s32 %s270, 1
    %p274 = scmp.eq.s32.totalorder %s26, 1
    %p275 = scmp.ne.s32.totalorder %s270, %s272
    %p276 = scmp.eq.s32.totalorder %s26, 0
    %p277 = por %p275, %p276
    %p278 = scmp.ne.s32.totalorder %s270, %s272
    %p279 = scmp.eq.s32.totalorder %s31, 1
    %p280 = por %p278, %p279
    %p281 = scmp.ne.s32.totalorder %s272, %s273
    %p282 = scmp.eq.s32.totalorder %s31, 0
    %p283 = por %p281, %p282
    %p284 = scmp.ne.s32.totalorder %s272, %s273
    %p285 = scmp.eq.s32.totalorder %s32, 1
    %p286 = por %p284, %p285
    %p288 = scmp.ne.s32.totalorder %s273, %s287
    %p289 = scmp.eq.s32.totalorder %s32, 0
    %p290 = por %p288, %p289
    %s292 = sadd.s32 %s291, 1
    %p295 = scmp.eq.s32.totalorder %s26, 1
    %p296 = scmp.ne.s32.totalorder %s291, %s293
    %p297 = scmp.eq.s32.totalorder %s26, 0
    %p298 = por %p296, %p297
    %p299 = scmp.ne.s32.totalorder %s291, %s293
    %p300 = scmp.eq.s32.totalorder %s31, 1
    %p301 = por %p299, %p300
    %p302 = scmp.ne.s32.totalorder %s293, %s294
    %p303 = scmp.eq.s32.totalorder %s31, 0
    %p304 = por %p302, %p303
    %p305 = scmp.ne.s32.totalorder %s293, %s294
    %p306 = scmp.eq.s32.totalorder %s32, 1
    %p307 = por %p305, %p306
    %p309 = scmp.ne.s32.totalorder %s294, %s308
    %p310 = scmp.eq.s32.totalorder %s32, 0
    %p311 = por %p309, %p310
    %s313 = sadd.s32 %s312, 1
    %p316 = scmp.eq.s32.totalorder %s26, 1
    %p317 = scmp.ne.s32.totalorder %s312, %s314
    %p318 = scmp.eq.s32.totalorder %s26, 0
    %p319 = por %p317, %p318
    %p320 = scmp.ne.s32.totalorder %s312, %s314
    %p321 = scmp.eq.s32.totalorder %s31, 1
    %p322 = por %p320, %p321
    %p323 = scmp.ne.s32.totalorder %s314, %s315
    %p324 = scmp.eq.s32.totalorder %s31, 0
    %p325 = por %p323, %p324
    %p326 = scmp.ne.s32.totalorder %s314, %s315
    %p327 = scmp.eq.s32.totalorder %s32, 1
    %p328 = por %p326, %p327
    %p330 = scmp.ne.s32.totalorder %s315, %s329
    %p331 = scmp.eq.s32.totalorder %s32, 0
    %p332 = por %p330, %p331
    %s334 = sadd.s32 %s333, 1
    %p337 = scmp.eq.s32.totalorder %s26, 1
    %p338 = scmp.ne.s32.totalorder %s333, %s335
    %p339 = scmp.eq.s32.totalorder %s26, 0
    %p340 = por %p338, %p339
    %p341 = scmp.ne.s32.totalorder %s333, %s335
    %p342 = scmp.eq.s32.totalorder %s31, 1
    %p343 = por %p341, %p342
    %p344 = scmp.ne.s32.totalorder %s335, %s336
    %p345 = scmp.eq.s32.totalorder %s31, 0
    %p346 = por %p344, %p345
    %p347 = scmp.ne.s32.totalorder %s335, %s336
    %p348 = scmp.eq.s32.totalorder %s32, 1
    %p349 = por %p347, %p348
    %p351 = scmp.ne.s32.totalorder %s336, %s350
    %p352 = scmp.eq.s32.totalorder %s32, 0
    %p353 = por %p351, %p352
    %s355 = sadd.s32 %s354, 1
    %p358 = scmp.eq.s32.totalorder %s26, 1
    %p359 = scmp.ne.s32.totalorder %s354, %s356
    %p360 = scmp.eq.s32.totalorder %s26, 0
    %p361 = por %p359, %p360
    %p362 = scmp.ne.s32.totalorder %s354, %s356
    %p363 = scmp.eq.s32.totalorder %s31, 1
    %p364 = por %p362, %p363
    %p365 = scmp.ne.s32.totalorder %s356, %s357
    %p366 = scmp.eq.s32.totalorder %s31, 0
    %p367 = por %p365, %p366
    %p368 = scmp.ne.s32.totalorder %s356, %s357
    %p369 = scmp.eq.s32.totalorder %s32, 1
    %p370 = por %p368, %p369
    %p372 = scmp.ne.s32.totalorder %s357, %s371
    %p373 = scmp.eq.s32.totalorder %s32, 0
    %p374 = por %p372, %p373
    %s376 = sadd.s32 %s375, 1
    %p379 = scmp.eq.s32.totalorder %s26, 1
    %p380 = scmp.ne.s32.totalorder %s375, %s377
    %p381 = scmp.eq.s32.totalorder %s26, 0
    %p382 = por %p380, %p381
    %p383 = scmp.ne.s32.totalorder %s375, %s377
    %p384 = scmp.eq.s32.totalorder %s31, 1
    %p385 = por %p383, %p384
    %p386 = scmp.ne.s32.totalorder %s377, %s378
    %p387 = scmp.eq.s32.totalorder %s31, 0
    %p388 = por %p386, %p387
    %p389 = scmp.ne.s32.totalorder %s377, %s378
    %p390 = scmp.eq.s32.totalorder %s32, 1
    %p391 = por %p389, %p390
    %p393 = scmp.ne.s32.totalorder %s378, %s392
    %p394 = scmp.eq.s32.totalorder %s32, 0
    %p395 = por %p393, %p394
    %s397 = sadd.s32 %s396, 1
    %p400 = scmp.eq.s32.totalorder %s26, 1
    %p401 = scmp.ne.s32.totalorder %s396, %s398
    %p402 = scmp.eq.s32.totalorder %s26, 0
    %p403 = por %p401, %p402
    %p404 = scmp.ne.s32.totalorder %s396, %s398
    %p405 = scmp.eq.s32.totalorder %s31, 1
    %p406 = por %p404, %p405
    %p407 = scmp.ne.s32.totalorder %s398, %s399
    %p408 = scmp.eq.s32.totalorder %s31, 0
    %p409 = por %p407, %p408
    %p410 = scmp.ne.s32.totalorder %s398, %s399
    %p411 = scmp.eq.s32.totalorder %s32, 1
    %p412 = por %p410, %p411
    %p414 = scmp.ne.s32.totalorder %s399, %s413
    %p415 = scmp.eq.s32.totalorder %s32, 0
    %p416 = por %p414, %p415
    %s418 = sadd.s32 %s417, 1
    %p421 = scmp.eq.s32.totalorder %s26, 1
    %p422 = scmp.ne.s32.totalorder %s417, %s419
    %p423 = scmp.eq.s32.totalorder %s26, 0
    %p424 = por %p422, %p423
    %p425 = scmp.ne.s32.totalorder %s417, %s419
    %p426 = scmp.eq.s32.totalorder %s31, 1
    %p427 = por %p425, %p426
    %p428 = scmp.ne.s32.totalorder %s419, %s420
    %p429 = scmp.eq.s32.totalorder %s31, 0
    %p430 = por %p428, %p429
    %p431 = scmp.ne.s32.totalorder %s419, %s420
    %p432 = scmp.eq.s32.totalorder %s32, 1
    %p433 = por %p431, %p432
    %p435 = scmp.ne.s32.totalorder %s420, %s434
    %p436 = scmp.eq.s32.totalorder %s32, 0
    %p437 = por %p435, %p436
    %s439 = sadd.s32 %s438, 1
    %p442 = scmp.eq.s32.totalorder %s26, 1
    %p443 = scmp.ne.s32.totalorder %s438, %s440
    %p444 = scmp.eq.s32.totalorder %s26, 0
    %p445 = por %p443, %p444
    %p446 = scmp.ne.s32.totalorder %s438, %s440
    %p447 = scmp.eq.s32.totalorder %s31, 1
    %p448 = por %p446, %p447
    %p449 = scmp.ne.s32.totalorder %s440, %s441
    %p450 = scmp.eq.s32.totalorder %s31, 0
    %p451 = por %p449, %p450
    %p452 = scmp.ne.s32.totalorder %s440, %s441
    %p453 = scmp.eq.s32.totalorder %s32, 1
    %p454 = por %p452, %p453
    %p456 = scmp.ne.s32.totalorder %s441, %s455
    %p457 = scmp.eq.s32.totalorder %s32, 0
    %p458 = por %p456, %p457
    %s459 = ssub.s32 %s26, %s33
    %p460 = scmp.eq.s32.totalorder %s459, 0
    %s462 = sadd.s32 %s461, 1
    %s463 = scalar_select %p460, %s461, %s462
    %p466 = pneg %p460
    %p467 = scmp.eq.s32.totalorder %s26, 1
    %p468 = por %p466, %p467
    %p469 = scmp.ne.s32.totalorder %s461, %s464
    %p470 = scmp.eq.s32.totalorder %s26, 0
    %p471 = por %p469, %p470
    %p472 = scmp.ne.s32.totalorder %s461, %s464
    %p473 = scmp.eq.s32.totalorder %s31, 1
    %p474 = por %p472, %p473
    %p475 = scmp.ne.s32.totalorder %s464, %s465
    %p476 = scmp.eq.s32.totalorder %s31, 0
    %p477 = por %p475, %p476
    %p478 = scmp.ne.s32.totalorder %s464, %s465
    %p479 = scmp.eq.s32.totalorder %s32, 1
    %p480 = por %p478, %p479
    %p482 = scmp.ne.s32.totalorder %s465, %s481
    %p483 = scmp.eq.s32.totalorder %s32, 0
    %p484 = por %p482, %p483
    %p485 = scmp.le.s32.totalorder 1, %s26
    %p486 = scmp.lt.s32.totalorder %s26, 3
    %p487 = pnand %p485, %p486
    %p488 = pneg %p487
    // Predicated region
    $region9: #{resnet_gpt2_forward.2} parent=5 // pred_check
      _
    $region10: #{resnet_gpt2_forward.2} parent=5 // pred_check_branch
      %490 = sbr.rel (%p487) target = $region12
    $region11: #{resnet_gpt2_forward.2} parent=5 // pred_region
      %s491 = ssub.s32 %s26, 1
      // Predicated region
      $region13: #{resnet_gpt2_forward.2} parent=11 // pred_check
        %p492 = pneg %p73
      $region14: #{resnet_gpt2_forward.2} parent=11 // pred_check_branch
        %494 = sbr.rel (%p492) target = $region16
      $region15: #{resnet_gpt2_forward.2} parent=11 // pred_region
        _
      $region16: #{resnet_gpt2_forward.2} parent=11 // pred_fallthru
        _
      // Predicated region
      $region17: #{resnet_gpt2_forward.2} parent=11 // pred_check
        %p495 = pneg %p94
      $region18: #{resnet_gpt2_forward.2} parent=11 // pred_check_branch
        %497 = sbr.rel (%p495) target = $region20
      $region19: #{resnet_gpt2_forward.2} parent=11 // pred_region
        _
      $region20: #{resnet_gpt2_forward.2} parent=11 // pred_fallthru
        _
      // Predicated region
      $region21: #{resnet_gpt2_forward.2} parent=11 // pred_check
        %p498 = pneg %p115
      $region22: #{resnet_gpt2_forward.2} parent=11 // pred_check_branch
        %500 = sbr.rel (%p498) target = $region24
      $region23: #{resnet_gpt2_forward.2} parent=11 // pred_region
        _
      $region24: #{resnet_gpt2_forward.2} parent=11 // pred_fallthru
        _
      // Predicated region
      $region25: #{resnet_gpt2_forward.2} parent=11 // pred_check
        %p501 = pneg %p136
      $region26: #{resnet_gpt2_forward.2} parent=11 // pred_check_branch
        %503 = sbr.rel (%p501) target = $region28
      $region27: #{resnet_gpt2_forward.2} parent=11 // pred_region
        _
      $region28: #{resnet_gpt2_forward.2} parent=11 // pred_fallthru
        _
      // Predicated region
      $region29: #{resnet_gpt2_forward.2} parent=11 // pred_check
        %p504 = pneg %p157
      $region30: #{resnet_gpt2_forward.2} parent=11 // pred_check_branch
        %506 = sbr.rel (%p504) target = $region32
      $region31: #{resnet_gpt2_forward.2} parent=11 // pred_region
        _
      $region32: #{resnet_gpt2_forward.2} parent=11 // pred_fallthru
        _
      // Predicated region
      $region33: #{resnet_gpt2_forward.2} parent=11 // pred_check
        %p507 = pneg %p178
      $region34: #{resnet_gpt2_forward.2} parent=11 // pred_check_branch
        %509 = sbr.rel (%p507) target = $region36
      $region35: #{resnet_gpt2_forward.2} parent=11 // pred_region
        _
      $region36: #{resnet_gpt2_forward.2} parent=11 // pred_fallthru
        _
      // Predicated region
      $region37: #{resnet_gpt2_forward.2} parent=11 // pred_check
        %p510 = pneg %p199
      $region38: #{resnet_gpt2_forward.2} parent=11 // pred_check_branch
        %512 = sbr.rel (%p510) target = $region40
      $region39: #{resnet_gpt2_forward.2} parent=11 // pred_region
        _
      $region40: #{resnet_gpt2_forward.2} parent=11 // pred_fallthru
        _
      // Predicated region
      $region41: #{resnet_gpt2_forward.2} parent=11 // pred_check
        %p513 = pneg %p220
      $region42: #{resnet_gpt2_forward.2} parent=11 // pred_check_branch
        %515 = sbr.rel (%p513) target = $region44
      $region43: #{resnet_gpt2_forward.2} parent=11 // pred_region
        _
      $region44: #{resnet_gpt2_forward.2} parent=11 // pred_fallthru
        _
      // Predicated region
      $region45: #{resnet_gpt2_forward.2} parent=11 // pred_check
        %p516 = pneg %p241
      $region46: #{resnet_gpt2_forward.2} parent=11 // pred_check_branch
        %518 = sbr.rel (%p516) target = $region48
      $region47: #{resnet_gpt2_forward.2} parent=11 // pred_region
        _
      $region48: #{resnet_gpt2_forward.2} parent=11 // pred_fallthru
        _
      // Predicated region
      $region49: #{resnet_gpt2_forward.2} parent=11 // pred_check
        %p519 = pneg %p262
      $region50: #{resnet_gpt2_forward.2} parent=11 // pred_check_branch
        %521 = sbr.rel (%p519) target = $region52
      $region51: #{resnet_gpt2_forward.2} parent=11 // pred_region
        _
      $region52: #{resnet_gpt2_forward.2} parent=11 // pred_fallthru
        _
      // Predicated region
      $region53: #{resnet_gpt2_forward.2} parent=11 // pred_check
        %p522 = pneg %p283
      $region54: #{resnet_gpt2_forward.2} parent=11 // pred_check_branch
        %524 = sbr.rel (%p522) target = $region56
      $region55: #{resnet_gpt2_forward.2} parent=11 // pred_region
        _
      $region56: #{resnet_gpt2_forward.2} parent=11 // pred_fallthru
        _
      // Predicated region
      $region57: #{resnet_gpt2_forward.2} parent=11 // pred_check
        %p525 = pneg %p304
      $region58: #{resnet_gpt2_forward.2} parent=11 // pred_check_branch
        %527 = sbr.rel (%p525) target = $region60
      $region59: #{resnet_gpt2_forward.2} parent=11 // pred_region
        _
      $region60: #{resnet_gpt2_forward.2} parent=11 // pred_fallthru
        _
      // Predicated region
      $region61: #{resnet_gpt2_forward.2} parent=11 // pred_check
        %p528 = pneg %p325
      $region62: #{resnet_gpt2_forward.2} parent=11 // pred_check_branch
        %530 = sbr.rel (%p528) target = $region64
      $region63: #{resnet_gpt2_forward.2} parent=11 // pred_region
        _
      $region64: #{resnet_gpt2_forward.2} parent=11 // pred_fallthru
        _
      // Predicated region
      $region65: #{resnet_gpt2_forward.2} parent=11 // pred_check
        %p531 = pneg %p346
      $region66: #{resnet_gpt2_forward.2} parent=11 // pred_check_branch
        %533 = sbr.rel (%p531) target = $region68
      $region67: #{resnet_gpt2_forward.2} parent=11 // pred_region
        _
      $region68: #{resnet_gpt2_forward.2} parent=11 // pred_fallthru
        _
      // Predicated region
      $region69: #{resnet_gpt2_forward.2} parent=11 // pred_check
        %p534 = pneg %p367
      $region70: #{resnet_gpt2_forward.2} parent=11 // pred_check_branch
        %536 = sbr.rel (%p534) target = $region72
      $region71: #{resnet_gpt2_forward.2} parent=11 // pred_region
        _
      $region72: #{resnet_gpt2_forward.2} parent=11 // pred_fallthru
        _
      // Predicated region
      $region73: #{resnet_gpt2_forward.2} parent=11 // pred_check
        %p537 = pneg %p388
      $region74: #{resnet_gpt2_forward.2} parent=11 // pred_check_branch
        %539 = sbr.rel (%p537) target = $region76
      $region75: #{resnet_gpt2_forward.2} parent=11 // pred_region
        _
      $region76: #{resnet_gpt2_forward.2} parent=11 // pred_fallthru
        _
      // Predicated region
      $region77: #{resnet_gpt2_forward.2} parent=11 // pred_check
        %p540 = pneg %p409
      $region78: #{resnet_gpt2_forward.2} parent=11 // pred_check_branch
        %542 = sbr.rel (%p540) target = $region80
      $region79: #{resnet_gpt2_forward.2} parent=11 // pred_region
        _
      $region80: #{resnet_gpt2_forward.2} parent=11 // pred_fallthru
        _
      // Predicated region
      $region81: #{resnet_gpt2_forward.2} parent=11 // pred_check
        %p543 = pneg %p430
      $region82: #{resnet_gpt2_forward.2} parent=11 // pred_check_branch
        %545 = sbr.rel (%p543) target = $region84
      $region83: #{resnet_gpt2_forward.2} parent=11 // pred_region
        _
      $region84: #{resnet_gpt2_forward.2} parent=11 // pred_fallthru
        _
      // Predicated region
      $region85: #{resnet_gpt2_forward.2} parent=11 // pred_check
        %p546 = pneg %p451
      $region86: #{resnet_gpt2_forward.2} parent=11 // pred_check_branch
        %548 = sbr.rel (%p546) target = $region88
      $region87: #{resnet_gpt2_forward.2} parent=11 // pred_region
        _
      $region88: #{resnet_gpt2_forward.2} parent=11 // pred_fallthru
        _
    $region12: #{resnet_gpt2_forward.2} parent=5 // pred_fallthru
      _
    %p549 = scmp.lt.s32.totalorder %s26, 2
    // Predicated region
    $region89: #{resnet_gpt2_forward.2} parent=5 // pred_check
      %p550 = pneg %p549
    $region90: #{resnet_gpt2_forward.2} parent=5 // pred_check_branch
      %552 = sbr.rel (%p550) target = $region92
    $region91: #{resnet_gpt2_forward.2} parent=5 // pred_region
      // Predicated region
      $region93: #{resnet_gpt2_forward.2} parent=91 // pred_check
        %p553 = pneg %p46
      $region94: #{resnet_gpt2_forward.2} parent=91 // pred_check_branch
        %555 = sbr.rel (%p553) target = $region96
      $region95: #{resnet_gpt2_forward.2} parent=91 // pred_region
        %p556 = scmp.lt.s32.totalorder %s26, 1
        %s557 = scalar_select %p556, %s26, 1
        %s558 = smul.addr %s557, 32
        %s559 = smul.addr %s558, 8
        %s560 = scalar_lea.vmem %s0, %s559
      $region96: #{resnet_gpt2_forward.2} parent=91 // pred_fallthru
        _
    $region92: #{resnet_gpt2_forward.2} parent=5 // pred_fallthru
      _
    %p561 = scmp.le.s32.totalorder 1, %s26
    %p562 = scmp.lt.s32.totalorder %s26, 3
    %p563 = pnand %p561, %p562
    %p564 = pneg %p563
    // Predicated region
    $region97: #{resnet_gpt2_forward.2} parent=5 // pred_check
      _
    $region98: #{resnet_gpt2_forward.2} parent=5 // pred_check_branch
      %566 = sbr.rel (%p563) target = $region100
    $region99: #{resnet_gpt2_forward.2} parent=5 // pred_region
      %s567 = ssub.s32 %s26, 1
      %p568 = scmp.lt.s32.totalorder %s31, 1
      %s569 = scalar_select %p568, %s31, 1
      %s570 = smul.addr %s569, 32
      %s571 = smul.addr %s570, 8
      %s572 = scalar_lea.vmem %s0, %s571
      %p573 = pneg %p52
      %p574 = pneg %p49
      %p575 = pneg %p73
      %p576 = pneg %p70
      %p577 = pneg %p94
      %p578 = pneg %p91
      %p579 = pneg %p115
      %p580 = pneg %p112
      %p581 = pneg %p136
      %p582 = pneg %p133
      %p583 = pneg %p157
      %p584 = pneg %p154
      %p585 = pneg %p178
      %p586 = pneg %p175
      %p587 = pneg %p199
      %p588 = pneg %p196
      %p589 = pneg %p220
      %p590 = pneg %p217
      %p591 = pneg %p241
      %p592 = pneg %p238
      %p593 = pneg %p262
      %p594 = pneg %p259
      %p595 = pneg %p283
      %p596 = pneg %p280
      %p597 = pneg %p304
      %p598 = pneg %p301
      %p599 = pneg %p325
      %p600 = pneg %p322
      %p601 = pneg %p346
      %p602 = pneg %p343
      %p603 = pneg %p367
      %p604 = pneg %p364
      %p605 = pneg %p388
      %p606 = pneg %p385
      %p607 = pneg %p409
      %p608 = pneg %p406
      %p609 = pneg %p430
      %p610 = pneg %p427
      %p611 = pneg %p451
      %p612 = pneg %p448
      %p613 = pneg %p477
      %p614 = pneg %p474
      %p615 = scmp.lt.s32.totalorder %s31, 1
      %s616 = scalar_select %p615, %s31, 1
      %s617 = scalar_lea.vmem %s20, %s616
      %p618 = scmp.lt.s32.totalorder %s31, 1
      %s619 = scalar_select %p618, %s31, 1
      %s620 = smul.addr %s619, 32
      %s621 = smul.addr %s620, 8
      %s622 = scalar_lea.vmem %s0, %s621
      %p623 = scmp.lt.s32.totalorder %s31, 1
      %s624 = scalar_select %p623, %s31, 1
      %s625 = scalar_lea.vmem %s20, %s624
      %v627 = vld [vmem:[%s622] sm:$0xff]
      %v628 = vld [vmem:[%s622 + $0x8] sm:$0xff]
      %v629 = vld [vmem:[%s622 + $0x10] sm:$0xff]
      %v630 = vld [vmem:[%s622 + $0x18] sm:$0xff]
      %v631 = vld [vmem:[%s622 + $0x20] sm:$0xff]
      %v632 = vld [vmem:[%s622 + $0x28] sm:$0xff]
      %v633 = vld [vmem:[%s622 + $0x30] sm:$0xff]
      %v634 = vld [vmem:[%s622 + $0x38] sm:$0xff]
      %v635 = vld [vmem:[%s622 + $0x40] sm:$0xff]
      %v636 = vld [vmem:[%s622 + $0x48] sm:$0xff]
      %v637 = vld [vmem:[%s622 + $0x50] sm:$0xff]
      %v638 = vld [vmem:[%s622 + $0x58] sm:$0xff]
      %v639 = vld [vmem:[%s622 + $0x60] sm:$0xff]
      %v640 = vld [vmem:[%s622 + $0x68] sm:$0xff]
      %v641 = vld [vmem:[%s622 + $0x70] sm:$0xff]
      %v642 = vld [vmem:[%s622 + $0x78] sm:$0xff]
      %v643 = vld [vmem:[%s622 + $0x80] sm:$0xff]
      %v644 = vld [vmem:[%s622 + $0x88] sm:$0xff]
      %v645 = vld [vmem:[%s622 + $0x90] sm:$0xff]
      %v646 = vld [vmem:[%s622 + $0x98] sm:$0xff]
      %v647 = vld [vmem:[%s622 + $0xa0] sm:$0xff]
      %v648 = vld [vmem:[%s622 + $0xa8] sm:$0xff]
      %v649 = vld [vmem:[%s622 + $0xb0] sm:$0xff]
      %v650 = vld [vmem:[%s622 + $0xb8] sm:$0xff]
      %v651 = vld [vmem:[%s622 + $0xc0] sm:$0xff]
      %v652 = vld [vmem:[%s622 + $0xc8] sm:$0xff]
      %v653 = vld [vmem:[%s622 + $0xd0] sm:$0xff]
      %v654 = vld [vmem:[%s622 + $0xd8] sm:$0xff]
      %v655 = vld [vmem:[%s622 + $0xe0] sm:$0xff]
      %v656 = vld [vmem:[%s622 + $0xe8] sm:$0xff]
      %v657 = vld [vmem:[%s622 + $0xf0] sm:$0xff]
      %v658 = vld [vmem:[%s622 + $0xf8] sm:$0xff]
      %v659 = vld [vmem:[%s1] sm:$0x7]
      %v660 = vld [vmem:[%s1 + $0x4] sm:$0x7]
      %v661 = vld [vmem:[%s1 + $0x8] sm:$0x7]
      %v662 = vld [vmem:[%s1 + $0xc] sm:$0x7]
      %v663 = vld [vmem:[%s1 + $0x10] sm:$0x7]
      %v664 = vld [vmem:[%s1 + $0x14] sm:$0x7]
      %v665 = vld [vmem:[%s1 + $0x18] sm:$0x7]
      %v666 = vld [vmem:[%s1 + $0x1c] sm:$0x7]
      %v667 = vld [vmem:[%s1 + $0x20] sm:$0x7]
      %v668 = vld [vmem:[%s2] sm:$0x1]
      %v669 = vld [vmem:[%s3] sm:$0x1]
      %vm701 = vcmask 1040384
      %v702 = vrot.slane 0.0, 7
      %v703 = vsel %vm701, %v702, %v702
      %v704 = vrot.slane %v627, 7
      %v705 = vsel %vm701, %v702, %v704
      %v706 = vrot.slane %v628, 7
      %v707 = vsel %vm701, %v704, %v706
      %v708 = vrot.slane %v629, 7
      %v709 = vsel %vm701, %v702, %v708
      %v710 = vrot.slane %v630, 7
      %v711 = vsel %vm701, %v708, %v710
      %v712 = vrot.slane %v631, 7
      %v713 = vsel %vm701, %v702, %v712
      %v714 = vrot.slane %v632, 7
      %v715 = vsel %vm701, %v712, %v714
      %v716 = vrot.slane %v633, 7
      %v717 = vsel %vm701, %v702, %v716
      %v718 = vrot.slane %v634, 7
      %v719 = vsel %vm701, %v716, %v718
      %v720 = vrot.slane %v635, 7
      %v721 = vsel %vm701, %v702, %v720
      %v722 = vrot.slane %v636, 7
      %v723 = vsel %vm701, %v720, %v722
      %v724 = vrot.slane %v637, 7
      %v725 = vsel %vm701, %v702, %v724
      %v726 = vrot.slane %v638, 7
      %v727 = vsel %vm701, %v724, %v726
      %v728 = vrot.slane %v639, 7
      %v729 = vsel %vm701, %v702, %v728
      %v730 = vrot.slane %v640, 7
      %v731 = vsel %vm701, %v728, %v730
      %v732 = vrot.slane %v641, 7
      %v733 = vsel %vm701, %v702, %v732
      %v734 = vrot.slane %v642, 7
      %v735 = vsel %vm701, %v732, %v734
      %v736 = vrot.slane %v643, 7
      %v737 = vsel %vm701, %v702, %v736
      %v738 = vrot.slane %v644, 7
      %v739 = vsel %vm701, %v736, %v738
      %v740 = vrot.slane %v645, 7
      %v741 = vsel %vm701, %v702, %v740
      %v742 = vrot.slane %v646, 7
      %v743 = vsel %vm701, %v740, %v742
      %v744 = vrot.slane %v647, 7
      %v745 = vsel %vm701, %v702, %v744
      %v746 = vrot.slane %v648, 7
      %v747 = vsel %vm701, %v744, %v746
      %v748 = vrot.slane %v649, 7
      %v749 = vsel %vm701, %v702, %v748
      %v750 = vrot.slane %v650, 7
      %v751 = vsel %vm701, %v748, %v750
      %v752 = vrot.slane %v651, 7
      %v753 = vsel %vm701, %v702, %v752
      %v754 = vrot.slane %v652, 7
      %v755 = vsel %vm701, %v752, %v754
      %v756 = vrot.slane %v653, 7
      %v757 = vsel %vm701, %v702, %v756
      %v758 = vrot.slane %v654, 7
      %v759 = vsel %vm701, %v756, %v758
      %v760 = vrot.slane %v655, 7
      %v761 = vsel %vm701, %v702, %v760
      %v762 = vrot.slane %v656, 7
      %v763 = vsel %vm701, %v760, %v762
      %v795 = vpack.c.bf16 %v703, %v703
      %v796 = vpack.c.bf16 %v707, %v705
      %v797 = vpack.c.bf16 %v711, %v709
      %v798 = vpack.c.bf16 %v715, %v713
      %v799 = vpack.c.bf16 %v719, %v717
      %v800 = vpack.c.bf16 %v723, %v721
      %v801 = vpack.c.bf16 %v727, %v725
      %v802 = vpack.c.bf16 %v731, %v729
      %v803 = vpack.c.bf16 %v735, %v733
      %v804 = vpack.c.bf16 %v739, %v737
      %v805 = vpack.c.bf16 %v743, %v741
      %v806 = vpack.c.bf16 %v747, %v745
      %v807 = vpack.c.bf16 %v751, %v749
      %v808 = vpack.c.bf16 %v755, %v753
      %v809 = vpack.c.bf16 %v759, %v757
      %v810 = vpack.c.bf16 %v763, %v761
      %v811 = vpack.c.bf16 %v659, %v659
      %v812 = vpack.c.bf16 0.0, 0.0
      %v813 = vpack.c.bf16 %v628, %v627
      %v814 = vpack.c.bf16 %v630, %v629
      %v815 = vpack.c.bf16 %v632, %v631
      %v816 = vpack.c.bf16 %v634, %v633
      %v817 = vpack.c.bf16 %v636, %v635
      %v818 = vpack.c.bf16 %v638, %v637
      %v819 = vpack.c.bf16 %v640, %v639
      %v820 = vpack.c.bf16 %v642, %v641
      %v821 = vpack.c.bf16 %v644, %v643
      %v822 = vpack.c.bf16 %v646, %v645
      %v823 = vpack.c.bf16 %v648, %v647
      %v824 = vpack.c.bf16 %v650, %v649
      %v825 = vpack.c.bf16 %v652, %v651
      %v826 = vpack.c.bf16 %v654, %v653
      %v827 = vpack.c.bf16 %v656, %v655
      %v828 = vpack.c.bf16 %v660, %v660
      %vm829 = vcmask 23552
      %v831 = vsel %vm829, %v812, 0
      %v834 = vsel %vm829, %v813, 0
      %v837 = vsel %vm829, %v814, 0
      %v840 = vsel %vm829, %v815, 0
      %v843 = vsel %vm829, %v816, 0
      %v846 = vsel %vm829, %v817, 0
      %v849 = vsel %vm829, %v818, 0
      %v852 = vsel %vm829, %v819, 0
      %v855 = vsel %vm829, %v820, 0
      %v858 = vsel %vm829, %v821, 0
      %v861 = vsel %vm829, %v822, 0
      %v864 = vsel %vm829, %v823, 0
      %v867 = vsel %vm829, %v824, 0
      %v870 = vsel %vm829, %v825, 0
      %v873 = vsel %vm829, %v826, 0
      %v876 = vsel %vm829, %v827, 0
      %vm878 = vcmask 1041408
      %v879 = vsel %vm701, 4294967295, 65535
      %v880 = vsel %vm878, %v879, 0
      %v882 = vand.u32 %v828, %v880
      %884 = vmatprep.subr.bf16.mxu0 0
      %885 = vmatpush1.bf16.msra.mxu0 %v882
      %886 = vmatprep.subr.bf16.mxu0 0
      %887 = vmatpush1.bf16.msra.mxu0 0
      %888 = vmatprep.subr.bf16.mxu0 0
      %889 = vmatpush1.bf16.msra.mxu0 0
      %890 = vmatprep.subr.bf16.mxu0 0
      %891 = vmatpush1.bf16.msra.mxu0 0
      %892 = vmatprep.subr.bf16.mxu0 0
      %893 = vmatpush1.bf16.msra.mxu0 0
      %894 = vmatprep.subr.bf16.mxu0 0
      %895 = vmatpush1.bf16.msra.mxu0 0
      %896 = vmatprep.subr.bf16.mxu0 0
      %897 = vmatpush1.bf16.msra.mxu0 0
      %898 = vmatprep.subr.bf16.mxu0 0
      %899 = vmatpush1.bf16.msra.mxu0 0
      %900 = vmatprep.subr.bf16.mxu0 0
      %901 = vmatpush1.bf16.msra.mxu0 0
      %902 = vmatprep.subr.bf16.mxu0 0
      %903 = vmatpush1.bf16.msra.mxu0 0
      %904 = vmatprep.subr.bf16.mxu0 0
      %905 = vmatpush1.bf16.msra.mxu0 0
      %906 = vmatprep.subr.bf16.mxu0 0
      %907 = vmatpush1.bf16.msra.mxu0 0
      %908 = vmatprep.subr.bf16.mxu0 0
      %909 = vmatpush1.bf16.msra.mxu0 0
      %910 = vmatprep.subr.bf16.mxu0 0
      %911 = vmatpush1.bf16.msra.mxu0 0
      %912 = vmatprep.subr.bf16.mxu0 0
      %913 = vmatpush1.bf16.msra.mxu0 0
      %914 = vmatprep.subr.bf16.mxu0 0
      %915 = vmatpush1.bf16.msra.mxu0 0
      %916 = vmatprep.mubr.bf16.mxu0 0
      %917 = vmatmul.mubr.bf16.gmra.mrb[0].mxu0 %v831
      %v918 = vpop.f32.mrb[0].mxu0
      %v919 = vadd.f32 0.0, %v918
      %v920 = vpop.f32.mrb[0].mxu0
      %v921 = vpop.f32.mrb[0].mxu0
      %v922 = vadd.f32 0.0, %v921
      %v923 = vpop.f32.mrb[0].mxu0
      %924 = vmatprep.mubr.bf16.mxu0 0
      %925 = vmatmul.mubr.bf16.gmra.mrb[0].mxu0 %v834
      %v926 = vpop.f32.mrb[0].mxu0
      %v927 = vadd.f32 0.0, %v926
      %v928 = vpop.f32.mrb[0].mxu0
      %v929 = vpop.f32.mrb[0].mxu0
      %v930 = vadd.f32 0.0, %v929
      %v931 = vpop.f32.mrb[0].mxu0
      %932 = vmatprep.mubr.bf16.mxu0 0
      %933 = vmatmul.mubr.bf16.gmra.mrb[0].mxu0 %v837
      %v934 = vpop.f32.mrb[0].mxu0
      %v935 = vadd.f32 0.0, %v934
      %v936 = vpop.f32.mrb[0].mxu0
      %v937 = vpop.f32.mrb[0].mxu0
      %v938 = vadd.f32 0.0, %v937
      %v939 = vpop.f32.mrb[0].mxu0
      %940 = vmatprep.mubr.bf16.mxu0 0
      %941 = vmatmul.mubr.bf16.gmra.mrb[0].mxu0 %v840
      %v942 = vpop.f32.mrb[0].mxu0
      %v943 = vadd.f32 0.0, %v942
      %v944 = vpop.f32.mrb[0].mxu0
      %v945 = vpop.f32.mrb[0].mxu0
      %v946 = vadd.f32 0.0, %v945
      %v947 = vpop.f32.mrb[0].mxu0
      %948 = vmatprep.mubr.bf16.mxu0 0
      %949 = vmatmul.mubr.bf16.gmra.mrb[0].mxu0 %v843
      %v950 = vpop.f32.mrb[0].mxu0
      %v951 = vadd.f32 0.0, %v950
      %v952 = vpop.f32.mrb[0].mxu0
      %v953 = vpop.f32.mrb[0].mxu0
      %v954 = vadd.f32 0.0, %v953
      %v955 = vpop.f32.mrb[0].mxu0
      %956 = vmatprep.mubr.bf16.mxu0 0
      %957 = vmatmul.mubr.bf16.gmra.mrb[0].mxu0 %v846
      %v958 = vpop.f32.mrb[0].mxu0
      %v959 = vadd.f32 0.0, %v958
      %v960 = vpop.f32.mrb[0].mxu0
      %v961 = vpop.f32.mrb[0].mxu0
      %v962 = vadd.f32 0.0, %v961
      %v963 = vpop.f32.mrb[0].mxu0
      %964 = vmatprep.mubr.bf16.mxu0 0
      %965 = vmatmul.mubr.bf16.gmra.mrb[0].mxu0 %v849
      %v966 = vpop.f32.mrb[0].mxu0
      %v967 = vadd.f32 0.0, %v966
      %v968 = vpop.f32.mrb[0].mxu0
      %v969 = vpop.f32.mrb[0].mxu0
      %v970 = vadd.f32 0.0, %v969
      %v971 = vpop.f32.mrb[0].mxu0
      %972 = vmatprep.mubr.bf16.mxu0 0
      %973 = vmatmul.mubr.bf16.gmra.mrb[0].mxu0 %v852
      %v974 = vpop.f32.mrb[0].mxu0
      %v975 = vadd.f32 0.0, %v974
      %v976 = vpop.f32.mrb[0].mxu0
      %v977 = vpop.f32.mrb[0].mxu0
      %v978 = vadd.f32 0.0, %v977
      %v979 = vpop.f32.mrb[0].mxu0
      %980 = vmatprep.mubr.bf16.mxu0 0
      %981 = vmatmul.mubr.bf16.gmra.mrb[0].mxu0 %v855
      %v982 = vpop.f32.mrb[0].mxu0
      %v983 = vadd.f32 0.0, %v982
      %v984 = vpop.f32.mrb[0].mxu0
      %v985 = vpop.f32.mrb[0].mxu0
      %v986 = vadd.f32 0.0, %v985
      %v987 = vpop.f32.mrb[0].mxu0
      %988 = vmatprep.mubr.bf16.mxu0 0
      %989 = vmatmul.mubr.bf16.gmra.mrb[0].mxu0 %v858
      %v990 = vpop.f32.mrb[0].mxu0
      %v991 = vadd.f32 0.0, %v990
      %v992 = vpop.f32.mrb[0].mxu0
      %v993 = vpop.f32.mrb[0].mxu0
      %v994 = vadd.f32 0.0, %v993
      %v995 = vpop.f32.mrb[0].mxu0
      %996 = vmatprep.mubr.bf16.mxu0 0
      %997 = vmatmul.mubr.bf16.gmra.mrb[0].mxu0 %v861
      %v998 = vpop.f32.mrb[0].mxu0
      %v999 = vadd.f32 0.0, %v998
      %v1000 = vpop.f32.mrb[0].mxu0
      %v1001 = vpop.f32.mrb[0].mxu0
      %v1002 = vadd.f32 0.0, %v1001
      %v1003 = vpop.f32.mrb[0].mxu0
      %1004 = vmatprep.mubr.bf16.mxu0 0
      %1005 = vmatmul.mubr.bf16.gmra.mrb[0].mxu0 %v864
      %v1006 = vpop.f32.mrb[0].mxu0
      %v1007 = vadd.f32 0.0, %v1006
      %v1008 = vpop.f32.mrb[0].mxu0
      %v1009 = vpop.f32.mrb[0].mxu0
      %v1010 = vadd.f32 0.0, %v1009
      %v1011 = vpop.f32.mrb[0].mxu0
      %1012 = vmatprep.mubr.bf16.mxu0 0
      %1013 = vmatmul.mubr.bf16.gmra.mrb[0].mxu0 %v867
      %v1014 = vpop.f32.mrb[0].mxu0
      %v1015 = vadd.f32 0.0, %v1014
      %v1016 = vpop.f32.mrb[0].mxu0
      %v1017 = vpop.f32.mrb[0].mxu0
      %v1018 = vadd.f32 0.0, %v1017
      %v1019 = vpop.f32.mrb[0].mxu0
      %1020 = vmatprep.mubr.bf16.mxu0 0
      %1021 = vmatmul.mubr.bf16.gmra.mrb[0].mxu0 %v870
      %v1022 = vpop.f32.mrb[0].mxu0
      %v1023 = vadd.f32 0.0, %v1022
      %v1024 = vpop.f32.mrb[0].mxu0
      %v1025 = vpop.f32.mrb[0].mxu0
      %v1026 = vadd.f32 0.0, %v1025
      %v1027 = vpop.f32.mrb[0].mxu0
      %1028 = vmatprep.mubr.bf16.mxu0 0
      %1029 = vmatmul.mubr.bf16.gmra.mrb[0].mxu0 %v873
      %v1030 = vpop.f32.mrb[0].mxu0
      %v1031 = vadd.f32 0.0, %v1030
      %v1032 = vpop.f32.mrb[0].mxu0
      %v1033 = vpop.f32.mrb[0].mxu0
      %v1034 = vadd.f32 0.0, %v1033
      %v1035 = vpop.f32.mrb[0].mxu0
      %1036 = vmatprep.mubr.bf16.mxu0 0
      %1037 = vmatmul.mubr.bf16.gmra.mrb[0].mxu0 %v876
      %v1038 = vpop.f32.mrb[0].mxu0
      %v1039 = vadd.f32 0.0, %v1038
      %v1040 = vpop.f32.mrb[0].mxu0
      %v1041 = vpop.f32.mrb[0].mxu0
      %v1042 = vadd.f32 0.0, %v1041
      %v1043 = vpop.f32.mrb[0].mxu0
      %1044 = vdwg.mxu0
      %v1046 = vsel %vm829, %v795, 0
      %v1049 = vsel %vm829, %v796, 0
      %v1052 = vsel %vm829, %v797, 0
      %v1055 = vsel %vm829, %v798, 0
      %v1058 = vsel %vm829, %v799, 0
      %v1061 = vsel %vm829, %v800, 0
      %v1064 = vsel %vm829, %v801, 0
      %v1067 = vsel %vm829, %v802, 0
      %v1070 = vsel %vm829, %v803, 0
      %v1073 = vsel %vm829, %v804, 0
      %v1076 = vsel %vm829, %v805, 0
      %v1079 = vsel %vm829, %v806, 0
      %v1082 = vsel %vm829, %v807, 0
      %v1085 = vsel %vm829, %v808, 0
      %v1088 = vsel %vm829, %v809, 0
      %v1091 = vsel %vm829, %v810, 0
      %v1094 = vand.u32 %v811, %v880
      %1096 = vmatprep.subr.bf16.mxu0 0
      %1097 = vmatpush1.bf16.msra.mxu0 %v1094
      %1098 = vmatprep.subr.bf16.mxu0 0
      %1099 = vmatpush1.bf16.msra.mxu0 0
      %1100 = vmatprep.subr.bf16.mxu0 0
      %1101 = vmatpush1.bf16.msra.mxu0 0
      %1102 = vmatprep.subr.bf16.mxu0 0
      %1103 = vmatpush1.bf16.msra.mxu0 0
      %1104 = vmatprep.subr.bf16.mxu0 0
      %1105 = vmatpush1.bf16.msra.mxu0 0
      %1106 = vmatprep.subr.bf16.mxu0 0
      %1107 = vmatpush1.bf16.msra.mxu0 0
      %1108 = vmatprep.subr.bf16.mxu0 0
      %1109 = vmatpush1.bf16.msra.mxu0 0
      %1110 = vmatprep.subr.bf16.mxu0 0
      %1111 = vmatpush1.bf16.msra.mxu0 0
      %1112 = vmatprep.subr.bf16.mxu0 0
      %1113 = vmatpush1.bf16.msra.mxu0 0
      %1114 = vmatprep.subr.bf16.mxu0 0
      %1115 = vmatpush1.bf16.msra.mxu0 0
      %1116 = vmatprep.subr.bf16.mxu0 0
      %1117 = vmatpush1.bf16.msra.mxu0 0
      %1118 = vmatprep.subr.bf16.mxu0 0
      %1119 = vmatpush1.bf16.msra.mxu0 0
      %1120 = vmatprep.subr.bf16.mxu0 0
      %1121 = vmatpush1.bf16.msra.mxu0 0
      %1122 = vmatprep.subr.bf16.mxu0 0
      %1123 = vmatpush1.bf16.msra.mxu0 0
      %1124 = vmatprep.subr.bf16.mxu0 0
      %1125 = vmatpush1.bf16.msra.mxu0 0
      %1126 = vmatprep.subr.bf16.mxu0 0
      %1127 = vmatpush1.bf16.msra.mxu0 0
      %1128 = vmatprep.mubr.bf16.mxu0 0
      %1129 = vmatmul.mubr.bf16.gmra.mrb[0].mxu0 %v1046
      %v1130 = vpop.f32.mrb[0].mxu0
      %v1131 = vadd.f32 %v919, %v1130
      %v1132 = vpop.f32.mrb[0].mxu0
      %v1133 = vpop.f32.mrb[0].mxu0
      %v1134 = vadd.f32 %v922, %v1133
      %v1135 = vpop.f32.mrb[0].mxu0
      %1136 = vmatprep.mubr.bf16.mxu0 0
      %1137 = vmatmul.mubr.bf16.gmra.mrb[0].mxu0 %v1049
      %v1138 = vpop.f32.mrb[0].mxu0
      %v1139 = vadd.f32 %v927, %v1138
      %v1140 = vpop.f32.mrb[0].mxu0
      %v1141 = vpop.f32.mrb[0].mxu0
      %v1142 = vadd.f32 %v930, %v1141
      %v1143 = vpop.f32.mrb[0].mxu0
      %1144 = vmatprep.mubr.bf16.mxu0 0
      %1145 = vmatmul.mubr.bf16.gmra.mrb[0].mxu0 %v1052
      %v1146 = vpop.f32.mrb[0].mxu0
      %v1147 = vadd.f32 %v935, %v1146
      %v1148 = vpop.f32.mrb[0].mxu0
      %v1149 = vpop.f32.mrb[0].mxu0
      %v1150 = vadd.f32 %v938, %v1149
      %v1151 = vpop.f32.mrb[0].mxu0
      %1152 = vmatprep.mubr.bf16.mxu0 0
      %1153 = vmatmul.mubr.bf16.gmra.mrb[0].mxu0 %v1055
      %v1154 = vpop.f32.mrb[0].mxu0
      %v1155 = vadd.f32 %v943, %v1154
      %v1156 = vpop.f32.mrb[0].mxu0
      %v1157 = vpop.f32.mrb[0].mxu0
      %v1158 = vadd.f32 %v946, %v1157
      %v1159 = vpop.f32.mrb[0].mxu0
      %1160 = vmatprep.mubr.bf16.mxu0 0
      %1161 = vmatmul.mubr.bf16.gmra.mrb[0].mxu0 %v1058
      %v1162 = vpop.f32.mrb[0].mxu0
      %v1163 = vadd.f32 %v951, %v1162
      %v1164 = vpop.f32.mrb[0].mxu0
      %v1165 = vpop.f32.mrb[0].mxu0
      %v1166 = vadd.f32 %v954, %v1165
      %v1167 = vpop.f32.mrb[0].mxu0
      %1168 = vmatprep.mubr.bf16.mxu0 0
      %1169 = vmatmul.mubr.bf16.gmra.mrb[0].mxu0 %v1061
      %v1170 = vpop.f32.mrb[0].mxu0
      %v1171 = vadd.f32 %v959, %v1170
      %v1172 = vpop.f32.mrb[0].mxu0
      %v1173 = vpop.f32.mrb[0].mxu0
      %v1174 = vadd.f32 %v962, %v1173
      %v1175 = vpop.f32.mrb[0].mxu0
      %1176 = vmatprep.mubr.bf16.mxu0 0
      %1177 = vmatmul.mubr.bf16.gmra.mrb[0].mxu0 %v1064
      %v1178 = vpop.f32.mrb[0].mxu0
      %v1179 = vadd.f32 %v967, %v1178
      %v1180 = vpop.f32.mrb[0].mxu0
      %v1181 = vpop.f32.mrb[0].mxu0
      %v1182 = vadd.f32 %v970, %v1181
      %v1183 = vpop.f32.mrb[0].mxu0
      %1184 = vmatprep.mubr.bf16.mxu0 0
      %1185 = vmatmul.mubr.bf16.gmra.mrb[0].mxu0 %v1067
      %v1186 = vpop.f32.mrb[0].mxu0
      %v1187 = vadd.f32 %v975, %v1186
      %v1188 = vpop.f32.mrb[0].mxu0
      %v1189 = vpop.f32.mrb[0].mxu0
      %v1190 = vadd.f32 %v978, %v1189
      %v1191 = vpop.f32.mrb[0].mxu0
      %1192 = vmatprep.mubr.bf16.mxu0 0
      %1193 = vmatmul.mubr.bf16.gmra.mrb[0].mxu0 %v1070
      %v1194 = vpop.f32.mrb[0].mxu0
      %v1195 = vadd.f32 %v983, %v1194
      %v1196 = vpop.f32.mrb[0].mxu0
      %v1197 = vpop.f32.mrb[0].mxu0
      %v1198 = vadd.f32 %v986, %v1197
      %v1199 = vpop.f32.mrb[0].mxu0
      %1200 = vmatprep.mubr.bf16.mxu0 0
      %1201 = vmatmul.mubr.bf16.gmra.mrb[0].mxu0 %v1073
      %v1202 = vpop.f32.mrb[0].mxu0
      %v1203 = vadd.f32 %v991, %v1202
      %v1204 = vpop.f32.mrb[0].mxu0
      %v1205 = vpop.f32.mrb[0].mxu0
      %v1206 = vadd.f32 %v994, %v1205
      %v1207 = vpop.f32.mrb[0].mxu0
      %1208 = vmatprep.mubr.bf16.mxu0 0
      %1209 = vmatmul.mubr.bf16.gmra.mrb[0].mxu0 %v1076
      %v1210 = vpop.f32.mrb[0].mxu0
      %v1211 = vadd.f32 %v999, %v1210
      %v1212 = vpop.f32.mrb[0].mxu0
      %v1213 = vpop.f32.mrb[0].mxu0
      %v1214 = vadd.f32 %v1002, %v1213
      %v1215 = vpop.f32.mrb[0].mxu0
      %1216 = vmatprep.mubr.bf16.mxu0 0
      %1217 = vmatmul.mubr.bf16.gmra.mrb[0].mxu0 %v1079
      %v1218 = vpop.f32.mrb[0].mxu0
      %v1219 = vadd.f32 %v1007, %v1218
      %v1220 = vpop.f32.mrb[0].mxu0
      %v1221 = vpop.f32.mrb[0].mxu0
      %v1222 = vadd.f32 %v1010, %v1221
      %v1223 = vpop.f32.mrb[0].mxu0
      %1224 = vmatprep.mubr.bf16.mxu0 0
      %1225 = vmatmul.mubr.bf16.gmra.mrb[0].mxu0 %v1082
      %v1226 = vpop.f32.mrb[0].mxu0
      %v1227 = vadd.f32 %v1015, %v1226
      %v1228 = vpop.f32.mrb[0].mxu0
      %v1229 = vpop.f32.mrb[0].mxu0
      %v1230 = vadd.f32 %v1018, %v1229
      %v1231 = vpop.f32.mrb[0].mxu0
      %1232 = vmatprep.mubr.bf16.mxu0 0
      %1233 = vmatmul.mubr.bf16.gmra.mrb[0].mxu0 %v1085
      %v1234 = vpop.f32.mrb[0].mxu0
      %v1235 = vadd.f32 %v1023, %v1234
      %v1236 = vpop.f32.mrb[0].mxu0
      %v1237 = vpop.f32.mrb[0].mxu0
      %v1238 = vadd.f32 %v1026, %v1237
      %v1239 = vpop.f32.mrb[0].mxu0
      %1240 = vmatprep.mubr.bf16.mxu0 0
      %1241 = vmatmul.mubr.bf16.gmra.mrb[0].mxu0 %v1088
      %v1242 = vpop.f32.mrb[0].mxu0
      %v1243 = vadd.f32 %v1031, %v1242
      %v1244 = vpop.f32.mrb[0].mxu0
      %v1245 = vpop.f32.mrb[0].mxu0
      %v1246 = vadd.f32 %v1034, %v1245
      %v1247 = vpop.f32.mrb[0].mxu0
      %1248 = vmatprep.mubr.bf16.mxu0 0
      %1249 = vmatmul.mubr.bf16.gmra.mrb[0].mxu0 %v1091
      %v1250 = vpop.f32.mrb[0].mxu0
      %v1251 = vadd.f32 %v1039, %v1250
      %v1252 = vpop.f32.mrb[0].mxu0
      %v1253 = vpop.f32.mrb[0].mxu0
      %v1254 = vadd.f32 %v1042, %v1253
      %v1255 = vpop.f32.mrb[0].mxu0
      %1256 = vdwg.mxu0
      %vm1257 = vcmask 1046528
      %v1258 = vrot.slane 0.0, 1
      %v1259 = vsel %vm1257, %v1258, %v1258
      %v1260 = vrot.slane %v627, 1
      %v1261 = vrot.slane %v628, 1
      %v1262 = vsel %vm1257, %v1260, %v1261
      %v1263 = vsel %vm1257, %v1261, %v1258
      %v1264 = vrot.slane %v629, 1
      %v1265 = vrot.slane %v630, 1
      %v1266 = vsel %vm1257, %v1264, %v1265
      %v1267 = vsel %vm1257, %v1265, %v1258
      %v1268 = vrot.slane %v631, 1
      %v1269 = vrot.slane %v632, 1
      %v1270 = vsel %vm1257, %v1268, %v1269
      %v1271 = vsel %vm1257, %v1269, %v1258
      %v1272 = vrot.slane %v633, 1
      %v1273 = vrot.slane %v634, 1
      %v1274 = vsel %vm1257, %v1272, %v1273
      %v1275 = vsel %vm1257, %v1273, %v1258
      %v1276 = vrot.slane %v635, 1
      %v1277 = vrot.slane %v636, 1
      %v1278 = vsel %vm1257, %v1276, %v1277
      %v1279 = vsel %vm1257, %v1277, %v1258
      %v1280 = vrot.slane %v637, 1
      %v1281 = vrot.slane %v638, 1
      %v1282 = vsel %vm1257, %v1280, %v1281
      %v1283 = vsel %vm1257, %v1281, %v1258
      %v1284 = vrot.slane %v639, 1
      %v1285 = vrot.slane %v640, 1
      %v1286 = vsel %vm1257, %v1284, %v1285
      %v1287 = vsel %vm1257, %v1285, %v1258
      %v1288 = vrot.slane %v641, 1
      %v1289 = vrot.slane %v642, 1
      %v1290 = vsel %vm1257, %v1288, %v1289
      %v1291 = vsel %vm1257, %v1289, %v1258
      %v1292 = vrot.slane %v643, 1
      %v1293 = vrot.slane %v644, 1
      %v1294 = vsel %vm1257, %v1292, %v1293
      %v1295 = vsel %vm1257, %v1293, %v1258
      %v1296 = vrot.slane %v645, 1
      %v1297 = vrot.slane %v646, 1
      %v1298 = vsel %vm1257, %v1296, %v1297
      %v1299 = vsel %vm1257, %v1297, %v1258
      %v1300 = vrot.slane %v647, 1
      %v1301 = vrot.slane %v648, 1
      %v1302 = vsel %vm1257, %v1300, %v1301
      %v1303 = vsel %vm1257, %v1301, %v1258
      %v1304 = vrot.slane %v649, 1
      %v1305 = vrot.slane %v650, 1
      %v1306 = vsel %vm1257, %v1304, %v1305
      %v1307 = vsel %vm1257, %v1305, %v1258
      %v1308 = vrot.slane %v651, 1
      %v1309 = vrot.slane %v652, 1
      %v1310 = vsel %vm1257, %v1308, %v1309
      %v1311 = vsel %vm1257, %v1309, %v1258
      %v1312 = vrot.slane %v653, 1
      %v1313 = vrot.slane %v654, 1
      %v1314 = vsel %vm1257, %v1312, %v1313
      %v1315 = vsel %vm1257, %v1313, %v1258
      %v1316 = vrot.slane %v655, 1
      %v1317 = vrot.slane %v656, 1
      %v1318 = vsel %vm1257, %v1316, %v1317
      %v1319 = vsel %vm1257, %v1317, %v1258
      %v1351 = vpack.c.bf16 %v1259, %v1259
      %v1352 = vpack.c.bf16 %v1263, %v1262
      %v1353 = vpack.c.bf16 %v1267, %v1266
      %v1354 = vpack.c.bf16 %v1271, %v1270
      %v1355 = vpack.c.bf16 %v1275, %v1274
      %v1356 = vpack.c.bf16 %v1279, %v1278
      %v1357 = vpack.c.bf16 %v1283, %v1282
      %v1358 = vpack.c.bf16 %v1287, %v1286
      %v1359 = vpack.c.bf16 %v1291, %v1290
      %v1360 = vpack.c.bf16 %v1295, %v1294
      %v1361 = vpack.c.bf16 %v1299, %v1298
      %v1362 = vpack.c.bf16 %v1303, %v1302
      %v1363 = vpack.c.bf16 %v1307, %v1306
      %v1364 = vpack.c.bf16 %v1311, %v1310
      %v1365 = vpack.c.bf16 %v1315, %v1314
      %v1366 = vpack.c.bf16 %v1319, %v1318
      %v1367 = vpack.c.bf16 %v661, %v661
      %v1369 = vsel %vm829, %v1351, 0
      %v1372 = vsel %vm829, %v1352, 0
      %v1375 = vsel %vm829, %v1353, 0
      %v1378 = vsel %vm829, %v1354, 0
      %v1381 = vsel %vm829, %v1355, 0
      %v1384 = vsel %vm829, %v1356, 0
      %v1387 = vsel %vm829, %v1357, 0
      %v1390 = vsel %vm829, %v1358, 0
      %v1393 = vsel %vm829, %v1359, 0
      %v1396 = vsel %vm829, %v1360, 0
      %v1399 = vsel %vm829, %v1361, 0
      %v1402 = vsel %vm829, %v1362, 0
      %v1405 = vsel %vm829, %v1363, 0
      %v1408 = vsel %vm829, %v1364, 0
      %v1411 = vsel %vm829, %v1365, 0
      %v1414 = vsel %vm829, %v1366, 0
      %v1417 = vand.u32 %v1367, %v880
      %1419 = vmatprep.subr.bf16.mxu0 0
      %1420 = vmatpush1.bf16.msra.mxu0 %v1417
      %1421 = vmatprep.subr.bf16.mxu0 0
      %1422 = vmatpush1.bf16.msra.mxu0 0
      %1423 = vmatprep.subr.bf16.mxu0 0
      %1424 = vmatpush1.bf16.msra.mxu0 0
      %1425 = vmatprep.subr.bf16.mxu0 0
      %1426 = vmatpush1.bf16.msra.mxu0 0
      %1427 = vmatprep.subr.bf16.mxu0 0
      %1428 = vmatpush1.bf16.msra.mxu0 0
      %1429 = vmatprep.subr.bf16.mxu0 0
      %1430 = vmatpush1.bf16.msra.mxu0 0
      %1431 = vmatprep.subr.bf16.mxu0 0
      %1432 = vmatpush1.bf16.msra.mxu0 0
      %1433 = vmatprep.subr.bf16.mxu0 0
      %1434 = vmatpush1.bf16.msra.mxu0 0
      %1435 = vmatprep.subr.bf16.mxu0 0
      %1436 = vmatpush1.bf16.msra.mxu0 0
      %1437 = vmatprep.subr.bf16.mxu0 0
      %1438 = vmatpush1.bf16.msra.mxu0 0
      %1439 = vmatprep.subr.bf16.mxu0 0
      %1440 = vmatpush1.bf16.msra.mxu0 0
      %1441 = vmatprep.subr.bf16.mxu0 0
      %1442 = vmatpush1.bf16.msra.mxu0 0
      %1443 = vmatprep.subr.bf16.mxu0 0
      %1444 = vmatpush1.bf16.msra.mxu0 0
      %1445 = vmatprep.subr.bf16.mxu0 0
      %1446 = vmatpush1.bf16.msra.mxu0 0
      %1447 = vmatprep.subr.bf16.mxu0 0
      %1448 = vmatpush1.bf16.msra.mxu0 0
      %1449 = vmatprep.subr.bf16.mxu0 0
      %1450 = vmatpush1.bf16.msra.mxu0 0
      %1451 = vmatprep.mubr.bf16.mxu0 0
      %1452 = vmatmul.mubr.bf16.gmra.mrb[0].mxu0 %v1369
      %v1453 = vpop.f32.mrb[0].mxu0
      %v1454 = vadd.f32 0.0, %v1453
      %v1455 = vpop.f32.mrb[0].mxu0
      %v1456 = vpop.f32.mrb[0].mxu0
      %v1457 = vadd.f32 0.0, %v1456
      %v1458 = vpop.f32.mrb[0].mxu0
      %1459 = vmatprep.mubr.bf16.mxu0 0
      %1460 = vmatmul.mubr.bf16.gmra.mrb[0].mxu0 %v1372
      %v1461 = vpop.f32.mrb[0].mxu0
      %v1462 = vadd.f32 0.0, %v1461
      %v1463 = vpop.f32.mrb[0].mxu0
      %v1464 = vpop.f32.mrb[0].mxu0
      %v1465 = vadd.f32 0.0, %v1464
      %v1466 = vpop.f32.mrb[0].mxu0
      %1467 = vmatprep.mubr.bf16.mxu0 0
      %1468 = vmatmul.mubr.bf16.gmra.mrb[0].mxu0 %v1375
      %v1469 = vpop.f32.mrb[0].mxu0
      %v1470 = vadd.f32 0.0, %v1469
      %v1471 = vpop.f32.mrb[0].mxu0
      %v1472 = vpop.f32.mrb[0].mxu0
      %v1473 = vadd.f32 0.0, %v1472
      %v1474 = vpop.f32.mrb[0].mxu0
      %1475 = vmatprep.mubr.bf16.mxu0 0
      %1476 = vmatmul.mubr.bf16.gmra.mrb[0].mxu0 %v1378
      %v1477 = vpop.f32.mrb[0].mxu0
      %v1478 = vadd.f32 0.0, %v1477
      %v1479 = vpop.f32.mrb[0].mxu0
      %v1480 = vpop.f32.mrb[0].mxu0
      %v1481 = vadd.f32 0.0, %v1480
      %v1482 = vpop.f32.mrb[0].mxu0
      %1483 = vmatprep.mubr.bf16.mxu0 0
      %1484 = vmatmul.mubr.bf16.gmra.mrb[0].mxu0 %v1381
      %v1485 = vpop.f32.mrb[0].mxu0
      %v1486 = vadd.f32 0.0, %v1485
      %v1487 = vpop.f32.mrb[0].mxu0
      %v1488 = vpop.f32.mrb[0].mxu0
      %v1489 = vadd.f32 0.0, %v1488
      %v1490 = vpop.f32.mrb[0].mxu0
      %1491 = vmatprep.mubr.bf16.mxu0 0
      %1492 = vmatmul.mubr.bf16.gmra.mrb[0].mxu0 %v1384
      %v1493 = vpop.f32.mrb[0].mxu0
      %v1494 = vadd.f32 0.0, %v1493
      %v1495 = vpop.f32.mrb[0].mxu0
      %v1496 = vpop.f32.mrb[0].mxu0
      %v1497 = vadd.f32 0.0, %v1496
      %v1498 = vpop.f32.mrb[0].mxu0
      %1499 = vmatprep.mubr.bf16.mxu0 0
      %1500 = vmatmul.mubr.bf16.gmra.mrb[0].mxu0 %v1387
      %v1501 = vpop.f32.mrb[0].mxu0
      %v1502 = vadd.f32 0.0, %v1501
      %v1503 = vpop.f32.mrb[0].mxu0
      %v1504 = vpop.f32.mrb[0].mxu0
      %v1505 = vadd.f32 0.0, %v1504
      %v1506 = vpop.f32.mrb[0].mxu0
      %1507 = vmatprep.mubr.bf16.mxu0 0
      %1508 = vmatmul.mubr.bf16.gmra.mrb[0].mxu0 %v1390
      %v1509 = vpop.f32.mrb[0].mxu0
      %v1510 = vadd.f32 0.0, %v1509
      %v1511 = vpop.f32.mrb[0].mxu0
      %v1512 = vpop.f32.mrb[0].mxu0
      %v1513 = vadd.f32 0.0, %v1512
      %v1514 = vpop.f32.mrb[0].mxu0
      %1515 = vmatprep.mubr.bf16.mxu0 0
      %1516 = vmatmul.mubr.bf16.gmra.mrb[0].mxu0 %v1393
      %v1517 = vpop.f32.mrb[0].mxu0
      %v1518 = vadd.f32 0.0, %v1517
      %v1519 = vpop.f32.mrb[0].mxu0
      %v1520 = vpop.f32.mrb[0].mxu0
      %v1521 = vadd.f32 0.0, %v1520
      %v1522 = vpop.f32.mrb[0].mxu0
      %1523 = vmatprep.mubr.bf16.mxu0 0
      %1524 = vmatmul.mubr.bf16.gmra.mrb[0].mxu0 %v1396
      %v1525 = vpop.f32.mrb[0].mxu0
      %v1526 = vadd.f32 0.0, %v1525
      %v1527 = vpop.f32.mrb[0].mxu0
      %v1528 = vpop.f32.mrb[0].mxu0
      %v1529 = vadd.f32 0.0, %v1528
      %v1530 = vpop.f32.mrb[0].mxu0
      %1531 = vmatprep.mubr.bf16.mxu0 0
      %1532 = vmatmul.mubr.bf16.gmra.mrb[0].mxu0 %v1399
      %v1533 = vpop.f32.mrb[0].mxu0
      %v1534 = vadd.f32 0.0, %v1533
      %v1535 = vpop.f32.mrb[0].mxu0
      %v1536 = vpop.f32.mrb[0].mxu0
      %v1537 = vadd.f32 0.0, %v1536
      %v1538 = vpop.f32.mrb[0].mxu0
      %1539 = vmatprep.mubr.bf16.mxu0 0
      %1540 = vmatmul.mubr.bf16.gmra.mrb[0].mxu0 %v1402
      %v1541 = vpop.f32.mrb[0].mxu0
      %v1542 = vadd.f32 0.0, %v1541
      %v1543 = vpop.f32.mrb[0].mxu0
      %v1544 = vpop.f32.mrb[0].mxu0
      %v1545 = vadd.f32 0.0, %v1544
      %v1546 = vpop.f32.mrb[0].mxu0
      %1547 = vmatprep.mubr.bf16.mxu0 0
      %1548 = vmatmul.mubr.bf16.gmra.mrb[0].mxu0 %v1405
      %v1549 = vpop.f32.mrb[0].mxu0
      %v1550 = vadd.f32 0.0, %v1549
      %v1551 = vpop.f32.mrb[0].mxu0
      %v1552 = vpop.f32.mrb[0].mxu0
      %v1553 = vadd.f32 0.0, %v1552
      %v1554 = vpop.f32.mrb[0].mxu0
      %1555 = vmatprep.mubr.bf16.mxu0 0
      %1556 = vmatmul.mubr.bf16.gmra.mrb[0].mxu0 %v1408
      %v1557 = vpop.f32.mrb[0].mxu0
      %v1558 = vadd.f32 0.0, %v1557
      %v1559 = vpop.f32.mrb[0].mxu0
      %v1560 = vpop.f32.mrb[0].mxu0
      %v1561 = vadd.f32 0.0, %v1560
      %v1562 = vpop.f32.mrb[0].mxu0
      %1563 = vmatprep.mubr.bf16.mxu0 0
      %1564 = vmatmul.mubr.bf16.gmra.mrb[0].mxu0 %v1411
      %v1565 = vpop.f32.mrb[0].mxu0
      %v1566 = vadd.f32 0.0, %v1565
      %v1567 = vpop.f32.mrb[0].mxu0
      %v1568 = vpop.f32.mrb[0].mxu0
      %v1569 = vadd.f32 0.0, %v1568
      %v1570 = vpop.f32.mrb[0].mxu0
      %1571 = vmatprep.mubr.bf16.mxu0 0
      %1572 = vmatmul.mubr.bf16.gmra.mrb[0].mxu0 %v1414
      %v1573 = vpop.f32.mrb[0].mxu0
      %v1574 = vadd.f32 0.0, %v1573
      %v1575 = vpop.f32.mrb[0].mxu0
      %v1576 = vpop.f32.mrb[0].mxu0
      %v1577 = vadd.f32 0.0, %v1576
      %v1578 = vpop.f32.mrb[0].mxu0
      %1579 = vdwg.mxu0
      %v1580 = vadd.f32 %v1131, %v1454
      %v1581 = vadd.f32 %v1134, %v1457
      %v1582 = vadd.f32 %v1139, %v1462
      %v1583 = vadd.f32 %v1142, %v1465
      %v1584 = vadd.f32 %v1147, %v1470
      %v1585 = vadd.f32 %v1150, %v1473
      %v1586 = vadd.f32 %v1155, %v1478
      %v1587 = vadd.f32 %v1158, %v1481
      %v1588 = vadd.f32 %v1163, %v1486
      %v1589 = vadd.f32 %v1166, %v1489
      %v1590 = vadd.f32 %v1171, %v1494
      %v1591 = vadd.f32 %v1174, %v1497
      %v1592 = vadd.f32 %v1179, %v1502
      %v1593 = vadd.f32 %v1182, %v1505
      %v1594 = vadd.f32 %v1187, %v1510
      %v1595 = vadd.f32 %v1190, %v1513
      %v1596 = vadd.f32 %v1195, %v1518
      %v1597 = vadd.f32 %v1198, %v1521
      %v1598 = vadd.f32 %v1203, %v1526
      %v1599 = vadd.f32 %v1206, %v1529
      %v1600 = vadd.f32 %v1211, %v1534
      %v1601 = vadd.f32 %v1214, %v1537
      %v1602 = vadd.f32 %v1219, %v1542
      %v1603 = vadd.f32 %v1222, %v1545
      %v1604 = vadd.f32 %v1227, %v1550
      %v1605 = vadd.f32 %v1230, %v1553
      %v1606 = vadd.f32 %v1235, %v1558
      %v1607 = vadd.f32 %v1238, %v1561
      %v1608 = vadd.f32 %v1243, %v1566
      %v1609 = vadd.f32 %v1246, %v1569
      %v1610 = vadd.f32 %v1251, %v1574
      %v1611 = vadd.f32 %v1254, %v1577
      %v1614 = vrot.slane %v657, 7
      %v1615 = vsel %vm701, %v702, %v1614
      %v1616 = vrot.slane %v658, 7
      %v1617 = vsel %vm701, %v1614, %v1616
      %v1620 = vpack.c.bf16 %v1617, %v1615
      %v1621 = vpack.c.bf16 %v662, %v662
      %v1623 = vsel %vm829, %v1620, 0
      %v1626 = vand.u32 %v1621, %v880
      %1628 = vmatprep.subr.bf16.mxu0 0
      %1629 = vmatpush1.bf16.msra.mxu0 %v1626
      %1630 = vmatprep.subr.bf16.mxu0 0
      %1631 = vmatpush1.bf16.msra.mxu0 0
      %1632 = vmatprep.subr.bf16.mxu0 0
      %1633 = vmatpush1.bf16.msra.mxu0 0
      %1634 = vmatprep.subr.bf16.mxu0 0
      %1635 = vmatpush1.bf16.msra.mxu0 0
      %1636 = vmatprep.subr.bf16.mxu0 0
      %1637 = vmatpush1.bf16.msra.mxu0 0
      %1638 = vmatprep.subr.bf16.mxu0 0
      %1639 = vmatpush1.bf16.msra.mxu0 0
      %1640 = vmatprep.subr.bf16.mxu0 0
      %1641 = vmatpush1.bf16.msra.mxu0 0
      %1642 = vmatprep.subr.bf16.mxu0 0
      %1643 = vmatpush1.bf16.msra.mxu0 0
      %1644 = vmatprep.subr.bf16.mxu0 0
      %1645 = vmatpush1.bf16.msra.mxu0 0
      %1646 = vmatprep.subr.bf16.mxu0 0
      %1647 = vmatpush1.bf16.msra.mxu0 0
      %1648 = vmatprep.subr.bf16.mxu0 0
      %1649 = vmatpush1.bf16.msra.mxu0 0
      %1650 = vmatprep.subr.bf16.mxu0 0
      %1651 = vmatpush1.bf16.msra.mxu0 0
      %1652 = vmatprep.subr.bf16.mxu0 0
      %1653 = vmatpush1.bf16.msra.mxu0 0
      %1654 = vmatprep.subr.bf16.mxu0 0
      %1655 = vmatpush1.bf16.msra.mxu0 0
      %1656 = vmatprep.subr.bf16.mxu0 0
      %1657 = vmatpush1.bf16.msra.mxu0 0
      %1658 = vmatprep.subr.bf16.mxu0 0
      %1659 = vmatpush1.bf16.msra.mxu0 0
      %1660 = vmatprep.mubr.bf16.mxu0 0
      %1661 = vmatmul.mubr.bf16.gmra.mrb[0].mxu0 %v1049
      %v1662 = vpop.f32.mrb[0].mxu0
      %v1663 = vadd.f32 0.0, %v1662
      %v1664 = vpop.f32.mrb[0].mxu0
      %v1665 = vpop.f32.mrb[0].mxu0
      %v1666 = vadd.f32 0.0, %v1665
      %v1667 = vpop.f32.mrb[0].mxu0
      %1668 = vmatprep.mubr.bf16.mxu0 0
      %1669 = vmatmul.mubr.bf16.gmra.mrb[0].mxu0 %v1052
      %v1670 = vpop.f32.mrb[0].mxu0
      %v1671 = vadd.f32 0.0, %v1670
      %v1672 = vpop.f32.mrb[0].mxu0
      %v1673 = vpop.f32.mrb[0].mxu0
      %v1674 = vadd.f32 0.0, %v1673
      %v1675 = vpop.f32.mrb[0].mxu0
      %1676 = vmatprep.mubr.bf16.mxu0 0
      %1677 = vmatmul.mubr.bf16.gmra.mrb[0].mxu0 %v1055
      %v1678 = vpop.f32.mrb[0].mxu0
      %v1679 = vadd.f32 0.0, %v1678
      %v1680 = vpop.f32.mrb[0].mxu0
      %v1681 = vpop.f32.mrb[0].mxu0
      %v1682 = vadd.f32 0.0, %v1681
      %v1683 = vpop.f32.mrb[0].mxu0
      %1684 = vmatprep.mubr.bf16.mxu0 0
      %1685 = vmatmul.mubr.bf16.gmra.mrb[0].mxu0 %v1058
      %v1686 = vpop.f32.mrb[0].mxu0
      %v1687 = vadd.f32 0.0, %v1686
      %v1688 = vpop.f32.mrb[0].mxu0
      %v1689 = vpop.f32.mrb[0].mxu0
      %v1690 = vadd.f32 0.0, %v1689
      %v1691 = vpop.f32.mrb[0].mxu0
      %1692 = vmatprep.mubr.bf16.mxu0 0
      %1693 = vmatmul.mubr.bf16.gmra.mrb[0].mxu0 %v1061
      %v1694 = vpop.f32.mrb[0].mxu0
      %v1695 = vadd.f32 0.0, %v1694
      %v1696 = vpop.f32.mrb[0].mxu0
      %v1697 = vpop.f32.mrb[0].mxu0
      %v1698 = vadd.f32 0.0, %v1697
      %v1699 = vpop.f32.mrb[0].mxu0
      %1700 = vmatprep.mubr.bf16.mxu0 0
      %1701 = vmatmul.mubr.bf16.gmra.mrb[0].mxu0 %v1064
      %v1702 = vpop.f32.mrb[0].mxu0
      %v1703 = vadd.f32 0.0, %v1702
      %v1704 = vpop.f32.mrb[0].mxu0
      %v1705 = vpop.f32.mrb[0].mxu0
      %v1706 = vadd.f32 0.0, %v1705
      %v1707 = vpop.f32.mrb[0].mxu0
      %1708 = vmatprep.mubr.bf16.mxu0 0
      %1709 = vmatmul.mubr.bf16.gmra.mrb[0].mxu0 %v1067
      %v1710 = vpop.f32.mrb[0].mxu0
      %v1711 = vadd.f32 0.0, %v1710
      %v1712 = vpop.f32.mrb[0].mxu0
      %v1713 = vpop.f32.mrb[0].mxu0
      %v1714 = vadd.f32 0.0, %v1713
      %v1715 = vpop.f32.mrb[0].mxu0
      %1716 = vmatprep.mubr.bf16.mxu0 0
      %1717 = vmatmul.mubr.bf16.gmra.mrb[0].mxu0 %v1070
      %v1718 = vpop.f32.mrb[0].mxu0
      %v1719 = vadd.f32 0.0, %v1718
      %v1720 = vpop.f32.mrb[0].mxu0
      %v1721 = vpop.f32.mrb[0].mxu0
      %v1722 = vadd.f32 0.0, %v1721
      %v1723 = vpop.f32.mrb[0].mxu0
      %1724 = vmatprep.mubr.bf16.mxu0 0
      %1725 = vmatmul.mubr.bf16.gmra.mrb[0].mxu0 %v1073
      %v1726 = vpop.f32.mrb[0].mxu0
      %v1727 = vadd.f32 0.0, %v1726
      %v1728 = vpop.f32.mrb[0].mxu0
      %v1729 = vpop.f32.mrb[0].mxu0
      %v1730 = vadd.f32 0.0, %v1729
      %v1731 = vpop.f32.mrb[0].mxu0
      %1732 = vmatprep.mubr.bf16.mxu0 0
      %1733 = vmatmul.mubr.bf16.gmra.mrb[0].mxu0 %v1076
      %v1734 = vpop.f32.mrb[0].mxu0
      %v1735 = vadd.f32 0.0, %v1734
      %v1736 = vpop.f32.mrb[0].mxu0
      %v1737 = vpop.f32.mrb[0].mxu0
      %v1738 = vadd.f32 0.0, %v1737
      %v1739 = vpop.f32.mrb[0].mxu0
      %1740 = vmatprep.mubr.bf16.mxu0 0
      %1741 = vmatmul.mubr.bf16.gmra.mrb[0].mxu0 %v1079
      %v1742 = vpop.f32.mrb[0].mxu0
      %v1743 = vadd.f32 0.0, %v1742
      %v1744 = vpop.f32.mrb[0].mxu0
      %v1745 = vpop.f32.mrb[0].mxu0
      %v1746 = vadd.f32 0.0, %v1745
      %v1747 = vpop.f32.mrb[0].mxu0
      %1748 = vmatprep.mubr.bf16.mxu0 0
      %1749 = vmatmul.mubr.bf16.gmra.mrb[0].mxu0 %v1082
      %v1750 = vpop.f32.mrb[0].mxu0
      %v1751 = vadd.f32 0.0, %v1750
      %v1752 = vpop.f32.mrb[0].mxu0
      %v1753 = vpop.f32.mrb[0].mxu0
      %v1754 = vadd.f32 0.0, %v1753
      %v1755 = vpop.f32.mrb[0].mxu0
      %1756 = vmatprep.mubr.bf16.mxu0 0
      %1757 = vmatmul.mubr.bf16.gmra.mrb[0].mxu0 %v1085
      %v1758 = vpop.f32.mrb[0].mxu0
      %v1759 = vadd.f32 0.0, %v1758
      %v1760 = vpop.f32.mrb[0].mxu0
      %v1761 = vpop.f32.mrb[0].mxu0
      %v1762 = vadd.f32 0.0, %v1761
      %v1763 = vpop.f32.mrb[0].mxu0
      %1764 = vmatprep.mubr.bf16.mxu0 0
      %1765 = vmatmul.mubr.bf16.gmra.mrb[0].mxu0 %v1088
      %v1766 = vpop.f32.mrb[0].mxu0
      %v1767 = vadd.f32 0.0, %v1766
      %v1768 = vpop.f32.mrb[0].mxu0
      %v1769 = vpop.f32.mrb[0].mxu0
      %v1770 = vadd.f32 0.0, %v1769
      %v1771 = vpop.f32.mrb[0].mxu0
      %1772 = vmatprep.mubr.bf16.mxu0 0
      %1773 = vmatmul.mubr.bf16.gmra.mrb[0].mxu0 %v1091
      %v1774 = vpop.f32.mrb[0].mxu0
      %v1775 = vadd.f32 0.0, %v1774
      %v1776 = vpop.f32.mrb[0].mxu0
      %v1777 = vpop.f32.mrb[0].mxu0
      %v1778 = vadd.f32 0.0, %v1777
      %v1779 = vpop.f32.mrb[0].mxu0
      %1780 = vmatprep.mubr.bf16.mxu0 0
      %1781 = vmatmul.mubr.bf16.gmra.mrb[0].mxu0 %v1623
      %v1782 = vpop.f32.mrb[0].mxu0
      %v1783 = vadd.f32 0.0, %v1782
      %v1784 = vpop.f32.mrb[0].mxu0
      %v1785 = vpop.f32.mrb[0].mxu0
      %v1786 = vadd.f32 0.0, %v1785
      %v1787 = vpop.f32.mrb[0].mxu0
      %1788 = vdwg.mxu0
      %v1789 = vadd.f32 %v1580, %v1663
      %v1790 = vadd.f32 %v1581, %v1666
      %v1791 = vadd.f32 %v1582, %v1671
      %v1792 = vadd.f32 %v1583, %v1674
      %v1793 = vadd.f32 %v1584, %v1679
      %v1794 = vadd.f32 %v1585, %v1682
      %v1795 = vadd.f32 %v1586, %v1687
      %v1796 = vadd.f32 %v1587, %v1690
      %v1797 = vadd.f32 %v1588, %v1695
      %v1798 = vadd.f32 %v1589, %v1698
      %v1799 = vadd.f32 %v1590, %v1703
      %v1800 = vadd.f32 %v1591, %v1706
      %v1801 = vadd.f32 %v1592, %v1711
      %v1802 = vadd.f32 %v1593, %v1714
      %v1803 = vadd.f32 %v1594, %v1719
      %v1804 = vadd.f32 %v1595, %v1722
      %v1805 = vadd.f32 %v1596, %v1727
      %v1806 = vadd.f32 %v1597, %v1730
      %v1807 = vadd.f32 %v1598, %v1735
      %v1808 = vadd.f32 %v1599, %v1738
      %v1809 = vadd.f32 %v1600, %v1743
      %v1810 = vadd.f32 %v1601, %v1746
      %v1811 = vadd.f32 %v1602, %v1751
      %v1812 = vadd.f32 %v1603, %v1754
      %v1813 = vadd.f32 %v1604, %v1759
      %v1814 = vadd.f32 %v1605, %v1762
      %v1815 = vadd.f32 %v1606, %v1767
      %v1816 = vadd.f32 %v1607, %v1770
      %v1817 = vadd.f32 %v1608, %v1775
      %v1818 = vadd.f32 %v1609, %v1778
      %v1819 = vadd.f32 %v1610, %v1783
      %v1820 = vadd.f32 %v1611, %v1786
      %v1821 = vpack.c.bf16 %v658, %v657
      %v1822 = vpack.c.bf16 %v663, %v663
      %v1824 = vsel %vm829, %v1821, 0
      %v1827 = vand.u32 %v1822, %v880
      %1829 = vmatprep.subr.bf16.mxu0 0
      %1830 = vmatpush1.bf16.msra.mxu0 %v1827
      %1831 = vmatprep.subr.bf16.mxu0 0
      %1832 = vmatpush1.bf16.msra.mxu0 0
      %1833 = vmatprep.subr.bf16.mxu0 0
      %1834 = vmatpush1.bf16.msra.mxu0 0
      %1835 = vmatprep.subr.bf16.mxu0 0
      %1836 = vmatpush1.bf16.msra.mxu0 0
      %1837 = vmatprep.subr.bf16.mxu0 0
      %1838 = vmatpush1.bf16.msra.mxu0 0
      %1839 = vmatprep.subr.bf16.mxu0 0
      %1840 = vmatpush1.bf16.msra.mxu0 0
      %1841 = vmatprep.subr.bf16.mxu0 0
      %1842 = vmatpush1.bf16.msra.mxu0 0
      %1843 = vmatprep.subr.bf16.mxu0 0
      %1844 = vmatpush1.bf16.msra.mxu0 0
      %1845 = vmatprep.subr.bf16.mxu0 0
      %1846 = vmatpush1.bf16.msra.mxu0 0
      %1847 = vmatprep.subr.bf16.mxu0 0
      %1848 = vmatpush1.bf16.msra.mxu0 0
      %1849 = vmatprep.subr.bf16.mxu0 0
      %1850 = vmatpush1.bf16.msra.mxu0 0
      %1851 = vmatprep.subr.bf16.mxu0 0
      %1852 = vmatpush1.bf16.msra.mxu0 0
      %1853 = vmatprep.subr.bf16.mxu0 0
      %1854 = vmatpush1.bf16.msra.mxu0 0
      %1855 = vmatprep.subr.bf16.mxu0 0
      %1856 = vmatpush1.bf16.msra.mxu0 0
      %1857 = vmatprep.subr.bf16.mxu0 0
      %1858 = vmatpush1.bf16.msra.mxu0 0
      %1859 = vmatprep.subr.bf16.mxu0 0
      %1860 = vmatpush1.bf16.msra.mxu0 0
      %1861 = vmatprep.mubr.bf16.mxu0 0
      %1862 = vmatmul.mubr.bf16.gmra.mrb[0].mxu0 %v834
      %v1863 = vpop.f32.mrb[0].mxu0
      %v1864 = vadd.f32 0.0, %v1863
      %v1865 = vpop.f32.mrb[0].mxu0
      %v1866 = vpop.f32.mrb[0].mxu0
      %v1867 = vadd.f32 0.0, %v1866
      %v1868 = vpop.f32.mrb[0].mxu0
      %1869 = vmatprep.mubr.bf16.mxu0 0
      %1870 = vmatmul.mubr.bf16.gmra.mrb[0].mxu0 %v837
      %v1871 = vpop.f32.mrb[0].mxu0
      %v1872 = vadd.f32 0.0, %v1871
      %v1873 = vpop.f32.mrb[0].mxu0
      %v1874 = vpop.f32.mrb[0].mxu0
      %v1875 = vadd.f32 0.0, %v1874
      %v1876 = vpop.f32.mrb[0].mxu0
      %1877 = vmatprep.mubr.bf16.mxu0 0
      %1878 = vmatmul.mubr.bf16.gmra.mrb[0].mxu0 %v840
      %v1879 = vpop.f32.mrb[0].mxu0
      %v1880 = vadd.f32 0.0, %v1879
      %v1881 = vpop.f32.mrb[0].mxu0
      %v1882 = vpop.f32.mrb[0].mxu0
      %v1883 = vadd.f32 0.0, %v1882
      %v1884 = vpop.f32.mrb[0].mxu0
      %1885 = vmatprep.mubr.bf16.mxu0 0
      %1886 = vmatmul.mubr.bf16.gmra.mrb[0].mxu0 %v843
      %v1887 = vpop.f32.mrb[0].mxu0
      %v1888 = vadd.f32 0.0, %v1887
      %v1889 = vpop.f32.mrb[0].mxu0
      %v1890 = vpop.f32.mrb[0].mxu0
      %v1891 = vadd.f32 0.0, %v1890
      %v1892 = vpop.f32.mrb[0].mxu0
      %1893 = vmatprep.mubr.bf16.mxu0 0
      %1894 = vmatmul.mubr.bf16.gmra.mrb[0].mxu0 %v846
      %v1895 = vpop.f32.mrb[0].mxu0
      %v1896 = vadd.f32 0.0, %v1895
      %v1897 = vpop.f32.mrb[0].mxu0
      %v1898 = vpop.f32.mrb[0].mxu0
      %v1899 = vadd.f32 0.0, %v1898
      %v1900 = vpop.f32.mrb[0].mxu0
      %1901 = vmatprep.mubr.bf16.mxu0 0
      %1902 = vmatmul.mubr.bf16.gmra.mrb[0].mxu0 %v849
      %v1903 = vpop.f32.mrb[0].mxu0
      %v1904 = vadd.f32 0.0, %v1903
      %v1905 = vpop.f32.mrb[0].mxu0
      %v1906 = vpop.f32.mrb[0].mxu0
      %v1907 = vadd.f32 0.0, %v1906
      %v1908 = vpop.f32.mrb[0].mxu0
      %1909 = vmatprep.mubr.bf16.mxu0 0
      %1910 = vmatmul.mubr.bf16.gmra.mrb[0].mxu0 %v852
      %v1911 = vpop.f32.mrb[0].mxu0
      %v1912 = vadd.f32 0.0, %v1911
      %v1913 = vpop.f32.mrb[0].mxu0
      %v1914 = vpop.f32.mrb[0].mxu0
      %v1915 = vadd.f32 0.0, %v1914
      %v1916 = vpop.f32.mrb[0].mxu0
      %1917 = vmatprep.mubr.bf16.mxu0 0
      %1918 = vmatmul.mubr.bf16.gmra.mrb[0].mxu0 %v855
      %v1919 = vpop.f32.mrb[0].mxu0
      %v1920 = vadd.f32 0.0, %v1919
      %v1921 = vpop.f32.mrb[0].mxu0
      %v1922 = vpop.f32.mrb[0].mxu0
      %v1923 = vadd.f32 0.0, %v1922
      %v1924 = vpop.f32.mrb[0].mxu0
      %1925 = vmatprep.mubr.bf16.mxu0 0
      %1926 = vmatmul.mubr.bf16.gmra.mrb[0].mxu0 %v858
      %v1927 = vpop.f32.mrb[0].mxu0
      %v1928 = vadd.f32 0.0, %v1927
      %v1929 = vpop.f32.mrb[0].mxu0
      %v1930 = vpop.f32.mrb[0].mxu0
      %v1931 = vadd.f32 0.0, %v1930
      %v1932 = vpop.f32.mrb[0].mxu0
      %1933 = vmatprep.mubr.bf16.mxu0 0
      %1934 = vmatmul.mubr.bf16.gmra.mrb[0].mxu0 %v861
      %v1935 = vpop.f32.mrb[0].mxu0
      %v1936 = vadd.f32 0.0, %v1935
      %v1937 = vpop.f32.mrb[0].mxu0
      %v1938 = vpop.f32.mrb[0].mxu0
      %v1939 = vadd.f32 0.0, %v1938
      %v1940 = vpop.f32.mrb[0].mxu0
      %1941 = vmatprep.mubr.bf16.mxu0 0
      %1942 = vmatmul.mubr.bf16.gmra.mrb[0].mxu0 %v864
      %v1943 = vpop.f32.mrb[0].mxu0
      %v1944 = vadd.f32 0.0, %v1943
      %v1945 = vpop.f32.mrb[0].mxu0
      %v1946 = vpop.f32.mrb[0].mxu0
      %v1947 = vadd.f32 0.0, %v1946
      %v1948 = vpop.f32.mrb[0].mxu0
      %1949 = vmatprep.mubr.bf16.mxu0 0
      %1950 = vmatmul.mubr.bf16.gmra.mrb[0].mxu0 %v867
      %v1951 = vpop.f32.mrb[0].mxu0
      %v1952 = vadd.f32 0.0, %v1951
      %v1953 = vpop.f32.mrb[0].mxu0
      %v1954 = vpop.f32.mrb[0].mxu0
      %v1955 = vadd.f32 0.0, %v1954
      %v1956 = vpop.f32.mrb[0].mxu0
      %1957 = vmatprep.mubr.bf16.mxu0 0
      %1958 = vmatmul.mubr.bf16.gmra.mrb[0].mxu0 %v870
      %v1959 = vpop.f32.mrb[0].mxu0
      %v1960 = vadd.f32 0.0, %v1959
      %v1961 = vpop.f32.mrb[0].mxu0
      %v1962 = vpop.f32.mrb[0].mxu0
      %v1963 = vadd.f32 0.0, %v1962
      %v1964 = vpop.f32.mrb[0].mxu0
      %1965 = vmatprep.mubr.bf16.mxu0 0
      %1966 = vmatmul.mubr.bf16.gmra.mrb[0].mxu0 %v873
      %v1967 = vpop.f32.mrb[0].mxu0
      %v1968 = vadd.f32 0.0, %v1967
      %v1969 = vpop.f32.mrb[0].mxu0
      %v1970 = vpop.f32.mrb[0].mxu0
      %v1971 = vadd.f32 0.0, %v1970
      %v1972 = vpop.f32.mrb[0].mxu0
      %1973 = vmatprep.mubr.bf16.mxu0 0
      %1974 = vmatmul.mubr.bf16.gmra.mrb[0].mxu0 %v876
      %v1975 = vpop.f32.mrb[0].mxu0
      %v1976 = vadd.f32 0.0, %v1975
      %v1977 = vpop.f32.mrb[0].mxu0
      %v1978 = vpop.f32.mrb[0].mxu0
      %v1979 = vadd.f32 0.0, %v1978
      %v1980 = vpop.f32.mrb[0].mxu0
      %1981 = vmatprep.mubr.bf16.mxu0 0
      %1982 = vmatmul.mubr.bf16.gmra.mrb[0].mxu0 %v1824
      %v1983 = vpop.f32.mrb[0].mxu0
      %v1984 = vadd.f32 0.0, %v1983
      %v1985 = vpop.f32.mrb[0].mxu0
      %v1986 = vpop.f32.mrb[0].mxu0
      %v1987 = vadd.f32 0.0, %v1986
      %v1988 = vpop.f32.mrb[0].mxu0
      %1989 = vdwg.mxu0
      %v1990 = vadd.f32 %v1789, %v1864
      %v1991 = vadd.f32 %v1790, %v1867
      %v1992 = vadd.f32 %v1791, %v1872
      %v1993 = vadd.f32 %v1792, %v1875
      %v1994 = vadd.f32 %v1793, %v1880
      %v1995 = vadd.f32 %v1794, %v1883
      %v1996 = vadd.f32 %v1795, %v1888
      %v1997 = vadd.f32 %v1796, %v1891
      %v1998 = vadd.f32 %v1797, %v1896
      %v1999 = vadd.f32 %v1798, %v1899
      %v2000 = vadd.f32 %v1799, %v1904
      %v2001 = vadd.f32 %v1800, %v1907
      %v2002 = vadd.f32 %v1801, %v1912
      %v2003 = vadd.f32 %v1802, %v1915
      %v2004 = vadd.f32 %v1803, %v1920
      %v2005 = vadd.f32 %v1804, %v1923
      %v2006 = vadd.f32 %v1805, %v1928
      %v2007 = vadd.f32 %v1806, %v1931
      %v2008 = vadd.f32 %v1807, %v1936
      %v2009 = vadd.f32 %v1808, %v1939
      %v2010 = vadd.f32 %v1809, %v1944
      %v2011 = vadd.f32 %v1810, %v1947
      %v2012 = vadd.f32 %v1811, %v1952
      %v2013 = vadd.f32 %v1812, %v1955
      %v2014 = vadd.f32 %v1813, %v1960
      %v2015 = vadd.f32 %v1814, %v1963
      %v2016 = vadd.f32 %v1815, %v1968
      %v2017 = vadd.f32 %v1816, %v1971
      %v2018 = vadd.f32 %v1817, %v1976
      %v2019 = vadd.f32 %v1818, %v1979
      %v2020 = vadd.f32 %v1819, %v1984
      %v2021 = vadd.f32 %v1820, %v1987
      %v2022 = vrot.slane %v657, 1
      %v2023 = vrot.slane %v658, 1
      %v2024 = vsel %vm1257, %v2022, %v2023
      %v2025 = vsel %vm1257, %v2023, %v1258
      %v2028 = vpack.c.bf16 %v2025, %v2024
      %v2029 = vpack.c.bf16 %v664, %v664
      %v2031 = vsel %vm829, %v2028, 0
      %v2034 = vand.u32 %v2029, %v880
      %2036 = vmatprep.subr.bf16.mxu0 0
      %2037 = vmatpush1.bf16.msra.mxu0 %v2034
      %2038 = vmatprep.subr.bf16.mxu0 0
      %2039 = vmatpush1.bf16.msra.mxu0 0
      %2040 = vmatprep.subr.bf16.mxu0 0
      %2041 = vmatpush1.bf16.msra.mxu0 0
      %2042 = vmatprep.subr.bf16.mxu0 0
      %2043 = vmatpush1.bf16.msra.mxu0 0
      %2044 = vmatprep.subr.bf16.mxu0 0
      %2045 = vmatpush1.bf16.msra.mxu0 0
      %2046 = vmatprep.subr.bf16.mxu0 0
      %2047 = vmatpush1.bf16.msra.mxu0 0
      %2048 = vmatprep.subr.bf16.mxu0 0
      %2049 = vmatpush1.bf16.msra.mxu0 0
      %2050 = vmatprep.subr.bf16.mxu0 0
      %2051 = vmatpush1.bf16.msra.mxu0 0
      %2052 = vmatprep.subr.bf16.mxu0 0
      %2053 = vmatpush1.bf16.msra.mxu0 0
      %2054 = vmatprep.subr.bf16.mxu0 0
      %2055 = vmatpush1.bf16.msra.mxu0 0
      %2056 = vmatprep.subr.bf16.mxu0 0
      %2057 = vmatpush1.bf16.msra.mxu0 0
      %2058 = vmatprep.subr.bf16.mxu0 0
      %2059 = vmatpush1.bf16.msra.mxu0 0
      %2060 = vmatprep.subr.bf16.mxu0 0
      %2061 = vmatpush1.bf16.msra.mxu0 0
      %2062 = vmatprep.subr.bf16.mxu0 0
      %2063 = vmatpush1.bf16.msra.mxu0 0
      %2064 = vmatprep.subr.bf16.mxu0 0
      %2065 = vmatpush1.bf16.msra.mxu0 0
      %2066 = vmatprep.subr.bf16.mxu0 0
      %2067 = vmatpush1.bf16.msra.mxu0 0
      %2068 = vmatprep.mubr.bf16.mxu0 0
      %2069 = vmatmul.mubr.bf16.gmra.mrb[0].mxu0 %v1372
      %v2070 = vpop.f32.mrb[0].mxu0
      %v2071 = vadd.f32 0.0, %v2070
      %v2072 = vpop.f32.mrb[0].mxu0
      %v2073 = vpop.f32.mrb[0].mxu0
      %v2074 = vadd.f32 0.0, %v2073
      %v2075 = vpop.f32.mrb[0].mxu0
      %2076 = vmatprep.mubr.bf16.mxu0 0
      %2077 = vmatmul.mubr.bf16.gmra.mrb[0].mxu0 %v1375
      %v2078 = vpop.f32.mrb[0].mxu0
      %v2079 = vadd.f32 0.0, %v2078
      %v2080 = vpop.f32.mrb[0].mxu0
      %v2081 = vpop.f32.mrb[0].mxu0
      %v2082 = vadd.f32 0.0, %v2081
      %v2083 = vpop.f32.mrb[0].mxu0
      %2084 = vmatprep.mubr.bf16.mxu0 0
      %2085 = vmatmul.mubr.bf16.gmra.mrb[0].mxu0 %v1378
      %v2086 = vpop.f32.mrb[0].mxu0
      %v2087 = vadd.f32 0.0, %v2086
      %v2088 = vpop.f32.mrb[0].mxu0
      %v2089 = vpop.f32.mrb[0].mxu0
      %v2090 = vadd.f32 0.0, %v2089
      %v2091 = vpop.f32.mrb[0].mxu0
      %2092 = vmatprep.mubr.bf16.mxu0 0
      %2093 = vmatmul.mubr.bf16.gmra.mrb[0].mxu0 %v1381
      %v2094 = vpop.f32.mrb[0].mxu0
      %v2095 = vadd.f32 0.0, %v2094
      %v2096 = vpop.f32.mrb[0].mxu0
      %v2097 = vpop.f32.mrb[0].mxu0
      %v2098 = vadd.f32 0.0, %v2097
      %v2099 = vpop.f32.mrb[0].mxu0
      %2100 = vmatprep.mubr.bf16.mxu0 0
      %2101 = vmatmul.mubr.bf16.gmra.mrb[0].mxu0 %v1384
      %v2102 = vpop.f32.mrb[0].mxu0
      %v2103 = vadd.f32 0.0, %v2102
      %v2104 = vpop.f32.mrb[0].mxu0
      %v2105 = vpop.f32.mrb[0].mxu0
      %v2106 = vadd.f32 0.0, %v2105
      %v2107 = vpop.f32.mrb[0].mxu0
      %2108 = vmatprep.mubr.bf16.mxu0 0
      %2109 = vmatmul.mubr.bf16.gmra.mrb[0].mxu0 %v1387
      %v2110 = vpop.f32.mrb[0].mxu0
      %v2111 = vadd.f32 0.0, %v2110
      %v2112 = vpop.f32.mrb[0].mxu0
      %v2113 = vpop.f32.mrb[0].mxu0
      %v2114 = vadd.f32 0.0, %v2113
      %v2115 = vpop.f32.mrb[0].mxu0
      %2116 = vmatprep.mubr.bf16.mxu0 0
      %2117 = vmatmul.mubr.bf16.gmra.mrb[0].mxu0 %v1390
      %v2118 = vpop.f32.mrb[0].mxu0
      %v2119 = vadd.f32 0.0, %v2118
      %v2120 = vpop.f32.mrb[0].mxu0
      %v2121 = vpop.f32.mrb[0].mxu0
      %v2122 = vadd.f32 0.0, %v2121
      %v2123 = vpop.f32.mrb[0].mxu0
      %2124 = vmatprep.mubr.bf16.mxu0 0
      %2125 = vmatmul.mubr.bf16.gmra.mrb[0].mxu0 %v1393
      %v2126 = vpop.f32.mrb[0].mxu0
      %v2127 = vadd.f32 0.0, %v2126
      %v2128 = vpop.f32.mrb[0].mxu0
      %v2129 = vpop.f32.mrb[0].mxu0
      %v2130 = vadd.f32 0.0, %v2129
      %v2131 = vpop.f32.mrb[0].mxu0
      %2132 = vmatprep.mubr.bf16.mxu0 0
      %2133 = vmatmul.mubr.bf16.gmra.mrb[0].mxu0 %v1396
      %v2134 = vpop.f32.mrb[0].mxu0
      %v2135 = vadd.f32 0.0, %v2134
      %v2136 = vpop.f32.mrb[0].mxu0
      %v2137 = vpop.f32.mrb[0].mxu0
      %v2138 = vadd.f32 0.0, %v2137
      %v2139 = vpop.f32.mrb[0].mxu0
      %2140 = vmatprep.mubr.bf16.mxu0 0
      %2141 = vmatmul.mubr.bf16.gmra.mrb[0].mxu0 %v1399
      %v2142 = vpop.f32.mrb[0].mxu0
      %v2143 = vadd.f32 0.0, %v2142
      %v2144 = vpop.f32.mrb[0].mxu0
      %v2145 = vpop.f32.mrb[0].mxu0
      %v2146 = vadd.f32 0.0, %v2145
      %v2147 = vpop.f32.mrb[0].mxu0
      %2148 = vmatprep.mubr.bf16.mxu0 0
      %2149 = vmatmul.mubr.bf16.gmra.mrb[0].mxu0 %v1402
      %v2150 = vpop.f32.mrb[0].mxu0
      %v2151 = vadd.f32 0.0, %v2150
      %v2152 = vpop.f32.mrb[0].mxu0
      %v2153 = vpop.f32.mrb[0].mxu0
      %v2154 = vadd.f32 0.0, %v2153
      %v2155 = vpop.f32.mrb[0].mxu0
      %2156 = vmatprep.mubr.bf16.mxu0 0
      %2157 = vmatmul.mubr.bf16.gmra.mrb[0].mxu0 %v1405
      %v2158 = vpop.f32.mrb[0].mxu0
      %v2159 = vadd.f32 0.0, %v2158
      %v2160 = vpop.f32.mrb[0].mxu0
      %v2161 = vpop.f32.mrb[0].mxu0
      %v2162 = vadd.f32 0.0, %v2161
      %v2163 = vpop.f32.mrb[0].mxu0
      %2164 = vmatprep.mubr.bf16.mxu0 0
      %2165 = vmatmul.mubr.bf16.gmra.mrb[0].mxu0 %v1408
      %v2166 = vpop.f32.mrb[0].mxu0
      %v2167 = vadd.f32 0.0, %v2166
      %v2168 = vpop.f32.mrb[0].mxu0
      %v2169 = vpop.f32.mrb[0].mxu0
      %v2170 = vadd.f32 0.0, %v2169
      %v2171 = vpop.f32.mrb[0].mxu0
      %2172 = vmatprep.mubr.bf16.mxu0 0
      %2173 = vmatmul.mubr.bf16.gmra.mrb[0].mxu0 %v1411
      %v2174 = vpop.f32.mrb[0].mxu0
      %v2175 = vadd.f32 0.0, %v2174
      %v2176 = vpop.f32.mrb[0].mxu0
      %v2177 = vpop.f32.mrb[0].mxu0
      %v2178 = vadd.f32 0.0, %v2177
      %v2179 = vpop.f32.mrb[0].mxu0
      %2180 = vmatprep.mubr.bf16.mxu0 0
      %2181 = vmatmul.mubr.bf16.gmra.mrb[0].mxu0 %v1414
      %v2182 = vpop.f32.mrb[0].mxu0
      %v2183 = vadd.f32 0.0, %v2182
      %v2184 = vpop.f32.mrb[0].mxu0
      %v2185 = vpop.f32.mrb[0].mxu0
      %v2186 = vadd.f32 0.0, %v2185
      %v2187 = vpop.f32.mrb[0].mxu0
      %2188 = vmatprep.mubr.bf16.mxu0 0
      %2189 = vmatmul.mubr.bf16.gmra.mrb[0].mxu0 %v2031
      %v2190 = vpop.f32.mrb[0].mxu0
      %v2191 = vadd.f32 0.0, %v2190
      %v2192 = vpop.f32.mrb[0].mxu0
      %v2193 = vpop.f32.mrb[0].mxu0
      %v2194 = vadd.f32 0.0, %v2193
      %v2195 = vpop.f32.mrb[0].mxu0
      %2196 = vdwg.mxu0
      %v2197 = vadd.f32 %v1990, %v2071
      %v2198 = vadd.f32 %v1991, %v2074
      %v2199 = vadd.f32 %v1992, %v2079
      %v2200 = vadd.f32 %v1993, %v2082
      %v2201 = vadd.f32 %v1994, %v2087
      %v2202 = vadd.f32 %v1995, %v2090
      %v2203 = vadd.f32 %v1996, %v2095
      %v2204 = vadd.f32 %v1997, %v2098
      %v2205 = vadd.f32 %v1998, %v2103
      %v2206 = vadd.f32 %v1999, %v2106
      %v2207 = vadd.f32 %v2000, %v2111
      %v2208 = vadd.f32 %v2001, %v2114
      %v2209 = vadd.f32 %v2002, %v2119
      %v2210 = vadd.f32 %v2003, %v2122
      %v2211 = vadd.f32 %v2004, %v2127
      %v2212 = vadd.f32 %v2005, %v2130
      %v2213 = vadd.f32 %v2006, %v2135
      %v2214 = vadd.f32 %v2007, %v2138
      %v2215 = vadd.f32 %v2008, %v2143
      %v2216 = vadd.f32 %v2009, %v2146
      %v2217 = vadd.f32 %v2010, %v2151
      %v2218 = vadd.f32 %v2011, %v2154
      %v2219 = vadd.f32 %v2012, %v2159
      %v2220 = vadd.f32 %v2013, %v2162
      %v2221 = vadd.f32 %v2014, %v2167
      %v2222 = vadd.f32 %v2015, %v2170
      %v2223 = vadd.f32 %v2016, %v2175
      %v2224 = vadd.f32 %v2017, %v2178
      %v2225 = vadd.f32 %v2018, %v2183
      %v2226 = vadd.f32 %v2019, %v2186
      %v2227 = vadd.f32 %v2020, %v2191
      %v2228 = vadd.f32 %v2021, %v2194
      %v2229 = vpack.c.bf16 %v665, %v665
      %v2231 = vand.u32 %v2229, %v880
      %2233 = vmatprep.subr.bf16.mxu0 0
      %2234 = vmatpush1.bf16.msra.mxu0 %v2231
      %2235 = vmatprep.subr.bf16.mxu0 0
      %2236 = vmatpush1.bf16.msra.mxu0 0
      %2237 = vmatprep.subr.bf16.mxu0 0
      %2238 = vmatpush1.bf16.msra.mxu0 0
      %2239 = vmatprep.subr.bf16.mxu0 0
      %2240 = vmatpush1.bf16.msra.mxu0 0
      %2241 = vmatprep.subr.bf16.mxu0 0
      %2242 = vmatpush1.bf16.msra.mxu0 0
      %2243 = vmatprep.subr.bf16.mxu0 0
      %2244 = vmatpush1.bf16.msra.mxu0 0
      %2245 = vmatprep.subr.bf16.mxu0 0
      %2246 = vmatpush1.bf16.msra.mxu0 0
      %2247 = vmatprep.subr.bf16.mxu0 0
      %2248 = vmatpush1.bf16.msra.mxu0 0
      %2249 = vmatprep.subr.bf16.mxu0 0
      %2250 = vmatpush1.bf16.msra.mxu0 0
      %2251 = vmatprep.subr.bf16.mxu0 0
      %2252 = vmatpush1.bf16.msra.mxu0 0
      %2253 = vmatprep.subr.bf16.mxu0 0
      %2254 = vmatpush1.bf16.msra.mxu0 0
      %2255 = vmatprep.subr.bf16.mxu0 0
      %2256 = vmatpush1.bf16.msra.mxu0 0
      %2257 = vmatprep.subr.bf16.mxu0 0
      %2258 = vmatpush1.bf16.msra.mxu0 0
      %2259 = vmatprep.subr.bf16.mxu0 0
      %2260 = vmatpush1.bf16.msra.mxu0 0
      %2261 = vmatprep.subr.bf16.mxu0 0
      %2262 = vmatpush1.bf16.msra.mxu0 0
      %2263 = vmatprep.subr.bf16.mxu0 0
      %2264 = vmatpush1.bf16.msra.mxu0 0
      %2265 = vmatprep.mubr.bf16.mxu0 0
      %2266 = vmatmul.mubr.bf16.gmra.mrb[0].mxu0 %v1052
      %v2267 = vpop.f32.mrb[0].mxu0
      %v2268 = vadd.f32 0.0, %v2267
      %v2269 = vpop.f32.mrb[0].mxu0
      %v2270 = vpop.f32.mrb[0].mxu0
      %v2271 = vadd.f32 0.0, %v2270
      %v2272 = vpop.f32.mrb[0].mxu0
      %2273 = vmatprep.mubr.bf16.mxu0 0
      %2274 = vmatmul.mubr.bf16.gmra.mrb[0].mxu0 %v1055
      %v2275 = vpop.f32.mrb[0].mxu0
      %v2276 = vadd.f32 0.0, %v2275
      %v2277 = vpop.f32.mrb[0].mxu0
      %v2278 = vpop.f32.mrb[0].mxu0
      %v2279 = vadd.f32 0.0, %v2278
      %v2280 = vpop.f32.mrb[0].mxu0
      %2281 = vmatprep.mubr.bf16.mxu0 0
      %2282 = vmatmul.mubr.bf16.gmra.mrb[0].mxu0 %v1058
      %v2283 = vpop.f32.mrb[0].mxu0
      %v2284 = vadd.f32 0.0, %v2283
      %v2285 = vpop.f32.mrb[0].mxu0
      %v2286 = vpop.f32.mrb[0].mxu0
      %v2287 = vadd.f32 0.0, %v2286
      %v2288 = vpop.f32.mrb[0].mxu0
      %2289 = vmatprep.mubr.bf16.mxu0 0
      %2290 = vmatmul.mubr.bf16.gmra.mrb[0].mxu0 %v1061
      %v2291 = vpop.f32.mrb[0].mxu0
      %v2292 = vadd.f32 0.0, %v2291
      %v2293 = vpop.f32.mrb[0].mxu0
      %v2294 = vpop.f32.mrb[0].mxu0
      %v2295 = vadd.f32 0.0, %v2294
      %v2296 = vpop.f32.mrb[0].mxu0
      %2297 = vmatprep.mubr.bf16.mxu0 0
      %2298 = vmatmul.mubr.bf16.gmra.mrb[0].mxu0 %v1064
      %v2299 = vpop.f32.mrb[0].mxu0
      %v2300 = vadd.f32 0.0, %v2299
      %v2301 = vpop.f32.mrb[0].mxu0
      %v2302 = vpop.f32.mrb[0].mxu0
      %v2303 = vadd.f32 0.0, %v2302
      %v2304 = vpop.f32.mrb[0].mxu0
      %2305 = vmatprep.mubr.bf16.mxu0 0
      %2306 = vmatmul.mubr.bf16.gmra.mrb[0].mxu0 %v1067
      %v2307 = vpop.f32.mrb[0].mxu0
      %v2308 = vadd.f32 0.0, %v2307
      %v2309 = vpop.f32.mrb[0].mxu0
      %v2310 = vpop.f32.mrb[0].mxu0
      %v2311 = vadd.f32 0.0, %v2310
      %v2312 = vpop.f32.mrb[0].mxu0
      %2313 = vmatprep.mubr.bf16.mxu0 0
      %2314 = vmatmul.mubr.bf16.gmra.mrb[0].mxu0 %v1070
      %v2315 = vpop.f32.mrb[0].mxu0
      %v2316 = vadd.f32 0.0, %v2315
      %v2317 = vpop.f32.mrb[0].mxu0
      %v2318 = vpop.f32.mrb[0].mxu0
      %v2319 = vadd.f32 0.0, %v2318
      %v2320 = vpop.f32.mrb[0].mxu0
      %2321 = vmatprep.mubr.bf16.mxu0 0
      %2322 = vmatmul.mubr.bf16.gmra.mrb[0].mxu0 %v1073
      %v2323 = vpop.f32.mrb[0].mxu0
      %v2324 = vadd.f32 0.0, %v2323
      %v2325 = vpop.f32.mrb[0].mxu0
      %v2326 = vpop.f32.mrb[0].mxu0
      %v2327 = vadd.f32 0.0, %v2326
      %v2328 = vpop.f32.mrb[0].mxu0
      %2329 = vmatprep.mubr.bf16.mxu0 0
      %2330 = vmatmul.mubr.bf16.gmra.mrb[0].mxu0 %v1076
      %v2331 = vpop.f32.mrb[0].mxu0
      %v2332 = vadd.f32 0.0, %v2331
      %v2333 = vpop.f32.mrb[0].mxu0
      %v2334 = vpop.f32.mrb[0].mxu0
      %v2335 = vadd.f32 0.0, %v2334
      %v2336 = vpop.f32.mrb[0].mxu0
      %2337 = vmatprep.mubr.bf16.mxu0 0
      %2338 = vmatmul.mubr.bf16.gmra.mrb[0].mxu0 %v1079
      %v2339 = vpop.f32.mrb[0].mxu0
      %v2340 = vadd.f32 0.0, %v2339
      %v2341 = vpop.f32.mrb[0].mxu0
      %v2342 = vpop.f32.mrb[0].mxu0
      %v2343 = vadd.f32 0.0, %v2342
      %v2344 = vpop.f32.mrb[0].mxu0
      %2345 = vmatprep.mubr.bf16.mxu0 0
      %2346 = vmatmul.mubr.bf16.gmra.mrb[0].mxu0 %v1082
      %v2347 = vpop.f32.mrb[0].mxu0
      %v2348 = vadd.f32 0.0, %v2347
      %v2349 = vpop.f32.mrb[0].mxu0
      %v2350 = vpop.f32.mrb[0].mxu0
      %v2351 = vadd.f32 0.0, %v2350
      %v2352 = vpop.f32.mrb[0].mxu0
      %2353 = vmatprep.mubr.bf16.mxu0 0
      %2354 = vmatmul.mubr.bf16.gmra.mrb[0].mxu0 %v1085
      %v2355 = vpop.f32.mrb[0].mxu0
      %v2356 = vadd.f32 0.0, %v2355
      %v2357 = vpop.f32.mrb[0].mxu0
      %v2358 = vpop.f32.mrb[0].mxu0
      %v2359 = vadd.f32 0.0, %v2358
      %v2360 = vpop.f32.mrb[0].mxu0
      %2361 = vmatprep.mubr.bf16.mxu0 0
      %2362 = vmatmul.mubr.bf16.gmra.mrb[0].mxu0 %v1088
      %v2363 = vpop.f32.mrb[0].mxu0
      %v2364 = vadd.f32 0.0, %v2363
      %v2365 = vpop.f32.mrb[0].mxu0
      %v2366 = vpop.f32.mrb[0].mxu0
      %v2367 = vadd.f32 0.0, %v2366
      %v2368 = vpop.f32.mrb[0].mxu0
      %2369 = vmatprep.mubr.bf16.mxu0 0
      %2370 = vmatmul.mubr.bf16.gmra.mrb[0].mxu0 %v1091
      %v2371 = vpop.f32.mrb[0].mxu0
      %v2372 = vadd.f32 0.0, %v2371
      %v2373 = vpop.f32.mrb[0].mxu0
      %v2374 = vpop.f32.mrb[0].mxu0
      %v2375 = vadd.f32 0.0, %v2374
      %v2376 = vpop.f32.mrb[0].mxu0
      %2377 = vmatprep.mubr.bf16.mxu0 0
      %2378 = vmatmul.mubr.bf16.gmra.mrb[0].mxu0 %v1623
      %v2379 = vpop.f32.mrb[0].mxu0
      %v2380 = vadd.f32 0.0, %v2379
      %v2381 = vpop.f32.mrb[0].mxu0
      %v2382 = vpop.f32.mrb[0].mxu0
      %v2383 = vadd.f32 0.0, %v2382
      %v2384 = vpop.f32.mrb[0].mxu0
      %2385 = vmatprep.mubr.bf16.mxu0 0
      %2386 = vmatmul.mubr.bf16.gmra.mrb[0].mxu0 %v1046
      %v2387 = vpop.f32.mrb[0].mxu0
      %v2388 = vadd.f32 0.0, %v2387
      %v2389 = vpop.f32.mrb[0].mxu0
      %v2390 = vpop.f32.mrb[0].mxu0
      %v2391 = vadd.f32 0.0, %v2390
      %v2392 = vpop.f32.mrb[0].mxu0
      %2393 = vdwg.mxu0
      %v2394 = vadd.f32 %v2197, %v2268
      %v2395 = vadd.f32 %v2198, %v2271
      %v2396 = vadd.f32 %v2199, %v2276
      %v2397 = vadd.f32 %v2200, %v2279
      %v2398 = vadd.f32 %v2201, %v2284
      %v2399 = vadd.f32 %v2202, %v2287
      %v2400 = vadd.f32 %v2203, %v2292
      %v2401 = vadd.f32 %v2204, %v2295
      %v2402 = vadd.f32 %v2205, %v2300
      %v2403 = vadd.f32 %v2206, %v2303
      %v2404 = vadd.f32 %v2207, %v2308
      %v2405 = vadd.f32 %v2208, %v2311
      %v2406 = vadd.f32 %v2209, %v2316
      %v2407 = vadd.f32 %v2210, %v2319
      %v2408 = vadd.f32 %v2211, %v2324
      %v2409 = vadd.f32 %v2212, %v2327
      %v2410 = vadd.f32 %v2213, %v2332
      %v2411 = vadd.f32 %v2214, %v2335
      %v2412 = vadd.f32 %v2215, %v2340
      %v2413 = vadd.f32 %v2216, %v2343
      %v2414 = vadd.f32 %v2217, %v2348
      %v2415 = vadd.f32 %v2218, %v2351
      %v2416 = vadd.f32 %v2219, %v2356
      %v2417 = vadd.f32 %v2220, %v2359
      %v2418 = vadd.f32 %v2221, %v2364
      %v2419 = vadd.f32 %v2222, %v2367
      %v2420 = vadd.f32 %v2223, %v2372
      %v2421 = vadd.f32 %v2224, %v2375
      %v2422 = vadd.f32 %v2225, %v2380
      %v2423 = vadd.f32 %v2226, %v2383
      %v2424 = vadd.f32 %v2227, %v2388
      %v2425 = vadd.f32 %v2228, %v2391
      %v2426 = vpack.c.bf16 %v666, %v666
      %v2428 = vand.u32 %v2426, %v880
      %2430 = vmatprep.subr.bf16.mxu0 0
      %2431 = vmatpush1.bf16.msra.mxu0 %v2428
      %2432 = vmatprep.subr.bf16.mxu0 0
      %2433 = vmatpush1.bf16.msra.mxu0 0
      %2434 = vmatprep.subr.bf16.mxu0 0
      %2435 = vmatpush1.bf16.msra.mxu0 0
      %2436 = vmatprep.subr.bf16.mxu0 0
      %2437 = vmatpush1.bf16.msra.mxu0 0
      %2438 = vmatprep.subr.bf16.mxu0 0
      %2439 = vmatpush1.bf16.msra.mxu0 0
      %2440 = vmatprep.subr.bf16.mxu0 0
      %2441 = vmatpush1.bf16.msra.mxu0 0
      %2442 = vmatprep.subr.bf16.mxu0 0
      %2443 = vmatpush1.bf16.msra.mxu0 0
      %2444 = vmatprep.subr.bf16.mxu0 0
      %2445 = vmatpush1.bf16.msra.mxu0 0
      %2446 = vmatprep.subr.bf16.mxu0 0
      %2447 = vmatpush1.bf16.msra.mxu0 0
      %2448 = vmatprep.subr.bf16.mxu0 0
      %2449 = vmatpush1.bf16.msra.mxu0 0
      %2450 = vmatprep.subr.bf16.mxu0 0
      %2451 = vmatpush1.bf16.msra.mxu0 0
      %2452 = vmatprep.subr.bf16.mxu0 0
      %2453 = vmatpush1.bf16.msra.mxu0 0
      %2454 = vmatprep.subr.bf16.mxu0 0
      %2455 = vmatpush1.bf16.msra.mxu0 0
      %2456 = vmatprep.subr.bf16.mxu0 0
      %2457 = vmatpush1.bf16.msra.mxu0 0
      %2458 = vmatprep.subr.bf16.mxu0 0
      %2459 = vmatpush1.bf16.msra.mxu0 0
      %2460 = vmatprep.subr.bf16.mxu0 0
      %2461 = vmatpush1.bf16.msra.mxu0 0
      %2462 = vmatprep.mubr.bf16.mxu0 0
      %2463 = vmatmul.mubr.bf16.gmra.mrb[0].mxu0 %v837
      %v2464 = vpop.f32.mrb[0].mxu0
      %v2465 = vadd.f32 0.0, %v2464
      %v2466 = vpop.f32.mrb[0].mxu0
      %v2467 = vpop.f32.mrb[0].mxu0
      %v2468 = vadd.f32 0.0, %v2467
      %v2469 = vpop.f32.mrb[0].mxu0
      %2470 = vmatprep.mubr.bf16.mxu0 0
      %2471 = vmatmul.mubr.bf16.gmra.mrb[0].mxu0 %v840
      %v2472 = vpop.f32.mrb[0].mxu0
      %v2473 = vadd.f32 0.0, %v2472
      %v2474 = vpop.f32.mrb[0].mxu0
      %v2475 = vpop.f32.mrb[0].mxu0
      %v2476 = vadd.f32 0.0, %v2475
      %v2477 = vpop.f32.mrb[0].mxu0
      %2478 = vmatprep.mubr.bf16.mxu0 0
      %2479 = vmatmul.mubr.bf16.gmra.mrb[0].mxu0 %v843
      %v2480 = vpop.f32.mrb[0].mxu0
      %v2481 = vadd.f32 0.0, %v2480
      %v2482 = vpop.f32.mrb[0].mxu0
      %v2483 = vpop.f32.mrb[0].mxu0
      %v2484 = vadd.f32 0.0, %v2483
      %v2485 = vpop.f32.mrb[0].mxu0
      %2486 = vmatprep.mubr.bf16.mxu0 0
      %2487 = vmatmul.mubr.bf16.gmra.mrb[0].mxu0 %v846
      %v2488 = vpop.f32.mrb[0].mxu0
      %v2489 = vadd.f32 0.0, %v2488
      %v2490 = vpop.f32.mrb[0].mxu0
      %v2491 = vpop.f32.mrb[0].mxu0
      %v2492 = vadd.f32 0.0, %v2491
      %v2493 = vpop.f32.mrb[0].mxu0
      %2494 = vmatprep.mubr.bf16.mxu0 0
      %2495 = vmatmul.mubr.bf16.gmra.mrb[0].mxu0 %v849
      %v2496 = vpop.f32.mrb[0].mxu0
      %v2497 = vadd.f32 0.0, %v2496
      %v2498 = vpop.f32.mrb[0].mxu0
      %v2499 = vpop.f32.mrb[0].mxu0
      %v2500 = vadd.f32 0.0, %v2499
      %v2501 = vpop.f32.mrb[0].mxu0
      %2502 = vmatprep.mubr.bf16.mxu0 0
      %2503 = vmatmul.mubr.bf16.gmra.mrb[0].mxu0 %v852
      %v2504 = vpop.f32.mrb[0].mxu0
      %v2505 = vadd.f32 0.0, %v2504
      %v2506 = vpop.f32.mrb[0].mxu0
      %v2507 = vpop.f32.mrb[0].mxu0
      %v2508 = vadd.f32 0.0, %v2507
      %v2509 = vpop.f32.mrb[0].mxu0
      %2510 = vmatprep.mubr.bf16.mxu0 0
      %2511 = vmatmul.mubr.bf16.gmra.mrb[0].mxu0 %v855
      %v2512 = vpop.f32.mrb[0].mxu0
      %v2513 = vadd.f32 0.0, %v2512
      %v2514 = vpop.f32.mrb[0].mxu0
      %v2515 = vpop.f32.mrb[0].mxu0
      %v2516 = vadd.f32 0.0, %v2515
      %v2517 = vpop.f32.mrb[0].mxu0
      %2518 = vmatprep.mubr.bf16.mxu0 0
      %2519 = vmatmul.mubr.bf16.gmra.mrb[0].mxu0 %v858
      %v2520 = vpop.f32.mrb[0].mxu0
      %v2521 = vadd.f32 0.0, %v2520
      %v2522 = vpop.f32.mrb[0].mxu0
      %v2523 = vpop.f32.mrb[0].mxu0
      %v2524 = vadd.f32 0.0, %v2523
      %v2525 = vpop.f32.mrb[0].mxu0
      %2526 = vmatprep.mubr.bf16.mxu0 0
      %2527 = vmatmul.mubr.bf16.gmra.mrb[0].mxu0 %v861
      %v2528 = vpop.f32.mrb[0].mxu0
      %v2529 = vadd.f32 0.0, %v2528
      %v2530 = vpop.f32.mrb[0].mxu0
      %v2531 = vpop.f32.mrb[0].mxu0
      %v2532 = vadd.f32 0.0, %v2531
      %v2533 = vpop.f32.mrb[0].mxu0
      %2534 = vmatprep.mubr.bf16.mxu0 0
      %2535 = vmatmul.mubr.bf16.gmra.mrb[0].mxu0 %v864
      %v2536 = vpop.f32.mrb[0].mxu0
      %v2537 = vadd.f32 0.0, %v2536
      %v2538 = vpop.f32.mrb[0].mxu0
      %v2539 = vpop.f32.mrb[0].mxu0
      %v2540 = vadd.f32 0.0, %v2539
      %v2541 = vpop.f32.mrb[0].mxu0
      %2542 = vmatprep.mubr.bf16.mxu0 0
      %2543 = vmatmul.mubr.bf16.gmra.mrb[0].mxu0 %v867
      %v2544 = vpop.f32.mrb[0].mxu0
      %v2545 = vadd.f32 0.0, %v2544
      %v2546 = vpop.f32.mrb[0].mxu0
      %v2547 = vpop.f32.mrb[0].mxu0
      %v2548 = vadd.f32 0.0, %v2547
      %v2549 = vpop.f32.mrb[0].mxu0
      %2550 = vmatprep.mubr.bf16.mxu0 0
      %2551 = vmatmul.mubr.bf16.gmra.mrb[0].mxu0 %v870
      %v2552 = vpop.f32.mrb[0].mxu0
      %v2553 = vadd.f32 0.0, %v2552
      %v2554 = vpop.f32.mrb[0].mxu0
      %v2555 = vpop.f32.mrb[0].mxu0
      %v2556 = vadd.f32 0.0, %v2555
      %v2557 = vpop.f32.mrb[0].mxu0
      %2558 = vmatprep.mubr.bf16.mxu0 0
      %2559 = vmatmul.mubr.bf16.gmra.mrb[0].mxu0 %v873
      %v2560 = vpop.f32.mrb[0].mxu0
      %v2561 = vadd.f32 0.0, %v2560
      %v2562 = vpop.f32.mrb[0].mxu0
      %v2563 = vpop.f32.mrb[0].mxu0
      %v2564 = vadd.f32 0.0, %v2563
      %v2565 = vpop.f32.mrb[0].mxu0
      %2566 = vmatprep.mubr.bf16.mxu0 0
      %2567 = vmatmul.mubr.bf16.gmra.mrb[0].mxu0 %v876
      %v2568 = vpop.f32.mrb[0].mxu0
      %v2569 = vadd.f32 0.0, %v2568
      %v2570 = vpop.f32.mrb[0].mxu0
      %v2571 = vpop.f32.mrb[0].mxu0
      %v2572 = vadd.f32 0.0, %v2571
      %v2573 = vpop.f32.mrb[0].mxu0
      %2574 = vmatprep.mubr.bf16.mxu0 0
      %2575 = vmatmul.mubr.bf16.gmra.mrb[0].mxu0 %v1824
      %v2576 = vpop.f32.mrb[0].mxu0
      %v2577 = vadd.f32 0.0, %v2576
      %v2578 = vpop.f32.mrb[0].mxu0
      %v2579 = vpop.f32.mrb[0].mxu0
      %v2580 = vadd.f32 0.0, %v2579
      %v2581 = vpop.f32.mrb[0].mxu0
      %2582 = vmatprep.mubr.bf16.mxu0 0
      %2583 = vmatmul.mubr.bf16.gmra.mrb[0].mxu0 %v831
      %v2584 = vpop.f32.mrb[0].mxu0
      %v2585 = vadd.f32 0.0, %v2584
      %v2586 = vpop.f32.mrb[0].mxu0
      %v2587 = vpop.f32.mrb[0].mxu0
      %v2588 = vadd.f32 0.0, %v2587
      %v2589 = vpop.f32.mrb[0].mxu0
      %2590 = vdwg.mxu0
      %v2591 = vadd.f32 %v2394, %v2465
      %v2592 = vadd.f32 %v2395, %v2468
      %v2593 = vadd.f32 %v2396, %v2473
      %v2594 = vadd.f32 %v2397, %v2476
      %v2595 = vadd.f32 %v2398, %v2481
      %v2596 = vadd.f32 %v2399, %v2484
      %v2597 = vadd.f32 %v2400, %v2489
      %v2598 = vadd.f32 %v2401, %v2492
      %v2599 = vadd.f32 %v2402, %v2497
      %v2600 = vadd.f32 %v2403, %v2500
      %v2601 = vadd.f32 %v2404, %v2505
      %v2602 = vadd.f32 %v2405, %v2508
      %v2603 = vadd.f32 %v2406, %v2513
      %v2604 = vadd.f32 %v2407, %v2516
      %v2605 = vadd.f32 %v2408, %v2521
      %v2606 = vadd.f32 %v2409, %v2524
      %v2607 = vadd.f32 %v2410, %v2529
      %v2608 = vadd.f32 %v2411, %v2532
      %v2609 = vadd.f32 %v2412, %v2537
      %v2610 = vadd.f32 %v2413, %v2540
      %v2611 = vadd.f32 %v2414, %v2545
      %v2612 = vadd.f32 %v2415, %v2548
      %v2613 = vadd.f32 %v2416, %v2553
      %v2614 = vadd.f32 %v2417, %v2556
      %v2615 = vadd.f32 %v2418, %v2561
      %v2616 = vadd.f32 %v2419, %v2564
      %v2617 = vadd.f32 %v2420, %v2569
      %v2618 = vadd.f32 %v2421, %v2572
      %v2619 = vadd.f32 %v2422, %v2577
      %v2620 = vadd.f32 %v2423, %v2580
      %v2621 = vadd.f32 %v2424, %v2585
      %v2622 = vadd.f32 %v2425, %v2588
      %v2623 = vpack.c.bf16 %v667, %v667
      %v2625 = vand.u32 %v2623, %v880
      %2627 = vmatprep.subr.bf16.mxu0 0
      %2628 = vmatpush1.bf16.msra.mxu0 %v2625
      %2629 = vmatprep.subr.bf16.mxu0 0
      %2630 = vmatpush1.bf16.msra.mxu0 0
      %2631 = vmatprep.subr.bf16.mxu0 0
      %2632 = vmatpush1.bf16.msra.mxu0 0
      %2633 = vmatprep.subr.bf16.mxu0 0
      %2634 = vmatpush1.bf16.msra.mxu0 0
      %2635 = vmatprep.subr.bf16.mxu0 0
      %2636 = vmatpush1.bf16.msra.mxu0 0
      %2637 = vmatprep.subr.bf16.mxu0 0
      %2638 = vmatpush1.bf16.msra.mxu0 0
      %2639 = vmatprep.subr.bf16.mxu0 0
      %2640 = vmatpush1.bf16.msra.mxu0 0
      %2641 = vmatprep.subr.bf16.mxu0 0
      %2642 = vmatpush1.bf16.msra.mxu0 0
      %2643 = vmatprep.subr.bf16.mxu0 0
      %2644 = vmatpush1.bf16.msra.mxu0 0
      %2645 = vmatprep.subr.bf16.mxu0 0
      %2646 = vmatpush1.bf16.msra.mxu0 0
      %2647 = vmatprep.subr.bf16.mxu0 0
      %2648 = vmatpush1.bf16.msra.mxu0 0
      %2649 = vmatprep.subr.bf16.mxu0 0
      %2650 = vmatpush1.bf16.msra.mxu0 0
      %2651 = vmatprep.subr.bf16.mxu0 0
      %2652 = vmatpush1.bf16.msra.mxu0 0
      %2653 = vmatprep.subr.bf16.mxu0 0
      %2654 = vmatpush1.bf16.msra.mxu0 0
      %2655 = vmatprep.subr.bf16.mxu0 0
      %2656 = vmatpush1.bf16.msra.mxu0 0
      %2657 = vmatprep.subr.bf16.mxu0 0
      %2658 = vmatpush1.bf16.msra.mxu0 0
      %2659 = vmatprep.mubr.bf16.mxu0 0
      %2660 = vmatmul.mubr.bf16.gmra.mrb[0].mxu0 %v1375
      %v2661 = vpop.f32.mrb[0].mxu0
      %v2662 = vadd.f32 0.0, %v2661
      %v2663 = vpop.f32.mrb[0].mxu0
      %v2664 = vpop.f32.mrb[0].mxu0
      %v2665 = vadd.f32 0.0, %v2664
      %v2666 = vpop.f32.mrb[0].mxu0
      %2667 = vmatprep.mubr.bf16.mxu0 0
      %2668 = vmatmul.mubr.bf16.gmra.mrb[0].mxu0 %v1378
      %v2669 = vpop.f32.mrb[0].mxu0
      %v2670 = vadd.f32 0.0, %v2669
      %v2671 = vpop.f32.mrb[0].mxu0
      %v2672 = vpop.f32.mrb[0].mxu0
      %v2673 = vadd.f32 0.0, %v2672
      %v2674 = vpop.f32.mrb[0].mxu0
      %2675 = vmatprep.mubr.bf16.mxu0 0
      %2676 = vmatmul.mubr.bf16.gmra.mrb[0].mxu0 %v1381
      %v2677 = vpop.f32.mrb[0].mxu0
      %v2678 = vadd.f32 0.0, %v2677
      %v2679 = vpop.f32.mrb[0].mxu0
      %v2680 = vpop.f32.mrb[0].mxu0
      %v2681 = vadd.f32 0.0, %v2680
      %v2682 = vpop.f32.mrb[0].mxu0
      %2683 = vmatprep.mubr.bf16.mxu0 0
      %2684 = vmatmul.mubr.bf16.gmra.mrb[0].mxu0 %v1384
      %v2685 = vpop.f32.mrb[0].mxu0
      %v2686 = vadd.f32 0.0, %v2685
      %v2687 = vpop.f32.mrb[0].mxu0
      %v2688 = vpop.f32.mrb[0].mxu0
      %v2689 = vadd.f32 0.0, %v2688
      %v2690 = vpop.f32.mrb[0].mxu0
      %2691 = vmatprep.mubr.bf16.mxu0 0
      %2692 = vmatmul.mubr.bf16.gmra.mrb[0].mxu0 %v1387
      %v2693 = vpop.f32.mrb[0].mxu0
      %v2694 = vadd.f32 0.0, %v2693
      %v2695 = vpop.f32.mrb[0].mxu0
      %v2696 = vpop.f32.mrb[0].mxu0
      %v2697 = vadd.f32 0.0, %v2696
      %v2698 = vpop.f32.mrb[0].mxu0
      %2699 = vmatprep.mubr.bf16.mxu0 0
      %2700 = vmatmul.mubr.bf16.gmra.mrb[0].mxu0 %v1390
      %v2701 = vpop.f32.mrb[0].mxu0
      %v2702 = vadd.f32 0.0, %v2701
      %v2703 = vpop.f32.mrb[0].mxu0
      %v2704 = vpop.f32.mrb[0].mxu0
      %v2705 = vadd.f32 0.0, %v2704
      %v2706 = vpop.f32.mrb[0].mxu0
      %2707 = vmatprep.mubr.bf16.mxu0 0
      %2708 = vmatmul.mubr.bf16.gmra.mrb[0].mxu0 %v1393
      %v2709 = vpop.f32.mrb[0].mxu0
      %v2710 = vadd.f32 0.0, %v2709
      %v2711 = vpop.f32.mrb[0].mxu0
      %v2712 = vpop.f32.mrb[0].mxu0
      %v2713 = vadd.f32 0.0, %v2712
      %v2714 = vpop.f32.mrb[0].mxu0
      %2715 = vmatprep.mubr.bf16.mxu0 0
      %2716 = vmatmul.mubr.bf16.gmra.mrb[0].mxu0 %v1396
      %v2717 = vpop.f32.mrb[0].mxu0
      %v2718 = vadd.f32 0.0, %v2717
      %v2719 = vpop.f32.mrb[0].mxu0
      %v2720 = vpop.f32.mrb[0].mxu0
      %v2721 = vadd.f32 0.0, %v2720
      %v2722 = vpop.f32.mrb[0].mxu0
      %2723 = vmatprep.mubr.bf16.mxu0 0
      %2724 = vmatmul.mubr.bf16.gmra.mrb[0].mxu0 %v1399
      %v2725 = vpop.f32.mrb[0].mxu0
      %v2726 = vadd.f32 0.0, %v2725
      %v2727 = vpop.f32.mrb[0].mxu0
      %v2728 = vpop.f32.mrb[0].mxu0
      %v2729 = vadd.f32 0.0, %v2728
      %v2730 = vpop.f32.mrb[0].mxu0
      %2731 = vmatprep.mubr.bf16.mxu0 0
      %2732 = vmatmul.mubr.bf16.gmra.mrb[0].mxu0 %v1402
      %v2733 = vpop.f32.mrb[0].mxu0
      %v2734 = vadd.f32 0.0, %v2733
      %v2735 = vpop.f32.mrb[0].mxu0
      %v2736 = vpop.f32.mrb[0].mxu0
      %v2737 = vadd.f32 0.0, %v2736
      %v2738 = vpop.f32.mrb[0].mxu0
      %2739 = vmatprep.mubr.bf16.mxu0 0
      %2740 = vmatmul.mubr.bf16.gmra.mrb[0].mxu0 %v1405
      %v2741 = vpop.f32.mrb[0].mxu0
      %v2742 = vadd.f32 0.0, %v2741
      %v2743 = vpop.f32.mrb[0].mxu0
      %v2744 = vpop.f32.mrb[0].mxu0
      %v2745 = vadd.f32 0.0, %v2744
      %v2746 = vpop.f32.mrb[0].mxu0
      %2747 = vmatprep.mubr.bf16.mxu0 0
      %2748 = vmatmul.mubr.bf16.gmra.mrb[0].mxu0 %v1408
      %v2749 = vpop.f32.mrb[0].mxu0
      %v2750 = vadd.f32 0.0, %v2749
      %v2751 = vpop.f32.mrb[0].mxu0
      %v2752 = vpop.f32.mrb[0].mxu0
      %v2753 = vadd.f32 0.0, %v2752
      %v2754 = vpop.f32.mrb[0].mxu0
      %2755 = vmatprep.mubr.bf16.mxu0 0
      %2756 = vmatmul.mubr.bf16.gmra.mrb[0].mxu0 %v1411
      %v2757 = vpop.f32.mrb[0].mxu0
      %v2758 = vadd.f32 0.0, %v2757
      %v2759 = vpop.f32.mrb[0].mxu0
      %v2760 = vpop.f32.mrb[0].mxu0
      %v2761 = vadd.f32 0.0, %v2760
      %v2762 = vpop.f32.mrb[0].mxu0
      %2763 = vmatprep.mubr.bf16.mxu0 0
      %2764 = vmatmul.mubr.bf16.gmra.mrb[0].mxu0 %v1414
      %v2765 = vpop.f32.mrb[0].mxu0
      %v2766 = vadd.f32 0.0, %v2765
      %v2767 = vpop.f32.mrb[0].mxu0
      %v2768 = vpop.f32.mrb[0].mxu0
      %v2769 = vadd.f32 0.0, %v2768
      %v2770 = vpop.f32.mrb[0].mxu0
      %2771 = vmatprep.mubr.bf16.mxu0 0
      %2772 = vmatmul.mubr.bf16.gmra.mrb[0].mxu0 %v2031
      %v2773 = vpop.f32.mrb[0].mxu0
      %v2774 = vadd.f32 0.0, %v2773
      %v2775 = vpop.f32.mrb[0].mxu0
      %v2776 = vpop.f32.mrb[0].mxu0
      %v2777 = vadd.f32 0.0, %v2776
      %v2778 = vpop.f32.mrb[0].mxu0
      %2779 = vmatprep.mubr.bf16.mxu0 0
      %2780 = vmatmul.mubr.bf16.gmra.mrb[0].mxu0 %v1369
      %v2781 = vpop.f32.mrb[0].mxu0
      %v2782 = vadd.f32 0.0, %v2781
      %v2783 = vpop.f32.mrb[0].mxu0
      %v2784 = vpop.f32.mrb[0].mxu0
      %v2785 = vadd.f32 0.0, %v2784
      %v2786 = vpop.f32.mrb[0].mxu0
      %2787 = vdwg.mxu0
      %v2788 = vadd.f32 %v2591, %v2662
      %v2789 = vadd.f32 %v2592, %v2665
      %v2790 = vadd.f32 %v2593, %v2670
      %v2791 = vadd.f32 %v2594, %v2673
      %v2792 = vadd.f32 %v2595, %v2678
      %v2793 = vadd.f32 %v2596, %v2681
      %v2794 = vadd.f32 %v2597, %v2686
      %v2795 = vadd.f32 %v2598, %v2689
      %v2796 = vadd.f32 %v2599, %v2694
      %v2797 = vadd.f32 %v2600, %v2697
      %v2798 = vadd.f32 %v2601, %v2702
      %v2799 = vadd.f32 %v2602, %v2705
      %v2800 = vadd.f32 %v2603, %v2710
      %v2801 = vadd.f32 %v2604, %v2713
      %v2802 = vadd.f32 %v2605, %v2718
      %v2803 = vadd.f32 %v2606, %v2721
      %v2804 = vadd.f32 %v2607, %v2726
      %v2805 = vadd.f32 %v2608, %v2729
      %v2806 = vadd.f32 %v2609, %v2734
      %v2807 = vadd.f32 %v2610, %v2737
      %v2808 = vadd.f32 %v2611, %v2742
      %v2809 = vadd.f32 %v2612, %v2745
      %v2810 = vadd.f32 %v2613, %v2750
      %v2811 = vadd.f32 %v2614, %v2753
      %v2812 = vadd.f32 %v2615, %v2758
      %v2813 = vadd.f32 %v2616, %v2761
      %v2814 = vadd.f32 %v2617, %v2766
      %v2815 = vadd.f32 %v2618, %v2769
      %v2816 = vadd.f32 %v2619, %v2774
      %v2817 = vadd.f32 %v2620, %v2777
      %v2818 = vadd.f32 %v2621, %v2782
      %v2819 = vadd.f32 %v2622, %v2785
      %v2821 = vlaneseq
      %v2822 = vshrl.u32 %v2821, 7
      %v2823 = vsub.s32 0, %v2822
      %v2824 = vrot.slane %v668, %v2823
      %v2826 = vmul.f32 %v2788, %v2824
      %v2827 = vmul.f32 %v2789, %v2824
      %v2828 = vmul.f32 %v2790, %v2824
      %v2829 = vmul.f32 %v2791, %v2824
      %v2830 = vmul.f32 %v2792, %v2824
      %v2831 = vmul.f32 %v2793, %v2824
      %v2832 = vmul.f32 %v2794, %v2824
      %v2833 = vmul.f32 %v2795, %v2824
      %v2834 = vmul.f32 %v2796, %v2824
      %v2835 = vmul.f32 %v2797, %v2824
      %v2836 = vmul.f32 %v2798, %v2824
      %v2837 = vmul.f32 %v2799, %v2824
      %v2838 = vmul.f32 %v2800, %v2824
      %v2839 = vmul.f32 %v2801, %v2824
      %v2840 = vmul.f32 %v2802, %v2824
      %v2841 = vmul.f32 %v2803, %v2824
      %v2842 = vmul.f32 %v2804, %v2824
      %v2843 = vmul.f32 %v2805, %v2824
      %v2844 = vmul.f32 %v2806, %v2824
      %v2845 = vmul.f32 %v2807, %v2824
      %v2846 = vmul.f32 %v2808, %v2824
      %v2847 = vmul.f32 %v2809, %v2824
      %v2848 = vmul.f32 %v2810, %v2824
      %v2849 = vmul.f32 %v2811, %v2824
      %v2850 = vmul.f32 %v2812, %v2824
      %v2851 = vmul.f32 %v2813, %v2824
      %v2852 = vmul.f32 %v2814, %v2824
      %v2853 = vmul.f32 %v2815, %v2824
      %v2854 = vmul.f32 %v2816, %v2824
      %v2855 = vmul.f32 %v2817, %v2824
      %v2856 = vmul.f32 %v2818, %v2824
      %v2857 = vmul.f32 %v2819, %v2824
      %v2859 = vlaneseq
      %v2860 = vshrl.u32 %v2859, 7
      %v2861 = vsub.s32 0, %v2860
      %v2862 = vrot.slane %v669, %v2861
      %v2864 = vadd.f32 %v2826, %v2862
      %v2865 = vadd.f32 %v2827, %v2862
      %v2866 = vadd.f32 %v2828, %v2862
      %v2867 = vadd.f32 %v2829, %v2862
      %v2868 = vadd.f32 %v2830, %v2862
      %v2869 = vadd.f32 %v2831, %v2862
      %v2870 = vadd.f32 %v2832, %v2862
      %v2871 = vadd.f32 %v2833, %v2862
      %v2872 = vadd.f32 %v2834, %v2862
      %v2873 = vadd.f32 %v2835, %v2862
      %v2874 = vadd.f32 %v2836, %v2862
      %v2875 = vadd.f32 %v2837, %v2862
      %v2876 = vadd.f32 %v2838, %v2862
      %v2877 = vadd.f32 %v2839, %v2862
      %v2878 = vadd.f32 %v2840, %v2862
      %v2879 = vadd.f32 %v2841, %v2862
      %v2880 = vadd.f32 %v2842, %v2862
      %v2881 = vadd.f32 %v2843, %v2862
      %v2882 = vadd.f32 %v2844, %v2862
      %v2883 = vadd.f32 %v2845, %v2862
      %v2884 = vadd.f32 %v2846, %v2862
      %v2885 = vadd.f32 %v2847, %v2862
      %v2886 = vadd.f32 %v2848, %v2862
      %v2887 = vadd.f32 %v2849, %v2862
      %v2888 = vadd.f32 %v2850, %v2862
      %v2889 = vadd.f32 %v2851, %v2862
      %v2890 = vadd.f32 %v2852, %v2862
      %v2891 = vadd.f32 %v2853, %v2862
      %v2892 = vadd.f32 %v2854, %v2862
      %v2893 = vadd.f32 %v2855, %v2862
      %v2894 = vadd.f32 %v2856, %v2862
      %v2895 = vadd.f32 %v2857, %v2862
      %v2896 = vmax.f32 %v2864, 0.0
      %v2897 = vmax.f32 %v2865, 0.0
      %v2898 = vmax.f32 %v2866, 0.0
      %v2899 = vmax.f32 %v2867, 0.0
      %v2900 = vmax.f32 %v2868, 0.0
      %v2901 = vmax.f32 %v2869, 0.0
      %v2902 = vmax.f32 %v2870, 0.0
      %v2903 = vmax.f32 %v2871, 0.0
      %v2904 = vmax.f32 %v2872, 0.0
      %v2905 = vmax.f32 %v2873, 0.0
      %v2906 = vmax.f32 %v2874, 0.0
      %v2907 = vmax.f32 %v2875, 0.0
      %v2908 = vmax.f32 %v2876, 0.0
      %v2909 = vmax.f32 %v2877, 0.0
      %v2910 = vmax.f32 %v2878, 0.0
      %v2911 = vmax.f32 %v2879, 0.0
      %v2912 = vmax.f32 %v2880, 0.0
      %v2913 = vmax.f32 %v2881, 0.0
      %v2914 = vmax.f32 %v2882, 0.0
      %v2915 = vmax.f32 %v2883, 0.0
      %v2916 = vmax.f32 %v2884, 0.0
      %v2917 = vmax.f32 %v2885, 0.0
      %v2918 = vmax.f32 %v2886, 0.0
      %v2919 = vmax.f32 %v2887, 0.0
      %v2920 = vmax.f32 %v2888, 0.0
      %v2921 = vmax.f32 %v2889, 0.0
      %v2922 = vmax.f32 %v2890, 0.0
      %v2923 = vmax.f32 %v2891, 0.0
      %v2924 = vmax.f32 %v2892, 0.0
      %v2925 = vmax.f32 %v2893, 0.0
      %v2926 = vmax.f32 %v2894, 0.0
      %v2927 = vmax.f32 %v2895, 0.0
      %v2928 = vld [vmem:[%s4] sm:$0xff]
      %v2929 = vld [vmem:[%s5] sm:$0x1]
      %v2930 = vld [vmem:[%s6] sm:$0x1]
      %v2931 = vpack.c.bf16 %v2897, %v2896
      %v2932 = vpack.c.bf16 %v2899, %v2898
      %v2933 = vpack.c.bf16 %v2901, %v2900
      %v2934 = vpack.c.bf16 %v2903, %v2902
      %v2935 = vpack.c.bf16 %v2905, %v2904
      %v2936 = vpack.c.bf16 %v2907, %v2906
      %v2937 = vpack.c.bf16 %v2909, %v2908
      %v2938 = vpack.c.bf16 %v2911, %v2910
      %v2939 = vpack.c.bf16 %v2913, %v2912
      %v2940 = vpack.c.bf16 %v2915, %v2914
      %v2941 = vpack.c.bf16 %v2917, %v2916
      %v2942 = vpack.c.bf16 %v2919, %v2918
      %v2943 = vpack.c.bf16 %v2921, %v2920
      %v2944 = vpack.c.bf16 %v2923, %v2922
      %v2945 = vpack.c.bf16 %v2925, %v2924
      %v2946 = vpack.c.bf16 %v2927, %v2926
      %v2947 = vpack.c.bf16 %v2928, %v2928
      %vm2948 = vcmask 64512
      %v2950 = vsel %vm2948, %v2931, 0
      %v2953 = vsel %vm2948, %v2932, 0
      %v2956 = vsel %vm2948, %v2933, 0
      %v2959 = vsel %vm2948, %v2934, 0
      %v2962 = vsel %vm2948, %v2935, 0
      %v2965 = vsel %vm2948, %v2936, 0
      %v2968 = vsel %vm2948, %v2937, 0
      %v2971 = vsel %vm2948, %v2938, 0
      %v2974 = vsel %vm2948, %v2939, 0
      %v2977 = vsel %vm2948, %v2940, 0
      %v2980 = vsel %vm2948, %v2941, 0
      %v2983 = vsel %vm2948, %v2942, 0
      %v2986 = vsel %vm2948, %v2943, 0
      %v2989 = vsel %vm2948, %v2944, 0
      %v2992 = vsel %vm2948, %v2945, 0
      %v2995 = vsel %vm2948, %v2946, 0
      %vm2997 = vcmask 1043456
      %v2999 = vsel %vm2997, %v2947, 0
      %3001 = vmatprep.subr.bf16.mxu0 0
      %3002 = vmatpush1.bf16.msra.mxu0 %v2999
      %3003 = vmatprep.subr.bf16.mxu0 0
      %3004 = vmatpush1.bf16.msra.mxu0 0
      %3005 = vmatprep.subr.bf16.mxu0 0
      %3006 = vmatpush1.bf16.msra.mxu0 0
      %3007 = vmatprep.subr.bf16.mxu0 0
      %3008 = vmatpush1.bf16.msra.mxu0 0
      %3009 = vmatprep.subr.bf16.mxu0 0
      %3010 = vmatpush1.bf16.msra.mxu0 0
      %3011 = vmatprep.subr.bf16.mxu0 0
      %3012 = vmatpush1.bf16.msra.mxu0 0
      %3013 = vmatprep.subr.bf16.mxu0 0
      %3014 = vmatpush1.bf16.msra.mxu0 0
      %3015 = vmatprep.subr.bf16.mxu0 0
      %3016 = vmatpush1.bf16.msra.mxu0 0
      %3017 = vmatprep.subr.bf16.mxu0 0
      %3018 = vmatpush1.bf16.msra.mxu0 0
      %3019 = vmatprep.subr.bf16.mxu0 0
      %3020 = vmatpush1.bf16.msra.mxu0 0
      %3021 = vmatprep.subr.bf16.mxu0 0
      %3022 = vmatpush1.bf16.msra.mxu0 0
      %3023 = vmatprep.subr.bf16.mxu0 0
      %3024 = vmatpush1.bf16.msra.mxu0 0
      %3025 = vmatprep.subr.bf16.mxu0 0
      %3026 = vmatpush1.bf16.msra.mxu0 0
      %3027 = vmatprep.subr.bf16.mxu0 0
      %3028 = vmatpush1.bf16.msra.mxu0 0
      %3029 = vmatprep.subr.bf16.mxu0 0
      %3030 = vmatpush1.bf16.msra.mxu0 0
      %3031 = vmatprep.subr.bf16.mxu0 0
      %3032 = vmatpush1.bf16.msra.mxu0 0
      %3033 = vmatprep.mubr.bf16.mxu0 0
      %3034 = vmatmul.mubr.bf16.gmra.mrb[0].mxu0 %v2950
      %v3035 = vpop.f32.mrb[0].mxu0
      %v3036 = vadd.f32 0.0, %v3035
      %v3037 = vpop.f32.mrb[0].mxu0
      %v3038 = vpop.f32.mrb[0].mxu0
      %v3039 = vadd.f32 0.0, %v3038
      %v3040 = vpop.f32.mrb[0].mxu0
      %3041 = vmatprep.mubr.bf16.mxu0 0
      %3042 = vmatmul.mubr.bf16.gmra.mrb[0].mxu0 %v2953
      %v3043 = vpop.f32.mrb[0].mxu0
      %v3044 = vadd.f32 0.0, %v3043
      %v3045 = vpop.f32.mrb[0].mxu0
      %v3046 = vpop.f32.mrb[0].mxu0
      %v3047 = vadd.f32 0.0, %v3046
      %v3048 = vpop.f32.mrb[0].mxu0
      %3049 = vmatprep.mubr.bf16.mxu0 0
      %3050 = vmatmul.mubr.bf16.gmra.mrb[0].mxu0 %v2956
      %v3051 = vpop.f32.mrb[0].mxu0
      %v3052 = vadd.f32 0.0, %v3051
      %v3053 = vpop.f32.mrb[0].mxu0
      %v3054 = vpop.f32.mrb[0].mxu0
      %v3055 = vadd.f32 0.0, %v3054
      %v3056 = vpop.f32.mrb[0].mxu0
      %3057 = vmatprep.mubr.bf16.mxu0 0
      %3058 = vmatmul.mubr.bf16.gmra.mrb[0].mxu0 %v2959
      %v3059 = vpop.f32.mrb[0].mxu0
      %v3060 = vadd.f32 0.0, %v3059
      %v3061 = vpop.f32.mrb[0].mxu0
      %v3062 = vpop.f32.mrb[0].mxu0
      %v3063 = vadd.f32 0.0, %v3062
      %v3064 = vpop.f32.mrb[0].mxu0
      %3065 = vmatprep.mubr.bf16.mxu0 0
      %3066 = vmatmul.mubr.bf16.gmra.mrb[0].mxu0 %v2962
      %v3067 = vpop.f32.mrb[0].mxu0
      %v3068 = vadd.f32 0.0, %v3067
      %v3069 = vpop.f32.mrb[0].mxu0
      %v3070 = vpop.f32.mrb[0].mxu0
      %v3071 = vadd.f32 0.0, %v3070
      %v3072 = vpop.f32.mrb[0].mxu0
      %3073 = vmatprep.mubr.bf16.mxu0 0
      %3074 = vmatmul.mubr.bf16.gmra.mrb[0].mxu0 %v2965
      %v3075 = vpop.f32.mrb[0].mxu0
      %v3076 = vadd.f32 0.0, %v3075
      %v3077 = vpop.f32.mrb[0].mxu0
      %v3078 = vpop.f32.mrb[0].mxu0
      %v3079 = vadd.f32 0.0, %v3078
      %v3080 = vpop.f32.mrb[0].mxu0
      %3081 = vmatprep.mubr.bf16.mxu0 0
      %3082 = vmatmul.mubr.bf16.gmra.mrb[0].mxu0 %v2968
      %v3083 = vpop.f32.mrb[0].mxu0
      %v3084 = vadd.f32 0.0, %v3083
      %v3085 = vpop.f32.mrb[0].mxu0
      %v3086 = vpop.f32.mrb[0].mxu0
      %v3087 = vadd.f32 0.0, %v3086
      %v3088 = vpop.f32.mrb[0].mxu0
      %3089 = vmatprep.mubr.bf16.mxu0 0
      %3090 = vmatmul.mubr.bf16.gmra.mrb[0].mxu0 %v2971
      %v3091 = vpop.f32.mrb[0].mxu0
      %v3092 = vadd.f32 0.0, %v3091
      %v3093 = vpop.f32.mrb[0].mxu0
      %v3094 = vpop.f32.mrb[0].mxu0
      %v3095 = vadd.f32 0.0, %v3094
      %v3096 = vpop.f32.mrb[0].mxu0
      %3097 = vmatprep.mubr.bf16.mxu0 0
      %3098 = vmatmul.mubr.bf16.gmra.mrb[0].mxu0 %v2974
      %v3099 = vpop.f32.mrb[0].mxu0
      %v3100 = vadd.f32 0.0, %v3099
      %v3101 = vpop.f32.mrb[0].mxu0
      %v3102 = vpop.f32.mrb[0].mxu0
      %v3103 = vadd.f32 0.0, %v3102
      %v3104 = vpop.f32.mrb[0].mxu0
      %3105 = vmatprep.mubr.bf16.mxu0 0
      %3106 = vmatmul.mubr.bf16.gmra.mrb[0].mxu0 %v2977
      %v3107 = vpop.f32.mrb[0].mxu0
      %v3108 = vadd.f32 0.0, %v3107
      %v3109 = vpop.f32.mrb[0].mxu0
      %v3110 = vpop.f32.mrb[0].mxu0
      %v3111 = vadd.f32 0.0, %v3110
      %v3112 = vpop.f32.mrb[0].mxu0
      %3113 = vmatprep.mubr.bf16.mxu0 0
      %3114 = vmatmul.mubr.bf16.gmra.mrb[0].mxu0 %v2980
      %v3115 = vpop.f32.mrb[0].mxu0
      %v3116 = vadd.f32 0.0, %v3115
      %v3117 = vpop.f32.mrb[0].mxu0
      %v3118 = vpop.f32.mrb[0].mxu0
      %v3119 = vadd.f32 0.0, %v3118
      %v3120 = vpop.f32.mrb[0].mxu0
      %3121 = vmatprep.mubr.bf16.mxu0 0
      %3122 = vmatmul.mubr.bf16.gmra.mrb[0].mxu0 %v2983
      %v3123 = vpop.f32.mrb[0].mxu0
      %v3124 = vadd.f32 0.0, %v3123
      %v3125 = vpop.f32.mrb[0].mxu0
      %v3126 = vpop.f32.mrb[0].mxu0
      %v3127 = vadd.f32 0.0, %v3126
      %v3128 = vpop.f32.mrb[0].mxu0
      %3129 = vmatprep.mubr.bf16.mxu0 0
      %3130 = vmatmul.mubr.bf16.gmra.mrb[0].mxu0 %v2986
      %v3131 = vpop.f32.mrb[0].mxu0
      %v3132 = vadd.f32 0.0, %v3131
      %v3133 = vpop.f32.mrb[0].mxu0
      %v3134 = vpop.f32.mrb[0].mxu0
      %v3135 = vadd.f32 0.0, %v3134
      %v3136 = vpop.f32.mrb[0].mxu0
      %3137 = vmatprep.mubr.bf16.mxu0 0
      %3138 = vmatmul.mubr.bf16.gmra.mrb[0].mxu0 %v2989
      %v3139 = vpop.f32.mrb[0].mxu0
      %v3140 = vadd.f32 0.0, %v3139
      %v3141 = vpop.f32.mrb[0].mxu0
      %v3142 = vpop.f32.mrb[0].mxu0
      %v3143 = vadd.f32 0.0, %v3142
      %v3144 = vpop.f32.mrb[0].mxu0
      %3145 = vmatprep.mubr.bf16.mxu0 0
      %3146 = vmatmul.mubr.bf16.gmra.mrb[0].mxu0 %v2992
      %v3147 = vpop.f32.mrb[0].mxu0
      %v3148 = vadd.f32 0.0, %v3147
      %v3149 = vpop.f32.mrb[0].mxu0
      %v3150 = vpop.f32.mrb[0].mxu0
      %v3151 = vadd.f32 0.0, %v3150
      %v3152 = vpop.f32.mrb[0].mxu0
      %3153 = vmatprep.mubr.bf16.mxu0 0
      %3154 = vmatmul.mubr.bf16.gmra.mrb[0].mxu0 %v2995
      %v3155 = vpop.f32.mrb[0].mxu0
      %v3156 = vadd.f32 0.0, %v3155
      %v3157 = vpop.f32.mrb[0].mxu0
      %v3158 = vpop.f32.mrb[0].mxu0
      %v3159 = vadd.f32 0.0, %v3158
      %v3160 = vpop.f32.mrb[0].mxu0
      %3161 = vdwg.mxu0
      %v3163 = vlaneseq
      %v3164 = vshrl.u32 %v3163, 7
      %v3165 = vsub.s32 0, %v3164
      %v3166 = vrot.slane %v2929, %v3165
      %v3168 = vmul.f32 %v3036, %v3166
      %v3169 = vmul.f32 %v3039, %v3166
      %v3170 = vmul.f32 %v3044, %v3166
      %v3171 = vmul.f32 %v3047, %v3166
      %v3172 = vmul.f32 %v3052, %v3166
      %v3173 = vmul.f32 %v3055, %v3166
      %v3174 = vmul.f32 %v3060, %v3166
      %v3175 = vmul.f32 %v3063, %v3166
      %v3176 = vmul.f32 %v3068, %v3166
      %v3177 = vmul.f32 %v3071, %v3166
      %v3178 = vmul.f32 %v3076, %v3166
      %v3179 = vmul.f32 %v3079, %v3166
      %v3180 = vmul.f32 %v3084, %v3166
      %v3181 = vmul.f32 %v3087, %v3166
      %v3182 = vmul.f32 %v3092, %v3166
      %v3183 = vmul.f32 %v3095, %v3166
      %v3184 = vmul.f32 %v3100, %v3166
      %v3185 = vmul.f32 %v3103, %v3166
      %v3186 = vmul.f32 %v3108, %v3166
      %v3187 = vmul.f32 %v3111, %v3166
      %v3188 = vmul.f32 %v3116, %v3166
      %v3189 = vmul.f32 %v3119, %v3166
      %v3190 = vmul.f32 %v3124, %v3166
      %v3191 = vmul.f32 %v3127, %v3166
      %v3192 = vmul.f32 %v3132, %v3166
      %v3193 = vmul.f32 %v3135, %v3166
      %v3194 = vmul.f32 %v3140, %v3166
      %v3195 = vmul.f32 %v3143, %v3166
      %v3196 = vmul.f32 %v3148, %v3166
      %v3197 = vmul.f32 %v3151, %v3166
      %v3198 = vmul.f32 %v3156, %v3166
      %v3199 = vmul.f32 %v3159, %v3166
      %v3201 = vlaneseq
      %v3202 = vshrl.u32 %v3201, 7
      %v3203 = vsub.s32 0, %v3202
      %v3204 = vrot.slane %v2930, %v3203
      %v3206 = vadd.f32 %v3168, %v3204
      %v3207 = vadd.f32 %v3169, %v3204
      %v3208 = vadd.f32 %v3170, %v3204
      %v3209 = vadd.f32 %v3171, %v3204
      %v3210 = vadd.f32 %v3172, %v3204
      %v3211 = vadd.f32 %v3173, %v3204
      %v3212 = vadd.f32 %v3174, %v3204
      %v3213 = vadd.f32 %v3175, %v3204
      %v3214 = vadd.f32 %v3176, %v3204
      %v3215 = vadd.f32 %v3177, %v3204
      %v3216 = vadd.f32 %v3178, %v3204
      %v3217 = vadd.f32 %v3179, %v3204
      %v3218 = vadd.f32 %v3180, %v3204
      %v3219 = vadd.f32 %v3181, %v3204
      %v3220 = vadd.f32 %v3182, %v3204
      %v3221 = vadd.f32 %v3183, %v3204
      %v3222 = vadd.f32 %v3184, %v3204
      %v3223 = vadd.f32 %v3185, %v3204
      %v3224 = vadd.f32 %v3186, %v3204
      %v3225 = vadd.f32 %v3187, %v3204
      %v3226 = vadd.f32 %v3188, %v3204
      %v3227 = vadd.f32 %v3189, %v3204
      %v3228 = vadd.f32 %v3190, %v3204
      %v3229 = vadd.f32 %v3191, %v3204
      %v3230 = vadd.f32 %v3192, %v3204
      %v3231 = vadd.f32 %v3193, %v3204
      %v3232 = vadd.f32 %v3194, %v3204
      %v3233 = vadd.f32 %v3195, %v3204
      %v3234 = vadd.f32 %v3196, %v3204
      %v3235 = vadd.f32 %v3197, %v3204
      %v3236 = vadd.f32 %v3198, %v3204
      %v3237 = vadd.f32 %v3199, %v3204
      %v3238 = vmax.f32 %v3206, 0.0
      %v3239 = vmax.f32 %v3207, 0.0
      %v3240 = vmax.f32 %v3208, 0.0
      %v3241 = vmax.f32 %v3209, 0.0
      %v3242 = vmax.f32 %v3210, 0.0
      %v3243 = vmax.f32 %v3211, 0.0
      %v3244 = vmax.f32 %v3212, 0.0
      %v3245 = vmax.f32 %v3213, 0.0
      %v3246 = vmax.f32 %v3214, 0.0
      %v3247 = vmax.f32 %v3215, 0.0
      %v3248 = vmax.f32 %v3216, 0.0
      %v3249 = vmax.f32 %v3217, 0.0
      %v3250 = vmax.f32 %v3218, 0.0
      %v3251 = vmax.f32 %v3219, 0.0
      %v3252 = vmax.f32 %v3220, 0.0
      %v3253 = vmax.f32 %v3221, 0.0
      %v3254 = vmax.f32 %v3222, 0.0
      %v3255 = vmax.f32 %v3223, 0.0
      %v3256 = vmax.f32 %v3224, 0.0
      %v3257 = vmax.f32 %v3225, 0.0
      %v3258 = vmax.f32 %v3226, 0.0
      %v3259 = vmax.f32 %v3227, 0.0
      %v3260 = vmax.f32 %v3228, 0.0
      %v3261 = vmax.f32 %v3229, 0.0
      %v3262 = vmax.f32 %v3230, 0.0
      %v3263 = vmax.f32 %v3231, 0.0
      %v3264 = vmax.f32 %v3232, 0.0
      %v3265 = vmax.f32 %v3233, 0.0
      %v3266 = vmax.f32 %v3234, 0.0
      %v3267 = vmax.f32 %v3235, 0.0
      %v3268 = vmax.f32 %v3236, 0.0
      %v3269 = vmax.f32 %v3237, 0.0
      %v3270 = vld [vmem:[%s7] sm:$0xf]
      %v3271 = vld [vmem:[%s7 + $0x4] sm:$0xf]
      %v3272 = vld [vmem:[%s7 + $0x8] sm:$0xf]
      %v3273 = vld [vmem:[%s7 + $0xc] sm:$0xf]
      %v3274 = vld [vmem:[%s7 + $0x10] sm:$0xf]
      %v3275 = vld [vmem:[%s7 + $0x14] sm:$0xf]
      %v3276 = vld [vmem:[%s7 + $0x18] sm:$0xf]
      %v3277 = vld [vmem:[%s7 + $0x1c] sm:$0xf]
      %v3278 = vld [vmem:[%s7 + $0x20] sm:$0xf]
      %v3279 = vld [vmem:[%s8] sm:$0x1]
      %v3280 = vld [vmem:[%s9] sm:$0x1]
      %v3311 = vrot.slane %v3238, 7
      %v3312 = vsel %vm701, %v702, %v3311
      %v3313 = vrot.slane %v3239, 7
      %v3314 = vsel %vm701, %v3311, %v3313
      %v3315 = vrot.slane %v3240, 7
      %v3316 = vsel %vm701, %v702, %v3315
      %v3317 = vrot.slane %v3241, 7
      %v3318 = vsel %vm701, %v3315, %v3317
      %v3319 = vrot.slane %v3242, 7
      %v3320 = vsel %vm701, %v702, %v3319
      %v3321 = vrot.slane %v3243, 7
      %v3322 = vsel %vm701, %v3319, %v3321
      %v3323 = vrot.slane %v3244, 7
      %v3324 = vsel %vm701, %v702, %v3323
      %v3325 = vrot.slane %v3245, 7
      %v3326 = vsel %vm701, %v3323, %v3325
      %v3327 = vrot.slane %v3246, 7
      %v3328 = vsel %vm701, %v702, %v3327
      %v3329 = vrot.slane %v3247, 7
      %v3330 = vsel %vm701, %v3327, %v3329
      %v3331 = vrot.slane %v3248, 7
      %v3332 = vsel %vm701, %v702, %v3331
      %v3333 = vrot.slane %v3249, 7
      %v3334 = vsel %vm701, %v3331, %v3333
      %v3335 = vrot.slane %v3250, 7
      %v3336 = vsel %vm701, %v702, %v3335
      %v3337 = vrot.slane %v3251, 7
      %v3338 = vsel %vm701, %v3335, %v3337
      %v3339 = vrot.slane %v3252, 7
      %v3340 = vsel %vm701, %v702, %v3339
      %v3341 = vrot.slane %v3253, 7
      %v3342 = vsel %vm701, %v3339, %v3341
      %v3343 = vrot.slane %v3254, 7
      %v3344 = vsel %vm701, %v702, %v3343
      %v3345 = vrot.slane %v3255, 7
      %v3346 = vsel %vm701, %v3343, %v3345
      %v3347 = vrot.slane %v3256, 7
      %v3348 = vsel %vm701, %v702, %v3347
      %v3349 = vrot.slane %v3257, 7
      %v3350 = vsel %vm701, %v3347, %v3349
      %v3351 = vrot.slane %v3258, 7
      %v3352 = vsel %vm701, %v702, %v3351
      %v3353 = vrot.slane %v3259, 7
      %v3354 = vsel %vm701, %v3351, %v3353
      %v3355 = vrot.slane %v3260, 7
      %v3356 = vsel %vm701, %v702, %v3355
      %v3357 = vrot.slane %v3261, 7
      %v3358 = vsel %vm701, %v3355, %v3357
      %v3359 = vrot.slane %v3262, 7
      %v3360 = vsel %vm701, %v702, %v3359
      %v3361 = vrot.slane %v3263, 7
      %v3362 = vsel %vm701, %v3359, %v3361
      %v3363 = vrot.slane %v3264, 7
      %v3364 = vsel %vm701, %v702, %v3363
      %v3365 = vrot.slane %v3265, 7
      %v3366 = vsel %vm701, %v3363, %v3365
      %v3367 = vrot.slane %v3266, 7
      %v3368 = vsel %vm701, %v702, %v3367
      %v3369 = vrot.slane %v3267, 7
      %v3370 = vsel %vm701, %v3367, %v3369
      %v3401 = vpack.c.bf16 %v3314, %v3312
      %v3402 = vpack.c.bf16 %v3318, %v3316
      %v3403 = vpack.c.bf16 %v3322, %v3320
      %v3404 = vpack.c.bf16 %v3326, %v3324
      %v3405 = vpack.c.bf16 %v3330, %v3328
      %v3406 = vpack.c.bf16 %v3334, %v3332
      %v3407 = vpack.c.bf16 %v3338, %v3336
      %v3408 = vpack.c.bf16 %v3342, %v3340
      %v3409 = vpack.c.bf16 %v3346, %v3344
      %v3410 = vpack.c.bf16 %v3350, %v3348
      %v3411 = vpack.c.bf16 %v3354, %v3352
      %v3412 = vpack.c.bf16 %v3358, %v3356
      %v3413 = vpack.c.bf16 %v3362, %v3360
      %v3414 = vpack.c.bf16 %v3366, %v3364
      %v3415 = vpack.c.bf16 %v3370, %v3368
      %v3416 = vpack.c.bf16 %v3270, %v3270
      %v3417 = vpack.c.bf16 %v3239, %v3238
      %v3418 = vpack.c.bf16 %v3241, %v3240
      %v3419 = vpack.c.bf16 %v3243, %v3242
      %v3420 = vpack.c.bf16 %v3245, %v3244
      %v3421 = vpack.c.bf16 %v3247, %v3246
      %v3422 = vpack.c.bf16 %v3249, %v3248
      %v3423 = vpack.c.bf16 %v3251, %v3250
      %v3424 = vpack.c.bf16 %v3253, %v3252
      %v3425 = vpack.c.bf16 %v3255, %v3254
      %v3426 = vpack.c.bf16 %v3257, %v3256
      %v3427 = vpack.c.bf16 %v3259, %v3258
      %v3428 = vpack.c.bf16 %v3261, %v3260
      %v3429 = vpack.c.bf16 %v3263, %v3262
      %v3430 = vpack.c.bf16 %v3265, %v3264
      %v3431 = vpack.c.bf16 %v3267, %v3266
      %v3432 = vpack.c.bf16 %v3271, %v3271
      %vm3433 = vcmask 31744
      %v3434 = vsel %vm3433, %v812, 0
      %v3437 = vsel %vm3433, %v3417, 0
      %v3440 = vsel %vm3433, %v3418, 0
      %v3443 = vsel %vm3433, %v3419, 0
      %v3446 = vsel %vm3433, %v3420, 0
      %v3449 = vsel %vm3433, %v3421, 0
      %v3452 = vsel %vm3433, %v3422, 0
      %v3455 = vsel %vm3433, %v3423, 0
      %v3458 = vsel %vm3433, %v3424, 0
      %v3461 = vsel %vm3433, %v3425, 0
      %v3464 = vsel %vm3433, %v3426, 0
      %v3467 = vsel %vm3433, %v3427, 0
      %v3470 = vsel %vm3433, %v3428, 0
      %v3473 = vsel %vm3433, %v3429, 0
      %v3476 = vsel %vm3433, %v3430, 0
      %v3479 = vsel %vm3433, %v3431, 0
      %v3482 = vsel %vm878, %v3432, 0
      %3484 = vmatprep.subr.bf16.mxu0 0
      %3485 = vmatpush1.bf16.msra.mxu0 %v3482
      %3486 = vmatprep.subr.bf16.mxu0 0
      %3487 = vmatpush1.bf16.msra.mxu0 0
      %3488 = vmatprep.subr.bf16.mxu0 0
      %3489 = vmatpush1.bf16.msra.mxu0 0
      %3490 = vmatprep.subr.bf16.mxu0 0
      %3491 = vmatpush1.bf16.msra.mxu0 0
      %3492 = vmatprep.subr.bf16.mxu0 0
      %3493 = vmatpush1.bf16.msra.mxu0 0
      %3494 = vmatprep.subr.bf16.mxu0 0
      %3495 = vmatpush1.bf16.msra.mxu0 0
      %3496 = vmatprep.subr.bf16.mxu0 0
      %3497 = vmatpush1.bf16.msra.mxu0 0
      %3498 = vmatprep.subr.bf16.mxu0 0
      %3499 = vmatpush1.bf16.msra.mxu0 0
      %3500 = vmatprep.subr.bf16.mxu0 0
      %3501 = vmatpush1.bf16.msra.mxu0 0
      %3502 = vmatprep.subr.bf16.mxu0 0
      %3503 = vmatpush1.bf16.msra.mxu0 0
      %3504 = vmatprep.subr.bf16.mxu0 0
      %3505 = vmatpush1.bf16.msra.mxu0 0
      %3506 = vmatprep.subr.bf16.mxu0 0
      %3507 = vmatpush1.bf16.msra.mxu0 0
      %3508 = vmatprep.subr.bf16.mxu0 0
      %3509 = vmatpush1.bf16.msra.mxu0 0
      %3510 = vmatprep.subr.bf16.mxu0 0
      %3511 = vmatpush1.bf16.msra.mxu0 0
      %3512 = vmatprep.subr.bf16.mxu0 0
      %3513 = vmatpush1.bf16.msra.mxu0 0
      %3514 = vmatprep.subr.bf16.mxu0 0
      %3515 = vmatpush1.bf16.msra.mxu0 0
      %3516 = vmatprep.mubr.bf16.mxu0 0
      %3517 = vmatmul.mubr.bf16.gmra.mrb[0].mxu0 %v3434
      %v3518 = vpop.f32.mrb[0].mxu0
      %v3519 = vadd.f32 0.0, %v3518
      %v3520 = vpop.f32.mrb[0].mxu0
      %v3521 = vpop.f32.mrb[0].mxu0
      %v3522 = vadd.f32 0.0, %v3521
      %v3523 = vpop.f32.mrb[0].mxu0
      %3524 = vmatprep.mubr.bf16.mxu0 0
      %3525 = vmatmul.mubr.bf16.gmra.mrb[0].mxu0 %v3437
      %v3526 = vpop.f32.mrb[0].mxu0
      %v3527 = vadd.f32 0.0, %v3526
      %v3528 = vpop.f32.mrb[0].mxu0
      %v3529 = vpop.f32.mrb[0].mxu0
      %v3530 = vadd.f32 0.0, %v3529
      %v3531 = vpop.f32.mrb[0].mxu0
      %3532 = vmatprep.mubr.bf16.mxu0 0
      %3533 = vmatmul.mubr.bf16.gmra.mrb[0].mxu0 %v3440
      %v3534 = vpop.f32.mrb[0].mxu0
      %v3535 = vadd.f32 0.0, %v3534
      %v3536 = vpop.f32.mrb[0].mxu0
      %v3537 = vpop.f32.mrb[0].mxu0
      %v3538 = vadd.f32 0.0, %v3537
      %v3539 = vpop.f32.mrb[0].mxu0
      %3540 = vmatprep.mubr.bf16.mxu0 0
      %3541 = vmatmul.mubr.bf16.gmra.mrb[0].mxu0 %v3443
      %v3542 = vpop.f32.mrb[0].mxu0
      %v3543 = vadd.f32 0.0, %v3542
      %v3544 = vpop.f32.mrb[0].mxu0
      %v3545 = vpop.f32.mrb[0].mxu0
      %v3546 = vadd.f32 0.0, %v3545
      %v3547 = vpop.f32.mrb[0].mxu0
      %3548 = vmatprep.mubr.bf16.mxu0 0
      %3549 = vmatmul.mubr.bf16.gmra.mrb[0].mxu0 %v3446
      %v3550 = vpop.f32.mrb[0].mxu0
      %v3551 = vadd.f32 0.0, %v3550
      %v3552 = vpop.f32.mrb[0].mxu0
      %v3553 = vpop.f32.mrb[0].mxu0
      %v3554 = vadd.f32 0.0, %v3553
      %v3555 = vpop.f32.mrb[0].mxu0
      %3556 = vmatprep.mubr.bf16.mxu0 0
      %3557 = vmatmul.mubr.bf16.gmra.mrb[0].mxu0 %v3449
      %v3558 = vpop.f32.mrb[0].mxu0
      %v3559 = vadd.f32 0.0, %v3558
      %v3560 = vpop.f32.mrb[0].mxu0
      %v3561 = vpop.f32.mrb[0].mxu0
      %v3562 = vadd.f32 0.0, %v3561
      %v3563 = vpop.f32.mrb[0].mxu0
      %3564 = vmatprep.mubr.bf16.mxu0 0
      %3565 = vmatmul.mubr.bf16.gmra.mrb[0].mxu0 %v3452
      %v3566 = vpop.f32.mrb[0].mxu0
      %v3567 = vadd.f32 0.0, %v3566
      %v3568 = vpop.f32.mrb[0].mxu0
      %v3569 = vpop.f32.mrb[0].mxu0
      %v3570 = vadd.f32 0.0, %v3569
      %v3571 = vpop.f32.mrb[0].mxu0
      %3572 = vmatprep.mubr.bf16.mxu0 0
      %3573 = vmatmul.mubr.bf16.gmra.mrb[0].mxu0 %v3455
      %v3574 = vpop.f32.mrb[0].mxu0
      %v3575 = vadd.f32 0.0, %v3574
      %v3576 = vpop.f32.mrb[0].mxu0
      %v3577 = vpop.f32.mrb[0].mxu0
      %v3578 = vadd.f32 0.0, %v3577
      %v3579 = vpop.f32.mrb[0].mxu0
      %3580 = vmatprep.mubr.bf16.mxu0 0
      %3581 = vmatmul.mubr.bf16.gmra.mrb[0].mxu0 %v3458
      %v3582 = vpop.f32.mrb[0].mxu0
      %v3583 = vadd.f32 0.0, %v3582
      %v3584 = vpop.f32.mrb[0].mxu0
      %v3585 = vpop.f32.mrb[0].mxu0
      %v3586 = vadd.f32 0.0, %v3585
      %v3587 = vpop.f32.mrb[0].mxu0
      %3588 = vmatprep.mubr.bf16.mxu0 0
      %3589 = vmatmul.mubr.bf16.gmra.mrb[0].mxu0 %v3461
      %v3590 = vpop.f32.mrb[0].mxu0
      %v3591 = vadd.f32 0.0, %v3590
      %v3592 = vpop.f32.mrb[0].mxu0
      %v3593 = vpop.f32.mrb[0].mxu0
      %v3594 = vadd.f32 0.0, %v3593
      %v3595 = vpop.f32.mrb[0].mxu0
      %3596 = vmatprep.mubr.bf16.mxu0 0
      %3597 = vmatmul.mubr.bf16.gmra.mrb[0].mxu0 %v3464
      %v3598 = vpop.f32.mrb[0].mxu0
      %v3599 = vadd.f32 0.0, %v3598
      %v3600 = vpop.f32.mrb[0].mxu0
      %v3601 = vpop.f32.mrb[0].mxu0
      %v3602 = vadd.f32 0.0, %v3601
      %v3603 = vpop.f32.mrb[0].mxu0
      %3604 = vmatprep.mubr.bf16.mxu0 0
      %3605 = vmatmul.mubr.bf16.gmra.mrb[0].mxu0 %v3467
      %v3606 = vpop.f32.mrb[0].mxu0
      %v3607 = vadd.f32 0.0, %v3606
      %v3608 = vpop.f32.mrb[0].mxu0
      %v3609 = vpop.f32.mrb[0].mxu0
      %v3610 = vadd.f32 0.0, %v3609
      %v3611 = vpop.f32.mrb[0].mxu0
      %3612 = vmatprep.mubr.bf16.mxu0 0
      %3613 = vmatmul.mubr.bf16.gmra.mrb[0].mxu0 %v3470
      %v3614 = vpop.f32.mrb[0].mxu0
      %v3615 = vadd.f32 0.0, %v3614
      %v3616 = vpop.f32.mrb[0].mxu0
      %v3617 = vpop.f32.mrb[0].mxu0
      %v3618 = vadd.f32 0.0, %v3617
      %v3619 = vpop.f32.mrb[0].mxu0
      %3620 = vmatprep.mubr.bf16.mxu0 0
      %3621 = vmatmul.mubr.bf16.gmra.mrb[0].mxu0 %v3473
      %v3622 = vpop.f32.mrb[0].mxu0
      %v3623 = vadd.f32 0.0, %v3622
      %v3624 = vpop.f32.mrb[0].mxu0
      %v3625 = vpop.f32.mrb[0].mxu0
      %v3626 = vadd.f32 0.0, %v3625
      %v3627 = vpop.f32.mrb[0].mxu0
      %3628 = vmatprep.mubr.bf16.mxu0 0
      %3629 = vmatmul.mubr.bf16.gmra.mrb[0].mxu0 %v3476
      %v3630 = vpop.f32.mrb[0].mxu0
      %v3631 = vadd.f32 0.0, %v3630
      %v3632 = vpop.f32.mrb[0].mxu0
      %v3633 = vpop.f32.mrb[0].mxu0
      %v3634 = vadd.f32 0.0, %v3633
      %v3635 = vpop.f32.mrb[0].mxu0
      %3636 = vmatprep.mubr.bf16.mxu0 0
      %3637 = vmatmul.mubr.bf16.gmra.mrb[0].mxu0 %v3479
      %v3638 = vpop.f32.mrb[0].mxu0
      %v3639 = vadd.f32 0.0, %v3638
      %v3640 = vpop.f32.mrb[0].mxu0
      %v3641 = vpop.f32.mrb[0].mxu0
      %v3642 = vadd.f32 0.0, %v3641
      %v3643 = vpop.f32.mrb[0].mxu0
      %3644 = vdwg.mxu0
      %v3645 = vsel %vm3433, %v795, 0
      %v3648 = vsel %vm3433, %v3401, 0
      %v3651 = vsel %vm3433, %v3402, 0
      %v3654 = vsel %vm3433, %v3403, 0
      %v3657 = vsel %vm3433, %v3404, 0
      %v3660 = vsel %vm3433, %v3405, 0
      %v3663 = vsel %vm3433, %v3406, 0
      %v3666 = vsel %vm3433, %v3407, 0
      %v3669 = vsel %vm3433, %v3408, 0
      %v3672 = vsel %vm3433, %v3409, 0
      %v3675 = vsel %vm3433, %v3410, 0
      %v3678 = vsel %vm3433, %v3411, 0
      %v3681 = vsel %vm3433, %v3412, 0
      %v3684 = vsel %vm3433, %v3413, 0
      %v3687 = vsel %vm3433, %v3414, 0
      %v3690 = vsel %vm3433, %v3415, 0
      %v3693 = vsel %vm878, %v3416, 0
      %3695 = vmatprep.subr.bf16.mxu0 0
      %3696 = vmatpush1.bf16.msra.mxu0 %v3693
      %3697 = vmatprep.subr.bf16.mxu0 0
      %3698 = vmatpush1.bf16.msra.mxu0 0
      %3699 = vmatprep.subr.bf16.mxu0 0
      %3700 = vmatpush1.bf16.msra.mxu0 0
      %3701 = vmatprep.subr.bf16.mxu0 0
      %3702 = vmatpush1.bf16.msra.mxu0 0
      %3703 = vmatprep.subr.bf16.mxu0 0
      %3704 = vmatpush1.bf16.msra.mxu0 0
      %3705 = vmatprep.subr.bf16.mxu0 0
      %3706 = vmatpush1.bf16.msra.mxu0 0
      %3707 = vmatprep.subr.bf16.mxu0 0
      %3708 = vmatpush1.bf16.msra.mxu0 0
      %3709 = vmatprep.subr.bf16.mxu0 0
      %3710 = vmatpush1.bf16.msra.mxu0 0
      %3711 = vmatprep.subr.bf16.mxu0 0
      %3712 = vmatpush1.bf16.msra.mxu0 0
      %3713 = vmatprep.subr.bf16.mxu0 0
      %3714 = vmatpush1.bf16.msra.mxu0 0
      %3715 = vmatprep.subr.bf16.mxu0 0
      %3716 = vmatpush1.bf16.msra.mxu0 0
      %3717 = vmatprep.subr.bf16.mxu0 0
      %3718 = vmatpush1.bf16.msra.mxu0 0
      %3719 = vmatprep.subr.bf16.mxu0 0
      %3720 = vmatpush1.bf16.msra.mxu0 0
      %3721 = vmatprep.subr.bf16.mxu0 0
      %3722 = vmatpush1.bf16.msra.mxu0 0
      %3723 = vmatprep.subr.bf16.mxu0 0
      %3724 = vmatpush1.bf16.msra.mxu0 0
      %3725 = vmatprep.subr.bf16.mxu0 0
      %3726 = vmatpush1.bf16.msra.mxu0 0
      %3727 = vmatprep.mubr.bf16.mxu0 0
      %3728 = vmatmul.mubr.bf16.gmra.mrb[0].mxu0 %v3645
      %v3729 = vpop.f32.mrb[0].mxu0
      %v3730 = vadd.f32 %v3519, %v3729
      %v3731 = vpop.f32.mrb[0].mxu0
      %v3732 = vpop.f32.mrb[0].mxu0
      %v3733 = vadd.f32 %v3522, %v3732
      %v3734 = vpop.f32.mrb[0].mxu0
      %3735 = vmatprep.mubr.bf16.mxu0 0
      %3736 = vmatmul.mubr.bf16.gmra.mrb[0].mxu0 %v3648
      %v3737 = vpop.f32.mrb[0].mxu0
      %v3738 = vadd.f32 %v3527, %v3737
      %v3739 = vpop.f32.mrb[0].mxu0
      %v3740 = vpop.f32.mrb[0].mxu0
      %v3741 = vadd.f32 %v3530, %v3740
      %v3742 = vpop.f32.mrb[0].mxu0
      %3743 = vmatprep.mubr.bf16.mxu0 0
      %3744 = vmatmul.mubr.bf16.gmra.mrb[0].mxu0 %v3651
      %v3745 = vpop.f32.mrb[0].mxu0
      %v3746 = vadd.f32 %v3535, %v3745
      %v3747 = vpop.f32.mrb[0].mxu0
      %v3748 = vpop.f32.mrb[0].mxu0
      %v3749 = vadd.f32 %v3538, %v3748
      %v3750 = vpop.f32.mrb[0].mxu0
      %3751 = vmatprep.mubr.bf16.mxu0 0
      %3752 = vmatmul.mubr.bf16.gmra.mrb[0].mxu0 %v3654
      %v3753 = vpop.f32.mrb[0].mxu0
      %v3754 = vadd.f32 %v3543, %v3753
      %v3755 = vpop.f32.mrb[0].mxu0
      %v3756 = vpop.f32.mrb[0].mxu0
      %v3757 = vadd.f32 %v3546, %v3756
      %v3758 = vpop.f32.mrb[0].mxu0
      %3759 = vmatprep.mubr.bf16.mxu0 0
      %3760 = vmatmul.mubr.bf16.gmra.mrb[0].mxu0 %v3657
      %v3761 = vpop.f32.mrb[0].mxu0
      %v3762 = vadd.f32 %v3551, %v3761
      %v3763 = vpop.f32.mrb[0].mxu0
      %v3764 = vpop.f32.mrb[0].mxu0
      %v3765 = vadd.f32 %v3554, %v3764
      %v3766 = vpop.f32.mrb[0].mxu0
      %3767 = vmatprep.mubr.bf16.mxu0 0
      %3768 = vmatmul.mubr.bf16.gmra.mrb[0].mxu0 %v3660
      %v3769 = vpop.f32.mrb[0].mxu0
      %v3770 = vadd.f32 %v3559, %v3769
      %v3771 = vpop.f32.mrb[0].mxu0
      %v3772 = vpop.f32.mrb[0].mxu0
      %v3773 = vadd.f32 %v3562, %v3772
      %v3774 = vpop.f32.mrb[0].mxu0
      %3775 = vmatprep.mubr.bf16.mxu0 0
      %3776 = vmatmul.mubr.bf16.gmra.mrb[0].mxu0 %v3663
      %v3777 = vpop.f32.mrb[0].mxu0
      %v3778 = vadd.f32 %v3567, %v3777
      %v3779 = vpop.f32.mrb[0].mxu0
      %v3780 = vpop.f32.mrb[0].mxu0
      %v3781 = vadd.f32 %v3570, %v3780
      %v3782 = vpop.f32.mrb[0].mxu0
      %3783 = vmatprep.mubr.bf16.mxu0 0
      %3784 = vmatmul.mubr.bf16.gmra.mrb[0].mxu0 %v3666
      %v3785 = vpop.f32.mrb[0].mxu0
      %v3786 = vadd.f32 %v3575, %v3785
      %v3787 = vpop.f32.mrb[0].mxu0
      %v3788 = vpop.f32.mrb[0].mxu0
      %v3789 = vadd.f32 %v3578, %v3788
      %v3790 = vpop.f32.mrb[0].mxu0
      %3791 = vmatprep.mubr.bf16.mxu0 0
      %3792 = vmatmul.mubr.bf16.gmra.mrb[0].mxu0 %v3669
      %v3793 = vpop.f32.mrb[0].mxu0
      %v3794 = vadd.f32 %v3583, %v3793
      %v3795 = vpop.f32.mrb[0].mxu0
      %v3796 = vpop.f32.mrb[0].mxu0
      %v3797 = vadd.f32 %v3586, %v3796
      %v3798 = vpop.f32.mrb[0].mxu0
      %3799 = vmatprep.mubr.bf16.mxu0 0
      %3800 = vmatmul.mubr.bf16.gmra.mrb[0].mxu0 %v3672
      %v3801 = vpop.f32.mrb[0].mxu0
      %v3802 = vadd.f32 %v3591, %v3801
      %v3803 = vpop.f32.mrb[0].mxu0
      %v3804 = vpop.f32.mrb[0].mxu0
      %v3805 = vadd.f32 %v3594, %v3804
      %v3806 = vpop.f32.mrb[0].mxu0
      %3807 = vmatprep.mubr.bf16.mxu0 0
      %3808 = vmatmul.mubr.bf16.gmra.mrb[0].mxu0 %v3675
      %v3809 = vpop.f32.mrb[0].mxu0
      %v3810 = vadd.f32 %v3599, %v3809
      %v3811 = vpop.f32.mrb[0].mxu0
      %v3812 = vpop.f32.mrb[0].mxu0
      %v3813 = vadd.f32 %v3602, %v3812
      %v3814 = vpop.f32.mrb[0].mxu0
      %3815 = vmatprep.mubr.bf16.mxu0 0
      %3816 = vmatmul.mubr.bf16.gmra.mrb[0].mxu0 %v3678
      %v3817 = vpop.f32.mrb[0].mxu0
      %v3818 = vadd.f32 %v3607, %v3817
      %v3819 = vpop.f32.mrb[0].mxu0
      %v3820 = vpop.f32.mrb[0].mxu0
      %v3821 = vadd.f32 %v3610, %v3820
      %v3822 = vpop.f32.mrb[0].mxu0
      %3823 = vmatprep.mubr.bf16.mxu0 0
      %3824 = vmatmul.mubr.bf16.gmra.mrb[0].mxu0 %v3681
      %v3825 = vpop.f32.mrb[0].mxu0
      %v3826 = vadd.f32 %v3615, %v3825
      %v3827 = vpop.f32.mrb[0].mxu0
      %v3828 = vpop.f32.mrb[0].mxu0
      %v3829 = vadd.f32 %v3618, %v3828
      %v3830 = vpop.f32.mrb[0].mxu0
      %3831 = vmatprep.mubr.bf16.mxu0 0
      %3832 = vmatmul.mubr.bf16.gmra.mrb[0].mxu0 %v3684
      %v3833 = vpop.f32.mrb[0].mxu0
      %v3834 = vadd.f32 %v3623, %v3833
      %v3835 = vpop.f32.mrb[0].mxu0
      %v3836 = vpop.f32.mrb[0].mxu0
      %v3837 = vadd.f32 %v3626, %v3836
      %v3838 = vpop.f32.mrb[0].mxu0
      %3839 = vmatprep.mubr.bf16.mxu0 0
      %3840 = vmatmul.mubr.bf16.gmra.mrb[0].mxu0 %v3687
      %v3841 = vpop.f32.mrb[0].mxu0
      %v3842 = vadd.f32 %v3631, %v3841
      %v3843 = vpop.f32.mrb[0].mxu0
      %v3844 = vpop.f32.mrb[0].mxu0
      %v3845 = vadd.f32 %v3634, %v3844
      %v3846 = vpop.f32.mrb[0].mxu0
      %3847 = vmatprep.mubr.bf16.mxu0 0
      %3848 = vmatmul.mubr.bf16.gmra.mrb[0].mxu0 %v3690
      %v3849 = vpop.f32.mrb[0].mxu0
      %v3850 = vadd.f32 %v3639, %v3849
      %v3851 = vpop.f32.mrb[0].mxu0
      %v3852 = vpop.f32.mrb[0].mxu0
      %v3853 = vadd.f32 %v3642, %v3852
      %v3854 = vpop.f32.mrb[0].mxu0
      %3855 = vdwg.mxu0
      %v3856 = vrot.slane %v3238, 1
      %v3857 = vrot.slane %v3239, 1
      %v3858 = vsel %vm1257, %v3856, %v3857
      %v3859 = vsel %vm1257, %v3857, %v1258
      %v3860 = vrot.slane %v3240, 1
      %v3861 = vrot.slane %v3241, 1
      %v3862 = vsel %vm1257, %v3860, %v3861
      %v3863 = vsel %vm1257, %v3861, %v1258
      %v3864 = vrot.slane %v3242, 1
      %v3865 = vrot.slane %v3243, 1
      %v3866 = vsel %vm1257, %v3864, %v3865
      %v3867 = vsel %vm1257, %v3865, %v1258
      %v3868 = vrot.slane %v3244, 1
      %v3869 = vrot.slane %v3245, 1
      %v3870 = vsel %vm1257, %v3868, %v3869
      %v3871 = vsel %vm1257, %v3869, %v1258
      %v3872 = vrot.slane %v3246, 1
      %v3873 = vrot.slane %v3247, 1
      %v3874 = vsel %vm1257, %v3872, %v3873
      %v3875 = vsel %vm1257, %v3873, %v1258
      %v3876 = vrot.slane %v3248, 1
      %v3877 = vrot.slane %v3249, 1
      %v3878 = vsel %vm1257, %v3876, %v3877
      %v3879 = vsel %vm1257, %v3877, %v1258
      %v3880 = vrot.slane %v3250, 1
      %v3881 = vrot.slane %v3251, 1
      %v3882 = vsel %vm1257, %v3880, %v3881
      %v3883 = vsel %vm1257, %v3881, %v1258
      %v3884 = vrot.slane %v3252, 1
      %v3885 = vrot.slane %v3253, 1
      %v3886 = vsel %vm1257, %v3884, %v3885
      %v3887 = vsel %vm1257, %v3885, %v1258
      %v3888 = vrot.slane %v3254, 1
      %v3889 = vrot.slane %v3255, 1
      %v3890 = vsel %vm1257, %v3888, %v3889
      %v3891 = vsel %vm1257, %v3889, %v1258
      %v3892 = vrot.slane %v3256, 1
      %v3893 = vrot.slane %v3257, 1
      %v3894 = vsel %vm1257, %v3892, %v3893
      %v3895 = vsel %vm1257, %v3893, %v1258
      %v3896 = vrot.slane %v3258, 1
      %v3897 = vrot.slane %v3259, 1
      %v3898 = vsel %vm1257, %v3896, %v3897
      %v3899 = vsel %vm1257, %v3897, %v1258
      %v3900 = vrot.slane %v3260, 1
      %v3901 = vrot.slane %v3261, 1
      %v3902 = vsel %vm1257, %v3900, %v3901
      %v3903 = vsel %vm1257, %v3901, %v1258
      %v3904 = vrot.slane %v3262, 1
      %v3905 = vrot.slane %v3263, 1
      %v3906 = vsel %vm1257, %v3904, %v3905
      %v3907 = vsel %vm1257, %v3905, %v1258
      %v3908 = vrot.slane %v3264, 1
      %v3909 = vrot.slane %v3265, 1
      %v3910 = vsel %vm1257, %v3908, %v3909
      %v3911 = vsel %vm1257, %v3909, %v1258
      %v3912 = vrot.slane %v3266, 1
      %v3913 = vrot.slane %v3267, 1
      %v3914 = vsel %vm1257, %v3912, %v3913
      %v3915 = vsel %vm1257, %v3913, %v1258
      %v3946 = vpack.c.bf16 %v3859, %v3858
      %v3947 = vpack.c.bf16 %v3863, %v3862
      %v3948 = vpack.c.bf16 %v3867, %v3866
      %v3949 = vpack.c.bf16 %v3871, %v3870
      %v3950 = vpack.c.bf16 %v3875, %v3874
      %v3951 = vpack.c.bf16 %v3879, %v3878
      %v3952 = vpack.c.bf16 %v3883, %v3882
      %v3953 = vpack.c.bf16 %v3887, %v3886
      %v3954 = vpack.c.bf16 %v3891, %v3890
      %v3955 = vpack.c.bf16 %v3895, %v3894
      %v3956 = vpack.c.bf16 %v3899, %v3898
      %v3957 = vpack.c.bf16 %v3903, %v3902
      %v3958 = vpack.c.bf16 %v3907, %v3906
      %v3959 = vpack.c.bf16 %v3911, %v3910
      %v3960 = vpack.c.bf16 %v3915, %v3914
      %v3961 = vpack.c.bf16 %v3272, %v3272
      %v3962 = vsel %vm3433, %v1351, 0
      %v3965 = vsel %vm3433, %v3946, 0
      %v3968 = vsel %vm3433, %v3947, 0
      %v3971 = vsel %vm3433, %v3948, 0
      %v3974 = vsel %vm3433, %v3949, 0
      %v3977 = vsel %vm3433, %v3950, 0
      %v3980 = vsel %vm3433, %v3951, 0
      %v3983 = vsel %vm3433, %v3952, 0
      %v3986 = vsel %vm3433, %v3953, 0
      %v3989 = vsel %vm3433, %v3954, 0
      %v3992 = vsel %vm3433, %v3955, 0
      %v3995 = vsel %vm3433, %v3956, 0
      %v3998 = vsel %vm3433, %v3957, 0
      %v4001 = vsel %vm3433, %v3958, 0
      %v4004 = vsel %vm3433, %v3959, 0
      %v4007 = vsel %vm3433, %v3960, 0
      %v4010 = vsel %vm878, %v3961, 0
      %4012 = vmatprep.subr.bf16.mxu0 0
      %4013 = vmatpush1.bf16.msra.mxu0 %v4010
      %4014 = vmatprep.subr.bf16.mxu0 0
      %4015 = vmatpush1.bf16.msra.mxu0 0
      %4016 = vmatprep.subr.bf16.mxu0 0
      %4017 = vmatpush1.bf16.msra.mxu0 0
      %4018 = vmatprep.subr.bf16.mxu0 0
      %4019 = vmatpush1.bf16.msra.mxu0 0
      %4020 = vmatprep.subr.bf16.mxu0 0
      %4021 = vmatpush1.bf16.msra.mxu0 0
      %4022 = vmatprep.subr.bf16.mxu0 0
      %4023 = vmatpush1.bf16.msra.mxu0 0
      %4024 = vmatprep.subr.bf16.mxu0 0
      %4025 = vmatpush1.bf16.msra.mxu0 0
      %4026 = vmatprep.subr.bf16.mxu0 0
      %4027 = vmatpush1.bf16.msra.mxu0 0
      %4028 = vmatprep.subr.bf16.mxu0 0
      %4029 = vmatpush1.bf16.msra.mxu0 0
      %4030 = vmatprep.subr.bf16.mxu0 0
      %4031 = vmatpush1.bf16.msra.mxu0 0
      %4032 = vmatprep.subr.bf16.mxu0 0
      %4033 = vmatpush1.bf16.msra.mxu0 0
      %4034 = vmatprep.subr.bf16.mxu0 0
      %4035 = vmatpush1.bf16.msra.mxu0 0
      %4036 = vmatprep.subr.bf16.mxu0 0
      %4037 = vmatpush1.bf16.msra.mxu0 0
      %4038 = vmatprep.subr.bf16.mxu0 0
      %4039 = vmatpush1.bf16.msra.mxu0 0
      %4040 = vmatprep.subr.bf16.mxu0 0
      %4041 = vmatpush1.bf16.msra.mxu0 0
      %4042 = vmatprep.subr.bf16.mxu0 0
      %4043 = vmatpush1.bf16.msra.mxu0 0
      %4044 = vmatprep.mubr.bf16.mxu0 0
      %4045 = vmatmul.mubr.bf16.gmra.mrb[0].mxu0 %v3962
      %v4046 = vpop.f32.mrb[0].mxu0
      %v4047 = vadd.f32 0.0, %v4046
      %v4048 = vpop.f32.mrb[0].mxu0
      %v4049 = vpop.f32.mrb[0].mxu0
      %v4050 = vadd.f32 0.0, %v4049
      %v4051 = vpop.f32.mrb[0].mxu0
      %4052 = vmatprep.mubr.bf16.mxu0 0
      %4053 = vmatmul.mubr.bf16.gmra.mrb[0].mxu0 %v3965
      %v4054 = vpop.f32.mrb[0].mxu0
      %v4055 = vadd.f32 0.0, %v4054
      %v4056 = vpop.f32.mrb[0].mxu0
      %v4057 = vpop.f32.mrb[0].mxu0
      %v4058 = vadd.f32 0.0, %v4057
      %v4059 = vpop.f32.mrb[0].mxu0
      %4060 = vmatprep.mubr.bf16.mxu0 0
      %4061 = vmatmul.mubr.bf16.gmra.mrb[0].mxu0 %v3968
      %v4062 = vpop.f32.mrb[0].mxu0
      %v4063 = vadd.f32 0.0, %v4062
      %v4064 = vpop.f32.mrb[0].mxu0
      %v4065 = vpop.f32.mrb[0].mxu0
      %v4066 = vadd.f32 0.0, %v4065
      %v4067 = vpop.f32.mrb[0].mxu0
      %4068 = vmatprep.mubr.bf16.mxu0 0
      %4069 = vmatmul.mubr.bf16.gmra.mrb[0].mxu0 %v3971
      %v4070 = vpop.f32.mrb[0].mxu0
      %v4071 = vadd.f32 0.0, %v4070
      %v4072 = vpop.f32.mrb[0].mxu0
      %v4073 = vpop.f32.mrb[0].mxu0
      %v4074 = vadd.f32 0.0, %v4073
      %v4075 = vpop.f32.mrb[0].mxu0
      %4076 = vmatprep.mubr.bf16.mxu0 0
      %4077 = vmatmul.mubr.bf16.gmra.mrb[0].mxu0 %v3974
      %v4078 = vpop.f32.mrb[0].mxu0
      %v4079 = vadd.f32 0.0, %v4078
      %v4080 = vpop.f32.mrb[0].mxu0
      %v4081 = vpop.f32.mrb[0].mxu0
      %v4082 = vadd.f32 0.0, %v4081
      %v4083 = vpop.f32.mrb[0].mxu0
      %4084 = vmatprep.mubr.bf16.mxu0 0
      %4085 = vmatmul.mubr.bf16.gmra.mrb[0].mxu0 %v3977
      %v4086 = vpop.f32.mrb[0].mxu0
      %v4087 = vadd.f32 0.0, %v4086
      %v4088 = vpop.f32.mrb[0].mxu0
      %v4089 = vpop.f32.mrb[0].mxu0
      %v4090 = vadd.f32 0.0, %v4089
      %v4091 = vpop.f32.mrb[0].mxu0
      %4092 = vmatprep.mubr.bf16.mxu0 0
      %4093 = vmatmul.mubr.bf16.gmra.mrb[0].mxu0 %v3980
      %v4094 = vpop.f32.mrb[0].mxu0
      %v4095 = vadd.f32 0.0, %v4094
      %v4096 = vpop.f32.mrb[0].mxu0
      %v4097 = vpop.f32.mrb[0].mxu0
      %v4098 = vadd.f32 0.0, %v4097
      %v4099 = vpop.f32.mrb[0].mxu0
      %4100 = vmatprep.mubr.bf16.mxu0 0
      %4101 = vmatmul.mubr.bf16.gmra.mrb[0].mxu0 %v3983
      %v4102 = vpop.f32.mrb[0].mxu0
      %v4103 = vadd.f32 0.0, %v4102
      %v4104 = vpop.f32.mrb[0].mxu0
      %v4105 = vpop.f32.mrb[0].mxu0
      %v4106 = vadd.f32 0.0, %v4105
      %v4107 = vpop.f32.mrb[0].mxu0
      %4108 = vmatprep.mubr.bf16.mxu0 0
      %4109 = vmatmul.mubr.bf16.gmra.mrb[0].mxu0 %v3986
      %v4110 = vpop.f32.mrb[0].mxu0
      %v4111 = vadd.f32 0.0, %v4110
      %v4112 = vpop.f32.mrb[0].mxu0
      %v4113 = vpop.f32.mrb[0].mxu0
      %v4114 = vadd.f32 0.0, %v4113
      %v4115 = vpop.f32.mrb[0].mxu0
      %4116 = vmatprep.mubr.bf16.mxu0 0
      %4117 = vmatmul.mubr.bf16.gmra.mrb[0].mxu0 %v3989
      %v4118 = vpop.f32.mrb[0].mxu0
      %v4119 = vadd.f32 0.0, %v4118
      %v4120 = vpop.f32.mrb[0].mxu0
      %v4121 = vpop.f32.mrb[0].mxu0
      %v4122 = vadd.f32 0.0, %v4121
      %v4123 = vpop.f32.mrb[0].mxu0
      %4124 = vmatprep.mubr.bf16.mxu0 0
      %4125 = vmatmul.mubr.bf16.gmra.mrb[0].mxu0 %v3992
      %v4126 = vpop.f32.mrb[0].mxu0
      %v4127 = vadd.f32 0.0, %v4126
      %v4128 = vpop.f32.mrb[0].mxu0
      %v4129 = vpop.f32.mrb[0].mxu0
      %v4130 = vadd.f32 0.0, %v4129
      %v4131 = vpop.f32.mrb[0].mxu0
      %4132 = vmatprep.mubr.bf16.mxu0 0
      %4133 = vmatmul.mubr.bf16.gmra.mrb[0].mxu0 %v3995
      %v4134 = vpop.f32.mrb[0].mxu0
      %v4135 = vadd.f32 0.0, %v4134
      %v4136 = vpop.f32.mrb[0].mxu0
      %v4137 = vpop.f32.mrb[0].mxu0
      %v4138 = vadd.f32 0.0, %v4137
      %v4139 = vpop.f32.mrb[0].mxu0
      %4140 = vmatprep.mubr.bf16.mxu0 0
      %4141 = vmatmul.mubr.bf16.gmra.mrb[0].mxu0 %v3998
      %v4142 = vpop.f32.mrb[0].mxu0
      %v4143 = vadd.f32 0.0, %v4142
      %v4144 = vpop.f32.mrb[0].mxu0
      %v4145 = vpop.f32.mrb[0].mxu0
      %v4146 = vadd.f32 0.0, %v4145
      %v4147 = vpop.f32.mrb[0].mxu0
      %4148 = vmatprep.mubr.bf16.mxu0 0
      %4149 = vmatmul.mubr.bf16.gmra.mrb[0].mxu0 %v4001
      %v4150 = vpop.f32.mrb[0].mxu0
      %v4151 = vadd.f32 0.0, %v4150
      %v4152 = vpop.f32.mrb[0].mxu0
      %v4153 = vpop.f32.mrb[0].mxu0
      %v4154 = vadd.f32 0.0, %v4153
      %v4155 = vpop.f32.mrb[0].mxu0
      %4156 = vmatprep.mubr.bf16.mxu0 0
      %4157 = vmatmul.mubr.bf16.gmra.mrb[0].mxu0 %v4004
      %v4158 = vpop.f32.mrb[0].mxu0
      %v4159 = vadd.f32 0.0, %v4158
      %v4160 = vpop.f32.mrb[0].mxu0
      %v4161 = vpop.f32.mrb[0].mxu0
      %v4162 = vadd.f32 0.0, %v4161
      %v4163 = vpop.f32.mrb[0].mxu0
      %4164 = vmatprep.mubr.bf16.mxu0 0
      %4165 = vmatmul.mubr.bf16.gmra.mrb[0].mxu0 %v4007
      %v4166 = vpop.f32.mrb[0].mxu0
      %v4167 = vadd.f32 0.0, %v4166
      %v4168 = vpop.f32.mrb[0].mxu0
      %v4169 = vpop.f32.mrb[0].mxu0
      %v4170 = vadd.f32 0.0, %v4169
      %v4171 = vpop.f32.mrb[0].mxu0
      %4172 = vdwg.mxu0
      %v4173 = vadd.f32 %v3730, %v4047
      %v4174 = vadd.f32 %v3733, %v4050
      %v4175 = vadd.f32 %v3738, %v4055
      %v4176 = vadd.f32 %v3741, %v4058
      %v4177 = vadd.f32 %v3746, %v4063
      %v4178 = vadd.f32 %v3749, %v4066
      %v4179 = vadd.f32 %v3754, %v4071
      %v4180 = vadd.f32 %v3757, %v4074
      %v4181 = vadd.f32 %v3762, %v4079
      %v4182 = vadd.f32 %v3765, %v4082
      %v4183 = vadd.f32 %v3770, %v4087
      %v4184 = vadd.f32 %v3773, %v4090
      %v4185 = vadd.f32 %v3778, %v4095
      %v4186 = vadd.f32 %v3781, %v4098
      %v4187 = vadd.f32 %v3786, %v4103
      %v4188 = vadd.f32 %v3789, %v4106
      %v4189 = vadd.f32 %v3794, %v4111
      %v4190 = vadd.f32 %v3797, %v4114
      %v4191 = vadd.f32 %v3802, %v4119
      %v4192 = vadd.f32 %v3805, %v4122
      %v4193 = vadd.f32 %v3810, %v4127
      %v4194 = vadd.f32 %v3813, %v4130
      %v4195 = vadd.f32 %v3818, %v4135
      %v4196 = vadd.f32 %v3821, %v4138
      %v4197 = vadd.f32 %v3826, %v4143
      %v4198 = vadd.f32 %v3829, %v4146
      %v4199 = vadd.f32 %v3834, %v4151
      %v4200 = vadd.f32 %v3837, %v4154
      %v4201 = vadd.f32 %v3842, %v4159
      %v4202 = vadd.f32 %v3845, %v4162
      %v4203 = vadd.f32 %v3850, %v4167
      %v4204 = vadd.f32 %v3853, %v4170
      %v4207 = vrot.slane %v3268, 7
      %v4208 = vsel %vm701, %v702, %v4207
      %v4209 = vrot.slane %v3269, 7
      %v4210 = vsel %vm701, %v4207, %v4209
      %v4213 = vpack.c.bf16 %v4210, %v4208
      %v4214 = vpack.c.bf16 %v3273, %v3273
      %v4216 = vsel %vm3433, %v4213, 0
      %v4219 = vsel %vm878, %v4214, 0
      %4221 = vmatprep.subr.bf16.mxu0 0
      %4222 = vmatpush1.bf16.msra.mxu0 %v4219
      %4223 = vmatprep.subr.bf16.mxu0 0
      %4224 = vmatpush1.bf16.msra.mxu0 0
      %4225 = vmatprep.subr.bf16.mxu0 0
      %4226 = vmatpush1.bf16.msra.mxu0 0
      %4227 = vmatprep.subr.bf16.mxu0 0
      %4228 = vmatpush1.bf16.msra.mxu0 0
      %4229 = vmatprep.subr.bf16.mxu0 0
      %4230 = vmatpush1.bf16.msra.mxu0 0
      %4231 = vmatprep.subr.bf16.mxu0 0
      %4232 = vmatpush1.bf16.msra.mxu0 0
      %4233 = vmatprep.subr.bf16.mxu0 0
      %4234 = vmatpush1.bf16.msra.mxu0 0
      %4235 = vmatprep.subr.bf16.mxu0 0
      %4236 = vmatpush1.bf16.msra.mxu0 0
      %4237 = vmatprep.subr.bf16.mxu0 0
      %4238 = vmatpush1.bf16.msra.mxu0 0
      %4239 = vmatprep.subr.bf16.mxu0 0
      %4240 = vmatpush1.bf16.msra.mxu0 0
      %4241 = vmatprep.subr.bf16.mxu0 0
      %4242 = vmatpush1.bf16.msra.mxu0 0
      %4243 = vmatprep.subr.bf16.mxu0 0
      %4244 = vmatpush1.bf16.msra.mxu0 0
      %4245 = vmatprep.subr.bf16.mxu0 0
      %4246 = vmatpush1.bf16.msra.mxu0 0
      %4247 = vmatprep.subr.bf16.mxu0 0
      %4248 = vmatpush1.bf16.msra.mxu0 0
      %4249 = vmatprep.subr.bf16.mxu0 0
      %4250 = vmatpush1.bf16.msra.mxu0 0
      %4251 = vmatprep.subr.bf16.mxu0 0
      %4252 = vmatpush1.bf16.msra.mxu0 0
      %4253 = vmatprep.mubr.bf16.mxu0 0
      %4254 = vmatmul.mubr.bf16.gmra.mrb[0].mxu0 %v3648
      %v4255 = vpop.f32.mrb[0].mxu0
      %v4256 = vadd.f32 0.0, %v4255
      %v4257 = vpop.f32.mrb[0].mxu0
      %v4258 = vpop.f32.mrb[0].mxu0
      %v4259 = vadd.f32 0.0, %v4258
      %v4260 = vpop.f32.mrb[0].mxu0
      %4261 = vmatprep.mubr.bf16.mxu0 0
      %4262 = vmatmul.mubr.bf16.gmra.mrb[0].mxu0 %v3651
      %v4263 = vpop.f32.mrb[0].mxu0
      %v4264 = vadd.f32 0.0, %v4263
      %v4265 = vpop.f32.mrb[0].mxu0
      %v4266 = vpop.f32.mrb[0].mxu0
      %v4267 = vadd.f32 0.0, %v4266
      %v4268 = vpop.f32.mrb[0].mxu0
      %4269 = vmatprep.mubr.bf16.mxu0 0
      %4270 = vmatmul.mubr.bf16.gmra.mrb[0].mxu0 %v3654
      %v4271 = vpop.f32.mrb[0].mxu0
      %v4272 = vadd.f32 0.0, %v4271
      %v4273 = vpop.f32.mrb[0].mxu0
      %v4274 = vpop.f32.mrb[0].mxu0
      %v4275 = vadd.f32 0.0, %v4274
      %v4276 = vpop.f32.mrb[0].mxu0
      %4277 = vmatprep.mubr.bf16.mxu0 0
      %4278 = vmatmul.mubr.bf16.gmra.mrb[0].mxu0 %v3657
      %v4279 = vpop.f32.mrb[0].mxu0
      %v4280 = vadd.f32 0.0, %v4279
      %v4281 = vpop.f32.mrb[0].mxu0
      %v4282 = vpop.f32.mrb[0].mxu0
      %v4283 = vadd.f32 0.0, %v4282
      %v4284 = vpop.f32.mrb[0].mxu0
      %4285 = vmatprep.mubr.bf16.mxu0 0
      %4286 = vmatmul.mubr.bf16.gmra.mrb[0].mxu0 %v3660
      %v4287 = vpop.f32.mrb[0].mxu0
      %v4288 = vadd.f32 0.0, %v4287
      %v4289 = vpop.f32.mrb[0].mxu0
      %v4290 = vpop.f32.mrb[0].mxu0
      %v4291 = vadd.f32 0.0, %v4290
      %v4292 = vpop.f32.mrb[0].mxu0
      %4293 = vmatprep.mubr.bf16.mxu0 0
      %4294 = vmatmul.mubr.bf16.gmra.mrb[0].mxu0 %v3663
      %v4295 = vpop.f32.mrb[0].mxu0
      %v4296 = vadd.f32 0.0, %v4295
      %v4297 = vpop.f32.mrb[0].mxu0
      %v4298 = vpop.f32.mrb[0].mxu0
      %v4299 = vadd.f32 0.0, %v4298
      %v4300 = vpop.f32.mrb[0].mxu0
      %4301 = vmatprep.mubr.bf16.mxu0 0
      %4302 = vmatmul.mubr.bf16.gmra.mrb[0].mxu0 %v3666
      %v4303 = vpop.f32.mrb[0].mxu0
      %v4304 = vadd.f32 0.0, %v4303
      %v4305 = vpop.f32.mrb[0].mxu0
      %v4306 = vpop.f32.mrb[0].mxu0
      %v4307 = vadd.f32 0.0, %v4306
      %v4308 = vpop.f32.mrb[0].mxu0
      %4309 = vmatprep.mubr.bf16.mxu0 0
      %4310 = vmatmul.mubr.bf16.gmra.mrb[0].mxu0 %v3669
      %v4311 = vpop.f32.mrb[0].mxu0
      %v4312 = vadd.f32 0.0, %v4311
      %v4313 = vpop.f32.mrb[0].mxu0
      %v4314 = vpop.f32.mrb[0].mxu0
      %v4315 = vadd.f32 0.0, %v4314
      %v4316 = vpop.f32.mrb[0].mxu0
      %4317 = vmatprep.mubr.bf16.mxu0 0
      %4318 = vmatmul.mubr.bf16.gmra.mrb[0].mxu0 %v3672
      %v4319 = vpop.f32.mrb[0].mxu0
      %v4320 = vadd.f32 0.0, %v4319
      %v4321 = vpop.f32.mrb[0].mxu0
      %v4322 = vpop.f32.mrb[0].mxu0
      %v4323 = vadd.f32 0.0, %v4322
      %v4324 = vpop.f32.mrb[0].mxu0
      %4325 = vmatprep.mubr.bf16.mxu0 0
      %4326 = vmatmul.mubr.bf16.gmra.mrb[0].mxu0 %v3675
      %v4327 = vpop.f32.mrb[0].mxu0
      %v4328 = vadd.f32 0.0, %v4327
      %v4329 = vpop.f32.mrb[0].mxu0
      %v4330 = vpop.f32.mrb[0].mxu0
      %v4331 = vadd.f32 0.0, %v4330
      %v4332 = vpop.f32.mrb[0].mxu0
      %4333 = vmatprep.mubr.bf16.mxu0 0
      %4334 = vmatmul.mubr.bf16.gmra.mrb[0].mxu0 %v3678
      %v4335 = vpop.f32.mrb[0].mxu0
      %v4336 = vadd.f32 0.0, %v4335
      %v4337 = vpop.f32.mrb[0].mxu0
      %v4338 = vpop.f32.mrb[0].mxu0
      %v4339 = vadd.f32 0.0, %v4338
      %v4340 = vpop.f32.mrb[0].mxu0
      %4341 = vmatprep.mubr.bf16.mxu0 0
      %4342 = vmatmul.mubr.bf16.gmra.mrb[0].mxu0 %v3681
      %v4343 = vpop.f32.mrb[0].mxu0
      %v4344 = vadd.f32 0.0, %v4343
      %v4345 = vpop.f32.mrb[0].mxu0
      %v4346 = vpop.f32.mrb[0].mxu0
      %v4347 = vadd.f32 0.0, %v4346
      %v4348 = vpop.f32.mrb[0].mxu0
      %4349 = vmatprep.mubr.bf16.mxu0 0
      %4350 = vmatmul.mubr.bf16.gmra.mrb[0].mxu0 %v3684
      %v4351 = vpop.f32.mrb[0].mxu0
      %v4352 = vadd.f32 0.0, %v4351
      %v4353 = vpop.f32.mrb[0].mxu0
      %v4354 = vpop.f32.mrb[0].mxu0
      %v4355 = vadd.f32 0.0, %v4354
      %v4356 = vpop.f32.mrb[0].mxu0
      %4357 = vmatprep.mubr.bf16.mxu0 0
      %4358 = vmatmul.mubr.bf16.gmra.mrb[0].mxu0 %v3687
      %v4359 = vpop.f32.mrb[0].mxu0
      %v4360 = vadd.f32 0.0, %v4359
      %v4361 = vpop.f32.mrb[0].mxu0
      %v4362 = vpop.f32.mrb[0].mxu0
      %v4363 = vadd.f32 0.0, %v4362
      %v4364 = vpop.f32.mrb[0].mxu0
      %4365 = vmatprep.mubr.bf16.mxu0 0
      %4366 = vmatmul.mubr.bf16.gmra.mrb[0].mxu0 %v3690
      %v4367 = vpop.f32.mrb[0].mxu0
      %v4368 = vadd.f32 0.0, %v4367
      %v4369 = vpop.f32.mrb[0].mxu0
      %v4370 = vpop.f32.mrb[0].mxu0
      %v4371 = vadd.f32 0.0, %v4370
      %v4372 = vpop.f32.mrb[0].mxu0
      %4373 = vmatprep.mubr.bf16.mxu0 0
      %4374 = vmatmul.mubr.bf16.gmra.mrb[0].mxu0 %v4216
      %v4375 = vpop.f32.mrb[0].mxu0
      %v4376 = vadd.f32 0.0, %v4375
      %v4377 = vpop.f32.mrb[0].mxu0
      %v4378 = vpop.f32.mrb[0].mxu0
      %v4379 = vadd.f32 0.0, %v4378
      %v4380 = vpop.f32.mrb[0].mxu0
      %4381 = vdwg.mxu0
      %v4382 = vadd.f32 %v4173, %v4256
      %v4383 = vadd.f32 %v4174, %v4259
      %v4384 = vadd.f32 %v4175, %v4264
      %v4385 = vadd.f32 %v4176, %v4267
      %v4386 = vadd.f32 %v4177, %v4272
      %v4387 = vadd.f32 %v4178, %v4275
      %v4388 = vadd.f32 %v4179, %v4280
      %v4389 = vadd.f32 %v4180, %v4283
      %v4390 = vadd.f32 %v4181, %v4288
      %v4391 = vadd.f32 %v4182, %v4291
      %v4392 = vadd.f32 %v4183, %v4296
      %v4393 = vadd.f32 %v4184, %v4299
      %v4394 = vadd.f32 %v4185, %v4304
      %v4395 = vadd.f32 %v4186, %v4307
      %v4396 = vadd.f32 %v4187, %v4312
      %v4397 = vadd.f32 %v4188, %v4315
      %v4398 = vadd.f32 %v4189, %v4320
      %v4399 = vadd.f32 %v4190, %v4323
      %v4400 = vadd.f32 %v4191, %v4328
      %v4401 = vadd.f32 %v4192, %v4331
      %v4402 = vadd.f32 %v4193, %v4336
      %v4403 = vadd.f32 %v4194, %v4339
      %v4404 = vadd.f32 %v4195, %v4344
      %v4405 = vadd.f32 %v4196, %v4347
      %v4406 = vadd.f32 %v4197, %v4352
      %v4407 = vadd.f32 %v4198, %v4355
      %v4408 = vadd.f32 %v4199, %v4360
      %v4409 = vadd.f32 %v4200, %v4363
      %v4410 = vadd.f32 %v4201, %v4368
      %v4411 = vadd.f32 %v4202, %v4371
      %v4412 = vadd.f32 %v4203, %v4376
      %v4413 = vadd.f32 %v4204, %v4379
      %v4414 = vpack.c.bf16 %v3269, %v3268
      %v4415 = vpack.c.bf16 %v3274, %v3274
      %v4417 = vsel %vm3433, %v4414, 0
      %v4420 = vsel %vm878, %v4415, 0
      %4422 = vmatprep.subr.bf16.mxu0 0
      %4423 = vmatpush1.bf16.msra.mxu0 %v4420
      %4424 = vmatprep.subr.bf16.mxu0 0
      %4425 = vmatpush1.bf16.msra.mxu0 0
      %4426 = vmatprep.subr.bf16.mxu0 0
      %4427 = vmatpush1.bf16.msra.mxu0 0
      %4428 = vmatprep.subr.bf16.mxu0 0
      %4429 = vmatpush1.bf16.msra.mxu0 0
      %4430 = vmatprep.subr.bf16.mxu0 0
      %4431 = vmatpush1.bf16.msra.mxu0 0
      %4432 = vmatprep.subr.bf16.mxu0 0
      %4433 = vmatpush1.bf16.msra.mxu0 0
      %4434 = vmatprep.subr.bf16.mxu0 0
      %4435 = vmatpush1.bf16.msra.mxu0 0
      %4436 = vmatprep.subr.bf16.mxu0 0
      %4437 = vmatpush1.bf16.msra.mxu0 0
      %4438 = vmatprep.subr.bf16.mxu0 0
      %4439 = vmatpush1.bf16.msra.mxu0 0
      %4440 = vmatprep.subr.bf16.mxu0 0
      %4441 = vmatpush1.bf16.msra.mxu0 0
      %4442 = vmatprep.subr.bf16.mxu0 0
      %4443 = vmatpush1.bf16.msra.mxu0 0
      %4444 = vmatprep.subr.bf16.mxu0 0
      %4445 = vmatpush1.bf16.msra.mxu0 0
      %4446 = vmatprep.subr.bf16.mxu0 0
      %4447 = vmatpush1.bf16.msra.mxu0 0
      %4448 = vmatprep.subr.bf16.mxu0 0
      %4449 = vmatpush1.bf16.msra.mxu0 0
      %4450 = vmatprep.subr.bf16.mxu0 0
      %4451 = vmatpush1.bf16.msra.mxu0 0
      %4452 = vmatprep.subr.bf16.mxu0 0
      %4453 = vmatpush1.bf16.msra.mxu0 0
      %4454 = vmatprep.mubr.bf16.mxu0 0
      %4455 = vmatmul.mubr.bf16.gmra.mrb[0].mxu0 %v3437
      %v4456 = vpop.f32.mrb[0].mxu0
      %v4457 = vadd.f32 0.0, %v4456
      %v4458 = vpop.f32.mrb[0].mxu0
      %v4459 = vpop.f32.mrb[0].mxu0
      %v4460 = vadd.f32 0.0, %v4459
      %v4461 = vpop.f32.mrb[0].mxu0
      %4462 = vmatprep.mubr.bf16.mxu0 0
      %4463 = vmatmul.mubr.bf16.gmra.mrb[0].mxu0 %v3440
      %v4464 = vpop.f32.mrb[0].mxu0
      %v4465 = vadd.f32 0.0, %v4464
      %v4466 = vpop.f32.mrb[0].mxu0
      %v4467 = vpop.f32.mrb[0].mxu0
      %v4468 = vadd.f32 0.0, %v4467
      %v4469 = vpop.f32.mrb[0].mxu0
      %4470 = vmatprep.mubr.bf16.mxu0 0
      %4471 = vmatmul.mubr.bf16.gmra.mrb[0].mxu0 %v3443
      %v4472 = vpop.f32.mrb[0].mxu0
      %v4473 = vadd.f32 0.0, %v4472
      %v4474 = vpop.f32.mrb[0].mxu0
      %v4475 = vpop.f32.mrb[0].mxu0
      %v4476 = vadd.f32 0.0, %v4475
      %v4477 = vpop.f32.mrb[0].mxu0
      %4478 = vmatprep.mubr.bf16.mxu0 0
      %4479 = vmatmul.mubr.bf16.gmra.mrb[0].mxu0 %v3446
      %v4480 = vpop.f32.mrb[0].mxu0
      %v4481 = vadd.f32 0.0, %v4480
      %v4482 = vpop.f32.mrb[0].mxu0
      %v4483 = vpop.f32.mrb[0].mxu0
      %v4484 = vadd.f32 0.0, %v4483
      %v4485 = vpop.f32.mrb[0].mxu0
      %4486 = vmatprep.mubr.bf16.mxu0 0
      %4487 = vmatmul.mubr.bf16.gmra.mrb[0].mxu0 %v3449
      %v4488 = vpop.f32.mrb[0].mxu0
      %v4489 = vadd.f32 0.0, %v4488
      %v4490 = vpop.f32.mrb[0].mxu0
      %v4491 = vpop.f32.mrb[0].mxu0
      %v4492 = vadd.f32 0.0, %v4491
      %v4493 = vpop.f32.mrb[0].mxu0
      %4494 = vmatprep.mubr.bf16.mxu0 0
      %4495 = vmatmul.mubr.bf16.gmra.mrb[0].mxu0 %v3452
      %v4496 = vpop.f32.mrb[0].mxu0
      %v4497 = vadd.f32 0.0, %v4496
      %v4498 = vpop.f32.mrb[0].mxu0
      %v4499 = vpop.f32.mrb[0].mxu0
      %v4500 = vadd.f32 0.0, %v4499
      %v4501 = vpop.f32.mrb[0].mxu0
      %4502 = vmatprep.mubr.bf16.mxu0 0
      %4503 = vmatmul.mubr.bf16.gmra.mrb[0].mxu0 %v3455
      %v4504 = vpop.f32.mrb[0].mxu0
      %v4505 = vadd.f32 0.0, %v4504
      %v4506 = vpop.f32.mrb[0].mxu0
      %v4507 = vpop.f32.mrb[0].mxu0
      %v4508 = vadd.f32 0.0, %v4507
      %v4509 = vpop.f32.mrb[0].mxu0
      %4510 = vmatprep.mubr.bf16.mxu0 0
      %4511 = vmatmul.mubr.bf16.gmra.mrb[0].mxu0 %v3458
      %v4512 = vpop.f32.mrb[0].mxu0
      %v4513 = vadd.f32 0.0, %v4512
      %v4514 = vpop.f32.mrb[0].mxu0
      %v4515 = vpop.f32.mrb[0].mxu0
      %v4516 = vadd.f32 0.0, %v4515
      %v4517 = vpop.f32.mrb[0].mxu0
      %4518 = vmatprep.mubr.bf16.mxu0 0
      %4519 = vmatmul.mubr.bf16.gmra.mrb[0].mxu0 %v3461
      %v4520 = vpop.f32.mrb[0].mxu0
      %v4521 = vadd.f32 0.0, %v4520
      %v4522 = vpop.f32.mrb[0].mxu0
      %v4523 = vpop.f32.mrb[0].mxu0
      %v4524 = vadd.f32 0.0, %v4523
      %v4525 = vpop.f32.mrb[0].mxu0
      %4526 = vmatprep.mubr.bf16.mxu0 0
      %4527 = vmatmul.mubr.bf16.gmra.mrb[0].mxu0 %v3464
      %v4528 = vpop.f32.mrb[0].mxu0
      %v4529 = vadd.f32 0.0, %v4528
      %v4530 = vpop.f32.mrb[0].mxu0
      %v4531 = vpop.f32.mrb[0].mxu0
      %v4532 = vadd.f32 0.0, %v4531
      %v4533 = vpop.f32.mrb[0].mxu0
      %4534 = vmatprep.mubr.bf16.mxu0 0
      %4535 = vmatmul.mubr.bf16.gmra.mrb[0].mxu0 %v3467
      %v4536 = vpop.f32.mrb[0].mxu0
      %v4537 = vadd.f32 0.0, %v4536
      %v4538 = vpop.f32.mrb[0].mxu0
      %v4539 = vpop.f32.mrb[0].mxu0
      %v4540 = vadd.f32 0.0, %v4539
      %v4541 = vpop.f32.mrb[0].mxu0
      %4542 = vmatprep.mubr.bf16.mxu0 0
      %4543 = vmatmul.mubr.bf16.gmra.mrb[0].mxu0 %v3470
      %v4544 = vpop.f32.mrb[0].mxu0
      %v4545 = vadd.f32 0.0, %v4544
      %v4546 = vpop.f32.mrb[0].mxu0
      %v4547 = vpop.f32.mrb[0].mxu0
      %v4548 = vadd.f32 0.0, %v4547
      %v4549 = vpop.f32.mrb[0].mxu0
      %4550 = vmatprep.mubr.bf16.mxu0 0
      %4551 = vmatmul.mubr.bf16.gmra.mrb[0].mxu0 %v3473
      %v4552 = vpop.f32.mrb[0].mxu0
      %v4553 = vadd.f32 0.0, %v4552
      %v4554 = vpop.f32.mrb[0].mxu0
      %v4555 = vpop.f32.mrb[0].mxu0
      %v4556 = vadd.f32 0.0, %v4555
      %v4557 = vpop.f32.mrb[0].mxu0
      %4558 = vmatprep.mubr.bf16.mxu0 0
      %4559 = vmatmul.mubr.bf16.gmra.mrb[0].mxu0 %v3476
      %v4560 = vpop.f32.mrb[0].mxu0
      %v4561 = vadd.f32 0.0, %v4560
      %v4562 = vpop.f32.mrb[0].mxu0
      %v4563 = vpop.f32.mrb[0].mxu0
      %v4564 = vadd.f32 0.0, %v4563
      %v4565 = vpop.f32.mrb[0].mxu0
      %4566 = vmatprep.mubr.bf16.mxu0 0
      %4567 = vmatmul.mubr.bf16.gmra.mrb[0].mxu0 %v3479
      %v4568 = vpop.f32.mrb[0].mxu0
      %v4569 = vadd.f32 0.0, %v4568
      %v4570 = vpop.f32.mrb[0].mxu0
      %v4571 = vpop.f32.mrb[0].mxu0
      %v4572 = vadd.f32 0.0, %v4571
      %v4573 = vpop.f32.mrb[0].mxu0
      %4574 = vmatprep.mubr.bf16.mxu0 0
      %4575 = vmatmul.mubr.bf16.gmra.mrb[0].mxu0 %v4417
      %v4576 = vpop.f32.mrb[0].mxu0
      %v4577 = vadd.f32 0.0, %v4576
      %v4578 = vpop.f32.mrb[0].mxu0
      %v4579 = vpop.f32.mrb[0].mxu0
      %v4580 = vadd.f32 0.0, %v4579
      %v4581 = vpop.f32.mrb[0].mxu0
      %4582 = vdwg.mxu0
      %v4583 = vadd.f32 %v4382, %v4457
      %v4584 = vadd.f32 %v4383, %v4460
      %v4585 = vadd.f32 %v4384, %v4465
      %v4586 = vadd.f32 %v4385, %v4468
      %v4587 = vadd.f32 %v4386, %v4473
      %v4588 = vadd.f32 %v4387, %v4476
      %v4589 = vadd.f32 %v4388, %v4481
      %v4590 = vadd.f32 %v4389, %v4484
      %v4591 = vadd.f32 %v4390, %v4489
      %v4592 = vadd.f32 %v4391, %v4492
      %v4593 = vadd.f32 %v4392, %v4497
      %v4594 = vadd.f32 %v4393, %v4500
      %v4595 = vadd.f32 %v4394, %v4505
      %v4596 = vadd.f32 %v4395, %v4508
      %v4597 = vadd.f32 %v4396, %v4513
      %v4598 = vadd.f32 %v4397, %v4516
      %v4599 = vadd.f32 %v4398, %v4521
      %v4600 = vadd.f32 %v4399, %v4524
      %v4601 = vadd.f32 %v4400, %v4529
      %v4602 = vadd.f32 %v4401, %v4532
      %v4603 = vadd.f32 %v4402, %v4537
      %v4604 = vadd.f32 %v4403, %v4540
      %v4605 = vadd.f32 %v4404, %v4545
      %v4606 = vadd.f32 %v4405, %v4548
      %v4607 = vadd.f32 %v4406, %v4553
      %v4608 = vadd.f32 %v4407, %v4556
      %v4609 = vadd.f32 %v4408, %v4561
      %v4610 = vadd.f32 %v4409, %v4564
      %v4611 = vadd.f32 %v4410, %v4569
      %v4612 = vadd.f32 %v4411, %v4572
      %v4613 = vadd.f32 %v4412, %v4577
      %v4614 = vadd.f32 %v4413, %v4580
      %v4615 = vrot.slane %v3268, 1
      %v4616 = vrot.slane %v3269, 1
      %v4617 = vsel %vm1257, %v4615, %v4616
      %v4618 = vsel %vm1257, %v4616, %v1258
      %v4621 = vpack.c.bf16 %v4618, %v4617
      %v4622 = vpack.c.bf16 %v3275, %v3275
      %v4624 = vsel %vm3433, %v4621, 0
      %v4627 = vsel %vm878, %v4622, 0
      %4629 = vmatprep.subr.bf16.mxu0 0
      %4630 = vmatpush1.bf16.msra.mxu0 %v4627
      %4631 = vmatprep.subr.bf16.mxu0 0
      %4632 = vmatpush1.bf16.msra.mxu0 0
      %4633 = vmatprep.subr.bf16.mxu0 0
      %4634 = vmatpush1.bf16.msra.mxu0 0
      %4635 = vmatprep.subr.bf16.mxu0 0
      %4636 = vmatpush1.bf16.msra.mxu0 0
      %4637 = vmatprep.subr.bf16.mxu0 0
      %4638 = vmatpush1.bf16.msra.mxu0 0
      %4639 = vmatprep.subr.bf16.mxu0 0
      %4640 = vmatpush1.bf16.msra.mxu0 0
      %4641 = vmatprep.subr.bf16.mxu0 0
      %4642 = vmatpush1.bf16.msra.mxu0 0
      %4643 = vmatprep.subr.bf16.mxu0 0
      %4644 = vmatpush1.bf16.msra.mxu0 0
      %4645 = vmatprep.subr.bf16.mxu0 0
      %4646 = vmatpush1.bf16.msra.mxu0 0
      %4647 = vmatprep.subr.bf16.mxu0 0
      %4648 = vmatpush1.bf16.msra.mxu0 0
      %4649 = vmatprep.subr.bf16.mxu0 0
      %4650 = vmatpush1.bf16.msra.mxu0 0
      %4651 = vmatprep.subr.bf16.mxu0 0
      %4652 = vmatpush1.bf16.msra.mxu0 0
      %4653 = vmatprep.subr.bf16.mxu0 0
      %4654 = vmatpush1.bf16.msra.mxu0 0
      %4655 = vmatprep.subr.bf16.mxu0 0
      %4656 = vmatpush1.bf16.msra.mxu0 0
      %4657 = vmatprep.subr.bf16.mxu0 0
      %4658 = vmatpush1.bf16.msra.mxu0 0
      %4659 = vmatprep.subr.bf16.mxu0 0
      %4660 = vmatpush1.bf16.msra.mxu0 0
      %4661 = vmatprep.mubr.bf16.mxu0 0
      %4662 = vmatmul.mubr.bf16.gmra.mrb[0].mxu0 %v3965
      %v4663 = vpop.f32.mrb[0].mxu0
      %v4664 = vadd.f32 0.0, %v4663
      %v4665 = vpop.f32.mrb[0].mxu0
      %v4666 = vpop.f32.mrb[0].mxu0
      %v4667 = vadd.f32 0.0, %v4666
      %v4668 = vpop.f32.mrb[0].mxu0
      %4669 = vmatprep.mubr.bf16.mxu0 0
      %4670 = vmatmul.mubr.bf16.gmra.mrb[0].mxu0 %v3968
      %v4671 = vpop.f32.mrb[0].mxu0
      %v4672 = vadd.f32 0.0, %v4671
      %v4673 = vpop.f32.mrb[0].mxu0
      %v4674 = vpop.f32.mrb[0].mxu0
      %v4675 = vadd.f32 0.0, %v4674
      %v4676 = vpop.f32.mrb[0].mxu0
      %4677 = vmatprep.mubr.bf16.mxu0 0
      %4678 = vmatmul.mubr.bf16.gmra.mrb[0].mxu0 %v3971
      %v4679 = vpop.f32.mrb[0].mxu0
      %v4680 = vadd.f32 0.0, %v4679
      %v4681 = vpop.f32.mrb[0].mxu0
      %v4682 = vpop.f32.mrb[0].mxu0
      %v4683 = vadd.f32 0.0, %v4682
      %v4684 = vpop.f32.mrb[0].mxu0
      %4685 = vmatprep.mubr.bf16.mxu0 0
      %4686 = vmatmul.mubr.bf16.gmra.mrb[0].mxu0 %v3974
      %v4687 = vpop.f32.mrb[0].mxu0
      %v4688 = vadd.f32 0.0, %v4687
      %v4689 = vpop.f32.mrb[0].mxu0
      %v4690 = vpop.f32.mrb[0].mxu0
      %v4691 = vadd.f32 0.0, %v4690
      %v4692 = vpop.f32.mrb[0].mxu0
      %4693 = vmatprep.mubr.bf16.mxu0 0
      %4694 = vmatmul.mubr.bf16.gmra.mrb[0].mxu0 %v3977
      %v4695 = vpop.f32.mrb[0].mxu0
      %v4696 = vadd.f32 0.0, %v4695
      %v4697 = vpop.f32.mrb[0].mxu0
      %v4698 = vpop.f32.mrb[0].mxu0
      %v4699 = vadd.f32 0.0, %v4698
      %v4700 = vpop.f32.mrb[0].mxu0
      %4701 = vmatprep.mubr.bf16.mxu0 0
      %4702 = vmatmul.mubr.bf16.gmra.mrb[0].mxu0 %v3980
      %v4703 = vpop.f32.mrb[0].mxu0
      %v4704 = vadd.f32 0.0, %v4703
      %v4705 = vpop.f32.mrb[0].mxu0
      %v4706 = vpop.f32.mrb[0].mxu0
      %v4707 = vadd.f32 0.0, %v4706
      %v4708 = vpop.f32.mrb[0].mxu0
      %4709 = vmatprep.mubr.bf16.mxu0 0
      %4710 = vmatmul.mubr.bf16.gmra.mrb[0].mxu0 %v3983
      %v4711 = vpop.f32.mrb[0].mxu0
      %v4712 = vadd.f32 0.0, %v4711
      %v4713 = vpop.f32.mrb[0].mxu0
      %v4714 = vpop.f32.mrb[0].mxu0
      %v4715 = vadd.f32 0.0, %v4714
      %v4716 = vpop.f32.mrb[0].mxu0
      %4717 = vmatprep.mubr.bf16.mxu0 0
      %4718 = vmatmul.mubr.bf16.gmra.mrb[0].mxu0 %v3986
      %v4719 = vpop.f32.mrb[0].mxu0
      %v4720 = vadd.f32 0.0, %v4719
      %v4721 = vpop.f32.mrb[0].mxu0
      %v4722 = vpop.f32.mrb[0].mxu0
      %v4723 = vadd.f32 0.0, %v4722
      %v4724 = vpop.f32.mrb[0].mxu0
      %4725 = vmatprep.mubr.bf16.mxu0 0
      %4726 = vmatmul.mubr.bf16.gmra.mrb[0].mxu0 %v3989
      %v4727 = vpop.f32.mrb[0].mxu0
      %v4728 = vadd.f32 0.0, %v4727
      %v4729 = vpop.f32.mrb[0].mxu0
      %v4730 = vpop.f32.mrb[0].mxu0
      %v4731 = vadd.f32 0.0, %v4730
      %v4732 = vpop.f32.mrb[0].mxu0
      %4733 = vmatprep.mubr.bf16.mxu0 0
      %4734 = vmatmul.mubr.bf16.gmra.mrb[0].mxu0 %v3992
      %v4735 = vpop.f32.mrb[0].mxu0
      %v4736 = vadd.f32 0.0, %v4735
      %v4737 = vpop.f32.mrb[0].mxu0
      %v4738 = vpop.f32.mrb[0].mxu0
      %v4739 = vadd.f32 0.0, %v4738
      %v4740 = vpop.f32.mrb[0].mxu0
      %4741 = vmatprep.mubr.bf16.mxu0 0
      %4742 = vmatmul.mubr.bf16.gmra.mrb[0].mxu0 %v3995
      %v4743 = vpop.f32.mrb[0].mxu0
      %v4744 = vadd.f32 0.0, %v4743
      %v4745 = vpop.f32.mrb[0].mxu0
      %v4746 = vpop.f32.mrb[0].mxu0
      %v4747 = vadd.f32 0.0, %v4746
      %v4748 = vpop.f32.mrb[0].mxu0
      %4749 = vmatprep.mubr.bf16.mxu0 0
      %4750 = vmatmul.mubr.bf16.gmra.mrb[0].mxu0 %v3998
      %v4751 = vpop.f32.mrb[0].mxu0
      %v4752 = vadd.f32 0.0, %v4751
      %v4753 = vpop.f32.mrb[0].mxu0
      %v4754 = vpop.f32.mrb[0].mxu0
      %v4755 = vadd.f32 0.0, %v4754
      %v4756 = vpop.f32.mrb[0].mxu0
      %4757 = vmatprep.mubr.bf16.mxu0 0
      %4758 = vmatmul.mubr.bf16.gmra.mrb[0].mxu0 %v4001
      %v4759 = vpop.f32.mrb[0].mxu0
      %v4760 = vadd.f32 0.0, %v4759
      %v4761 = vpop.f32.mrb[0].mxu0
      %v4762 = vpop.f32.mrb[0].mxu0
      %v4763 = vadd.f32 0.0, %v4762
      %v4764 = vpop.f32.mrb[0].mxu0
      %4765 = vmatprep.mubr.bf16.mxu0 0
      %4766 = vmatmul.mubr.bf16.gmra.mrb[0].mxu0 %v4004
      %v4767 = vpop.f32.mrb[0].mxu0
      %v4768 = vadd.f32 0.0, %v4767
      %v4769 = vpop.f32.mrb[0].mxu0
      %v4770 = vpop.f32.mrb[0].mxu0
      %v4771 = vadd.f32 0.0, %v4770
      %v4772 = vpop.f32.mrb[0].mxu0
      %4773 = vmatprep.mubr.bf16.mxu0 0
      %4774 = vmatmul.mubr.bf16.gmra.mrb[0].mxu0 %v4007
      %v4775 = vpop.f32.mrb[0].mxu0
      %v4776 = vadd.f32 0.0, %v4775
      %v4777 = vpop.f32.mrb[0].mxu0
      %v4778 = vpop.f32.mrb[0].mxu0
      %v4779 = vadd.f32 0.0, %v4778
      %v4780 = vpop.f32.mrb[0].mxu0
      %4781 = vmatprep.mubr.bf16.mxu0 0
      %4782 = vmatmul.mubr.bf16.gmra.mrb[0].mxu0 %v4624
      %v4783 = vpop.f32.mrb[0].mxu0
      %v4784 = vadd.f32 0.0, %v4783
      %v4785 = vpop.f32.mrb[0].mxu0
      %v4786 = vpop.f32.mrb[0].mxu0
      %v4787 = vadd.f32 0.0, %v4786
      %v4788 = vpop.f32.mrb[0].mxu0
      %4789 = vdwg.mxu0
      %v4790 = vadd.f32 %v4583, %v4664
      %v4791 = vadd.f32 %v4584, %v4667
      %v4792 = vadd.f32 %v4585, %v4672
      %v4793 = vadd.f32 %v4586, %v4675
      %v4794 = vadd.f32 %v4587, %v4680
      %v4795 = vadd.f32 %v4588, %v4683
      %v4796 = vadd.f32 %v4589, %v4688
      %v4797 = vadd.f32 %v4590, %v4691
      %v4798 = vadd.f32 %v4591, %v4696
      %v4799 = vadd.f32 %v4592, %v4699
      %v4800 = vadd.f32 %v4593, %v4704
      %v4801 = vadd.f32 %v4594, %v4707
      %v4802 = vadd.f32 %v4595, %v4712
      %v4803 = vadd.f32 %v4596, %v4715
      %v4804 = vadd.f32 %v4597, %v4720
      %v4805 = vadd.f32 %v4598, %v4723
      %v4806 = vadd.f32 %v4599, %v4728
      %v4807 = vadd.f32 %v4600, %v4731
      %v4808 = vadd.f32 %v4601, %v4736
      %v4809 = vadd.f32 %v4602, %v4739
      %v4810 = vadd.f32 %v4603, %v4744
      %v4811 = vadd.f32 %v4604, %v4747
      %v4812 = vadd.f32 %v4605, %v4752
      %v4813 = vadd.f32 %v4606, %v4755
      %v4814 = vadd.f32 %v4607, %v4760
      %v4815 = vadd.f32 %v4608, %v4763
      %v4816 = vadd.f32 %v4609, %v4768
      %v4817 = vadd.f32 %v4610, %v4771
      %v4818 = vadd.f32 %v4611, %v4776
      %v4819 = vadd.f32 %v4612, %v4779
      %v4820 = vadd.f32 %v4613, %v4784
      %v4821 = vadd.f32 %v4614, %v4787
      %v4822 = vpack.c.bf16 %v3276, %v3276
      %v4824 = vsel %vm878, %v4822, 0
      %4826 = vmatprep.subr.bf16.mxu0 0
      %4827 = vmatpush1.bf16.msra.mxu0 %v4824
      %4828 = vmatprep.subr.bf16.mxu0 0
      %4829 = vmatpush1.bf16.msra.mxu0 0
      %4830 = vmatprep.subr.bf16.mxu0 0
      %4831 = vmatpush1.bf16.msra.mxu0 0
      %4832 = vmatprep.subr.bf16.mxu0 0
      %4833 = vmatpush1.bf16.msra.mxu0 0
      %4834 = vmatprep.subr.bf16.mxu0 0
      %4835 = vmatpush1.bf16.msra.mxu0 0
      %4836 = vmatprep.subr.bf16.mxu0 0
      %4837 = vmatpush1.bf16.msra.mxu0 0
      %4838 = vmatprep.subr.bf16.mxu0 0
      %4839 = vmatpush1.bf16.msra.mxu0 0
      %4840 = vmatprep.subr.bf16.mxu0 0
      %4841 = vmatpush1.bf16.msra.mxu0 0
      %4842 = vmatprep.subr.bf16.mxu0 0
      %4843 = vmatpush1.bf16.msra.mxu0 0
      %4844 = vmatprep.subr.bf16.mxu0 0
      %4845 = vmatpush1.bf16.msra.mxu0 0
      %4846 = vmatprep.subr.bf16.mxu0 0
      %4847 = vmatpush1.bf16.msra.mxu0 0
      %4848 = vmatprep.subr.bf16.mxu0 0
      %4849 = vmatpush1.bf16.msra.mxu0 0
      %4850 = vmatprep.subr.bf16.mxu0 0
      %4851 = vmatpush1.bf16.msra.mxu0 0
      %4852 = vmatprep.subr.bf16.mxu0 0
      %4853 = vmatpush1.bf16.msra.mxu0 0
      %4854 = vmatprep.subr.bf16.mxu0 0
      %4855 = vmatpush1.bf16.msra.mxu0 0
      %4856 = vmatprep.subr.bf16.mxu0 0
      %4857 = vmatpush1.bf16.msra.mxu0 0
      %4858 = vmatprep.mubr.bf16.mxu0 0
      %4859 = vmatmul.mubr.bf16.gmra.mrb[0].mxu0 %v3651
      %v4860 = vpop.f32.mrb[0].mxu0
      %v4861 = vadd.f32 0.0, %v4860
      %v4862 = vpop.f32.mrb[0].mxu0
      %v4863 = vpop.f32.mrb[0].mxu0
      %v4864 = vadd.f32 0.0, %v4863
      %v4865 = vpop.f32.mrb[0].mxu0
      %4866 = vmatprep.mubr.bf16.mxu0 0
      %4867 = vmatmul.mubr.bf16.gmra.mrb[0].mxu0 %v3654
      %v4868 = vpop.f32.mrb[0].mxu0
      %v4869 = vadd.f32 0.0, %v4868
      %v4870 = vpop.f32.mrb[0].mxu0
      %v4871 = vpop.f32.mrb[0].mxu0
      %v4872 = vadd.f32 0.0, %v4871
      %v4873 = vpop.f32.mrb[0].mxu0
      %4874 = vmatprep.mubr.bf16.mxu0 0
      %4875 = vmatmul.mubr.bf16.gmra.mrb[0].mxu0 %v3657
      %v4876 = vpop.f32.mrb[0].mxu0
      %v4877 = vadd.f32 0.0, %v4876
      %v4878 = vpop.f32.mrb[0].mxu0
      %v4879 = vpop.f32.mrb[0].mxu0
      %v4880 = vadd.f32 0.0, %v4879
      %v4881 = vpop.f32.mrb[0].mxu0
      %4882 = vmatprep.mubr.bf16.mxu0 0
      %4883 = vmatmul.mubr.bf16.gmra.mrb[0].mxu0 %v3660
      %v4884 = vpop.f32.mrb[0].mxu0
      %v4885 = vadd.f32 0.0, %v4884
      %v4886 = vpop.f32.mrb[0].mxu0
      %v4887 = vpop.f32.mrb[0].mxu0
      %v4888 = vadd.f32 0.0, %v4887
      %v4889 = vpop.f32.mrb[0].mxu0
      %4890 = vmatprep.mubr.bf16.mxu0 0
      %4891 = vmatmul.mubr.bf16.gmra.mrb[0].mxu0 %v3663
      %v4892 = vpop.f32.mrb[0].mxu0
      %v4893 = vadd.f32 0.0, %v4892
      %v4894 = vpop.f32.mrb[0].mxu0
      %v4895 = vpop.f32.mrb[0].mxu0
      %v4896 = vadd.f32 0.0, %v4895
      %v4897 = vpop.f32.mrb[0].mxu0
      %4898 = vmatprep.mubr.bf16.mxu0 0
      %4899 = vmatmul.mubr.bf16.gmra.mrb[0].mxu0 %v3666
      %v4900 = vpop.f32.mrb[0].mxu0
      %v4901 = vadd.f32 0.0, %v4900
      %v4902 = vpop.f32.mrb[0].mxu0
      %v4903 = vpop.f32.mrb[0].mxu0
      %v4904 = vadd.f32 0.0, %v4903
      %v4905 = vpop.f32.mrb[0].mxu0
      %4906 = vmatprep.mubr.bf16.mxu0 0
      %4907 = vmatmul.mubr.bf16.gmra.mrb[0].mxu0 %v3669
      %v4908 = vpop.f32.mrb[0].mxu0
      %v4909 = vadd.f32 0.0, %v4908
      %v4910 = vpop.f32.mrb[0].mxu0
      %v4911 = vpop.f32.mrb[0].mxu0
      %v4912 = vadd.f32 0.0, %v4911
      %v4913 = vpop.f32.mrb[0].mxu0
      %4914 = vmatprep.mubr.bf16.mxu0 0
      %4915 = vmatmul.mubr.bf16.gmra.mrb[0].mxu0 %v3672
      %v4916 = vpop.f32.mrb[0].mxu0
      %v4917 = vadd.f32 0.0, %v4916
      %v4918 = vpop.f32.mrb[0].mxu0
      %v4919 = vpop.f32.mrb[0].mxu0
      %v4920 = vadd.f32 0.0, %v4919
      %v4921 = vpop.f32.mrb[0].mxu0
      %4922 = vmatprep.mubr.bf16.mxu0 0
      %4923 = vmatmul.mubr.bf16.gmra.mrb[0].mxu0 %v3675
      %v4924 = vpop.f32.mrb[0].mxu0
      %v4925 = vadd.f32 0.0, %v4924
      %v4926 = vpop.f32.mrb[0].mxu0
      %v4927 = vpop.f32.mrb[0].mxu0
      %v4928 = vadd.f32 0.0, %v4927
      %v4929 = vpop.f32.mrb[0].mxu0
      %4930 = vmatprep.mubr.bf16.mxu0 0
      %4931 = vmatmul.mubr.bf16.gmra.mrb[0].mxu0 %v3678
      %v4932 = vpop.f32.mrb[0].mxu0
      %v4933 = vadd.f32 0.0, %v4932
      %v4934 = vpop.f32.mrb[0].mxu0
      %v4935 = vpop.f32.mrb[0].mxu0
      %v4936 = vadd.f32 0.0, %v4935
      %v4937 = vpop.f32.mrb[0].mxu0
      %4938 = vmatprep.mubr.bf16.mxu0 0
      %4939 = vmatmul.mubr.bf16.gmra.mrb[0].mxu0 %v3681
      %v4940 = vpop.f32.mrb[0].mxu0
      %v4941 = vadd.f32 0.0, %v4940
      %v4942 = vpop.f32.mrb[0].mxu0
      %v4943 = vpop.f32.mrb[0].mxu0
      %v4944 = vadd.f32 0.0, %v4943
      %v4945 = vpop.f32.mrb[0].mxu0
      %4946 = vmatprep.mubr.bf16.mxu0 0
      %4947 = vmatmul.mubr.bf16.gmra.mrb[0].mxu0 %v3684
      %v4948 = vpop.f32.mrb[0].mxu0
      %v4949 = vadd.f32 0.0, %v4948
      %v4950 = vpop.f32.mrb[0].mxu0
      %v4951 = vpop.f32.mrb[0].mxu0
      %v4952 = vadd.f32 0.0, %v4951
      %v4953 = vpop.f32.mrb[0].mxu0
      %4954 = vmatprep.mubr.bf16.mxu0 0
      %4955 = vmatmul.mubr.bf16.gmra.mrb[0].mxu0 %v3687
      %v4956 = vpop.f32.mrb[0].mxu0
      %v4957 = vadd.f32 0.0, %v4956
      %v4958 = vpop.f32.mrb[0].mxu0
      %v4959 = vpop.f32.mrb[0].mxu0
      %v4960 = vadd.f32 0.0, %v4959
      %v4961 = vpop.f32.mrb[0].mxu0
      %4962 = vmatprep.mubr.bf16.mxu0 0
      %4963 = vmatmul.mubr.bf16.gmra.mrb[0].mxu0 %v3690
      %v4964 = vpop.f32.mrb[0].mxu0
      %v4965 = vadd.f32 0.0, %v4964
      %v4966 = vpop.f32.mrb[0].mxu0
      %v4967 = vpop.f32.mrb[0].mxu0
      %v4968 = vadd.f32 0.0, %v4967
      %v4969 = vpop.f32.mrb[0].mxu0
      %4970 = vmatprep.mubr.bf16.mxu0 0
      %4971 = vmatmul.mubr.bf16.gmra.mrb[0].mxu0 %v4216
      %v4972 = vpop.f32.mrb[0].mxu0
      %v4973 = vadd.f32 0.0, %v4972
      %v4974 = vpop.f32.mrb[0].mxu0
      %v4975 = vpop.f32.mrb[0].mxu0
      %v4976 = vadd.f32 0.0, %v4975
      %v4977 = vpop.f32.mrb[0].mxu0
      %4978 = vmatprep.mubr.bf16.mxu0 0
      %4979 = vmatmul.mubr.bf16.gmra.mrb[0].mxu0 %v3645
      %v4980 = vpop.f32.mrb[0].mxu0
      %v4981 = vadd.f32 0.0, %v4980
      %v4982 = vpop.f32.mrb[0].mxu0
      %v4983 = vpop.f32.mrb[0].mxu0
      %v4984 = vadd.f32 0.0, %v4983
      %v4985 = vpop.f32.mrb[0].mxu0
      %4986 = vdwg.mxu0
      %v4987 = vadd.f32 %v4790, %v4861
      %v4988 = vadd.f32 %v4791, %v4864
      %v4989 = vadd.f32 %v4792, %v4869
      %v4990 = vadd.f32 %v4793, %v4872
      %v4991 = vadd.f32 %v4794, %v4877
      %v4992 = vadd.f32 %v4795, %v4880
      %v4993 = vadd.f32 %v4796, %v4885
      %v4994 = vadd.f32 %v4797, %v4888
      %v4995 = vadd.f32 %v4798, %v4893
      %v4996 = vadd.f32 %v4799, %v4896
      %v4997 = vadd.f32 %v4800, %v4901
      %v4998 = vadd.f32 %v4801, %v4904
      %v4999 = vadd.f32 %v4802, %v4909
      %v5000 = vadd.f32 %v4803, %v4912
      %v5001 = vadd.f32 %v4804, %v4917
      %v5002 = vadd.f32 %v4805, %v4920
      %v5003 = vadd.f32 %v4806, %v4925
      %v5004 = vadd.f32 %v4807, %v4928
      %v5005 = vadd.f32 %v4808, %v4933
      %v5006 = vadd.f32 %v4809, %v4936
      %v5007 = vadd.f32 %v4810, %v4941
      %v5008 = vadd.f32 %v4811, %v4944
      %v5009 = vadd.f32 %v4812, %v4949
      %v5010 = vadd.f32 %v4813, %v4952
      %v5011 = vadd.f32 %v4814, %v4957
      %v5012 = vadd.f32 %v4815, %v4960
      %v5013 = vadd.f32 %v4816, %v4965
      %v5014 = vadd.f32 %v4817, %v4968
      %v5015 = vadd.f32 %v4818, %v4973
      %v5016 = vadd.f32 %v4819, %v4976
      %v5017 = vadd.f32 %v4820, %v4981
      %v5018 = vadd.f32 %v4821, %v4984
      %v5019 = vpack.c.bf16 %v3277, %v3277
      %v5021 = vsel %vm878, %v5019, 0
      %5023 = vmatprep.subr.bf16.mxu0 0
      %5024 = vmatpush1.bf16.msra.mxu0 %v5021
      %5025 = vmatprep.subr.bf16.mxu0 0
      %5026 = vmatpush1.bf16.msra.mxu0 0
      %5027 = vmatprep.subr.bf16.mxu0 0
      %5028 = vmatpush1.bf16.msra.mxu0 0
      %5029 = vmatprep.subr.bf16.mxu0 0
      %5030 = vmatpush1.bf16.msra.mxu0 0
      %5031 = vmatprep.subr.bf16.mxu0 0
      %5032 = vmatpush1.bf16.msra.mxu0 0
      %5033 = vmatprep.subr.bf16.mxu0 0
      %5034 = vmatpush1.bf16.msra.mxu0 0
      %5035 = vmatprep.subr.bf16.mxu0 0
      %5036 = vmatpush1.bf16.msra.mxu0 0
      %5037 = vmatprep.subr.bf16.mxu0 0
      %5038 = vmatpush1.bf16.msra.mxu0 0
      %5039 = vmatprep.subr.bf16.mxu0 0
      %5040 = vmatpush1.bf16.msra.mxu0 0
      %5041 = vmatprep.subr.bf16.mxu0 0
      %5042 = vmatpush1.bf16.msra.mxu0 0
      %5043 = vmatprep.subr.bf16.mxu0 0
      %5044 = vmatpush1.bf16.msra.mxu0 0
      %5045 = vmatprep.subr.bf16.mxu0 0
      %5046 = vmatpush1.bf16.msra.mxu0 0
      %5047 = vmatprep.subr.bf16.mxu0 0
      %5048 = vmatpush1.bf16.msra.mxu0 0
      %5049 = vmatprep.subr.bf16.mxu0 0
      %5050 = vmatpush1.bf16.msra.mxu0 0
      %5051 = vmatprep.subr.bf16.mxu0 0
      %5052 = vmatpush1.bf16.msra.mxu0 0
      %5053 = vmatprep.subr.bf16.mxu0 0
      %5054 = vmatpush1.bf16.msra.mxu0 0
      %5055 = vmatprep.mubr.bf16.mxu0 0
      %5056 = vmatmul.mubr.bf16.gmra.mrb[0].mxu0 %v3440
      %v5057 = vpop.f32.mrb[0].mxu0
      %v5058 = vadd.f32 0.0, %v5057
      %v5059 = vpop.f32.mrb[0].mxu0
      %v5060 = vpop.f32.mrb[0].mxu0
      %v5061 = vadd.f32 0.0, %v5060
      %v5062 = vpop.f32.mrb[0].mxu0
      %5063 = vmatprep.mubr.bf16.mxu0 0
      %5064 = vmatmul.mubr.bf16.gmra.mrb[0].mxu0 %v3443
      %v5065 = vpop.f32.mrb[0].mxu0
      %v5066 = vadd.f32 0.0, %v5065
      %v5067 = vpop.f32.mrb[0].mxu0
      %v5068 = vpop.f32.mrb[0].mxu0
      %v5069 = vadd.f32 0.0, %v5068
      %v5070 = vpop.f32.mrb[0].mxu0
      %5071 = vmatprep.mubr.bf16.mxu0 0
      %5072 = vmatmul.mubr.bf16.gmra.mrb[0].mxu0 %v3446
      %v5073 = vpop.f32.mrb[0].mxu0
      %v5074 = vadd.f32 0.0, %v5073
      %v5075 = vpop.f32.mrb[0].mxu0
      %v5076 = vpop.f32.mrb[0].mxu0
      %v5077 = vadd.f32 0.0, %v5076
      %v5078 = vpop.f32.mrb[0].mxu0
      %5079 = vmatprep.mubr.bf16.mxu0 0
      %5080 = vmatmul.mubr.bf16.gmra.mrb[0].mxu0 %v3449
      %v5081 = vpop.f32.mrb[0].mxu0
      %v5082 = vadd.f32 0.0, %v5081
      %v5083 = vpop.f32.mrb[0].mxu0
      %v5084 = vpop.f32.mrb[0].mxu0
      %v5085 = vadd.f32 0.0, %v5084
      %v5086 = vpop.f32.mrb[0].mxu0
      %5087 = vmatprep.mubr.bf16.mxu0 0
      %5088 = vmatmul.mubr.bf16.gmra.mrb[0].mxu0 %v3452
      %v5089 = vpop.f32.mrb[0].mxu0
      %v5090 = vadd.f32 0.0, %v5089
      %v5091 = vpop.f32.mrb[0].mxu0
      %v5092 = vpop.f32.mrb[0].mxu0
      %v5093 = vadd.f32 0.0, %v5092
      %v5094 = vpop.f32.mrb[0].mxu0
      %5095 = vmatprep.mubr.bf16.mxu0 0
      %5096 = vmatmul.mubr.bf16.gmra.mrb[0].mxu0 %v3455
      %v5097 = vpop.f32.mrb[0].mxu0
      %v5098 = vadd.f32 0.0, %v5097
      %v5099 = vpop.f32.mrb[0].mxu0
      %v5100 = vpop.f32.mrb[0].mxu0
      %v5101 = vadd.f32 0.0, %v5100
      %v5102 = vpop.f32.mrb[0].mxu0
      %5103 = vmatprep.mubr.bf16.mxu0 0
      %5104 = vmatmul.mubr.bf16.gmra.mrb[0].mxu0 %v3458
      %v5105 = vpop.f32.mrb[0].mxu0
      %v5106 = vadd.f32 0.0, %v5105
      %v5107 = vpop.f32.mrb[0].mxu0
      %v5108 = vpop.f32.mrb[0].mxu0
      %v5109 = vadd.f32 0.0, %v5108
      %v5110 = vpop.f32.mrb[0].mxu0
      %5111 = vmatprep.mubr.bf16.mxu0 0
      %5112 = vmatmul.mubr.bf16.gmra.mrb[0].mxu0 %v3461
      %v5113 = vpop.f32.mrb[0].mxu0
      %v5114 = vadd.f32 0.0, %v5113
      %v5115 = vpop.f32.mrb[0].mxu0
      %v5116 = vpop.f32.mrb[0].mxu0
      %v5117 = vadd.f32 0.0, %v5116
      %v5118 = vpop.f32.mrb[0].mxu0
      %5119 = vmatprep.mubr.bf16.mxu0 0
      %5120 = vmatmul.mubr.bf16.gmra.mrb[0].mxu0 %v3464
      %v5121 = vpop.f32.mrb[0].mxu0
      %v5122 = vadd.f32 0.0, %v5121
      %v5123 = vpop.f32.mrb[0].mxu0
      %v5124 = vpop.f32.mrb[0].mxu0
      %v5125 = vadd.f32 0.0, %v5124
      %v5126 = vpop.f32.mrb[0].mxu0
      %5127 = vmatprep.mubr.bf16.mxu0 0
      %5128 = vmatmul.mubr.bf16.gmra.mrb[0].mxu0 %v3467
      %v5129 = vpop.f32.mrb[0].mxu0
      %v5130 = vadd.f32 0.0, %v5129
      %v5131 = vpop.f32.mrb[0].mxu0
      %v5132 = vpop.f32.mrb[0].mxu0
      %v5133 = vadd.f32 0.0, %v5132
      %v5134 = vpop.f32.mrb[0].mxu0
      %5135 = vmatprep.mubr.bf16.mxu0 0
      %5136 = vmatmul.mubr.bf16.gmra.mrb[0].mxu0 %v3470
      %v5137 = vpop.f32.mrb[0].mxu0
      %v5138 = vadd.f32 0.0, %v5137
      %v5139 = vpop.f32.mrb[0].mxu0
      %v5140 = vpop.f32.mrb[0].mxu0
      %v5141 = vadd.f32 0.0, %v5140
      %v5142 = vpop.f32.mrb[0].mxu0
      %5143 = vmatprep.mubr.bf16.mxu0 0
      %5144 = vmatmul.mubr.bf16.gmra.mrb[0].mxu0 %v3473
      %v5145 = vpop.f32.mrb[0].mxu0
      %v5146 = vadd.f32 0.0, %v5145
      %v5147 = vpop.f32.mrb[0].mxu0
      %v5148 = vpop.f32.mrb[0].mxu0
      %v5149 = vadd.f32 0.0, %v5148
      %v5150 = vpop.f32.mrb[0].mxu0
      %5151 = vmatprep.mubr.bf16.mxu0 0
      %5152 = vmatmul.mubr.bf16.gmra.mrb[0].mxu0 %v3476
      %v5153 = vpop.f32.mrb[0].mxu0
      %v5154 = vadd.f32 0.0, %v5153
      %v5155 = vpop.f32.mrb[0].mxu0
      %v5156 = vpop.f32.mrb[0].mxu0
      %v5157 = vadd.f32 0.0, %v5156
      %v5158 = vpop.f32.mrb[0].mxu0
      %5159 = vmatprep.mubr.bf16.mxu0 0
      %5160 = vmatmul.mubr.bf16.gmra.mrb[0].mxu0 %v3479
      %v5161 = vpop.f32.mrb[0].mxu0
      %v5162 = vadd.f32 0.0, %v5161
      %v5163 = vpop.f32.mrb[0].mxu0
      %v5164 = vpop.f32.mrb[0].mxu0
      %v5165 = vadd.f32 0.0, %v5164
      %v5166 = vpop.f32.mrb[0].mxu0
      %5167 = vmatprep.mubr.bf16.mxu0 0
      %5168 = vmatmul.mubr.bf16.gmra.mrb[0].mxu0 %v4417
      %v5169 = vpop.f32.mrb[0].mxu0
      %v5170 = vadd.f32 0.0, %v5169
      %v5171 = vpop.f32.mrb[0].mxu0
      %v5172 = vpop.f32.mrb[0].mxu0
      %v5173 = vadd.f32 0.0, %v5172
      %v5174 = vpop.f32.mrb[0].mxu0
      %5175 = vmatprep.mubr.bf16.mxu0 0
      %5176 = vmatmul.mubr.bf16.gmra.mrb[0].mxu0 %v3434
      %v5177 = vpop.f32.mrb[0].mxu0
      %v5178 = vadd.f32 0.0, %v5177
      %v5179 = vpop.f32.mrb[0].mxu0
      %v5180 = vpop.f32.mrb[0].mxu0
      %v5181 = vadd.f32 0.0, %v5180
      %v5182 = vpop.f32.mrb[0].mxu0
      %5183 = vdwg.mxu0
      %v5184 = vadd.f32 %v4987, %v5058
      %v5185 = vadd.f32 %v4988, %v5061
      %v5186 = vadd.f32 %v4989, %v5066
      %v5187 = vadd.f32 %v4990, %v5069
      %v5188 = vadd.f32 %v4991, %v5074
      %v5189 = vadd.f32 %v4992, %v5077
      %v5190 = vadd.f32 %v4993, %v5082
      %v5191 = vadd.f32 %v4994, %v5085
      %v5192 = vadd.f32 %v4995, %v5090
      %v5193 = vadd.f32 %v4996, %v5093
      %v5194 = vadd.f32 %v4997, %v5098
      %v5195 = vadd.f32 %v4998, %v5101
      %v5196 = vadd.f32 %v4999, %v5106
      %v5197 = vadd.f32 %v5000, %v5109
      %v5198 = vadd.f32 %v5001, %v5114
      %v5199 = vadd.f32 %v5002, %v5117
      %v5200 = vadd.f32 %v5003, %v5122
      %v5201 = vadd.f32 %v5004, %v5125
      %v5202 = vadd.f32 %v5005, %v5130
      %v5203 = vadd.f32 %v5006, %v5133
      %v5204 = vadd.f32 %v5007, %v5138
      %v5205 = vadd.f32 %v5008, %v5141
      %v5206 = vadd.f32 %v5009, %v5146
      %v5207 = vadd.f32 %v5010, %v5149
      %v5208 = vadd.f32 %v5011, %v5154
      %v5209 = vadd.f32 %v5012, %v5157
      %v5210 = vadd.f32 %v5013, %v5162
      %v5211 = vadd.f32 %v5014, %v5165
      %v5212 = vadd.f32 %v5015, %v5170
      %v5213 = vadd.f32 %v5016, %v5173
      %v5214 = vadd.f32 %v5017, %v5178
      %v5215 = vadd.f32 %v5018, %v5181
      %v5216 = vpack.c.bf16 %v3278, %v3278
      %v5218 = vsel %vm878, %v5216, 0
      %5220 = vmatprep.subr.bf16.mxu0 0
      %5221 = vmatpush1.bf16.msra.mxu0 %v5218
      %5222 = vmatprep.subr.bf16.mxu0 0
      %5223 = vmatpush1.bf16.msra.mxu0 0
      %5224 = vmatprep.subr.bf16.mxu0 0
      %5225 = vmatpush1.bf16.msra.mxu0 0
      %5226 = vmatprep.subr.bf16.mxu0 0
      %5227 = vmatpush1.bf16.msra.mxu0 0
      %5228 = vmatprep.subr.bf16.mxu0 0
      %5229 = vmatpush1.bf16.msra.mxu0 0
      %5230 = vmatprep.subr.bf16.mxu0 0
      %5231 = vmatpush1.bf16.msra.mxu0 0
      %5232 = vmatprep.subr.bf16.mxu0 0
      %5233 = vmatpush1.bf16.msra.mxu0 0
      %5234 = vmatprep.subr.bf16.mxu0 0
      %5235 = vmatpush1.bf16.msra.mxu0 0
      %5236 = vmatprep.subr.bf16.mxu0 0
      %5237 = vmatpush1.bf16.msra.mxu0 0
      %5238 = vmatprep.subr.bf16.mxu0 0
      %5239 = vmatpush1.bf16.msra.mxu0 0
      %5240 = vmatprep.subr.bf16.mxu0 0
      %5241 = vmatpush1.bf16.msra.mxu0 0
      %5242 = vmatprep.subr.bf16.mxu0 0
      %5243 = vmatpush1.bf16.msra.mxu0 0
      %5244 = vmatprep.subr.bf16.mxu0 0
      %5245 = vmatpush1.bf16.msra.mxu0 0
      %5246 = vmatprep.subr.bf16.mxu0 0
      %5247 = vmatpush1.bf16.msra.mxu0 0
      %5248 = vmatprep.subr.bf16.mxu0 0
      %5249 = vmatpush1.bf16.msra.mxu0 0
      %5250 = vmatprep.subr.bf16.mxu0 0
      %5251 = vmatpush1.bf16.msra.mxu0 0
      %5252 = vmatprep.mubr.bf16.mxu0 0
      %5253 = vmatmul.mubr.bf16.gmra.mrb[0].mxu0 %v3968
      %v5254 = vpop.f32.mrb[0].mxu0
      %v5255 = vadd.f32 0.0, %v5254
      %v5256 = vpop.f32.mrb[0].mxu0
      %v5257 = vpop.f32.mrb[0].mxu0
      %v5258 = vadd.f32 0.0, %v5257
      %v5259 = vpop.f32.mrb[0].mxu0
      %5260 = vmatprep.mubr.bf16.mxu0 0
      %5261 = vmatmul.mubr.bf16.gmra.mrb[0].mxu0 %v3971
      %v5262 = vpop.f32.mrb[0].mxu0
      %v5263 = vadd.f32 0.0, %v5262
      %v5264 = vpop.f32.mrb[0].mxu0
      %v5265 = vpop.f32.mrb[0].mxu0
      %v5266 = vadd.f32 0.0, %v5265
      %v5267 = vpop.f32.mrb[0].mxu0
      %5268 = vmatprep.mubr.bf16.mxu0 0
      %5269 = vmatmul.mubr.bf16.gmra.mrb[0].mxu0 %v3974
      %v5270 = vpop.f32.mrb[0].mxu0
      %v5271 = vadd.f32 0.0, %v5270
      %v5272 = vpop.f32.mrb[0].mxu0
      %v5273 = vpop.f32.mrb[0].mxu0
      %v5274 = vadd.f32 0.0, %v5273
      %v5275 = vpop.f32.mrb[0].mxu0
      %5276 = vmatprep.mubr.bf16.mxu0 0
      %5277 = vmatmul.mubr.bf16.gmra.mrb[0].mxu0 %v3977
      %v5278 = vpop.f32.mrb[0].mxu0
      %v5279 = vadd.f32 0.0, %v5278
      %v5280 = vpop.f32.mrb[0].mxu0
      %v5281 = vpop.f32.mrb[0].mxu0
      %v5282 = vadd.f32 0.0, %v5281
      %v5283 = vpop.f32.mrb[0].mxu0
      %5284 = vmatprep.mubr.bf16.mxu0 0
      %5285 = vmatmul.mubr.bf16.gmra.mrb[0].mxu0 %v3980
      %v5286 = vpop.f32.mrb[0].mxu0
      %v5287 = vadd.f32 0.0, %v5286
      %v5288 = vpop.f32.mrb[0].mxu0
      %v5289 = vpop.f32.mrb[0].mxu0
      %v5290 = vadd.f32 0.0, %v5289
      %v5291 = vpop.f32.mrb[0].mxu0
      %5292 = vmatprep.mubr.bf16.mxu0 0
      %5293 = vmatmul.mubr.bf16.gmra.mrb[0].mxu0 %v3983
      %v5294 = vpop.f32.mrb[0].mxu0
      %v5295 = vadd.f32 0.0, %v5294
      %v5296 = vpop.f32.mrb[0].mxu0
      %v5297 = vpop.f32.mrb[0].mxu0
      %v5298 = vadd.f32 0.0, %v5297
      %v5299 = vpop.f32.mrb[0].mxu0
      %5300 = vmatprep.mubr.bf16.mxu0 0
      %5301 = vmatmul.mubr.bf16.gmra.mrb[0].mxu0 %v3986
      %v5302 = vpop.f32.mrb[0].mxu0
      %v5303 = vadd.f32 0.0, %v5302
      %v5304 = vpop.f32.mrb[0].mxu0
      %v5305 = vpop.f32.mrb[0].mxu0
      %v5306 = vadd.f32 0.0, %v5305
      %v5307 = vpop.f32.mrb[0].mxu0
      %5308 = vmatprep.mubr.bf16.mxu0 0
      %5309 = vmatmul.mubr.bf16.gmra.mrb[0].mxu0 %v3989
      %v5310 = vpop.f32.mrb[0].mxu0
      %v5311 = vadd.f32 0.0, %v5310
      %v5312 = vpop.f32.mrb[0].mxu0
      %v5313 = vpop.f32.mrb[0].mxu0
      %v5314 = vadd.f32 0.0, %v5313
      %v5315 = vpop.f32.mrb[0].mxu0
      %5316 = vmatprep.mubr.bf16.mxu0 0
      %5317 = vmatmul.mubr.bf16.gmra.mrb[0].mxu0 %v3992
      %v5318 = vpop.f32.mrb[0].mxu0
      %v5319 = vadd.f32 0.0, %v5318
      %v5320 = vpop.f32.mrb[0].mxu0
      %v5321 = vpop.f32.mrb[0].mxu0
      %v5322 = vadd.f32 0.0, %v5321
      %v5323 = vpop.f32.mrb[0].mxu0
      %5324 = vmatprep.mubr.bf16.mxu0 0
      %5325 = vmatmul.mubr.bf16.gmra.mrb[0].mxu0 %v3995
      %v5326 = vpop.f32.mrb[0].mxu0
      %v5327 = vadd.f32 0.0, %v5326
      %v5328 = vpop.f32.mrb[0].mxu0
      %v5329 = vpop.f32.mrb[0].mxu0
      %v5330 = vadd.f32 0.0, %v5329
      %v5331 = vpop.f32.mrb[0].mxu0
      %5332 = vmatprep.mubr.bf16.mxu0 0
      %5333 = vmatmul.mubr.bf16.gmra.mrb[0].mxu0 %v3998
      %v5334 = vpop.f32.mrb[0].mxu0
      %v5335 = vadd.f32 0.0, %v5334
      %v5336 = vpop.f32.mrb[0].mxu0
      %v5337 = vpop.f32.mrb[0].mxu0
      %v5338 = vadd.f32 0.0, %v5337
      %v5339 = vpop.f32.mrb[0].mxu0
      %5340 = vmatprep.mubr.bf16.mxu0 0
      %5341 = vmatmul.mubr.bf16.gmra.mrb[0].mxu0 %v4001
      %v5342 = vpop.f32.mrb[0].mxu0
      %v5343 = vadd.f32 0.0, %v5342
      %v5344 = vpop.f32.mrb[0].mxu0
      %v5345 = vpop.f32.mrb[0].mxu0
      %v5346 = vadd.f32 0.0, %v5345
      %v5347 = vpop.f32.mrb[0].mxu0
      %5348 = vmatprep.mubr.bf16.mxu0 0
      %5349 = vmatmul.mubr.bf16.gmra.mrb[0].mxu0 %v4004
      %v5350 = vpop.f32.mrb[0].mxu0
      %v5351 = vadd.f32 0.0, %v5350
      %v5352 = vpop.f32.mrb[0].mxu0
      %v5353 = vpop.f32.mrb[0].mxu0
      %v5354 = vadd.f32 0.0, %v5353
      %v5355 = vpop.f32.mrb[0].mxu0
      %5356 = vmatprep.mubr.bf16.mxu0 0
      %5357 = vmatmul.mubr.bf16.gmra.mrb[0].mxu0 %v4007
      %v5358 = vpop.f32.mrb[0].mxu0
      %v5359 = vadd.f32 0.0, %v5358
      %v5360 = vpop.f32.mrb[0].mxu0
      %v5361 = vpop.f32.mrb[0].mxu0
      %v5362 = vadd.f32 0.0, %v5361
      %v5363 = vpop.f32.mrb[0].mxu0
      %5364 = vmatprep.mubr.bf16.mxu0 0
      %5365 = vmatmul.mubr.bf16.gmra.mrb[0].mxu0 %v4624
      %v5366 = vpop.f32.mrb[0].mxu0
      %v5367 = vadd.f32 0.0, %v5366
      %v5368 = vpop.f32.mrb[0].mxu0
      %v5369 = vpop.f32.mrb[0].mxu0
      %v5370 = vadd.f32 0.0, %v5369
      %v5371 = vpop.f32.mrb[0].mxu0
      %5372 = vmatprep.mubr.bf16.mxu0 0
      %5373 = vmatmul.mubr.bf16.gmra.mrb[0].mxu0 %v3962
      %v5374 = vpop.f32.mrb[0].mxu0
      %v5375 = vadd.f32 0.0, %v5374
      %v5376 = vpop.f32.mrb[0].mxu0
      %v5377 = vpop.f32.mrb[0].mxu0
      %v5378 = vadd.f32 0.0, %v5377
      %v5379 = vpop.f32.mrb[0].mxu0
      %5380 = vdwg.mxu0
      %v5381 = vadd.f32 %v5184, %v5255
      %v5382 = vadd.f32 %v5185, %v5258
      %v5383 = vadd.f32 %v5186, %v5263
      %v5384 = vadd.f32 %v5187, %v5266
      %v5385 = vadd.f32 %v5188, %v5271
      %v5386 = vadd.f32 %v5189, %v5274
      %v5387 = vadd.f32 %v5190, %v5279
      %v5388 = vadd.f32 %v5191, %v5282
      %v5389 = vadd.f32 %v5192, %v5287
      %v5390 = vadd.f32 %v5193, %v5290
      %v5391 = vadd.f32 %v5194, %v5295
      %v5392 = vadd.f32 %v5195, %v5298
      %v5393 = vadd.f32 %v5196, %v5303
      %v5394 = vadd.f32 %v5197, %v5306
      %v5395 = vadd.f32 %v5198, %v5311
      %v5396 = vadd.f32 %v5199, %v5314
      %v5397 = vadd.f32 %v5200, %v5319
      %v5398 = vadd.f32 %v5201, %v5322
      %v5399 = vadd.f32 %v5202, %v5327
      %v5400 = vadd.f32 %v5203, %v5330
      %v5401 = vadd.f32 %v5204, %v5335
      %v5402 = vadd.f32 %v5205, %v5338
      %v5403 = vadd.f32 %v5206, %v5343
      %v5404 = vadd.f32 %v5207, %v5346
      %v5405 = vadd.f32 %v5208, %v5351
      %v5406 = vadd.f32 %v5209, %v5354
      %v5407 = vadd.f32 %v5210, %v5359
      %v5408 = vadd.f32 %v5211, %v5362
      %v5409 = vadd.f32 %v5212, %v5367
      %v5410 = vadd.f32 %v5213, %v5370
      %v5411 = vadd.f32 %v5214, %v5375
      %v5412 = vadd.f32 %v5215, %v5378
      %v5414 = vlaneseq
      %v5415 = vshrl.u32 %v5414, 7
      %v5416 = vsub.s32 0, %v5415
      %v5417 = vrot.slane %v3279, %v5416
      %v5419 = vmul.f32 %v5381, %v5417
      %v5420 = vmul.f32 %v5382, %v5417
      %v5421 = vmul.f32 %v5383, %v5417
      %v5422 = vmul.f32 %v5384, %v5417
      %v5423 = vmul.f32 %v5385, %v5417
      %v5424 = vmul.f32 %v5386, %v5417
      %v5425 = vmul.f32 %v5387, %v5417
      %v5426 = vmul.f32 %v5388, %v5417
      %v5427 = vmul.f32 %v5389, %v5417
      %v5428 = vmul.f32 %v5390, %v5417
      %v5429 = vmul.f32 %v5391, %v5417
      %v5430 = vmul.f32 %v5392, %v5417
      %v5431 = vmul.f32 %v5393, %v5417
      %v5432 = vmul.f32 %v5394, %v5417
      %v5433 = vmul.f32 %v5395, %v5417
      %v5434 = vmul.f32 %v5396, %v5417
      %v5435 = vmul.f32 %v5397, %v5417
      %v5436 = vmul.f32 %v5398, %v5417
      %v5437 = vmul.f32 %v5399, %v5417
      %v5438 = vmul.f32 %v5400, %v5417
      %v5439 = vmul.f32 %v5401, %v5417
      %v5440 = vmul.f32 %v5402, %v5417
      %v5441 = vmul.f32 %v5403, %v5417
      %v5442 = vmul.f32 %v5404, %v5417
      %v5443 = vmul.f32 %v5405, %v5417
      %v5444 = vmul.f32 %v5406, %v5417
      %v5445 = vmul.f32 %v5407, %v5417
      %v5446 = vmul.f32 %v5408, %v5417
      %v5447 = vmul.f32 %v5409, %v5417
      %v5448 = vmul.f32 %v5410, %v5417
      %v5449 = vmul.f32 %v5411, %v5417
      %v5450 = vmul.f32 %v5412, %v5417
      %v5452 = vlaneseq
      %v5453 = vshrl.u32 %v5452, 7
      %v5454 = vsub.s32 0, %v5453
      %v5455 = vrot.slane %v3280, %v5454
      %v5457 = vadd.f32 %v5419, %v5455
      %v5458 = vadd.f32 %v5420, %v5455
      %v5459 = vadd.f32 %v5421, %v5455
      %v5460 = vadd.f32 %v5422, %v5455
      %v5461 = vadd.f32 %v5423, %v5455
      %v5462 = vadd.f32 %v5424, %v5455
      %v5463 = vadd.f32 %v5425, %v5455
      %v5464 = vadd.f32 %v5426, %v5455
      %v5465 = vadd.f32 %v5427, %v5455
      %v5466 = vadd.f32 %v5428, %v5455
      %v5467 = vadd.f32 %v5429, %v5455
      %v5468 = vadd.f32 %v5430, %v5455
      %v5469 = vadd.f32 %v5431, %v5455
      %v5470 = vadd.f32 %v5432, %v5455
      %v5471 = vadd.f32 %v5433, %v5455
      %v5472 = vadd.f32 %v5434, %v5455
      %v5473 = vadd.f32 %v5435, %v5455
      %v5474 = vadd.f32 %v5436, %v5455
      %v5475 = vadd.f32 %v5437, %v5455
      %v5476 = vadd.f32 %v5438, %v5455
      %v5477 = vadd.f32 %v5439, %v5455
      %v5478 = vadd.f32 %v5440, %v5455
      %v5479 = vadd.f32 %v5441, %v5455
      %v5480 = vadd.f32 %v5442, %v5455
      %v5481 = vadd.f32 %v5443, %v5455
      %v5482 = vadd.f32 %v5444, %v5455
      %v5483 = vadd.f32 %v5445, %v5455
      %v5484 = vadd.f32 %v5446, %v5455
      %v5485 = vadd.f32 %v5447, %v5455
      %v5486 = vadd.f32 %v5448, %v5455
      %v5487 = vadd.f32 %v5449, %v5455
      %v5488 = vadd.f32 %v5450, %v5455
      %v5489 = vmax.f32 %v5457, 0.0
      %v5490 = vmax.f32 %v5458, 0.0
      %v5491 = vmax.f32 %v5459, 0.0
      %v5492 = vmax.f32 %v5460, 0.0
      %v5493 = vmax.f32 %v5461, 0.0
      %v5494 = vmax.f32 %v5462, 0.0
      %v5495 = vmax.f32 %v5463, 0.0
      %v5496 = vmax.f32 %v5464, 0.0
      %v5497 = vmax.f32 %v5465, 0.0
      %v5498 = vmax.f32 %v5466, 0.0
      %v5499 = vmax.f32 %v5467, 0.0
      %v5500 = vmax.f32 %v5468, 0.0
      %v5501 = vmax.f32 %v5469, 0.0
      %v5502 = vmax.f32 %v5470, 0.0
      %v5503 = vmax.f32 %v5471, 0.0
      %v5504 = vmax.f32 %v5472, 0.0
      %v5505 = vmax.f32 %v5473, 0.0
      %v5506 = vmax.f32 %v5474, 0.0
      %v5507 = vmax.f32 %v5475, 0.0
      %v5508 = vmax.f32 %v5476, 0.0
      %v5509 = vmax.f32 %v5477, 0.0
      %v5510 = vmax.f32 %v5478, 0.0
      %v5511 = vmax.f32 %v5479, 0.0
      %v5512 = vmax.f32 %v5480, 0.0
      %v5513 = vmax.f32 %v5481, 0.0
      %v5514 = vmax.f32 %v5482, 0.0
      %v5515 = vmax.f32 %v5483, 0.0
      %v5516 = vmax.f32 %v5484, 0.0
      %v5517 = vmax.f32 %v5485, 0.0
      %v5518 = vmax.f32 %v5486, 0.0
      %v5519 = vmax.f32 %v5487, 0.0
      %v5520 = vmax.f32 %v5488, 0.0
      %v5521 = vld [vmem:[%s10] sm:$0xf]
      %v5522 = vld [vmem:[%s11] sm:$0x1]
      %v5523 = vld [vmem:[%s12] sm:$0x1]
      %v5524 = vpack.c.bf16 %v5490, %v5489
      %v5525 = vpack.c.bf16 %v5492, %v5491
      %v5526 = vpack.c.bf16 %v5494, %v5493
      %v5527 = vpack.c.bf16 %v5496, %v5495
      %v5528 = vpack.c.bf16 %v5498, %v5497
      %v5529 = vpack.c.bf16 %v5500, %v5499
      %v5530 = vpack.c.bf16 %v5502, %v5501
      %v5531 = vpack.c.bf16 %v5504, %v5503
      %v5532 = vpack.c.bf16 %v5506, %v5505
      %v5533 = vpack.c.bf16 %v5508, %v5507
      %v5534 = vpack.c.bf16 %v5510, %v5509
      %v5535 = vpack.c.bf16 %v5512, %v5511
      %v5536 = vpack.c.bf16 %v5514, %v5513
      %v5537 = vpack.c.bf16 %v5516, %v5515
      %v5538 = vpack.c.bf16 %v5518, %v5517
      %v5539 = vpack.c.bf16 %v5520, %v5519
      %v5540 = vpack.c.bf16 %v5521, %v5521
      %v5542 = vsel %vm3433, %v5524, 0
      %v5545 = vsel %vm3433, %v5525, 0
      %v5548 = vsel %vm3433, %v5526, 0
      %v5551 = vsel %vm3433, %v5527, 0
      %v5554 = vsel %vm3433, %v5528, 0
      %v5557 = vsel %vm3433, %v5529, 0
      %v5560 = vsel %vm3433, %v5530, 0
      %v5563 = vsel %vm3433, %v5531, 0
      %v5566 = vsel %vm3433, %v5532, 0
      %v5569 = vsel %vm3433, %v5533, 0
      %v5572 = vsel %vm3433, %v5534, 0
      %v5575 = vsel %vm3433, %v5535, 0
      %v5578 = vsel %vm3433, %v5536, 0
      %v5581 = vsel %vm3433, %v5537, 0
      %v5584 = vsel %vm3433, %v5538, 0
      %v5587 = vsel %vm3433, %v5539, 0
      %v5590 = vsel %vm878, %v5540, 0
      %5592 = vmatprep.subr.bf16.mxu0 0
      %5593 = vmatpush1.bf16.msra.mxu0 %v5590
      %5594 = vmatprep.subr.bf16.mxu0 0
      %5595 = vmatpush1.bf16.msra.mxu0 0
      %5596 = vmatprep.subr.bf16.mxu0 0
      %5597 = vmatpush1.bf16.msra.mxu0 0
      %5598 = vmatprep.subr.bf16.mxu0 0
      %5599 = vmatpush1.bf16.msra.mxu0 0
      %5600 = vmatprep.subr.bf16.mxu0 0
      %5601 = vmatpush1.bf16.msra.mxu0 0
      %5602 = vmatprep.subr.bf16.mxu0 0
      %5603 = vmatpush1.bf16.msra.mxu0 0
      %5604 = vmatprep.subr.bf16.mxu0 0
      %5605 = vmatpush1.bf16.msra.mxu0 0
      %5606 = vmatprep.subr.bf16.mxu0 0
      %5607 = vmatpush1.bf16.msra.mxu0 0
      %5608 = vmatprep.subr.bf16.mxu0 0
      %5609 = vmatpush1.bf16.msra.mxu0 0
      %5610 = vmatprep.subr.bf16.mxu0 0
      %5611 = vmatpush1.bf16.msra.mxu0 0
      %5612 = vmatprep.subr.bf16.mxu0 0
      %5613 = vmatpush1.bf16.msra.mxu0 0
      %5614 = vmatprep.subr.bf16.mxu0 0
      %5615 = vmatpush1.bf16.msra.mxu0 0
      %5616 = vmatprep.subr.bf16.mxu0 0
      %5617 = vmatpush1.bf16.msra.mxu0 0
      %5618 = vmatprep.subr.bf16.mxu0 0
      %5619 = vmatpush1.bf16.msra.mxu0 0
      %5620 = vmatprep.subr.bf16.mxu0 0
      %5621 = vmatpush1.bf16.msra.mxu0 0
      %5622 = vmatprep.subr.bf16.mxu0 0
      %5623 = vmatpush1.bf16.msra.mxu0 0
      %5624 = vmatprep.mubr.bf16.mxu0 0
      %5625 = vmatmul.mubr.bf16.gmra.mrb[0].mxu0 %v5542
      %v5626 = vpop.f32.mrb[0].mxu0
      %v5627 = vadd.f32 0.0, %v5626
      %v5628 = vpop.f32.mrb[0].mxu0
      %v5629 = vpop.f32.mrb[0].mxu0
      %v5630 = vadd.f32 0.0, %v5629
      %v5631 = vpop.f32.mrb[0].mxu0
      %5632 = vmatprep.mubr.bf16.mxu0 0
      %5633 = vmatmul.mubr.bf16.gmra.mrb[0].mxu0 %v5545
      %v5634 = vpop.f32.mrb[0].mxu0
      %v5635 = vadd.f32 0.0, %v5634
      %v5636 = vpop.f32.mrb[0].mxu0
      %v5637 = vpop.f32.mrb[0].mxu0
      %v5638 = vadd.f32 0.0, %v5637
      %v5639 = vpop.f32.mrb[0].mxu0
      %5640 = vmatprep.mubr.bf16.mxu0 0
      %5641 = vmatmul.mubr.bf16.gmra.mrb[0].mxu0 %v5548
      %v5642 = vpop.f32.mrb[0].mxu0
      %v5643 = vadd.f32 0.0, %v5642
      %v5644 = vpop.f32.mrb[0].mxu0
      %v5645 = vpop.f32.mrb[0].mxu0
      %v5646 = vadd.f32 0.0, %v5645
      %v5647 = vpop.f32.mrb[0].mxu0
      %5648 = vmatprep.mubr.bf16.mxu0 0
      %5649 = vmatmul.mubr.bf16.gmra.mrb[0].mxu0 %v5551
      %v5650 = vpop.f32.mrb[0].mxu0
      %v5651 = vadd.f32 0.0, %v5650
      %v5652 = vpop.f32.mrb[0].mxu0
      %v5653 = vpop.f32.mrb[0].mxu0
      %v5654 = vadd.f32 0.0, %v5653
      %v5655 = vpop.f32.mrb[0].mxu0
      %5656 = vmatprep.mubr.bf16.mxu0 0
      %5657 = vmatmul.mubr.bf16.gmra.mrb[0].mxu0 %v5554
      %v5658 = vpop.f32.mrb[0].mxu0
      %v5659 = vadd.f32 0.0, %v5658
      %v5660 = vpop.f32.mrb[0].mxu0
      %v5661 = vpop.f32.mrb[0].mxu0
      %v5662 = vadd.f32 0.0, %v5661
      %v5663 = vpop.f32.mrb[0].mxu0
      %5664 = vmatprep.mubr.bf16.mxu0 0
      %5665 = vmatmul.mubr.bf16.gmra.mrb[0].mxu0 %v5557
      %v5666 = vpop.f32.mrb[0].mxu0
      %v5667 = vadd.f32 0.0, %v5666
      %v5668 = vpop.f32.mrb[0].mxu0
      %v5669 = vpop.f32.mrb[0].mxu0
      %v5670 = vadd.f32 0.0, %v5669
      %v5671 = vpop.f32.mrb[0].mxu0
      %5672 = vmatprep.mubr.bf16.mxu0 0
      %5673 = vmatmul.mubr.bf16.gmra.mrb[0].mxu0 %v5560
      %v5674 = vpop.f32.mrb[0].mxu0
      %v5675 = vadd.f32 0.0, %v5674
      %v5676 = vpop.f32.mrb[0].mxu0
      %v5677 = vpop.f32.mrb[0].mxu0
      %v5678 = vadd.f32 0.0, %v5677
      %v5679 = vpop.f32.mrb[0].mxu0
      %5680 = vmatprep.mubr.bf16.mxu0 0
      %5681 = vmatmul.mubr.bf16.gmra.mrb[0].mxu0 %v5563
      %v5682 = vpop.f32.mrb[0].mxu0
      %v5683 = vadd.f32 0.0, %v5682
      %v5684 = vpop.f32.mrb[0].mxu0
      %v5685 = vpop.f32.mrb[0].mxu0
      %v5686 = vadd.f32 0.0, %v5685
      %v5687 = vpop.f32.mrb[0].mxu0
      %5688 = vmatprep.mubr.bf16.mxu0 0
      %5689 = vmatmul.mubr.bf16.gmra.mrb[0].mxu0 %v5566
      %v5690 = vpop.f32.mrb[0].mxu0
      %v5691 = vadd.f32 0.0, %v5690
      %v5692 = vpop.f32.mrb[0].mxu0
      %v5693 = vpop.f32.mrb[0].mxu0
      %v5694 = vadd.f32 0.0, %v5693
      %v5695 = vpop.f32.mrb[0].mxu0
      %5696 = vmatprep.mubr.bf16.mxu0 0
      %5697 = vmatmul.mubr.bf16.gmra.mrb[0].mxu0 %v5569
      %v5698 = vpop.f32.mrb[0].mxu0
      %v5699 = vadd.f32 0.0, %v5698
      %v5700 = vpop.f32.mrb[0].mxu0
      %v5701 = vpop.f32.mrb[0].mxu0
      %v5702 = vadd.f32 0.0, %v5701
      %v5703 = vpop.f32.mrb[0].mxu0
      %5704 = vmatprep.mubr.bf16.mxu0 0
      %5705 = vmatmul.mubr.bf16.gmra.mrb[0].mxu0 %v5572
      %v5706 = vpop.f32.mrb[0].mxu0
      %v5707 = vadd.f32 0.0, %v5706
      %v5708 = vpop.f32.mrb[0].mxu0
      %v5709 = vpop.f32.mrb[0].mxu0
      %v5710 = vadd.f32 0.0, %v5709
      %v5711 = vpop.f32.mrb[0].mxu0
      %5712 = vmatprep.mubr.bf16.mxu0 0
      %5713 = vmatmul.mubr.bf16.gmra.mrb[0].mxu0 %v5575
      %v5714 = vpop.f32.mrb[0].mxu0
      %v5715 = vadd.f32 0.0, %v5714
      %v5716 = vpop.f32.mrb[0].mxu0
      %v5717 = vpop.f32.mrb[0].mxu0
      %v5718 = vadd.f32 0.0, %v5717
      %v5719 = vpop.f32.mrb[0].mxu0
      %5720 = vmatprep.mubr.bf16.mxu0 0
      %5721 = vmatmul.mubr.bf16.gmra.mrb[0].mxu0 %v5578
      %v5722 = vpop.f32.mrb[0].mxu0
      %v5723 = vadd.f32 0.0, %v5722
      %v5724 = vpop.f32.mrb[0].mxu0
      %v5725 = vpop.f32.mrb[0].mxu0
      %v5726 = vadd.f32 0.0, %v5725
      %v5727 = vpop.f32.mrb[0].mxu0
      %5728 = vmatprep.mubr.bf16.mxu0 0
      %5729 = vmatmul.mubr.bf16.gmra.mrb[0].mxu0 %v5581
      %v5730 = vpop.f32.mrb[0].mxu0
      %v5731 = vadd.f32 0.0, %v5730
      %v5732 = vpop.f32.mrb[0].mxu0
      %v5733 = vpop.f32.mrb[0].mxu0
      %v5734 = vadd.f32 0.0, %v5733
      %v5735 = vpop.f32.mrb[0].mxu0
      %5736 = vmatprep.mubr.bf16.mxu0 0
      %5737 = vmatmul.mubr.bf16.gmra.mrb[0].mxu0 %v5584
      %v5738 = vpop.f32.mrb[0].mxu0
      %v5739 = vadd.f32 0.0, %v5738
      %v5740 = vpop.f32.mrb[0].mxu0
      %v5741 = vpop.f32.mrb[0].mxu0
      %v5742 = vadd.f32 0.0, %v5741
      %v5743 = vpop.f32.mrb[0].mxu0
      %5744 = vmatprep.mubr.bf16.mxu0 0
      %5745 = vmatmul.mubr.bf16.gmra.mrb[0].mxu0 %v5587
      %v5746 = vpop.f32.mrb[0].mxu0
      %v5747 = vadd.f32 0.0, %v5746
      %v5748 = vpop.f32.mrb[0].mxu0
      %v5749 = vpop.f32.mrb[0].mxu0
      %v5750 = vadd.f32 0.0, %v5749
      %v5751 = vpop.f32.mrb[0].mxu0
      %5752 = vdwg.mxu0
      %v5754 = vlaneseq
      %v5755 = vshrl.u32 %v5754, 7
      %v5756 = vsub.s32 0, %v5755
      %v5757 = vrot.slane %v5522, %v5756
      %v5759 = vmul.f32 %v5627, %v5757
      %v5760 = vmul.f32 %v5630, %v5757
      %v5761 = vmul.f32 %v5635, %v5757
      %v5762 = vmul.f32 %v5638, %v5757
      %v5763 = vmul.f32 %v5643, %v5757
      %v5764 = vmul.f32 %v5646, %v5757
      %v5765 = vmul.f32 %v5651, %v5757
      %v5766 = vmul.f32 %v5654, %v5757
      %v5767 = vmul.f32 %v5659, %v5757
      %v5768 = vmul.f32 %v5662, %v5757
      %v5769 = vmul.f32 %v5667, %v5757
      %v5770 = vmul.f32 %v5670, %v5757
      %v5771 = vmul.f32 %v5675, %v5757
      %v5772 = vmul.f32 %v5678, %v5757
      %v5773 = vmul.f32 %v5683, %v5757
      %v5774 = vmul.f32 %v5686, %v5757
      %v5775 = vmul.f32 %v5691, %v5757
      %v5776 = vmul.f32 %v5694, %v5757
      %v5777 = vmul.f32 %v5699, %v5757
      %v5778 = vmul.f32 %v5702, %v5757
      %v5779 = vmul.f32 %v5707, %v5757
      %v5780 = vmul.f32 %v5710, %v5757
      %v5781 = vmul.f32 %v5715, %v5757
      %v5782 = vmul.f32 %v5718, %v5757
      %v5783 = vmul.f32 %v5723, %v5757
      %v5784 = vmul.f32 %v5726, %v5757
      %v5785 = vmul.f32 %v5731, %v5757
      %v5786 = vmul.f32 %v5734, %v5757
      %v5787 = vmul.f32 %v5739, %v5757
      %v5788 = vmul.f32 %v5742, %v5757
      %v5789 = vmul.f32 %v5747, %v5757
      %v5790 = vmul.f32 %v5750, %v5757
      %v5792 = vlaneseq
      %v5793 = vshrl.u32 %v5792, 7
      %v5794 = vsub.s32 0, %v5793
      %v5795 = vrot.slane %v5523, %v5794
      %v5797 = vadd.f32 %v5759, %v5795
      %v5798 = vadd.f32 %v5760, %v5795
      %v5799 = vadd.f32 %v5761, %v5795
      %v5800 = vadd.f32 %v5762, %v5795
      %v5801 = vadd.f32 %v5763, %v5795
      %v5802 = vadd.f32 %v5764, %v5795
      %v5803 = vadd.f32 %v5765, %v5795
      %v5804 = vadd.f32 %v5766, %v5795
      %v5805 = vadd.f32 %v5767, %v5795
      %v5806 = vadd.f32 %v5768, %v5795
      %v5807 = vadd.f32 %v5769, %v5795
      %v5808 = vadd.f32 %v5770, %v5795
      %v5809 = vadd.f32 %v5771, %v5795
      %v5810 = vadd.f32 %v5772, %v5795
      %v5811 = vadd.f32 %v5773, %v5795
      %v5812 = vadd.f32 %v5774, %v5795
      %v5813 = vadd.f32 %v5775, %v5795
      %v5814 = vadd.f32 %v5776, %v5795
      %v5815 = vadd.f32 %v5777, %v5795
      %v5816 = vadd.f32 %v5778, %v5795
      %v5817 = vadd.f32 %v5779, %v5795
      %v5818 = vadd.f32 %v5780, %v5795
      %v5819 = vadd.f32 %v5781, %v5795
      %v5820 = vadd.f32 %v5782, %v5795
      %v5821 = vadd.f32 %v5783, %v5795
      %v5822 = vadd.f32 %v5784, %v5795
      %v5823 = vadd.f32 %v5785, %v5795
      %v5824 = vadd.f32 %v5786, %v5795
      %v5825 = vadd.f32 %v5787, %v5795
      %v5826 = vadd.f32 %v5788, %v5795
      %v5827 = vadd.f32 %v5789, %v5795
      %v5828 = vadd.f32 %v5790, %v5795
      %v5829 = vld [vmem:[%s13] sm:$0xff]
      %v5830 = vld [vmem:[%s14] sm:$0x1]
      %v5831 = vld [vmem:[%s15] sm:$0x1]
      %v5832 = vpack.c.bf16 %v5829, %v5829
      %v5834 = vsel %vm2997, %v5832, 0
      %5836 = vmatprep.subr.bf16.mxu0 0
      %5837 = vmatpush1.bf16.msra.mxu0 %v5834
      %5838 = vmatprep.subr.bf16.mxu0 0
      %5839 = vmatpush1.bf16.msra.mxu0 0
      %5840 = vmatprep.subr.bf16.mxu0 0
      %5841 = vmatpush1.bf16.msra.mxu0 0
      %5842 = vmatprep.subr.bf16.mxu0 0
      %5843 = vmatpush1.bf16.msra.mxu0 0
      %5844 = vmatprep.subr.bf16.mxu0 0
      %5845 = vmatpush1.bf16.msra.mxu0 0
      %5846 = vmatprep.subr.bf16.mxu0 0
      %5847 = vmatpush1.bf16.msra.mxu0 0
      %5848 = vmatprep.subr.bf16.mxu0 0
      %5849 = vmatpush1.bf16.msra.mxu0 0
      %5850 = vmatprep.subr.bf16.mxu0 0
      %5851 = vmatpush1.bf16.msra.mxu0 0
      %5852 = vmatprep.subr.bf16.mxu0 0
      %5853 = vmatpush1.bf16.msra.mxu0 0
      %5854 = vmatprep.subr.bf16.mxu0 0
      %5855 = vmatpush1.bf16.msra.mxu0 0
      %5856 = vmatprep.subr.bf16.mxu0 0
      %5857 = vmatpush1.bf16.msra.mxu0 0
      %5858 = vmatprep.subr.bf16.mxu0 0
      %5859 = vmatpush1.bf16.msra.mxu0 0
      %5860 = vmatprep.subr.bf16.mxu0 0
      %5861 = vmatpush1.bf16.msra.mxu0 0
      %5862 = vmatprep.subr.bf16.mxu0 0
      %5863 = vmatpush1.bf16.msra.mxu0 0
      %5864 = vmatprep.subr.bf16.mxu0 0
      %5865 = vmatpush1.bf16.msra.mxu0 0
      %5866 = vmatprep.subr.bf16.mxu0 0
      %5867 = vmatpush1.bf16.msra.mxu0 0
      %5868 = vmatprep.mubr.bf16.mxu0 0
      %5869 = vmatmul.mubr.bf16.gmra.mrb[0].mxu0 %v2950
      %v5870 = vpop.f32.mrb[0].mxu0
      %v5871 = vadd.f32 0.0, %v5870
      %v5872 = vpop.f32.mrb[0].mxu0
      %v5873 = vpop.f32.mrb[0].mxu0
      %v5874 = vadd.f32 0.0, %v5873
      %v5875 = vpop.f32.mrb[0].mxu0
      %5876 = vmatprep.mubr.bf16.mxu0 0
      %5877 = vmatmul.mubr.bf16.gmra.mrb[0].mxu0 %v2953
      %v5878 = vpop.f32.mrb[0].mxu0
      %v5879 = vadd.f32 0.0, %v5878
      %v5880 = vpop.f32.mrb[0].mxu0
      %v5881 = vpop.f32.mrb[0].mxu0
      %v5882 = vadd.f32 0.0, %v5881
      %v5883 = vpop.f32.mrb[0].mxu0
      %5884 = vmatprep.mubr.bf16.mxu0 0
      %5885 = vmatmul.mubr.bf16.gmra.mrb[0].mxu0 %v2956
      %v5886 = vpop.f32.mrb[0].mxu0
      %v5887 = vadd.f32 0.0, %v5886
      %v5888 = vpop.f32.mrb[0].mxu0
      %v5889 = vpop.f32.mrb[0].mxu0
      %v5890 = vadd.f32 0.0, %v5889
      %v5891 = vpop.f32.mrb[0].mxu0
      %5892 = vmatprep.mubr.bf16.mxu0 0
      %5893 = vmatmul.mubr.bf16.gmra.mrb[0].mxu0 %v2959
      %v5894 = vpop.f32.mrb[0].mxu0
      %v5895 = vadd.f32 0.0, %v5894
      %v5896 = vpop.f32.mrb[0].mxu0
      %v5897 = vpop.f32.mrb[0].mxu0
      %v5898 = vadd.f32 0.0, %v5897
      %v5899 = vpop.f32.mrb[0].mxu0
      %5900 = vmatprep.mubr.bf16.mxu0 0
      %5901 = vmatmul.mubr.bf16.gmra.mrb[0].mxu0 %v2962
      %v5902 = vpop.f32.mrb[0].mxu0
      %v5903 = vadd.f32 0.0, %v5902
      %v5904 = vpop.f32.mrb[0].mxu0
      %v5905 = vpop.f32.mrb[0].mxu0
      %v5906 = vadd.f32 0.0, %v5905
      %v5907 = vpop.f32.mrb[0].mxu0
      %5908 = vmatprep.mubr.bf16.mxu0 0
      %5909 = vmatmul.mubr.bf16.gmra.mrb[0].mxu0 %v2965
      %v5910 = vpop.f32.mrb[0].mxu0
      %v5911 = vadd.f32 0.0, %v5910
      %v5912 = vpop.f32.mrb[0].mxu0
      %v5913 = vpop.f32.mrb[0].mxu0
      %v5914 = vadd.f32 0.0, %v5913
      %v5915 = vpop.f32.mrb[0].mxu0
      %5916 = vmatprep.mubr.bf16.mxu0 0
      %5917 = vmatmul.mubr.bf16.gmra.mrb[0].mxu0 %v2968
      %v5918 = vpop.f32.mrb[0].mxu0
      %v5919 = vadd.f32 0.0, %v5918
      %v5920 = vpop.f32.mrb[0].mxu0
      %v5921 = vpop.f32.mrb[0].mxu0
      %v5922 = vadd.f32 0.0, %v5921
      %v5923 = vpop.f32.mrb[0].mxu0
      %5924 = vmatprep.mubr.bf16.mxu0 0
      %5925 = vmatmul.mubr.bf16.gmra.mrb[0].mxu0 %v2971
      %v5926 = vpop.f32.mrb[0].mxu0
      %v5927 = vadd.f32 0.0, %v5926
      %v5928 = vpop.f32.mrb[0].mxu0
      %v5929 = vpop.f32.mrb[0].mxu0
      %v5930 = vadd.f32 0.0, %v5929
      %v5931 = vpop.f32.mrb[0].mxu0
      %5932 = vmatprep.mubr.bf16.mxu0 0
      %5933 = vmatmul.mubr.bf16.gmra.mrb[0].mxu0 %v2974
      %v5934 = vpop.f32.mrb[0].mxu0
      %v5935 = vadd.f32 0.0, %v5934
      %v5936 = vpop.f32.mrb[0].mxu0
      %v5937 = vpop.f32.mrb[0].mxu0
      %v5938 = vadd.f32 0.0, %v5937
      %v5939 = vpop.f32.mrb[0].mxu0
      %5940 = vmatprep.mubr.bf16.mxu0 0
      %5941 = vmatmul.mubr.bf16.gmra.mrb[0].mxu0 %v2977
      %v5942 = vpop.f32.mrb[0].mxu0
      %v5943 = vadd.f32 0.0, %v5942
      %v5944 = vpop.f32.mrb[0].mxu0
      %v5945 = vpop.f32.mrb[0].mxu0
      %v5946 = vadd.f32 0.0, %v5945
      %v5947 = vpop.f32.mrb[0].mxu0
      %5948 = vmatprep.mubr.bf16.mxu0 0
      %5949 = vmatmul.mubr.bf16.gmra.mrb[0].mxu0 %v2980
      %v5950 = vpop.f32.mrb[0].mxu0
      %v5951 = vadd.f32 0.0, %v5950
      %v5952 = vpop.f32.mrb[0].mxu0
      %v5953 = vpop.f32.mrb[0].mxu0
      %v5954 = vadd.f32 0.0, %v5953
      %v5955 = vpop.f32.mrb[0].mxu0
      %5956 = vmatprep.mubr.bf16.mxu0 0
      %5957 = vmatmul.mubr.bf16.gmra.mrb[0].mxu0 %v2983
      %v5958 = vpop.f32.mrb[0].mxu0
      %v5959 = vadd.f32 0.0, %v5958
      %v5960 = vpop.f32.mrb[0].mxu0
      %v5961 = vpop.f32.mrb[0].mxu0
      %v5962 = vadd.f32 0.0, %v5961
      %v5963 = vpop.f32.mrb[0].mxu0
      %5964 = vmatprep.mubr.bf16.mxu0 0
      %5965 = vmatmul.mubr.bf16.gmra.mrb[0].mxu0 %v2986
      %v5966 = vpop.f32.mrb[0].mxu0
      %v5967 = vadd.f32 0.0, %v5966
      %v5968 = vpop.f32.mrb[0].mxu0
      %v5969 = vpop.f32.mrb[0].mxu0
      %v5970 = vadd.f32 0.0, %v5969
      %v5971 = vpop.f32.mrb[0].mxu0
      %5972 = vmatprep.mubr.bf16.mxu0 0
      %5973 = vmatmul.mubr.bf16.gmra.mrb[0].mxu0 %v2989
      %v5974 = vpop.f32.mrb[0].mxu0
      %v5975 = vadd.f32 0.0, %v5974
      %v5976 = vpop.f32.mrb[0].mxu0
      %v5977 = vpop.f32.mrb[0].mxu0
      %v5978 = vadd.f32 0.0, %v5977
      %v5979 = vpop.f32.mrb[0].mxu0
      %5980 = vmatprep.mubr.bf16.mxu0 0
      %5981 = vmatmul.mubr.bf16.gmra.mrb[0].mxu0 %v2992
      %v5982 = vpop.f32.mrb[0].mxu0
      %v5983 = vadd.f32 0.0, %v5982
      %v5984 = vpop.f32.mrb[0].mxu0
      %v5985 = vpop.f32.mrb[0].mxu0
      %v5986 = vadd.f32 0.0, %v5985
      %v5987 = vpop.f32.mrb[0].mxu0
      %5988 = vmatprep.mubr.bf16.mxu0 0
      %5989 = vmatmul.mubr.bf16.gmra.mrb[0].mxu0 %v2995
      %v5990 = vpop.f32.mrb[0].mxu0
      %v5991 = vadd.f32 0.0, %v5990
      %v5992 = vpop.f32.mrb[0].mxu0
      %v5993 = vpop.f32.mrb[0].mxu0
      %v5994 = vadd.f32 0.0, %v5993
      %v5995 = vpop.f32.mrb[0].mxu0
      %5996 = vdwg.mxu0
      %v5998 = vlaneseq
      %v5999 = vshrl.u32 %v5998, 7
      %v6000 = vsub.s32 0, %v5999
      %v6001 = vrot.slane %v5830, %v6000
      %v6003 = vmul.f32 %v5871, %v6001
      %v6004 = vmul.f32 %v5874, %v6001
      %v6005 = vmul.f32 %v5879, %v6001
      %v6006 = vmul.f32 %v5882, %v6001
      %v6007 = vmul.f32 %v5887, %v6001
      %v6008 = vmul.f32 %v5890, %v6001
      %v6009 = vmul.f32 %v5895, %v6001
      %v6010 = vmul.f32 %v5898, %v6001
      %v6011 = vmul.f32 %v5903, %v6001
      %v6012 = vmul.f32 %v5906, %v6001
      %v6013 = vmul.f32 %v5911, %v6001
      %v6014 = vmul.f32 %v5914, %v6001
      %v6015 = vmul.f32 %v5919, %v6001
      %v6016 = vmul.f32 %v5922, %v6001
      %v6017 = vmul.f32 %v5927, %v6001
      %v6018 = vmul.f32 %v5930, %v6001
      %v6019 = vmul.f32 %v5935, %v6001
      %v6020 = vmul.f32 %v5938, %v6001
      %v6021 = vmul.f32 %v5943, %v6001
      %v6022 = vmul.f32 %v5946, %v6001
      %v6023 = vmul.f32 %v5951, %v6001
      %v6024 = vmul.f32 %v5954, %v6001
      %v6025 = vmul.f32 %v5959, %v6001
      %v6026 = vmul.f32 %v5962, %v6001
      %v6027 = vmul.f32 %v5967, %v6001
      %v6028 = vmul.f32 %v5970, %v6001
      %v6029 = vmul.f32 %v5975, %v6001
      %v6030 = vmul.f32 %v5978, %v6001
      %v6031 = vmul.f32 %v5983, %v6001
      %v6032 = vmul.f32 %v5986, %v6001
      %v6033 = vmul.f32 %v5991, %v6001
      %v6034 = vmul.f32 %v5994, %v6001
      %v6036 = vlaneseq
      %v6037 = vshrl.u32 %v6036, 7
      %v6038 = vsub.s32 0, %v6037
      %v6039 = vrot.slane %v5831, %v6038
      %v6041 = vadd.f32 %v6003, %v6039
      %v6042 = vadd.f32 %v6004, %v6039
      %v6043 = vadd.f32 %v6005, %v6039
      %v6044 = vadd.f32 %v6006, %v6039
      %v6045 = vadd.f32 %v6007, %v6039
      %v6046 = vadd.f32 %v6008, %v6039
      %v6047 = vadd.f32 %v6009, %v6039
      %v6048 = vadd.f32 %v6010, %v6039
      %v6049 = vadd.f32 %v6011, %v6039
      %v6050 = vadd.f32 %v6012, %v6039
      %v6051 = vadd.f32 %v6013, %v6039
      %v6052 = vadd.f32 %v6014, %v6039
      %v6053 = vadd.f32 %v6015, %v6039
      %v6054 = vadd.f32 %v6016, %v6039
      %v6055 = vadd.f32 %v6017, %v6039
      %v6056 = vadd.f32 %v6018, %v6039
      %v6057 = vadd.f32 %v6019, %v6039
      %v6058 = vadd.f32 %v6020, %v6039
      %v6059 = vadd.f32 %v6021, %v6039
      %v6060 = vadd.f32 %v6022, %v6039
      %v6061 = vadd.f32 %v6023, %v6039
      %v6062 = vadd.f32 %v6024, %v6039
      %v6063 = vadd.f32 %v6025, %v6039
      %v6064 = vadd.f32 %v6026, %v6039
      %v6065 = vadd.f32 %v6027, %v6039
      %v6066 = vadd.f32 %v6028, %v6039
      %v6067 = vadd.f32 %v6029, %v6039
      %v6068 = vadd.f32 %v6030, %v6039
      %v6069 = vadd.f32 %v6031, %v6039
      %v6070 = vadd.f32 %v6032, %v6039
      %v6071 = vadd.f32 %v6033, %v6039
      %v6072 = vadd.f32 %v6034, %v6039
      %v6073 = vadd.f32 %v5797, %v6041
      %v6074 = vadd.f32 %v5798, %v6042
      %v6075 = vadd.f32 %v5799, %v6043
      %v6076 = vadd.f32 %v5800, %v6044
      %v6077 = vadd.f32 %v5801, %v6045
      %v6078 = vadd.f32 %v5802, %v6046
      %v6079 = vadd.f32 %v5803, %v6047
      %v6080 = vadd.f32 %v5804, %v6048
      %v6081 = vadd.f32 %v5805, %v6049
      %v6082 = vadd.f32 %v5806, %v6050
      %v6083 = vadd.f32 %v5807, %v6051
      %v6084 = vadd.f32 %v5808, %v6052
      %v6085 = vadd.f32 %v5809, %v6053
      %v6086 = vadd.f32 %v5810, %v6054
      %v6087 = vadd.f32 %v5811, %v6055
      %v6088 = vadd.f32 %v5812, %v6056
      %v6089 = vadd.f32 %v5813, %v6057
      %v6090 = vadd.f32 %v5814, %v6058
      %v6091 = vadd.f32 %v5815, %v6059
      %v6092 = vadd.f32 %v5816, %v6060
      %v6093 = vadd.f32 %v5817, %v6061
      %v6094 = vadd.f32 %v5818, %v6062
      %v6095 = vadd.f32 %v5819, %v6063
      %v6096 = vadd.f32 %v5820, %v6064
      %v6097 = vadd.f32 %v5821, %v6065
      %v6098 = vadd.f32 %v5822, %v6066
      %v6099 = vadd.f32 %v5823, %v6067
      %v6100 = vadd.f32 %v5824, %v6068
      %v6101 = vadd.f32 %v5825, %v6069
      %v6102 = vadd.f32 %v5826, %v6070
      %v6103 = vadd.f32 %v5827, %v6071
      %v6104 = vadd.f32 %v5828, %v6072
      %v6105 = vmax.f32 %v6073, 0.0
      %v6106 = vmax.f32 %v6074, 0.0
      %v6107 = vmax.f32 %v6075, 0.0
      %v6108 = vmax.f32 %v6076, 0.0
      %v6109 = vmax.f32 %v6077, 0.0
      %v6110 = vmax.f32 %v6078, 0.0
      %v6111 = vmax.f32 %v6079, 0.0
      %v6112 = vmax.f32 %v6080, 0.0
      %v6113 = vmax.f32 %v6081, 0.0
      %v6114 = vmax.f32 %v6082, 0.0
      %v6115 = vmax.f32 %v6083, 0.0
      %v6116 = vmax.f32 %v6084, 0.0
      %v6117 = vmax.f32 %v6085, 0.0
      %v6118 = vmax.f32 %v6086, 0.0
      %v6119 = vmax.f32 %v6087, 0.0
      %v6120 = vmax.f32 %v6088, 0.0
      %v6121 = vmax.f32 %v6089, 0.0
      %v6122 = vmax.f32 %v6090, 0.0
      %v6123 = vmax.f32 %v6091, 0.0
      %v6124 = vmax.f32 %v6092, 0.0
      %v6125 = vmax.f32 %v6093, 0.0
      %v6126 = vmax.f32 %v6094, 0.0
      %v6127 = vmax.f32 %v6095, 0.0
      %v6128 = vmax.f32 %v6096, 0.0
      %v6129 = vmax.f32 %v6097, 0.0
      %v6130 = vmax.f32 %v6098, 0.0
      %v6131 = vmax.f32 %v6099, 0.0
      %v6132 = vmax.f32 %v6100, 0.0
      %v6133 = vmax.f32 %v6101, 0.0
      %v6134 = vmax.f32 %v6102, 0.0
      %v6135 = vmax.f32 %v6103, 0.0
      %v6136 = vmax.f32 %v6104, 0.0
      %vm6137 = vcmask 130048
      %v6138 = vsel %vm6137, %v6105, 0.0
      %v6139 = vsel %vm6137, %v6106, 0.0
      %v6140 = vadd.f32 %v6138, %v6139
      %v6141 = vsel %vm6137, %v6107, 0.0
      %v6142 = vadd.f32 %v6140, %v6141
      %v6143 = vsel %vm6137, %v6108, 0.0
      %v6144 = vadd.f32 %v6142, %v6143
      %v6145 = vsel %vm6137, %v6109, 0.0
      %v6146 = vadd.f32 %v6144, %v6145
      %v6147 = vsel %vm6137, %v6110, 0.0
      %v6148 = vadd.f32 %v6146, %v6147
      %v6149 = vsel %vm6137, %v6111, 0.0
      %v6150 = vadd.f32 %v6148, %v6149
      %v6151 = vsel %vm6137, %v6112, 0.0
      %v6152 = vadd.f32 %v6150, %v6151
      %v6153 = vsel %vm6137, %v6113, 0.0
      %v6154 = vadd.f32 %v6152, %v6153
      %v6155 = vsel %vm6137, %v6114, 0.0
      %v6156 = vadd.f32 %v6154, %v6155
      %v6157 = vsel %vm6137, %v6115, 0.0
      %v6158 = vadd.f32 %v6156, %v6157
      %v6159 = vsel %vm6137, %v6116, 0.0
      %v6160 = vadd.f32 %v6158, %v6159
      %v6161 = vsel %vm6137, %v6117, 0.0
      %v6162 = vadd.f32 %v6160, %v6161
      %v6163 = vsel %vm6137, %v6118, 0.0
      %v6164 = vadd.f32 %v6162, %v6163
      %v6165 = vsel %vm6137, %v6119, 0.0
      %v6166 = vadd.f32 %v6164, %v6165
      %v6167 = vsel %vm6137, %v6120, 0.0
      %v6168 = vadd.f32 %v6166, %v6167
      %v6169 = vsel %vm6137, %v6121, 0.0
      %v6170 = vadd.f32 %v6168, %v6169
      %v6171 = vsel %vm6137, %v6122, 0.0
      %v6172 = vadd.f32 %v6170, %v6171
      %v6173 = vsel %vm6137, %v6123, 0.0
      %v6174 = vadd.f32 %v6172, %v6173
      %v6175 = vsel %vm6137, %v6124, 0.0
      %v6176 = vadd.f32 %v6174, %v6175
      %v6177 = vsel %vm6137, %v6125, 0.0
      %v6178 = vadd.f32 %v6176, %v6177
      %v6179 = vsel %vm6137, %v6126, 0.0
      %v6180 = vadd.f32 %v6178, %v6179
      %v6181 = vsel %vm6137, %v6127, 0.0
      %v6182 = vadd.f32 %v6180, %v6181
      %v6183 = vsel %vm6137, %v6128, 0.0
      %v6184 = vadd.f32 %v6182, %v6183
      %v6185 = vsel %vm6137, %v6129, 0.0
      %v6186 = vadd.f32 %v6184, %v6185
      %v6187 = vsel %vm6137, %v6130, 0.0
      %v6188 = vadd.f32 %v6186, %v6187
      %v6189 = vsel %vm6137, %v6131, 0.0
      %v6190 = vadd.f32 %v6188, %v6189
      %v6191 = vsel %vm6137, %v6132, 0.0
      %v6192 = vadd.f32 %v6190, %v6191
      %v6193 = vsel %vm6137, %v6133, 0.0
      %v6194 = vadd.f32 %v6192, %v6193
      %v6195 = vsel %vm6137, %v6134, 0.0
      %v6196 = vadd.f32 %v6194, %v6195
      %v6197 = vsel %vm6137, %v6135, 0.0
      %v6198 = vadd.f32 %v6196, %v6197
      %v6199 = vsel %vm6137, %v6136, 0.0
      %v6200 = vadd.f32 %v6198, %v6199
      %v6201 = vrot.slane %v6200, 4
      %v6202 = vadd.f32 %v6200, %v6201
      %v6203 = vrot.slane %v6202, 2
      %v6204 = vadd.f32 %v6202, %v6203
      %v6205 = vrot.slane %v6204, 1
      %v6206 = vadd.f32 %v6204, %v6205
      %v6207 = vrcp.pop 256.0
      %v6208 = vmul.f32 %v6206, %v6207
      %v6209 = vld [vmem:[%s16] sm:$0xff]
      %v6210 = vld [vmem:[%s16 + $0x8] sm:$0xff]
      %v6211 = vpack.c.bf16 %v6208, %v6208
      %v6212 = vpack.c.bf16 %v6210, %v6209
      %v6213 = vld [vmem:[%s17] sm:$0x1]
      %v6215 = vsel %vm6137, %v6211, 0
      %6217 = vmatprep.subr.bf16.mxu0 0
      %6218 = vmatpush1.bf16.msra.mxu0 %v6212
      %6219 = vmatprep.subr.bf16.mxu0 0
      %6220 = vmatpush1.bf16.msra.mxu0 0
      %6221 = vmatprep.subr.bf16.mxu0 0
      %6222 = vmatpush1.bf16.msra.mxu0 0
      %6223 = vmatprep.subr.bf16.mxu0 0
      %6224 = vmatpush1.bf16.msra.mxu0 0
      %6225 = vmatprep.subr.bf16.mxu0 0
      %6226 = vmatpush1.bf16.msra.mxu0 0
      %6227 = vmatprep.subr.bf16.mxu0 0
      %6228 = vmatpush1.bf16.msra.mxu0 0
      %6229 = vmatprep.subr.bf16.mxu0 0
      %6230 = vmatpush1.bf16.msra.mxu0 0
      %6231 = vmatprep.subr.bf16.mxu0 0
      %6232 = vmatpush1.bf16.msra.mxu0 0
      %6233 = vmatprep.subr.bf16.mxu0 0
      %6234 = vmatpush1.bf16.msra.mxu0 0
      %6235 = vmatprep.subr.bf16.mxu0 0
      %6236 = vmatpush1.bf16.msra.mxu0 0
      %6237 = vmatprep.subr.bf16.mxu0 0
      %6238 = vmatpush1.bf16.msra.mxu0 0
      %6239 = vmatprep.subr.bf16.mxu0 0
      %6240 = vmatpush1.bf16.msra.mxu0 0
      %6241 = vmatprep.subr.bf16.mxu0 0
      %6242 = vmatpush1.bf16.msra.mxu0 0
      %6243 = vmatprep.subr.bf16.mxu0 0
      %6244 = vmatpush1.bf16.msra.mxu0 0
      %6245 = vmatprep.subr.bf16.mxu0 0
      %6246 = vmatpush1.bf16.msra.mxu0 0
      %6247 = vmatprep.subr.bf16.mxu0 0
      %6248 = vmatpush1.bf16.msra.mxu0 0
      %6249 = vmatprep.mubr.bf16.mxu0 0
      %6250 = vmatmul.mubr.bf16.gmra.mrb[0].mxu0 %v6215
      %v6251 = vpop.f32.mrb[0].mxu0
      %v6252 = vadd.f32 %v6213, %v6251
      %v6253 = vpop.f32.mrb[0].mxu0
      %v6254 = vpop.f32.mrb[0].mxu0
      %v6255 = vpop.f32.mrb[0].mxu0
      %6256 = vdwg.mxu0
      %v6257 = vld [vmem:[%s18] sm:$0xff]
      %v6258 = vld [vmem:[%s18 + $0x8] sm:$0xff]
      %v6259 = vld [vmem:[%s18 + $0x10] sm:$0xff]
      %v6260 = vld [vmem:[%s18 + $0x18] sm:$0xff]
      %v6261 = vpack.c.bf16 %v6252, %v6252
      %v6262 = vpack.c.bf16 %v6258, %v6257
      %v6263 = vpack.c.bf16 %v6260, %v6259
      %v6264 = vld [vmem:[%s19] sm:$0x1]
      %vm6265 = vcmask 261120
      %v6267 = vsel %vm6265, %v6261, 0
      %6269 = vmatprep.subr.bf16.mxu0 0
      %6270 = vmatpush1.bf16.msra.mxu0 %v6262
      %6271 = vmatprep.subr.bf16.mxu0 0
      %6272 = vmatpush1.bf16.msra.mxu0 %v6263
      %6273 = vmatprep.subr.bf16.mxu0 0
      %6274 = vmatpush1.bf16.msra.mxu0 0
      %6275 = vmatprep.subr.bf16.mxu0 0
      %6276 = vmatpush1.bf16.msra.mxu0 0
      %6277 = vmatprep.subr.bf16.mxu0 0
      %6278 = vmatpush1.bf16.msra.mxu0 0
      %6279 = vmatprep.subr.bf16.mxu0 0
      %6280 = vmatpush1.bf16.msra.mxu0 0
      %6281 = vmatprep.subr.bf16.mxu0 0
      %6282 = vmatpush1.bf16.msra.mxu0 0
      %6283 = vmatprep.subr.bf16.mxu0 0
      %6284 = vmatpush1.bf16.msra.mxu0 0
      %6285 = vmatprep.subr.bf16.mxu0 0
      %6286 = vmatpush1.bf16.msra.mxu0 0
      %6287 = vmatprep.subr.bf16.mxu0 0
      %6288 = vmatpush1.bf16.msra.mxu0 0
      %6289 = vmatprep.subr.bf16.mxu0 0
      %6290 = vmatpush1.bf16.msra.mxu0 0
      %6291 = vmatprep.subr.bf16.mxu0 0
      %6292 = vmatpush1.bf16.msra.mxu0 0
      %6293 = vmatprep.subr.bf16.mxu0 0
      %6294 = vmatpush1.bf16.msra.mxu0 0
      %6295 = vmatprep.subr.bf16.mxu0 0
      %6296 = vmatpush1.bf16.msra.mxu0 0
      %6297 = vmatprep.subr.bf16.mxu0 0
      %6298 = vmatpush1.bf16.msra.mxu0 0
      %6299 = vmatprep.subr.bf16.mxu0 0
      %6300 = vmatpush1.bf16.msra.mxu0 0
      %6301 = vmatprep.mubr.bf16.mxu0 0
      %6302 = vmatmul.mubr.bf16.gmra.mrb[0].mxu0 %v6267
      %v6303 = vpop.f32.mrb[0].mxu0
      %v6304 = vadd.f32 %v6264, %v6303
      %v6305 = vpop.f32.mrb[0].mxu0
      %v6306 = vpop.f32.mrb[0].mxu0
      %v6307 = vpop.f32.mrb[0].mxu0
      %6308 = vdwg.mxu0
      %vm6309 = vcmask 253952
      %6310 = vst.msk [vmem:[%s625] sm:$0x1] %vm6309, %v6304
      %p6311 = scmp.lt.s32.totalorder %s31, 1
      %s6312 = scalar_select %p6311, %s31, 1
      %s6313 = scalar_lea.vmem %s20, %s6312
      // Predicated region
      $region101: #{resnet_gpt2_forward.2} parent=99 // pred_check
        %p6314 = pneg %p474
      $region102: #{resnet_gpt2_forward.2} parent=99 // pred_check_branch
        %6316 = sbr.rel (%p6314) target = $region104
      $region103: #{resnet_gpt2_forward.2} parent=99 // pred_region
        _
      $region104: #{resnet_gpt2_forward.2} parent=99 // pred_fallthru
        _
    $region100: #{resnet_gpt2_forward.2} parent=5 // pred_fallthru
      _
    %p6317 = scmp.le.s32.totalorder 2, %s26
    // Predicated region
    $region105: #{resnet_gpt2_forward.2} parent=5 // pred_check
      %p6318 = pneg %p6317
    $region106: #{resnet_gpt2_forward.2} parent=5 // pred_check_branch
      %6320 = sbr.rel (%p6318) target = $region108
    $region107: #{resnet_gpt2_forward.2} parent=5 // pred_region
      %s6321 = ssub.s32 %s26, 2
      // Predicated region
      $region109: #{resnet_gpt2_forward.2} parent=107 // pred_check
        %p6322 = pneg %p480
      $region110: #{resnet_gpt2_forward.2} parent=107 // pred_check_branch
        %6324 = sbr.rel (%p6322) target = $region112
      $region111: #{resnet_gpt2_forward.2} parent=107 // pred_region
        %p6325 = scmp.lt.s32.totalorder %s32, 1
        %s6326 = scalar_select %p6325, %s32, 1
        %s6327 = scalar_lea.vmem %s20, %s6326
      $region112: #{resnet_gpt2_forward.2} parent=107 // pred_fallthru
        _
    $region108: #{resnet_gpt2_forward.2} parent=5 // pred_fallthru
      _
  $region6: #{resnet_gpt2_forward.2} parent=0 // loop_footer
    %s30 = sadd.s32 1, %s26
  $region7: #{resnet_gpt2_forward.2} parent=0 // loop_footer_branch
    %25 = sbr.rel target = $region3
  $region8: #{resnet_gpt2_forward.2} parent=0 // loop_exit
    _

</llo_original>
